<compile_context>
chip_gen: v7x
topology: tpu7x:2x2x1
jax: 0.10.0
libtpu: 0.0.40
codegen_flags: <defaults>
</compile_context>

<pallas_src>
import functools

import jax
import jax.numpy as jnp
from jax.experimental import pallas as pl
from jax.experimental.pallas import tpu as pltpu


def _round_up(x, m):
    return ((x + m - 1) // m) * m


def _device_kind():
    try:
        return jax.devices()[0].device_kind.lower()
    except Exception:  # pragma: no cover - defensive
        return ""


# v5e MXU is 4x128x128 -> 128-wide N tiles already fill the array.
_IS_V5 = "v5" in _device_kind()


# ----------------------------------------------------------------------------
# Fused matmul + bias + activation Pallas kernel (single K block)
# ----------------------------------------------------------------------------
def _matmul_kernel(a_ref, b_ref, bias_ref, o_ref, *, act):
    # Full K fits in one block for every layer of this model (K <= 1152),
    # so there is no k grid axis / accumulator scratch.
    r = jnp.dot(a_ref[...], b_ref[...], preferred_element_type=jnp.float32)
    r = r + bias_ref[...]                     # bias broadcast over rows
    if act == 1:                              # LeakyReLU(0.01)
        r = jnp.where(r > 0, r, 0.01 * r)
    elif act == 2:                            # Sigmoid
        r = jax.nn.sigmoid(r)
    o_ref[...] = r.astype(o_ref.dtype)


def matmul_bias_act(a, w_p, b_p, n, act):
    """Compute act(a @ W + bias) with a Pallas TPU kernel.

    a:   (M, K) activations (any float dtype; cast to bf16 here)
    w_p: (Kp, Np) pre-packed bf16 weights (padded at init time)
    b_p: (1, Np)  pre-packed f32 bias
    n:   logical output width (<= Np)
    act: 0 = identity, 1 = leaky_relu(0.01), 2 = sigmoid
    """
    M, K = a.shape
    Kp, Np = w_p.shape
    assert K <= Kp and n <= Np

    # N tile: 256 fills the 256x256 MXU on v6e/v7x; keep 128 on v5e.
    tn = 256 if (not _IS_V5 and Np % 256 == 0) else 128

    # M tiling: one row block unless M is large; >=2 parallel row blocks keep
    # both v7x TensorCores busy (neutral on 1-TC chips).
    if M > 256:
        tm = _round_up((M + 1) // 2, 8)
        Mp = 2 * tm
    else:
        tm = _round_up(M, 8)
        Mp = tm

    # Minimal activation padding only (M -> mult of 8, K -> packed Kp), bf16
    # inputs halve the HBM->VMEM traffic; accumulation stays f32.
    a_p = jnp.zeros((Mp, Kp), jnp.bfloat16).at[:M, :K].set(a.astype(jnp.bfloat16))

    grid = (Mp // tm, Np // tn)

    flops = 2 * Mp * Kp * Np
    bytes_accessed = Mp * Kp * 2 + Kp * Np * 2 + Np * 4 + Mp * Np * 4

    out = pl.pallas_call(
        functools.partial(_matmul_kernel, act=act),
        out_shape=jax.ShapeDtypeStruct((Mp, Np), jnp.float32),
        grid_spec=pltpu.PrefetchScalarGridSpec(
            num_scalar_prefetch=0,
            grid=grid,
            in_specs=[
                pl.BlockSpec((tm, Kp), lambda i, j: (i, 0)),   # A row block, full K
                pl.BlockSpec((Kp, tn), lambda i, j: (0, j)),   # B full K, N tile
                pl.BlockSpec((1, tn), lambda i, j: (0, j)),    # bias N tile
            ],
            out_specs=pl.BlockSpec((tm, tn), lambda i, j: (i, j)),
        ),
        compiler_params=pltpu.CompilerParams(
            dimension_semantics=("parallel", "parallel"),
            vmem_limit_bytes=32 * 1024 * 1024),
        cost_estimate=pl.CostEstimate(
            flops=flops,
            transcendentals=Mp * Np if act == 2 else 0,
            bytes_accessed=bytes_accessed),
    )(a_p, w_p, b_p)
    return out[:M, :n]


# ----------------------------------------------------------------------------
# im2col / conv wrappers (plain-JAX glue, matmul in Pallas)
# ----------------------------------------------------------------------------
def _im2col(x, kh, kw, stride):
    # x: (B, C, H, W) NCHW
    B, C, H, W = x.shape
    OH = (H - kh) // stride + 1
    OW = (W - kw) // stride + 1
    patches = []
    for i in range(kh):
        for j in range(kw):
            patches.append(x[:, :, i:i + stride * OH:stride,
                              j:j + stride * OW:stride])
    cols = jnp.stack(patches, axis=2)                  # (B, C, KH*KW, OH, OW)
    cols = cols.transpose(0, 3, 4, 1, 2).reshape(B * OH * OW, C * kh * kw)
    return cols, OH, OW


def conv2d(x, packed, cout, k, stride, act):
    # x: (B, Cin, H, W); packed = (W_p (Cin*k*k, Cout) padded bf16, bias_p)
    B = x.shape[0]
    w_p, b_p = packed
    cols, OH, OW = _im2col(x, k, k, stride)
    out = matmul_bias_act(cols, w_p, b_p, n=cout, act=act)   # (B*OH*OW, Cout)
    return out.reshape(B, OH, OW, cout).transpose(0, 3, 1, 2)


def conv_transpose2d(x, packed, bias_raw, cout, k, stride, act):
    # Direct (zero-free) conv-transpose:
    #   patches(B*H*W, Cout*k*k) = rows(B*H*W, Cin) @ W(Cin, Cout*k*k)  [Pallas]
    #   out[b, co, ih*s+kh, iw*s+kw] += patches[b, ih, iw, co, kh, kw]  [glue]
    B, Cin, H, W = x.shape
    w_p, b_p = packed
    n = cout * k * k
    rows = x.transpose(0, 2, 3, 1).reshape(B * H * W, Cin)

    if H == 1 and W == 1:
        # No overlapping contributions: bias (pre-repeated per (kh,kw)) and
        # activation are fused into the kernel epilogue.
        patches = matmul_bias_act(rows, w_p, b_p, n=n, act=act)
        return patches.reshape(B, cout, k, k)

    patches = matmul_bias_act(rows, w_p, b_p, n=n, act=0)
    patches = patches.reshape(B, H, W, cout, k, k)
    OH = (H - 1) * stride + k
    OW = (W - 1) * stride + k
    out = jnp.zeros((B, cout, OH, OW), jnp.float32)
    for kh in range(k):
        for kw in range(k):
            out = out.at[:, :,
                         kh: kh + stride * (H - 1) + 1: stride,
                         kw: kw + stride * (W - 1) + 1: stride].add(
                patches[:, :, :, :, kh, kw].transpose(0, 3, 1, 2))
    # Overlapping windows -> bias/activation cannot be fused into the matmul;
    # apply them on the tiny NCHW output in plain JAX.
    out = out + bias_raw[None, :, None, None]
    if act == 1:
        out = jnp.where(out > 0, out, 0.01 * out)
    elif act == 2:
        out = jax.nn.sigmoid(out)
    return out


# ----------------------------------------------------------------------------
# Parameter init + one-time weight packing (hoisted out of the forward pass)
# ----------------------------------------------------------------------------
def _pack(w_mat, bias):
    # w_mat: (K, N), bias: (N,)  ->  bf16 (Kp, Np), f32 (1, Np)
    K, N = w_mat.shape
    Kp = _round_up(K, 16)      # bf16 sublane-packing friendly; NOT padded to 256
    Np = _round_up(N, 128)
    w_p = jnp.zeros((Kp, Np), jnp.bfloat16).at[:K, :N].set(
        w_mat.astype(jnp.bfloat16))
    b_p = jnp.zeros((1, Np), jnp.float32).at[0, :N].set(bias.astype(jnp.float32))
    return w_p, b_p


def init_params(key, image_channels=1, h_dim=1024, z_dim=32):
    def uni(key, shape, fan_in):
        bound = 1.0 / jnp.sqrt(jnp.maximum(fan_in, 1.0))
        return jax.random.uniform(key, shape, jnp.float32, -bound, bound)

    keys = iter(jax.random.split(key, 40))
    p = {}

    # encoder convs: PyTorch weight (Cout, Cin, KH, KW) -> B matrix (Cin*k*k, Cout)
    for name, (co, ci, k) in [("c1", (32, image_channels, 3)), ("c2", (64, 32, 3)),
                              ("c3", (128, 64, 3)), ("c4", (256, 128, 3))]:
        fan = ci * k * k
        w = uni(next(keys), (co, ci, k, k), fan)
        b = uni(next(keys), (co,), fan)
        p[name] = _pack(w.reshape(co, ci * k * k).T, b)

    # linears: PyTorch weight (out, in) -> B matrix (in, out)
    lin = {}
    for name, (o, i) in [("fc", (h_dim, h_dim)), ("mu", (z_dim, h_dim)),
                         ("ls", (z_dim, h_dim)), ("up", (h_dim, z_dim)),
                         ("d1", (h_dim, h_dim))]:
        lin[name] = (uni(next(keys), (o, i), i), uni(next(keys), (o,), i))
    for name in ("fc", "up", "d1"):
        w, b = lin[name]
        p[name] = _pack(w.T, b)
    # fused mu / logsigma head: one matmul with N = 2*z_dim
    w = jnp.concatenate([lin["mu"][0], lin["ls"][0]], axis=0)   # (2*z, h)
    b = jnp.concatenate([lin["mu"][1], lin["ls"][1]], axis=0)
    p["muls"] = _pack(w.T, b)

    # decoder conv-transposes: PyTorch weight (Cin, Cout, KH, KW)
    #   -> B matrix (Cin, Cout*KH*KW) for the direct formulation
    for name, (ci, co, k) in [("ct1", (h_dim, 128, 4)), ("ct2", (128, 64, 5)),
                              ("ct3", (64, 32, 4)), ("ct4", (32, image_channels, 5))]:
        fan = ci * k * k
        w = uni(next(keys), (ci, co, k, k), fan)
        b = uni(next(keys), (co,), fan)
        if name == "ct1":
            # 1x1 spatial input: conv-transpose == linear; fuse bias + act.
            p[name] = _pack(w.reshape(ci, co * k * k), jnp.repeat(b, k * k))
        else:
            p[name] = _pack(w.reshape(ci, co * k * k),
                            jnp.zeros((co * k * k,), jnp.float32))
            p[name + "_bias"] = b          # added after overlap-add
    return p


# ----------------------------------------------------------------------------
# Forward pass (mu, logvar, z, x_recon), mirroring M1.forward
# ----------------------------------------------------------------------------
def forward(params, x, eps_key, h_dim=1024, z_dim=32):
    B = x.shape[0]
    c_img = x.shape[1]

    # ---- encoder ----
    h = conv2d(x, params["c1"], cout=32, k=3, stride=2, act=1)
    h = conv2d(h, params["c2"], cout=64, k=3, stride=2, act=1)
    # TODO(synk): Dropout2d(p=0.2) treated as identity (eval-mode semantics).
    h = conv2d(h, params["c3"], cout=128, k=3, stride=1, act=1)
    h = conv2d(h, params["c4"], cout=256, k=3, stride=1, act=1)
    h = h.reshape(B, -1)                                     # Flatten (NCHW order)
    h = matmul_bias_act(h, *params["fc"], n=h_dim, act=1)
    ml = matmul_bias_act(h, *params["muls"], n=2 * z_dim, act=0)   # fused heads
    mu, logvar = ml[:, :z_dim], ml[:, z_dim:]

    # ---- reparameterize (reference uses std = exp(logvar), not exp(0.5*logvar)) ----
    eps = jax.random.normal(eps_key, mu.shape, jnp.float32)
    z = mu + jnp.exp(logvar) * eps

    # ---- decoder ----
    hd = matmul_bias_act(z, *params["up"], n=h_dim, act=0)
    hd = matmul_bias_act(hd, *params["d1"], n=h_dim, act=1)
    hd = hd.reshape(B, h_dim, 1, 1)                          # UnFlatten
    hd = conv_transpose2d(hd, params["ct1"], None, cout=128, k=4, stride=2, act=1)
    hd = conv_transpose2d(hd, params["ct2"], params["ct2_bias"],
                          cout=64, k=5, stride=2, act=1)
    hd = conv_transpose2d(hd, params["ct3"], params["ct3_bias"],
                          cout=32, k=4, stride=2, act=1)
    x_recon = conv_transpose2d(hd, params["ct4"], params["ct4_bias"],
                               cout=c_img, k=5, stride=1, act=2)
    return mu, logvar, z, x_recon


if __name__ == "__main__":
    key = jax.random.PRNGKey(0)
    pkey, xkey, ekey = jax.random.split(key, 3)

    B, C, H, W = 2, 1, 28, 28      # 28 -> 13 -> 6 -> 4 -> 2 -> flatten 1024
    x = jax.random.uniform(xkey, (B, C, H, W), jnp.float32)

    params = init_params(pkey, image_channels=C, h_dim=1024, z_dim=32)

    fwd = jax.jit(forward)
    mu, logvar, z, x_recon = fwd(params, x, ekey)
    jax.block_until_ready((mu, logvar, z, x_recon))

    assert mu.shape == (B, 32) and logvar.shape == (B, 32)
    assert z.shape == (B, 32)
    assert x_recon.shape == (B, C, 28, 28)
    assert bool(jnp.all(jnp.isfinite(x_recon)))
    print("KERNEL_OK")
</pallas_src>

<mosaic_0001>
module attributes {stable_mosaic.version = 11 : i64} {
  func.func @_matmul_kernel(%arg0: i32, %arg1: i32, %arg2: memref<176x16xbf16, #tpu.memory_space<vmem>>, %arg3: memref<16x128xbf16, #tpu.memory_space<vmem>>, %arg4: memref<1x128xf32, #tpu.memory_space<vmem>>, %arg5: memref<176x128xf32, #tpu.memory_space<vmem>>) attributes {dimension_semantics = [#tpu.dimension_semantics<parallel>, #tpu.dimension_semantics<parallel>], iteration_bounds = array<i64: 2, 1>, scalar_prefetch = 0 : i64, scratch_operands = 0 : i64, tpu.core_type = #tpu.core_type<tc>, window_params = [{transform_indices = @transform_0, window_bounds = array<i64: 176, 16>}, {transform_indices = @transform_1, window_bounds = array<i64: 16, 128>}, {transform_indices = @transform_2, window_bounds = array<i64: 1, 128>}, {transform_indices = @transform_3, window_bounds = array<i64: 176, 128>}]} {
    %c0 = arith.constant 0 : index
    %c0_0 = arith.constant 0 : index
    %0 = vector.load %arg2[%c0, %c0_0] : memref<176x16xbf16, #tpu.memory_space<vmem>>, vector<176x16xbf16>
    %c0_1 = arith.constant 0 : index
    %c0_2 = arith.constant 0 : index
    %1 = vector.load %arg3[%c0_1, %c0_2] : memref<16x128xbf16, #tpu.memory_space<vmem>>, vector<16x128xbf16>
    %cst = arith.constant dense<0.000000e+00> : vector<176x128xf32>
    %2 = tpu.matmul %0, %1, %cst {dimension_numbers = #tpu.dot_dimension_numbers<[1], [0], [0], [1], [0, 0, 1, 1], [], []>} : vector<176x16xbf16>, vector<16x128xbf16>, vector<176x128xf32> -> vector<176x128xf32>
    %c0_3 = arith.constant 0 : index
    %c0_4 = arith.constant 0 : index
    %3 = vector.load %arg4[%c0_3, %c0_4] : memref<1x128xf32, #tpu.memory_space<vmem>>, vector<1x128xf32>
    %4 = vector.broadcast %3 : vector<1x128xf32> to vector<176x128xf32>
    %5 = arith.addf %2, %4 : vector<176x128xf32>
    %cst_5 = arith.constant 0.000000e+00 : f32
    %6 = vector.broadcast %cst_5 : f32 to vector<176x128xf32>
    %7 = arith.cmpf ogt, %5, %6 : vector<176x128xf32>
    %cst_6 = arith.constant 0.00999999977 : f32
    %8 = vector.broadcast %cst_6 : f32 to vector<176x128xf32>
    %9 = arith.mulf %8, %5 : vector<176x128xf32>
    %10 = arith.select %7, %5, %9 : vector<176x128xi1>, vector<176x128xf32>
    %c0_7 = arith.constant 0 : index
    %c0_8 = arith.constant 0 : index
    %11 = vector.load %arg5[%c0_7, %c0_8] : memref<176x128xf32, #tpu.memory_space<vmem>>, vector<176x128xf32>
    tpu.vector_store %arg5[%c0_7, %c0_8], %10 {strides = array<i32>} : memref<176x128xf32, #tpu.memory_space<vmem>>, vector<176x128xf32>,
    return
  }
  func.func @transform_0(%arg0: i32, %arg1: i32) -> (i32, i32) {
    %c0_i32 = arith.constant 0 : i32
    %c0_i32_0 = arith.constant 0 : i32
    return %arg0, %c0_i32 : i32, i32
  }
  func.func @transform_1(%arg0: i32, %arg1: i32) -> (i32, i32) {
    %c0_i32 = arith.constant 0 : i32
    %c0_i32_0 = arith.constant 0 : i32
    return %c0_i32, %arg1 : i32, i32
  }
  func.func @transform_2(%arg0: i32, %arg1: i32) -> (i32, i32) {
    %c0_i32 = arith.constant 0 : i32
    %c0_i32_0 = arith.constant 0 : i32
    return %c0_i32, %arg1 : i32, i32
  }
  func.func @transform_3(%arg0: i32, %arg1: i32) -> (i32, i32) {
    %c0_i32 = arith.constant 0 : i32
    return %arg0, %arg1 : i32, i32
  }
}

module attributes {stable_mosaic.version = 11 : i64} {
  func.func @_matmul_kernel(%arg0: i32, %arg1: i32, %arg2: memref<72x288xbf16, #tpu.memory_space<vmem>>, %arg3: memref<288x128xbf16, #tpu.memory_space<vmem>>, %arg4: memref<1x128xf32, #tpu.memory_space<vmem>>, %arg5: memref<72x128xf32, #tpu.memory_space<vmem>>) attributes {dimension_semantics = [#tpu.dimension_semantics<parallel>, #tpu.dimension_semantics<parallel>], iteration_bounds = array<i64: 1, 1>, scalar_prefetch = 0 : i64, scratch_operands = 0 : i64, tpu.core_type = #tpu.core_type<tc>, window_params = [{transform_indices = @transform_0, window_bounds = array<i64: 72, 288>}, {transform_indices = @transform_1, window_bounds = array<i64: 288, 128>}, {transform_indices = @transform_2, window_bounds = array<i64: 1, 128>}, {transform_indices = @transform_3, window_bounds = array<i64: 72, 128>}]} {
    %c0 = arith.constant 0 : index
    %c0_0 = arith.constant 0 : index
    %0 = vector.load %arg2[%c0, %c0_0] : memref<72x288xbf16, #tpu.memory_space<vmem>>, vector<72x288xbf16>
    %c0_1 = arith.constant 0 : index
    %c0_2 = arith.constant 0 : index
    %1 = vector.load %arg3[%c0_1, %c0_2] : memref<288x128xbf16, #tpu.memory_space<vmem>>, vector<288x128xbf16>
    %cst = arith.constant dense<0.000000e+00> : vector<72x128xf32>
    %2 = tpu.matmul %0, %1, %cst {dimension_numbers = #tpu.dot_dimension_numbers<[1], [0], [0], [1], [0, 0, 1, 1], [], []>} : vector<72x288xbf16>, vector<288x128xbf16>, vector<72x128xf32> -> vector<72x128xf32>
    %c0_3 = arith.constant 0 : index
    %c0_4 = arith.constant 0 : index
    %3 = vector.load %arg4[%c0_3, %c0_4] : memref<1x128xf32, #tpu.memory_space<vmem>>, vector<1x128xf32>
    %4 = vector.broadcast %3 : vector<1x128xf32> to vector<72x128xf32>
    %5 = arith.addf %2, %4 : vector<72x128xf32>
    %cst_5 = arith.constant 0.000000e+00 : f32
    %6 = vector.broadcast %cst_5 : f32 to vector<72x128xf32>
    %7 = arith.cmpf ogt, %5, %6 : vector<72x128xf32>
    %cst_6 = arith.constant 0.00999999977 : f32
    %8 = vector.broadcast %cst_6 : f32 to vector<72x128xf32>
    %9 = arith.mulf %8, %5 : vector<72x128xf32>
    %10 = arith.select %7, %5, %9 : vector<72x128xi1>, vector<72x128xf32>
    %c0_7 = arith.constant 0 : index
    %c0_8 = arith.constant 0 : index
    %11 = vector.load %arg5[%c0_7, %c0_8] : memref<72x128xf32, #tpu.memory_space<vmem>>, vector<72x128xf32>
    tpu.vector_store %arg5[%c0_7, %c0_8], %10 {strides = array<i32>} : memref<72x128xf32, #tpu.memory_space<vmem>>, vector<72x128xf32>,
    return
  }
  func.func @transform_0(%arg0: i32, %arg1: i32) -> (i32, i32) {
    %c0_i32 = arith.constant 0 : i32
    %c0_i32_0 = arith.constant 0 : i32
    return %arg0, %c0_i32 : i32, i32
  }
  func.func @transform_1(%arg0: i32, %arg1: i32) -> (i32, i32) {
    %c0_i32 = arith.constant 0 : i32
    %c0_i32_0 = arith.constant 0 : i32
    return %c0_i32, %arg1 : i32, i32
  }
  func.func @transform_2(%arg0: i32, %arg1: i32) -> (i32, i32) {
    %c0_i32 = arith.constant 0 : i32
    %c0_i32_0 = arith.constant 0 : i32
    return %c0_i32, %arg1 : i32, i32
  }
  func.func @transform_3(%arg0: i32, %arg1: i32) -> (i32, i32) {
    %c0_i32 = arith.constant 0 : i32
    return %arg0, %arg1 : i32, i32
  }
}

module attributes {stable_mosaic.version = 11 : i64} {
  func.func @_matmul_kernel(%arg0: i32, %arg1: i32, %arg2: memref<32x576xbf16, #tpu.memory_space<vmem>>, %arg3: memref<576x128xbf16, #tpu.memory_space<vmem>>, %arg4: memref<1x128xf32, #tpu.memory_space<vmem>>, %arg5: memref<32x128xf32, #tpu.memory_space<vmem>>) attributes {dimension_semantics = [#tpu.dimension_semantics<parallel>, #tpu.dimension_semantics<parallel>], iteration_bounds = array<i64: 1, 1>, scalar_prefetch = 0 : i64, scratch_operands = 0 : i64, tpu.core_type = #tpu.core_type<tc>, window_params = [{transform_indices = @transform_0, window_bounds = array<i64: 32, 576>}, {transform_indices = @transform_1, window_bounds = array<i64: 576, 128>}, {transform_indices = @transform_2, window_bounds = array<i64: 1, 128>}, {transform_indices = @transform_3, window_bounds = array<i64: 32, 128>}]} {
    %c0 = arith.constant 0 : index
    %c0_0 = arith.constant 0 : index
    %0 = vector.load %arg2[%c0, %c0_0] : memref<32x576xbf16, #tpu.memory_space<vmem>>, vector<32x576xbf16>
    %c0_1 = arith.constant 0 : index
    %c0_2 = arith.constant 0 : index
    %1 = vector.load %arg3[%c0_1, %c0_2] : memref<576x128xbf16, #tpu.memory_space<vmem>>, vector<576x128xbf16>
    %cst = arith.constant dense<0.000000e+00> : vector<32x128xf32>
    %2 = tpu.matmul %0, %1, %cst {dimension_numbers = #tpu.dot_dimension_numbers<[1], [0], [0], [1], [0, 0, 1, 1], [], []>} : vector<32x576xbf16>, vector<576x128xbf16>, vector<32x128xf32> -> vector<32x128xf32>
    %c0_3 = arith.constant 0 : index
    %c0_4 = arith.constant 0 : index
    %3 = vector.load %arg4[%c0_3, %c0_4] : memref<1x128xf32, #tpu.memory_space<vmem>>, vector<1x128xf32>
    %4 = vector.broadcast %3 : vector<1x128xf32> to vector<32x128xf32>
    %5 = arith.addf %2, %4 : vector<32x128xf32>
    %cst_5 = arith.constant 0.000000e+00 : f32
    %6 = vector.broadcast %cst_5 : f32 to vector<32x128xf32>
    %7 = arith.cmpf ogt, %5, %6 : vector<32x128xf32>
    %cst_6 = arith.constant 0.00999999977 : f32
    %8 = vector.broadcast %cst_6 : f32 to vector<32x128xf32>
    %9 = arith.mulf %8, %5 : vector<32x128xf32>
    %10 = arith.select %7, %5, %9 : vector<32x128xi1>, vector<32x128xf32>
    %c0_7 = arith.constant 0 : index
    %c0_8 = arith.constant 0 : index
    %11 = vector.load %arg5[%c0_7, %c0_8] : memref<32x128xf32, #tpu.memory_space<vmem>>, vector<32x128xf32>
    tpu.vector_store %arg5[%c0_7, %c0_8], %10 {strides = array<i32>} : memref<32x128xf32, #tpu.memory_space<vmem>>, vector<32x128xf32>,
    return
  }
  func.func @transform_0(%arg0: i32, %arg1: i32) -> (i32, i32) {
    %c0_i32 = arith.constant 0 : i32
    %c0_i32_0 = arith.constant 0 : i32
    return %arg0, %c0_i32 : i32, i32
  }
  func.func @transform_1(%arg0: i32, %arg1: i32) -> (i32, i32) {
    %c0_i32 = arith.constant 0 : i32
    %c0_i32_0 = arith.constant 0 : i32
    return %c0_i32, %arg1 : i32, i32
  }
  func.func @transform_2(%arg0: i32, %arg1: i32) -> (i32, i32) {
    %c0_i32 = arith.constant 0 : i32
    %c0_i32_0 = arith.constant 0 : i32
    return %c0_i32, %arg1 : i32, i32
  }
  func.func @transform_3(%arg0: i32, %arg1: i32) -> (i32, i32) {
    %c0_i32 = arith.constant 0 : i32
    return %arg0, %arg1 : i32, i32
  }
}

module attributes {stable_mosaic.version = 11 : i64} {
  func.func @_matmul_kernel(%arg0: i32, %arg1: i32, %arg2: memref<8x1152xbf16, #tpu.memory_space<vmem>>, %arg3: memref<1152x256xbf16, #tpu.memory_space<vmem>>, %arg4: memref<1x256xf32, #tpu.memory_space<vmem>>, %arg5: memref<8x256xf32, #tpu.memory_space<vmem>>) attributes {dimension_semantics = [#tpu.dimension_semantics<parallel>, #tpu.dimension_semantics<parallel>], iteration_bounds = array<i64: 1, 1>, scalar_prefetch = 0 : i64, scratch_operands = 0 : i64, tpu.core_type = #tpu.core_type<tc>, window_params = [{transform_indices = @transform_0, window_bounds = array<i64: 8, 1152>}, {transform_indices = @transform_1, window_bounds = array<i64: 1152, 256>}, {transform_indices = @transform_2, window_bounds = array<i64: 1, 256>}, {transform_indices = @transform_3, window_bounds = array<i64: 8, 256>}]} {
    %c0 = arith.constant 0 : index
    %c0_0 = arith.constant 0 : index
    %0 = vector.load %arg2[%c0, %c0_0] : memref<8x1152xbf16, #tpu.memory_space<vmem>>, vector<8x1152xbf16>
    %c0_1 = arith.constant 0 : index
    %c0_2 = arith.constant 0 : index
    %1 = vector.load %arg3[%c0_1, %c0_2] : memref<1152x256xbf16, #tpu.memory_space<vmem>>, vector<1152x256xbf16>
    %cst = arith.constant dense<0.000000e+00> : vector<8x256xf32>
    %2 = tpu.matmul %0, %1, %cst {dimension_numbers = #tpu.dot_dimension_numbers<[1], [0], [0], [1], [0, 0, 1, 1], [], []>} : vector<8x1152xbf16>, vector<1152x256xbf16>, vector<8x256xf32> -> vector<8x256xf32>
    %c0_3 = arith.constant 0 : index
    %c0_4 = arith.constant 0 : index
    %3 = vector.load %arg4[%c0_3, %c0_4] : memref<1x256xf32, #tpu.memory_space<vmem>>, vector<1x256xf32>
    %4 = vector.broadcast %3 : vector<1x256xf32> to vector<8x256xf32>
    %5 = arith.addf %2, %4 : vector<8x256xf32>
    %cst_5 = arith.constant 0.000000e+00 : f32
    %6 = vector.broadcast %cst_5 : f32 to vector<8x256xf32>
    %7 = arith.cmpf ogt, %5, %6 : vector<8x256xf32>
    %cst_6 = arith.constant 0.00999999977 : f32
    %8 = vector.broadcast %cst_6 : f32 to vector<8x256xf32>
    %9 = arith.mulf %8, %5 : vector<8x256xf32>
    %10 = arith.select %7, %5, %9 : vector<8x256xi1>, vector<8x256xf32>
    %c0_7 = arith.constant 0 : index
    %c0_8 = arith.constant 0 : index
    %11 = vector.load %arg5[%c0_7, %c0_8] : memref<8x256xf32, #tpu.memory_space<vmem>>, vector<8x256xf32>
    tpu.vector_store %arg5[%c0_7, %c0_8], %10 {strides = array<i32>} : memref<8x256xf32, #tpu.memory_space<vmem>>, vector<8x256xf32>,
    return
  }
  func.func @transform_0(%arg0: i32, %arg1: i32) -> (i32, i32) {
    %c0_i32 = arith.constant 0 : i32
    %c0_i32_0 = arith.constant 0 : i32
    return %arg0, %c0_i32 : i32, i32
  }
  func.func @transform_1(%arg0: i32, %arg1: i32) -> (i32, i32) {
    %c0_i32 = arith.constant 0 : i32
    %c0_i32_0 = arith.constant 0 : i32
    return %c0_i32, %arg1 : i32, i32
  }
  func.func @transform_2(%arg0: i32, %arg1: i32) -> (i32, i32) {
    %c0_i32 = arith.constant 0 : i32
    %c0_i32_0 = arith.constant 0 : i32
    return %c0_i32, %arg1 : i32, i32
  }
  func.func @transform_3(%arg0: i32, %arg1: i32) -> (i32, i32) {
    %c0_i32 = arith.constant 0 : i32
    return %arg0, %arg1 : i32, i32
  }
}

module attributes {stable_mosaic.version = 11 : i64} {
  func.func @_matmul_kernel(%arg0: i32, %arg1: i32, %arg2: memref<8x1024xbf16, #tpu.memory_space<vmem>>, %arg3: memref<1024x256xbf16, #tpu.memory_space<vmem>>, %arg4: memref<1x256xf32, #tpu.memory_space<vmem>>, %arg5: memref<8x256xf32, #tpu.memory_space<vmem>>) attributes {dimension_semantics = [#tpu.dimension_semantics<parallel>, #tpu.dimension_semantics<parallel>], iteration_bounds = array<i64: 1, 4>, scalar_prefetch = 0 : i64, scratch_operands = 0 : i64, tpu.core_type = #tpu.core_type<tc>, window_params = [{transform_indices = @transform_0, window_bounds = array<i64: 8, 1024>}, {transform_indices = @transform_1, window_bounds = array<i64: 1024, 256>}, {transform_indices = @transform_2, window_bounds = array<i64: 1, 256>}, {transform_indices = @transform_3, window_bounds = array<i64: 8, 256>}]} {
    %c0 = arith.constant 0 : index
    %c0_0 = arith.constant 0 : index
    %0 = vector.load %arg2[%c0, %c0_0] : memref<8x1024xbf16, #tpu.memory_space<vmem>>, vector<8x1024xbf16>
    %c0_1 = arith.constant 0 : index
    %c0_2 = arith.constant 0 : index
    %1 = vector.load %arg3[%c0_1, %c0_2] : memref<1024x256xbf16, #tpu.memory_space<vmem>>, vector<1024x256xbf16>
    %cst = arith.constant dense<0.000000e+00> : vector<8x256xf32>
    %2 = tpu.matmul %0, %1, %cst {dimension_numbers = #tpu.dot_dimension_numbers<[1], [0], [0], [1], [0, 0, 1, 1], [], []>} : vector<8x1024xbf16>, vector<1024x256xbf16>, vector<8x256xf32> -> vector<8x256xf32>
    %c0_3 = arith.constant 0 : index
    %c0_4 = arith.constant 0 : index
    %3 = vector.load %arg4[%c0_3, %c0_4] : memref<1x256xf32, #tpu.memory_space<vmem>>, vector<1x256xf32>
    %4 = vector.broadcast %3 : vector<1x256xf32> to vector<8x256xf32>
    %5 = arith.addf %2, %4 : vector<8x256xf32>
    %cst_5 = arith.constant 0.000000e+00 : f32
    %6 = vector.broadcast %cst_5 : f32 to vector<8x256xf32>
    %7 = arith.cmpf ogt, %5, %6 : vector<8x256xf32>
    %cst_6 = arith.constant 0.00999999977 : f32
    %8 = vector.broadcast %cst_6 : f32 to vector<8x256xf32>
    %9 = arith.mulf %8, %5 : vector<8x256xf32>
    %10 = arith.select %7, %5, %9 : vector<8x256xi1>, vector<8x256xf32>
    %c0_7 = arith.constant 0 : index
    %c0_8 = arith.constant 0 : index
    %11 = vector.load %arg5[%c0_7, %c0_8] : memref<8x256xf32, #tpu.memory_space<vmem>>, vector<8x256xf32>
    tpu.vector_store %arg5[%c0_7, %c0_8], %10 {strides = array<i32>} : memref<8x256xf32, #tpu.memory_space<vmem>>, vector<8x256xf32>,
    return
  }
  func.func @transform_0(%arg0: i32, %arg1: i32) -> (i32, i32) {
    %c0_i32 = arith.constant 0 : i32
    %c0_i32_0 = arith.constant 0 : i32
    return %arg0, %c0_i32 : i32, i32
  }
  func.func @transform_1(%arg0: i32, %arg1: i32) -> (i32, i32) {
    %c0_i32 = arith.constant 0 : i32
    %c0_i32_0 = arith.constant 0 : i32
    return %c0_i32, %arg1 : i32, i32
  }
  func.func @transform_2(%arg0: i32, %arg1: i32) -> (i32, i32) {
    %c0_i32 = arith.constant 0 : i32
    %c0_i32_0 = arith.constant 0 : i32
    return %c0_i32, %arg1 : i32, i32
  }
  func.func @transform_3(%arg0: i32, %arg1: i32) -> (i32, i32) {
    %c0_i32 = arith.constant 0 : i32
    return %arg0, %arg1 : i32, i32
  }
}

module attributes {stable_mosaic.version = 11 : i64} {
  func.func @_matmul_kernel(%arg0: i32, %arg1: i32, %arg2: memref<8x1024xbf16, #tpu.memory_space<vmem>>, %arg3: memref<1024x128xbf16, #tpu.memory_space<vmem>>, %arg4: memref<1x128xf32, #tpu.memory_space<vmem>>, %arg5: memref<8x128xf32, #tpu.memory_space<vmem>>) attributes {dimension_semantics = [#tpu.dimension_semantics<parallel>, #tpu.dimension_semantics<parallel>], iteration_bounds = array<i64: 1, 1>, scalar_prefetch = 0 : i64, scratch_operands = 0 : i64, tpu.core_type = #tpu.core_type<tc>, window_params = [{transform_indices = @transform_0, window_bounds = array<i64: 8, 1024>}, {transform_indices = @transform_1, window_bounds = array<i64: 1024, 128>}, {transform_indices = @transform_2, window_bounds = array<i64: 1, 128>}, {transform_indices = @transform_3, window_bounds = array<i64: 8, 128>}]} {
    %c0 = arith.constant 0 : index
    %c0_0 = arith.constant 0 : index
    %0 = vector.load %arg2[%c0, %c0_0] : memref<8x1024xbf16, #tpu.memory_space<vmem>>, vector<8x1024xbf16>
    %c0_1 = arith.constant 0 : index
    %c0_2 = arith.constant 0 : index
    %1 = vector.load %arg3[%c0_1, %c0_2] : memref<1024x128xbf16, #tpu.memory_space<vmem>>, vector<1024x128xbf16>
    %cst = arith.constant dense<0.000000e+00> : vector<8x128xf32>
    %2 = tpu.matmul %0, %1, %cst {dimension_numbers = #tpu.dot_dimension_numbers<[1], [0], [0], [1], [0, 0, 1, 1], [], []>} : vector<8x1024xbf16>, vector<1024x128xbf16>, vector<8x128xf32> -> vector<8x128xf32>
    %c0_3 = arith.constant 0 : index
    %c0_4 = arith.constant 0 : index
    %3 = vector.load %arg4[%c0_3, %c0_4] : memref<1x128xf32, #tpu.memory_space<vmem>>, vector<1x128xf32>
    %4 = vector.broadcast %3 : vector<1x128xf32> to vector<8x128xf32>
    %5 = arith.addf %2, %4 : vector<8x128xf32>
    %c0_5 = arith.constant 0 : index
    %c0_6 = arith.constant 0 : index
    %6 = vector.load %arg5[%c0_5, %c0_6] : memref<8x128xf32, #tpu.memory_space<vmem>>, vector<8x128xf32>
    tpu.vector_store %arg5[%c0_5, %c0_6], %5 {strides = array<i32>} : memref<8x128xf32, #tpu.memory_space<vmem>>, vector<8x128xf32>,
    return
  }
  func.func @transform_0(%arg0: i32, %arg1: i32) -> (i32, i32) {
    %c0_i32 = arith.constant 0 : i32
    %c0_i32_0 = arith.constant 0 : i32
    return %arg0, %c0_i32 : i32, i32
  }
  func.func @transform_1(%arg0: i32, %arg1: i32) -> (i32, i32) {
    %c0_i32 = arith.constant 0 : i32
    %c0_i32_0 = arith.constant 0 : i32
    return %c0_i32, %arg1 : i32, i32
  }
  func.func @transform_2(%arg0: i32, %arg1: i32) -> (i32, i32) {
    %c0_i32 = arith.constant 0 : i32
    %c0_i32_0 = arith.constant 0 : i32
    return %c0_i32, %arg1 : i32, i32
  }
  func.func @transform_3(%arg0: i32, %arg1: i32) -> (i32, i32) {
    %c0_i32 = arith.constant 0 : i32
    return %arg0, %arg1 : i32, i32
  }
}

module attributes {stable_mosaic.version = 11 : i64} {
  func.func @_matmul_kernel(%arg0: i32, %arg1: i32, %arg2: memref<8x1024xbf16, #tpu.memory_space<vmem>>, %arg3: memref<1024x256xbf16, #tpu.memory_space<vmem>>, %arg4: memref<1x256xf32, #tpu.memory_space<vmem>>, %arg5: memref<8x256xf32, #tpu.memory_space<vmem>>) attributes {dimension_semantics = [#tpu.dimension_semantics<parallel>, #tpu.dimension_semantics<parallel>], iteration_bounds = array<i64: 1, 8>, scalar_prefetch = 0 : i64, scratch_operands = 0 : i64, tpu.core_type = #tpu.core_type<tc>, window_params = [{transform_indices = @transform_0, window_bounds = array<i64: 8, 1024>}, {transform_indices = @transform_1, window_bounds = array<i64: 1024, 256>}, {transform_indices = @transform_2, window_bounds = array<i64: 1, 256>}, {transform_indices = @transform_3, window_bounds = array<i64: 8, 256>}]} {
    %c0 = arith.constant 0 : index
    %c0_0 = arith.constant 0 : index
    %0 = vector.load %arg2[%c0, %c0_0] : memref<8x1024xbf16, #tpu.memory_space<vmem>>, vector<8x1024xbf16>
    %c0_1 = arith.constant 0 : index
    %c0_2 = arith.constant 0 : index
    %1 = vector.load %arg3[%c0_1, %c0_2] : memref<1024x256xbf16, #tpu.memory_space<vmem>>, vector<1024x256xbf16>
    %cst = arith.constant dense<0.000000e+00> : vector<8x256xf32>
    %2 = tpu.matmul %0, %1, %cst {dimension_numbers = #tpu.dot_dimension_numbers<[1], [0], [0], [1], [0, 0, 1, 1], [], []>} : vector<8x1024xbf16>, vector<1024x256xbf16>, vector<8x256xf32> -> vector<8x256xf32>
    %c0_3 = arith.constant 0 : index
    %c0_4 = arith.constant 0 : index
    %3 = vector.load %arg4[%c0_3, %c0_4] : memref<1x256xf32, #tpu.memory_space<vmem>>, vector<1x256xf32>
    %4 = vector.broadcast %3 : vector<1x256xf32> to vector<8x256xf32>
    %5 = arith.addf %2, %4 : vector<8x256xf32>
    %cst_5 = arith.constant 0.000000e+00 : f32
    %6 = vector.broadcast %cst_5 : f32 to vector<8x256xf32>
    %7 = arith.cmpf ogt, %5, %6 : vector<8x256xf32>
    %cst_6 = arith.constant 0.00999999977 : f32
    %8 = vector.broadcast %cst_6 : f32 to vector<8x256xf32>
    %9 = arith.mulf %8, %5 : vector<8x256xf32>
    %10 = arith.select %7, %5, %9 : vector<8x256xi1>, vector<8x256xf32>
    %c0_7 = arith.constant 0 : index
    %c0_8 = arith.constant 0 : index
    %11 = vector.load %arg5[%c0_7, %c0_8] : memref<8x256xf32, #tpu.memory_space<vmem>>, vector<8x256xf32>
    tpu.vector_store %arg5[%c0_7, %c0_8], %10 {strides = array<i32>} : memref<8x256xf32, #tpu.memory_space<vmem>>, vector<8x256xf32>,
    return
  }
  func.func @transform_0(%arg0: i32, %arg1: i32) -> (i32, i32) {
    %c0_i32 = arith.constant 0 : i32
    %c0_i32_0 = arith.constant 0 : i32
    return %arg0, %c0_i32 : i32, i32
  }
  func.func @transform_1(%arg0: i32, %arg1: i32) -> (i32, i32) {
    %c0_i32 = arith.constant 0 : i32
    %c0_i32_0 = arith.constant 0 : i32
    return %c0_i32, %arg1 : i32, i32
  }
  func.func @transform_2(%arg0: i32, %arg1: i32) -> (i32, i32) {
    %c0_i32 = arith.constant 0 : i32
    %c0_i32_0 = arith.constant 0 : i32
    return %c0_i32, %arg1 : i32, i32
  }
  func.func @transform_3(%arg0: i32, %arg1: i32) -> (i32, i32) {
    %c0_i32 = arith.constant 0 : i32
    return %arg0, %arg1 : i32, i32
  }
}

module attributes {stable_mosaic.version = 11 : i64} {
  func.func @_matmul_kernel(%arg0: i32, %arg1: i32, %arg2: memref<8x32xbf16, #tpu.memory_space<vmem>>, %arg3: memref<32x256xbf16, #tpu.memory_space<vmem>>, %arg4: memref<1x256xf32, #tpu.memory_space<vmem>>, %arg5: memref<8x256xf32, #tpu.memory_space<vmem>>) attributes {dimension_semantics = [#tpu.dimension_semantics<parallel>, #tpu.dimension_semantics<parallel>], iteration_bounds = array<i64: 1, 4>, scalar_prefetch = 0 : i64, scratch_operands = 0 : i64, tpu.core_type = #tpu.core_type<tc>, window_params = [{transform_indices = @transform_0, window_bounds = array<i64: 8, 32>}, {transform_indices = @transform_1, window_bounds = array<i64: 32, 256>}, {transform_indices = @transform_2, window_bounds = array<i64: 1, 256>}, {transform_indices = @transform_3, window_bounds = array<i64: 8, 256>}]} {
    %c0 = arith.constant 0 : index
    %c0_0 = arith.constant 0 : index
    %0 = vector.load %arg2[%c0, %c0_0] : memref<8x32xbf16, #tpu.memory_space<vmem>>, vector<8x32xbf16>
    %c0_1 = arith.constant 0 : index
    %c0_2 = arith.constant 0 : index
    %1 = vector.load %arg3[%c0_1, %c0_2] : memref<32x256xbf16, #tpu.memory_space<vmem>>, vector<32x256xbf16>
    %cst = arith.constant dense<0.000000e+00> : vector<8x256xf32>
    %2 = tpu.matmul %0, %1, %cst {dimension_numbers = #tpu.dot_dimension_numbers<[1], [0], [0], [1], [0, 0, 1, 1], [], []>} : vector<8x32xbf16>, vector<32x256xbf16>, vector<8x256xf32> -> vector<8x256xf32>
    %c0_3 = arith.constant 0 : index
    %c0_4 = arith.constant 0 : index
    %3 = vector.load %arg4[%c0_3, %c0_4] : memref<1x256xf32, #tpu.memory_space<vmem>>, vector<1x256xf32>
    %4 = vector.broadcast %3 : vector<1x256xf32> to vector<8x256xf32>
    %5 = arith.addf %2, %4 : vector<8x256xf32>
    %c0_5 = arith.constant 0 : index
    %c0_6 = arith.constant 0 : index
    %6 = vector.load %arg5[%c0_5, %c0_6] : memref<8x256xf32, #tpu.memory_space<vmem>>, vector<8x256xf32>
    tpu.vector_store %arg5[%c0_5, %c0_6], %5 {strides = array<i32>} : memref<8x256xf32, #tpu.memory_space<vmem>>, vector<8x256xf32>,
    return
  }
  func.func @transform_0(%arg0: i32, %arg1: i32) -> (i32, i32) {
    %c0_i32 = arith.constant 0 : i32
    %c0_i32_0 = arith.constant 0 : i32
    return %arg0, %c0_i32 : i32, i32
  }
  func.func @transform_1(%arg0: i32, %arg1: i32) -> (i32, i32) {
    %c0_i32 = arith.constant 0 : i32
    %c0_i32_0 = arith.constant 0 : i32
    return %c0_i32, %arg1 : i32, i32
  }
  func.func @transform_2(%arg0: i32, %arg1: i32) -> (i32, i32) {
    %c0_i32 = arith.constant 0 : i32
    %c0_i32_0 = arith.constant 0 : i32
    return %c0_i32, %arg1 : i32, i32
  }
  func.func @transform_3(%arg0: i32, %arg1: i32) -> (i32, i32) {
    %c0_i32 = arith.constant 0 : i32
    return %arg0, %arg1 : i32, i32
  }
}

module attributes {stable_mosaic.version = 11 : i64} {
  func.func @_matmul_kernel(%arg0: i32, %arg1: i32, %arg2: memref<32x128xbf16, #tpu.memory_space<vmem>>, %arg3: memref<128x128xbf16, #tpu.memory_space<vmem>>, %arg4: memref<1x128xf32, #tpu.memory_space<vmem>>, %arg5: memref<32x128xf32, #tpu.memory_space<vmem>>) attributes {dimension_semantics = [#tpu.dimension_semantics<parallel>, #tpu.dimension_semantics<parallel>], iteration_bounds = array<i64: 1, 13>, scalar_prefetch = 0 : i64, scratch_operands = 0 : i64, tpu.core_type = #tpu.core_type<tc>, window_params = [{transform_indices = @transform_0, window_bounds = array<i64: 32, 128>}, {transform_indices = @transform_1, window_bounds = array<i64: 128, 128>}, {transform_indices = @transform_2, window_bounds = array<i64: 1, 128>}, {transform_indices = @transform_3, window_bounds = array<i64: 32, 128>}]} {
    %c0 = arith.constant 0 : index
    %c0_0 = arith.constant 0 : index
    %0 = vector.load %arg2[%c0, %c0_0] : memref<32x128xbf16, #tpu.memory_space<vmem>>, vector<32x128xbf16>
    %c0_1 = arith.constant 0 : index
    %c0_2 = arith.constant 0 : index
    %1 = vector.load %arg3[%c0_1, %c0_2] : memref<128x128xbf16, #tpu.memory_space<vmem>>, vector<128x128xbf16>
    %cst = arith.constant dense<0.000000e+00> : vector<32x128xf32>
    %2 = tpu.matmul %0, %1, %cst {dimension_numbers = #tpu.dot_dimension_numbers<[1], [0], [0], [1], [0, 0, 1, 1], [], []>} : vector<32x128xbf16>, vector<128x128xbf16>, vector<32x128xf32> -> vector<32x128xf32>
    %c0_3 = arith.constant 0 : index
    %c0_4 = arith.constant 0 : index
    %3 = vector.load %arg4[%c0_3, %c0_4] : memref<1x128xf32, #tpu.memory_space<vmem>>, vector<1x128xf32>
    %4 = vector.broadcast %3 : vector<1x128xf32> to vector<32x128xf32>
    %5 = arith.addf %2, %4 : vector<32x128xf32>
    %c0_5 = arith.constant 0 : index
    %c0_6 = arith.constant 0 : index
    %6 = vector.load %arg5[%c0_5, %c0_6] : memref<32x128xf32, #tpu.memory_space<vmem>>, vector<32x128xf32>
    tpu.vector_store %arg5[%c0_5, %c0_6], %5 {strides = array<i32>} : memref<32x128xf32, #tpu.memory_space<vmem>>, vector<32x128xf32>,
    return
  }
  func.func @transform_0(%arg0: i32, %arg1: i32) -> (i32, i32) {
    %c0_i32 = arith.constant 0 : i32
    %c0_i32_0 = arith.constant 0 : i32
    return %arg0, %c0_i32 : i32, i32
  }
  func.func @transform_1(%arg0: i32, %arg1: i32) -> (i32, i32) {
    %c0_i32 = arith.constant 0 : i32
    %c0_i32_0 = arith.constant 0 : i32
    return %c0_i32, %arg1 : i32, i32
  }
  func.func @transform_2(%arg0: i32, %arg1: i32) -> (i32, i32) {
    %c0_i32 = arith.constant 0 : i32
    %c0_i32_0 = arith.constant 0 : i32
    return %c0_i32, %arg1 : i32, i32
  }
  func.func @transform_3(%arg0: i32, %arg1: i32) -> (i32, i32) {
    %c0_i32 = arith.constant 0 : i32
    return %arg0, %arg1 : i32, i32
  }
}

module attributes {stable_mosaic.version = 11 : i64} {
  func.func @_matmul_kernel(%arg0: i32, %arg1: i32, %arg2: memref<248x64xbf16, #tpu.memory_space<vmem>>, %arg3: memref<64x256xbf16, #tpu.memory_space<vmem>>, %arg4: memref<1x256xf32, #tpu.memory_space<vmem>>, %arg5: memref<248x256xf32, #tpu.memory_space<vmem>>) attributes {dimension_semantics = [#tpu.dimension_semantics<parallel>, #tpu.dimension_semantics<parallel>], iteration_bounds = array<i64: 1, 2>, scalar_prefetch = 0 : i64, scratch_operands = 0 : i64, tpu.core_type = #tpu.core_type<tc>, window_params = [{transform_indices = @transform_0, window_bounds = array<i64: 248, 64>}, {transform_indices = @transform_1, window_bounds = array<i64: 64, 256>}, {transform_indices = @transform_2, window_bounds = array<i64: 1, 256>}, {transform_indices = @transform_3, window_bounds = array<i64: 248, 256>}]} {
    %c0 = arith.constant 0 : index
    %c0_0 = arith.constant 0 : index
    %0 = vector.load %arg2[%c0, %c0_0] : memref<248x64xbf16, #tpu.memory_space<vmem>>, vector<248x64xbf16>
    %c0_1 = arith.constant 0 : index
    %c0_2 = arith.constant 0 : index
    %1 = vector.load %arg3[%c0_1, %c0_2] : memref<64x256xbf16, #tpu.memory_space<vmem>>, vector<64x256xbf16>
    %cst = arith.constant dense<0.000000e+00> : vector<248x256xf32>
    %2 = tpu.matmul %0, %1, %cst {dimension_numbers = #tpu.dot_dimension_numbers<[1], [0], [0], [1], [0, 0, 1, 1], [], []>} : vector<248x64xbf16>, vector<64x256xbf16>, vector<248x256xf32> -> vector<248x256xf32>
    %c0_3 = arith.constant 0 : index
    %c0_4 = arith.constant 0 : index
    %3 = vector.load %arg4[%c0_3, %c0_4] : memref<1x256xf32, #tpu.memory_space<vmem>>, vector<1x256xf32>
    %4 = vector.broadcast %3 : vector<1x256xf32> to vector<248x256xf32>
    %5 = arith.addf %2, %4 : vector<248x256xf32>
    %c0_5 = arith.constant 0 : index
    %c0_6 = arith.constant 0 : index
    %6 = vector.load %arg5[%c0_5, %c0_6] : memref<248x256xf32, #tpu.memory_space<vmem>>, vector<248x256xf32>
    tpu.vector_store %arg5[%c0_5, %c0_6], %5 {strides = array<i32>} : memref<248x256xf32, #tpu.memory_space<vmem>>, vector<248x256xf32>,
    return
  }
  func.func @transform_0(%arg0: i32, %arg1: i32) -> (i32, i32) {
    %c0_i32 = arith.constant 0 : i32
    %c0_i32_0 = arith.constant 0 : i32
    return %arg0, %c0_i32 : i32, i32
  }
  func.func @transform_1(%arg0: i32, %arg1: i32) -> (i32, i32) {
    %c0_i32 = arith.constant 0 : i32
    %c0_i32_0 = arith.constant 0 : i32
    return %c0_i32, %arg1 : i32, i32
  }
  func.func @transform_2(%arg0: i32, %arg1: i32) -> (i32, i32) {
    %c0_i32 = arith.constant 0 : i32
    %c0_i32_0 = arith.constant 0 : i32
    return %c0_i32, %arg1 : i32, i32
  }
  func.func @transform_3(%arg0: i32, %arg1: i32) -> (i32, i32) {
    %c0_i32 = arith.constant 0 : i32
    return %arg0, %arg1 : i32, i32
  }
}

module attributes {stable_mosaic.version = 11 : i64} {
  func.func @_matmul_kernel(%arg0: i32, %arg1: i32, %arg2: memref<576x32xbf16, #tpu.memory_space<vmem>>, %arg3: memref<32x128xbf16, #tpu.memory_space<vmem>>, %arg4: memref<1x128xf32, #tpu.memory_space<vmem>>, %arg5: memref<576x128xf32, #tpu.memory_space<vmem>>) attributes {dimension_semantics = [#tpu.dimension_semantics<parallel>, #tpu.dimension_semantics<parallel>], iteration_bounds = array<i64: 2, 1>, scalar_prefetch = 0 : i64, scratch_operands = 0 : i64, tpu.core_type = #tpu.core_type<tc>, window_params = [{transform_indices = @transform_0, window_bounds = array<i64: 576, 32>}, {transform_indices = @transform_1, window_bounds = array<i64: 32, 128>}, {transform_indices = @transform_2, window_bounds = array<i64: 1, 128>}, {transform_indices = @transform_3, window_bounds = array<i64: 576, 128>}]} {
    %c0 = arith.constant 0 : index
    %c0_0 = arith.constant 0 : index
    %0 = vector.load %arg2[%c0, %c0_0] : memref<576x32xbf16, #tpu.memory_space<vmem>>, vector<576x32xbf16>
    %c0_1 = arith.constant 0 : index
    %c0_2 = arith.constant 0 : index
    %1 = vector.load %arg3[%c0_1, %c0_2] : memref<32x128xbf16, #tpu.memory_space<vmem>>, vector<32x128xbf16>
    %cst = arith.constant dense<0.000000e+00> : vector<576x128xf32>
    %2 = tpu.matmul %0, %1, %cst {dimension_numbers = #tpu.dot_dimension_numbers<[1], [0], [0], [1], [0, 0, 1, 1], [], []>} : vector<576x32xbf16>, vector<32x128xbf16>, vector<576x128xf32> -> vector<576x128xf32>
    %c0_3 = arith.constant 0 : index
    %c0_4 = arith.constant 0 : index
    %3 = vector.load %arg4[%c0_3, %c0_4] : memref<1x128xf32, #tpu.memory_space<vmem>>, vector<1x128xf32>
    %4 = vector.broadcast %3 : vector<1x128xf32> to vector<576x128xf32>
    %5 = arith.addf %2, %4 : vector<576x128xf32>
    %c0_5 = arith.constant 0 : index
    %c0_6 = arith.constant 0 : index
    %6 = vector.load %arg5[%c0_5, %c0_6] : memref<576x128xf32, #tpu.memory_space<vmem>>, vector<576x128xf32>
    tpu.vector_store %arg5[%c0_5, %c0_6], %5 {strides = array<i32>} : memref<576x128xf32, #tpu.memory_space<vmem>>, vector<576x128xf32>,
    return
  }
  func.func @transform_0(%arg0: i32, %arg1: i32) -> (i32, i32) {
    %c0_i32 = arith.constant 0 : i32
    %c0_i32_0 = arith.constant 0 : i32
    return %arg0, %c0_i32 : i32, i32
  }
  func.func @transform_1(%arg0: i32, %arg1: i32) -> (i32, i32) {
    %c0_i32 = arith.constant 0 : i32
    %c0_i32_0 = arith.constant 0 : i32
    return %c0_i32, %arg1 : i32, i32
  }
  func.func @transform_2(%arg0: i32, %arg1: i32) -> (i32, i32) {
    %c0_i32 = arith.constant 0 : i32
    %c0_i32_0 = arith.constant 0 : i32
    return %c0_i32, %arg1 : i32, i32
  }
  func.func @transform_3(%arg0: i32, %arg1: i32) -> (i32, i32) {
    %c0_i32 = arith.constant 0 : i32
    return %arg0, %arg1 : i32, i32
  }
}

</mosaic_0001>

<llo_original>
// kernel: forward.12
$region0: #{forward.12}
  #allocation0 [shape = 'u32[]', space=smem, size = 0x4, offset = 0x4, fixed_abs, tag = 'smem constant byte address 0x4 - core index']
  #allocation1 [shape = 'u32[144,128]{1,0:T(1,128)}', space=vmem, size = 0x12000, scoped, tag = 'internal scratch']
  %s0 = inlined_call_operand.vmem [shape: bf16[352,16], index: 0, kind: input, shape index: {}]
  %s1 = inlined_call_operand.hbm [shape: bf16[16,128], index: 1, kind: input, shape index: {}]
  %s2 = inlined_call_operand.hbm [shape: f32[1,128], index: 2, kind: input, shape index: {}]
  %s3 = inlined_call_operand.vmem [shape: f32[352,128], index: 3, kind: output, shape index: {}]
  %s4 = sld [smem:[#allocation0]]
  $region53: #{forward.12} parent=0
    _
  %s6 = ssub.s32 1, %s4
  %s7 = scalar_select 0, %s6, %s4
  $region1: #{forward.12} parent=0
    #allocation2 [shape = 'u8[4096]{0}', space=vmem, size = 0x1000, scoped, tag = 'input window, operand 1, single buffered']
    #allocation3 [shape = 's32[2]{0}', space=sflag, size = 0x8, scoped, tag = 'scoped memory for forward.12']
    #allocation4 [shape = 'u8[512]{0}', space=vmem, size = 0x400, scoped, tag = 'input window, operand 2, single buffered']
    #allocation5 [shape = 's32[1]{0}', space=sflag, size = 0x4, scoped, tag = 'scoped memory for forward.12']
    %8 = vsyncpa [#allocation3], 0
    %9 = vsyncpa [#allocation5], 0
    loop: start=0, step=1, limit=4
    $region2: #{forward.12} parent=1 // loop_pre_header
      _
    $region3: #{forward.12} parent=1 // loop_header
      %s11 = sphi 0, %s15
      %p12 = scmp.ge.s32.totalorder %s11, 4
      %s18 = sphi 0, %s30
      %s19 = sphi 0, %s26
      %s20 = sphi 0, %s18
      %s21 = sphi 0, %s19
      %s22 = sphi 0, %s20
      %s23 = sphi 0, %s21
      %s33 = sphi 0, %s35
      %s36 = sphi 0, %s33
      %s37 = sphi 0, %s36
      %s53 = sphi 0, %s37
      %s59 = sphi 0, %s61
      %s62 = sphi 0, %s59
      %s63 = sphi 0, %s62
      %s79 = sphi 0, %s63
      %s85 = sphi 0, %s87
      %s88 = sphi 0, %s85
      %s89 = sphi 0, %s88
      %s105 = sphi 0, %s89
      %s113 = sphi 0, %s115
      %s116 = sphi 0, %s113
      %s117 = sphi 0, %s116
      %s133 = sphi 0, %s117
    $region4: #{forward.12} parent=1 // loop_header_branch
      %14 = sbr.rel (%p12) target = $region8
    $region5: #{forward.12} parent=1 // loop_body
      %s16 = ssub.s32 %s11, 1
      %s17 = ssub.s32 %s11, 2
      %s24 = sadd.s32 1, %s19
      %p25 = scmp.ge.s32.totalorder %s24, 1
      %s26 = scalar_select %p25, 0, %s24
      %s27 = sadd.s32 1, %s18
      %s28 = scalar_select %p25, %s27, %s18
      %p29 = scmp.ge.s32.totalorder %s28, 2
      %s30 = scalar_select %p29, 0, %s28
      %s31 = ssub.s32 %s18, %s30
      %p32 = scmp.eq.s32.totalorder %s31, 0
      %s34 = sadd.s32 %s33, 1
      %s35 = scalar_select %p32, %s33, %s34
      %p38 = pneg %p32
      %p39 = scmp.eq.s32.totalorder %s11, 1
      %p40 = por %p38, %p39
      %p41 = scmp.ne.s32.totalorder %s33, %s36
      %p42 = scmp.eq.s32.totalorder %s11, 0
      %p43 = por %p41, %p42
      %p44 = scmp.ne.s32.totalorder %s33, %s36
      %p45 = scmp.eq.s32.totalorder %s16, 1
      %p46 = por %p44, %p45
      %p47 = scmp.ne.s32.totalorder %s36, %s37
      %p48 = scmp.eq.s32.totalorder %s16, 0
      %p49 = por %p47, %p48
      %p50 = scmp.ne.s32.totalorder %s36, %s37
      %p51 = scmp.eq.s32.totalorder %s17, 1
      %p52 = por %p50, %p51
      %p54 = scmp.ne.s32.totalorder %s37, %s53
      %p55 = scmp.eq.s32.totalorder %s17, 0
      %p56 = por %p54, %p55
      %s57 = ssub.s32 %s19, %s26
      %p58 = scmp.eq.s32.totalorder %s57, 0
      %s60 = sadd.s32 %s59, 1
      %s61 = scalar_select %p58, %s59, %s60
      %p64 = pneg %p58
      %p65 = scmp.eq.s32.totalorder %s11, 1
      %p66 = por %p64, %p65
      %p67 = scmp.ne.s32.totalorder %s59, %s62
      %p68 = scmp.eq.s32.totalorder %s11, 0
      %p69 = por %p67, %p68
      %p70 = scmp.ne.s32.totalorder %s59, %s62
      %p71 = scmp.eq.s32.totalorder %s16, 1
      %p72 = por %p70, %p71
      %p73 = scmp.ne.s32.totalorder %s62, %s63
      %p74 = scmp.eq.s32.totalorder %s16, 0
      %p75 = por %p73, %p74
      %p76 = scmp.ne.s32.totalorder %s62, %s63
      %p77 = scmp.eq.s32.totalorder %s17, 1
      %p78 = por %p76, %p77
      %p80 = scmp.ne.s32.totalorder %s63, %s79
      %p81 = scmp.eq.s32.totalorder %s17, 0
      %p82 = por %p80, %p81
      %s83 = ssub.s32 %s19, %s26
      %p84 = scmp.eq.s32.totalorder %s83, 0
      %s86 = sadd.s32 %s85, 1
      %s87 = scalar_select %p84, %s85, %s86
      %p90 = pneg %p84
      %p91 = scmp.eq.s32.totalorder %s11, 1
      %p92 = por %p90, %p91
      %p93 = scmp.ne.s32.totalorder %s85, %s88
      %p94 = scmp.eq.s32.totalorder %s11, 0
      %p95 = por %p93, %p94
      %p96 = scmp.ne.s32.totalorder %s85, %s88
      %p97 = scmp.eq.s32.totalorder %s16, 1
      %p98 = por %p96, %p97
      %p99 = scmp.ne.s32.totalorder %s88, %s89
      %p100 = scmp.eq.s32.totalorder %s16, 0
      %p101 = por %p99, %p100
      %p102 = scmp.ne.s32.totalorder %s88, %s89
      %p103 = scmp.eq.s32.totalorder %s17, 1
      %p104 = por %p102, %p103
      %p106 = scmp.ne.s32.totalorder %s89, %s105
      %p107 = scmp.eq.s32.totalorder %s17, 0
      %p108 = por %p106, %p107
      %s109 = ssub.s32 %s18, %s30
      %s110 = ssub.s32 %s19, %s26
      %s111 = sor.u32 %s109, %s110
      %p112 = scmp.eq.s32.totalorder %s111, 0
      %s114 = sadd.s32 %s113, 1
      %s115 = scalar_select %p112, %s113, %s114
      %p118 = pneg %p112
      %p119 = scmp.eq.s32.totalorder %s11, 1
      %p120 = por %p118, %p119
      %p121 = scmp.ne.s32.totalorder %s113, %s116
      %p122 = scmp.eq.s32.totalorder %s11, 0
      %p123 = por %p121, %p122
      %p124 = scmp.ne.s32.totalorder %s113, %s116
      %p125 = scmp.eq.s32.totalorder %s16, 1
      %p126 = por %p124, %p125
      %p127 = scmp.ne.s32.totalorder %s116, %s117
      %p128 = scmp.eq.s32.totalorder %s16, 0
      %p129 = por %p127, %p128
      %p130 = scmp.ne.s32.totalorder %s116, %s117
      %p131 = scmp.eq.s32.totalorder %s17, 1
      %p132 = por %p130, %p131
      %p134 = scmp.ne.s32.totalorder %s117, %s133
      %p135 = scmp.eq.s32.totalorder %s17, 0
      %p136 = por %p134, %p135
      %p137 = scmp.le.s32.totalorder 1, %s11
      %p138 = scmp.lt.s32.totalorder %s11, 3
      %p139 = pnand %p137, %p138
      %p140 = pneg %p139
      // Predicated region
      $region9: #{forward.12} parent=5 // pred_check
        _
      $region10: #{forward.12} parent=5 // pred_check_branch
        %142 = sbr.rel (%p139) target = $region12
      $region11: #{forward.12} parent=5 // pred_region
        %s143 = ssub.s32 %s11, 1
        // Predicated region
        $region13: #{forward.12} parent=11 // pred_check
          %p144 = pneg %p75
        $region14: #{forward.12} parent=11 // pred_check_branch
          %146 = sbr.rel (%p144) target = $region16
        $region15: #{forward.12} parent=11 // pred_region
          %s148 = ssub.s32 128, 128
          %149 = vsyncadd [#allocation3], %s148
          %s150 = smul.addr %s21, 64
          %s151 = scalar_lea.hbm %s1, %s150
          %s152 = sshll.u32 [#allocation2], 4
          %s153 = int_to_ptr.vmem [resolvable:$true] %s152
          %158 = dma.hbm_to_vmem [thread:$0]  %s151, 128, %s153, [#allocation3], 64, 64, 4
        $region16: #{forward.12} parent=11 // pred_fallthru
          _
        // Predicated region
        $region17: #{forward.12} parent=11 // pred_check
          %p159 = pneg %p101
        $region18: #{forward.12} parent=11 // pred_check_branch
          %161 = sbr.rel (%p159) target = $region20
        $region19: #{forward.12} parent=11 // pred_region
          %s163 = ssub.s32 16, 16
          %164 = vsyncadd [#allocation5], %s163
          %s165 = smul.addr %s21, 16
          %s166 = scalar_lea.hbm %s2, %s165
          %s168 = sshll.u32 [#allocation4], 4
          %s169 = int_to_ptr.vmem [resolvable:$true] %s168
          %171 = dma.hbm_to_vmem [thread:$0]  %s166, 16, %s169, [#allocation5]
        $region20: #{forward.12} parent=11 // pred_fallthru
          _
      $region12: #{forward.12} parent=5 // pred_fallthru
        _
      %p172 = scmp.lt.s32.totalorder %s11, 2
      // Predicated region
      $region21: #{forward.12} parent=5 // pred_check
        %p173 = pneg %p172
      $region22: #{forward.12} parent=5 // pred_check_branch
        %175 = sbr.rel (%p173) target = $region24
      $region23: #{forward.12} parent=5 // pred_region
        // Predicated region
        $region25: #{forward.12} parent=23 // pred_check
          %p176 = pneg %p43
        $region26: #{forward.12} parent=23 // pred_check_branch
          %178 = sbr.rel (%p176) target = $region28
        $region27: #{forward.12} parent=23 // pred_region
          %s179 = smul.u32 22, %s18
          %p180 = scmp.lt.s32.totalorder %s179, 43
          %s181 = scalar_select %p180, %s179, 43
          %s182 = smul.addr %s181, 4
          %s183 = scalar_lea.vmem %s0, %s182
          %s184 = smul.u32 22, %s18
        $region28: #{forward.12} parent=23 // pred_fallthru
          _
      $region24: #{forward.12} parent=5 // pred_fallthru
        _
      %p185 = scmp.le.s32.totalorder 1, %s11
      %p186 = scmp.lt.s32.totalorder %s11, 3
      %p187 = pnand %p185, %p186
      %p188 = pneg %p187
      // Predicated region
      $region29: #{forward.12} parent=5 // pred_check
        _
      $region30: #{forward.12} parent=5 // pred_check_branch
        %190 = sbr.rel (%p187) target = $region32
      $region31: #{forward.12} parent=5 // pred_region
        %s191 = ssub.s32 %s11, 1
        // Predicated region
        $region33: #{forward.12} parent=31 // pred_check
          %p192 = pneg %p75
        $region34: #{forward.12} parent=31 // pred_check_branch
          %194 = sbr.rel (%p192) target = $region36
        $region35: #{forward.12} parent=31 // pred_region
          %195 = dma.done [#allocation3], 128
        $region36: #{forward.12} parent=31 // pred_fallthru
          _
        // Predicated region
        $region37: #{forward.12} parent=31 // pred_check
          %p196 = pneg %p101
        $region38: #{forward.12} parent=31 // pred_check_branch
          %198 = sbr.rel (%p196) target = $region40
        $region39: #{forward.12} parent=31 // pred_region
          %199 = dma.done [#allocation5], 16
        $region40: #{forward.12} parent=31 // pred_fallthru
          _
        %s200 = smul.u32 22, %s20
        %p201 = scmp.lt.s32.totalorder %s200, 43
        %s202 = scalar_select %p201, %s200, 43
        %s203 = smul.addr %s202, 4
        %s204 = scalar_lea.vmem %s0, %s203
        %p205 = pneg %p49
        %p206 = pneg %p46
        %p207 = pneg %p75
        %p208 = pneg %p72
        %p209 = pneg %p101
        %p210 = pneg %p98
        %p211 = pneg %p129
        %p212 = pneg %p126
        %s213 = smul.u32 22, %s20
        %p214 = scmp.lt.s32.totalorder %s213, 43
        %s215 = scalar_select %p214, %s213, 43
        %p216 = scmp.lt.s32.totalorder %s21, 0
        %s217 = scalar_select %p216, %s21, 0
        %s218 = sadd.s32 %s217, %s215
        %s219 = smul.addr %s218, 8
        %s220 = scalar_lea.vmem %s3, %s219
        %s221 = smul.u32 22, %s20
        %p222 = scmp.lt.s32.totalorder %s221, 43
        %s223 = scalar_select %p222, %s221, 43
        %s224 = smul.addr %s223, 4
        %s225 = scalar_lea.vmem %s0, %s224
        %s226 = smul.u32 22, %s20
        %s227 = smul.u32 22, %s20
        %p228 = scmp.lt.s32.totalorder %s227, 43
        %s229 = scalar_select %p228, %s227, 43
        %p230 = scmp.lt.s32.totalorder %s21, 0
        %s231 = scalar_select %p230, %s21, 0
        %s232 = sadd.s32 %s231, %s229
        %s233 = smul.addr %s232, 8
        %s234 = scalar_lea.vmem %s3, %s233
        %s235 = smul.u32 22, %s20
        %v237 = vld [vmem:[%s225] sm:$0xf]
        %v238 = vld [vmem:[%s225 + $0x4] sm:$0xf]
        %v239 = vld [vmem:[%s225 + $0x8] sm:$0xf]
        %v240 = vld [vmem:[%s225 + $0xc] sm:$0xf]
        %v241 = vld [vmem:[%s225 + $0x10] sm:$0xf]
        %v242 = vld [vmem:[%s225 + $0x14] sm:$0xf]
        %v243 = vld [vmem:[%s225 + $0x18] sm:$0xf]
        %v244 = vld [vmem:[%s225 + $0x1c] sm:$0xf]
        %v245 = vld [vmem:[%s225 + $0x20] sm:$0xf]
        %v246 = vld [vmem:[%s225 + $0x24] sm:$0xf]
        %v247 = vld [vmem:[%s225 + $0x28] sm:$0xf]
        %v248 = vld [vmem:[%s225 + $0x2c] sm:$0xf]
        %v249 = vld [vmem:[%s225 + $0x30] sm:$0xf]
        %v250 = vld [vmem:[%s225 + $0x34] sm:$0xf]
        %v251 = vld [vmem:[%s225 + $0x38] sm:$0xf]
        %v252 = vld [vmem:[%s225 + $0x3c] sm:$0xf]
        %v253 = vld [vmem:[%s225 + $0x40] sm:$0xf]
        %v254 = vld [vmem:[%s225 + $0x44] sm:$0xf]
        %v255 = vld [vmem:[%s225 + $0x48] sm:$0xf]
        %v256 = vld [vmem:[%s225 + $0x4c] sm:$0xf]
        %v257 = vld [vmem:[%s225 + $0x50] sm:$0xf]
        %v258 = vld [vmem:[%s225 + $0x54] sm:$0xf]
        %v259 = vld [vmem:[#allocation2] sm:$0xf]
        %v260 = vld [vmem:[#allocation2 + $0x4] sm:$0xf]
        %v261 = vld [vmem:[#allocation4] sm:$0x1]
        %v263 = vlaneseq
        %v264 = vshrl.u32 %v263, 7
        %v265 = vsub.s32 0, %v264
        %v266 = vrot.slane %v261, %v265
        %v290 = vunpack.c.l.b16 %v237
        %v291 = vunpack.c.l.b16 %v238
        %v292 = vunpack.c.l.b16 %v239
        %v293 = vunpack.c.l.b16 %v240
        %v294 = vunpack.c.l.b16 %v241
        %v295 = vunpack.c.l.b16 %v242
        %v296 = vunpack.c.l.b16 %v243
        %v297 = vunpack.c.l.b16 %v244
        %v298 = vunpack.c.l.b16 %v245
        %v299 = vunpack.c.l.b16 %v246
        %v300 = vunpack.c.l.b16 %v247
        %v301 = vunpack.c.l.b16 %v248
        %v302 = vunpack.c.l.b16 %v249
        %v303 = vunpack.c.l.b16 %v250
        %v304 = vunpack.c.l.b16 %v251
        %v305 = vunpack.c.l.b16 %v252
        %v306 = vunpack.c.l.b16 %v253
        %v307 = vunpack.c.l.b16 %v254
        %v308 = vunpack.c.l.b16 %v255
        %v309 = vunpack.c.l.b16 %v256
        %v310 = vunpack.c.l.b16 %v257
        %v311 = vunpack.c.l.b16 %v258
        %v312 = vpack.c.b16 %v291, %v290
        %v313 = vpack.c.b16 %v293, %v292
        %v314 = vpack.c.b16 %v295, %v294
        %v315 = vpack.c.b16 %v297, %v296
        %v316 = vpack.c.b16 %v299, %v298
        %v317 = vpack.c.b16 %v301, %v300
        %v318 = vpack.c.b16 %v303, %v302
        %v319 = vpack.c.b16 %v305, %v304
        %v320 = vpack.c.b16 %v307, %v306
        %v321 = vpack.c.b16 %v309, %v308
        %v322 = vpack.c.b16 %v311, %v310
        %v325 = vunpack.c.l.b16 %v259
        %v326 = vunpack.c.l.b16 %v260
        %v327 = vpack.c.b16 %v326, %v325
        %vm329 = vcmask 130048
        %v331 = vsel %vm329, %v312, 0
        %v334 = vsel %vm329, %v313, 0
        %v337 = vsel %vm329, %v314, 0
        %v340 = vsel %vm329, %v315, 0
        %v343 = vsel %vm329, %v316, 0
        %v346 = vsel %vm329, %v317, 0
        %v349 = vsel %vm329, %v318, 0
        %v352 = vsel %vm329, %v319, 0
        %v355 = vsel %vm329, %v320, 0
        %v358 = vsel %vm329, %v321, 0
        %v361 = vsel %vm329, %v322, 0
        %363 = vmatprep.subr.bf16.mxu0 0
        %364 = vmatpush1.bf16.msra.mxu0 %v327
        %365 = vmatprep.subr.bf16.mxu0 0
        %366 = vmatpush1.bf16.msra.mxu0 0
        %367 = vmatprep.subr.bf16.mxu0 0
        %368 = vmatpush1.bf16.msra.mxu0 0
        %369 = vmatprep.subr.bf16.mxu0 0
        %370 = vmatpush1.bf16.msra.mxu0 0
        %371 = vmatprep.subr.bf16.mxu0 0
        %372 = vmatpush1.bf16.msra.mxu0 0
        %373 = vmatprep.subr.bf16.mxu0 0
        %374 = vmatpush1.bf16.msra.mxu0 0
        %375 = vmatprep.subr.bf16.mxu0 0
        %376 = vmatpush1.bf16.msra.mxu0 0
        %377 = vmatprep.subr.bf16.mxu0 0
        %378 = vmatpush1.bf16.msra.mxu0 0
        %379 = vmatprep.subr.bf16.mxu0 0
        %380 = vmatpush1.bf16.msra.mxu0 0
        %381 = vmatprep.subr.bf16.mxu0 0
        %382 = vmatpush1.bf16.msra.mxu0 0
        %383 = vmatprep.subr.bf16.mxu0 0
        %384 = vmatpush1.bf16.msra.mxu0 0
        %385 = vmatprep.subr.bf16.mxu0 0
        %386 = vmatpush1.bf16.msra.mxu0 0
        %387 = vmatprep.subr.bf16.mxu0 0
        %388 = vmatpush1.bf16.msra.mxu0 0
        %389 = vmatprep.subr.bf16.mxu0 0
        %390 = vmatpush1.bf16.msra.mxu0 0
        %391 = vmatprep.subr.bf16.mxu0 0
        %392 = vmatpush1.bf16.msra.mxu0 0
        %393 = vmatprep.subr.bf16.mxu0 0
        %394 = vmatpush1.bf16.msra.mxu0 0
        %395 = vmatprep.mubr.bf16.mxu0 0
        %396 = vmatmul.mubr.bf16.gmra.mrb[0].mxu0 %v331
        %v397 = vpop.f32.mrb[0].mxu0
        %v398 = vadd.f32 %v266, %v397
        %v399 = vpop.f32.mrb[0].mxu0
        %v400 = vpop.f32.mrb[0].mxu0
        %v401 = vadd.f32 %v266, %v400
        %v402 = vpop.f32.mrb[0].mxu0
        %403 = vmatprep.mubr.bf16.mxu0 0
        %404 = vmatmul.mubr.bf16.gmra.mrb[0].mxu0 %v334
        %v405 = vpop.f32.mrb[0].mxu0
        %v406 = vadd.f32 %v266, %v405
        %v407 = vpop.f32.mrb[0].mxu0
        %v408 = vpop.f32.mrb[0].mxu0
        %v409 = vadd.f32 %v266, %v408
        %v410 = vpop.f32.mrb[0].mxu0
        %411 = vmatprep.mubr.bf16.mxu0 0
        %412 = vmatmul.mubr.bf16.gmra.mrb[0].mxu0 %v337
        %v413 = vpop.f32.mrb[0].mxu0
        %v414 = vadd.f32 %v266, %v413
        %v415 = vpop.f32.mrb[0].mxu0
        %v416 = vpop.f32.mrb[0].mxu0
        %v417 = vadd.f32 %v266, %v416
        %v418 = vpop.f32.mrb[0].mxu0
        %419 = vmatprep.mubr.bf16.mxu0 0
        %420 = vmatmul.mubr.bf16.gmra.mrb[0].mxu0 %v340
        %v421 = vpop.f32.mrb[0].mxu0
        %v422 = vadd.f32 %v266, %v421
        %v423 = vpop.f32.mrb[0].mxu0
        %v424 = vpop.f32.mrb[0].mxu0
        %v425 = vadd.f32 %v266, %v424
        %v426 = vpop.f32.mrb[0].mxu0
        %427 = vmatprep.mubr.bf16.mxu0 0
        %428 = vmatmul.mubr.bf16.gmra.mrb[0].mxu0 %v343
        %v429 = vpop.f32.mrb[0].mxu0
        %v430 = vadd.f32 %v266, %v429
        %v431 = vpop.f32.mrb[0].mxu0
        %v432 = vpop.f32.mrb[0].mxu0
        %v433 = vadd.f32 %v266, %v432
        %v434 = vpop.f32.mrb[0].mxu0
        %435 = vmatprep.mubr.bf16.mxu0 0
        %436 = vmatmul.mubr.bf16.gmra.mrb[0].mxu0 %v346
        %v437 = vpop.f32.mrb[0].mxu0
        %v438 = vadd.f32 %v266, %v437
        %v439 = vpop.f32.mrb[0].mxu0
        %v440 = vpop.f32.mrb[0].mxu0
        %v441 = vadd.f32 %v266, %v440
        %v442 = vpop.f32.mrb[0].mxu0
        %443 = vmatprep.mubr.bf16.mxu0 0
        %444 = vmatmul.mubr.bf16.gmra.mrb[0].mxu0 %v349
        %v445 = vpop.f32.mrb[0].mxu0
        %v446 = vadd.f32 %v266, %v445
        %v447 = vpop.f32.mrb[0].mxu0
        %v448 = vpop.f32.mrb[0].mxu0
        %v449 = vadd.f32 %v266, %v448
        %v450 = vpop.f32.mrb[0].mxu0
        %451 = vmatprep.mubr.bf16.mxu0 0
        %452 = vmatmul.mubr.bf16.gmra.mrb[0].mxu0 %v352
        %v453 = vpop.f32.mrb[0].mxu0
        %v454 = vadd.f32 %v266, %v453
        %v455 = vpop.f32.mrb[0].mxu0
        %v456 = vpop.f32.mrb[0].mxu0
        %v457 = vadd.f32 %v266, %v456
        %v458 = vpop.f32.mrb[0].mxu0
        %459 = vmatprep.mubr.bf16.mxu0 0
        %460 = vmatmul.mubr.bf16.gmra.mrb[0].mxu0 %v355
        %v461 = vpop.f32.mrb[0].mxu0
        %v462 = vadd.f32 %v266, %v461
        %v463 = vpop.f32.mrb[0].mxu0
        %v464 = vpop.f32.mrb[0].mxu0
        %v465 = vadd.f32 %v266, %v464
        %v466 = vpop.f32.mrb[0].mxu0
        %467 = vmatprep.mubr.bf16.mxu0 0
        %468 = vmatmul.mubr.bf16.gmra.mrb[0].mxu0 %v358
        %v469 = vpop.f32.mrb[0].mxu0
        %v470 = vadd.f32 %v266, %v469
        %v471 = vpop.f32.mrb[0].mxu0
        %v472 = vpop.f32.mrb[0].mxu0
        %v473 = vadd.f32 %v266, %v472
        %v474 = vpop.f32.mrb[0].mxu0
        %475 = vmatprep.mubr.bf16.mxu0 0
        %476 = vmatmul.mubr.bf16.gmra.mrb[0].mxu0 %v361
        %v477 = vpop.f32.mrb[0].mxu0
        %v478 = vadd.f32 %v266, %v477
        %v479 = vpop.f32.mrb[0].mxu0
        %v480 = vpop.f32.mrb[0].mxu0
        %v481 = vadd.f32 %v266, %v480
        %v482 = vpop.f32.mrb[0].mxu0
        %483 = vdwg.mxu0
        %vm484 = vcmp.gt.f32.partialorder %v398, 0.0
        %vm485 = vcmp.gt.f32.partialorder %v401, 0.0
        %vm486 = vcmp.gt.f32.partialorder %v406, 0.0
        %vm487 = vcmp.gt.f32.partialorder %v409, 0.0
        %vm488 = vcmp.gt.f32.partialorder %v414, 0.0
        %vm489 = vcmp.gt.f32.partialorder %v417, 0.0
        %vm490 = vcmp.gt.f32.partialorder %v422, 0.0
        %vm491 = vcmp.gt.f32.partialorder %v425, 0.0
        %vm492 = vcmp.gt.f32.partialorder %v430, 0.0
        %vm493 = vcmp.gt.f32.partialorder %v433, 0.0
        %vm494 = vcmp.gt.f32.partialorder %v438, 0.0
        %vm495 = vcmp.gt.f32.partialorder %v441, 0.0
        %vm496 = vcmp.gt.f32.partialorder %v446, 0.0
        %vm497 = vcmp.gt.f32.partialorder %v449, 0.0
        %vm498 = vcmp.gt.f32.partialorder %v454, 0.0
        %vm499 = vcmp.gt.f32.partialorder %v457, 0.0
        %vm500 = vcmp.gt.f32.partialorder %v462, 0.0
        %vm501 = vcmp.gt.f32.partialorder %v465, 0.0
        %vm502 = vcmp.gt.f32.partialorder %v470, 0.0
        %vm503 = vcmp.gt.f32.partialorder %v473, 0.0
        %vm504 = vcmp.gt.f32.partialorder %v478, 0.0
        %vm505 = vcmp.gt.f32.partialorder %v481, 0.0
        %v506 = vmul.f32 %v398, 0.01
        %v507 = vmul.f32 %v401, 0.01
        %v508 = vmul.f32 %v406, 0.01
        %v509 = vmul.f32 %v409, 0.01
        %v510 = vmul.f32 %v414, 0.01
        %v511 = vmul.f32 %v417, 0.01
        %v512 = vmul.f32 %v422, 0.01
        %v513 = vmul.f32 %v425, 0.01
        %v514 = vmul.f32 %v430, 0.01
        %v515 = vmul.f32 %v433, 0.01
        %v516 = vmul.f32 %v438, 0.01
        %v517 = vmul.f32 %v441, 0.01
        %v518 = vmul.f32 %v446, 0.01
        %v519 = vmul.f32 %v449, 0.01
        %v520 = vmul.f32 %v454, 0.01
        %v521 = vmul.f32 %v457, 0.01
        %v522 = vmul.f32 %v462, 0.01
        %v523 = vmul.f32 %v465, 0.01
        %v524 = vmul.f32 %v470, 0.01
        %v525 = vmul.f32 %v473, 0.01
        %v526 = vmul.f32 %v478, 0.01
        %v527 = vmul.f32 %v481, 0.01
        %v528 = vsel %vm484, %v398, %v506
        %v529 = vsel %vm485, %v401, %v507
        %v530 = vsel %vm486, %v406, %v508
        %v531 = vsel %vm487, %v409, %v509
        %v532 = vsel %vm488, %v414, %v510
        %v533 = vsel %vm489, %v417, %v511
        %v534 = vsel %vm490, %v422, %v512
        %v535 = vsel %vm491, %v425, %v513
        %v536 = vsel %vm492, %v430, %v514
        %v537 = vsel %vm493, %v433, %v515
        %v538 = vsel %vm494, %v438, %v516
        %v539 = vsel %vm495, %v441, %v517
        %v540 = vsel %vm496, %v446, %v518
        %v541 = vsel %vm497, %v449, %v519
        %v542 = vsel %vm498, %v454, %v520
        %v543 = vsel %vm499, %v457, %v521
        %v544 = vsel %vm500, %v462, %v522
        %v545 = vsel %vm501, %v465, %v523
        %v546 = vsel %vm502, %v470, %v524
        %v547 = vsel %vm503, %v473, %v525
        %v548 = vsel %vm504, %v478, %v526
        %v549 = vsel %vm505, %v481, %v527
        %550 = vst [vmem:[%s234] sm:$0xff] %v528
        %551 = vst [vmem:[%s234 + $0x8] sm:$0xff] %v529
        %552 = vst [vmem:[%s234 + $0x10] sm:$0xff] %v530
        %553 = vst [vmem:[%s234 + $0x18] sm:$0xff] %v531
        %554 = vst [vmem:[%s234 + $0x20] sm:$0xff] %v532
        %555 = vst [vmem:[%s234 + $0x28] sm:$0xff] %v533
        %556 = vst [vmem:[%s234 + $0x30] sm:$0xff] %v534
        %557 = vst [vmem:[%s234 + $0x38] sm:$0xff] %v535
        %558 = vst [vmem:[%s234 + $0x40] sm:$0xff] %v536
        %559 = vst [vmem:[%s234 + $0x48] sm:$0xff] %v537
        %560 = vst [vmem:[%s234 + $0x50] sm:$0xff] %v538
        %561 = vst [vmem:[%s234 + $0x58] sm:$0xff] %v539
        %562 = vst [vmem:[%s234 + $0x60] sm:$0xff] %v540
        %563 = vst [vmem:[%s234 + $0x68] sm:$0xff] %v541
        %564 = vst [vmem:[%s234 + $0x70] sm:$0xff] %v542
        %565 = vst [vmem:[%s234 + $0x78] sm:$0xff] %v543
        %566 = vst [vmem:[%s234 + $0x80] sm:$0xff] %v544
        %567 = vst [vmem:[%s234 + $0x88] sm:$0xff] %v545
        %568 = vst [vmem:[%s234 + $0x90] sm:$0xff] %v546
        %569 = vst [vmem:[%s234 + $0x98] sm:$0xff] %v547
        %570 = vst [vmem:[%s234 + $0xa0] sm:$0xff] %v548
        %571 = vst [vmem:[%s234 + $0xa8] sm:$0xff] %v549
        %s572 = smul.u32 22, %s20
        %p573 = scmp.lt.s32.totalorder %s572, 43
        %s574 = scalar_select %p573, %s572, 43
        %p575 = scmp.lt.s32.totalorder %s21, 0
        %s576 = scalar_select %p575, %s21, 0
        %s577 = sadd.s32 %s576, %s574
        %s578 = smul.addr %s577, 8
        %s579 = scalar_lea.vmem %s3, %s578
        // Predicated region
        $region41: #{forward.12} parent=31 // pred_check
          %p580 = pneg %p126
        $region42: #{forward.12} parent=31 // pred_check_branch
          %582 = sbr.rel (%p580) target = $region44
        $region43: #{forward.12} parent=31 // pred_region
          %s583 = smul.u32 22, %s20
        $region44: #{forward.12} parent=31 // pred_fallthru
          _
      $region32: #{forward.12} parent=5 // pred_fallthru
        _
      %p584 = scmp.le.s32.totalorder 2, %s11
      // Predicated region
      $region45: #{forward.12} parent=5 // pred_check
        %p585 = pneg %p584
      $region46: #{forward.12} parent=5 // pred_check_branch
        %587 = sbr.rel (%p585) target = $region48
      $region47: #{forward.12} parent=5 // pred_region
        %s588 = ssub.s32 %s11, 2
        // Predicated region
        $region49: #{forward.12} parent=47 // pred_check
          %p589 = pneg %p132
        $region50: #{forward.12} parent=47 // pred_check_branch
          %591 = sbr.rel (%p589) target = $region52
        $region51: #{forward.12} parent=47 // pred_region
          %s592 = smul.u32 22, %s22
          %p593 = scmp.lt.s32.totalorder %s592, 43
          %s594 = scalar_select %p593, %s592, 43
          %p595 = scmp.lt.s32.totalorder %s23, 0
          %s596 = scalar_select %p595, %s23, 0
          %s597 = sadd.s32 %s596, %s594
          %s598 = smul.addr %s597, 8
          %s599 = scalar_lea.vmem %s3, %s598
        $region52: #{forward.12} parent=47 // pred_fallthru
          _
      $region48: #{forward.12} parent=5 // pred_fallthru
        _
    $region6: #{forward.12} parent=1 // loop_footer
      %s15 = sadd.s32 1, %s11
    $region7: #{forward.12} parent=1 // loop_footer_branch
      %10 = sbr.rel target = $region3
    $region8: #{forward.12} parent=1 // loop_exit
      _
    %600 = vsyncpa [#allocation3], 1
    %s601 = scalar_lea.sflag [#allocation3], 1
    %602 = vsyncpa %s601, 1
    %603 = vsyncpa [#allocation5], 1

// kernel: forward.13
$region0: #{forward.13}
  #allocation0 [shape = 'u32[]', space=smem, size = 0x4, offset = 0x4, fixed_abs, tag = 'smem constant byte address 0x4 - core index']
  #allocation1 [shape = 'u32[144,128]{1,0:T(1,128)}', space=vmem, size = 0x12000, scoped, tag = 'internal scratch']
  %s0 = inlined_call_operand.vmem [shape: bf16[72,288], index: 0, kind: input, shape index: {}]
  %s1 = inlined_call_operand.hbm [shape: bf16[288,128], index: 1, kind: input, shape index: {}]
  %s2 = inlined_call_operand.hbm [shape: f32[1,128], index: 2, kind: input, shape index: {}]
  %s3 = inlined_call_operand.vmem [shape: f32[72,128], index: 3, kind: output, shape index: {}]
  %s4 = sld [smem:[#allocation0]]
  $region30: #{forward.13} parent=0
    _
  %s6 = ssub.s32 1, %s4
  %s7 = scalar_select 0, %s6, %s4
  $region1: #{forward.13} parent=0
    #allocation2 [shape = 'u8[73728]{0}', space=vmem, size = 0x12000, scoped, tag = 'input window, operand 1, single buffered']
    #allocation3 [shape = 's32[1]{0}', space=sflag, size = 0x4, scoped, tag = 'scoped memory for forward.13']
    #allocation4 [shape = 'u8[512]{0}', space=vmem, size = 0x400, scoped, tag = 'input window, operand 2, single buffered']
    #allocation5 [shape = 's32[1]{0}', space=sflag, size = 0x4, scoped, tag = 'scoped memory for forward.13']
    %8 = vsyncpa [#allocation3], 0
    %9 = vsyncpa [#allocation5], 0
    // Predicated region
    $region2: #{forward.13} parent=1 // pred_check
      _
    $region3: #{forward.13} parent=1 // pred_check_branch
      %11 = sbr.rel (0) target = $region5
    $region4: #{forward.13} parent=1 // pred_region
      _
    $region5: #{forward.13} parent=1 // pred_fallthru
      _
    // Predicated region
    $region6: #{forward.13} parent=1 // pred_check
      _
    $region7: #{forward.13} parent=1 // pred_check_branch
      %13 = sbr.rel (0) target = $region9
    $region8: #{forward.13} parent=1 // pred_region
      %s15 = ssub.s32 2304, 2304
      %16 = vsyncadd [#allocation3], %s15
      %s17 = sshll.u32 [#allocation2], 4
      %s18 = int_to_ptr.vmem [resolvable:$true] %s17
      %23 = dma.hbm_to_vmem [thread:$0]  %s1, 2304, %s18, [#allocation3], 64, 64, 4
    $region9: #{forward.13} parent=1 // pred_fallthru
      _
    // Predicated region
    $region10: #{forward.13} parent=1 // pred_check
      _
    $region11: #{forward.13} parent=1 // pred_check_branch
      %25 = sbr.rel (0) target = $region13
    $region12: #{forward.13} parent=1 // pred_region
      %s27 = ssub.s32 16, 16
      %28 = vsyncadd [#allocation5], %s27
      %s30 = sshll.u32 [#allocation4], 4
      %s31 = int_to_ptr.vmem [resolvable:$true] %s30
      %33 = dma.hbm_to_vmem [thread:$0]  %s2, 16, %s31, [#allocation5]
    $region13: #{forward.13} parent=1 // pred_fallthru
      _
    // Predicated region
    $region14: #{forward.13} parent=1 // pred_check
      _
    $region15: #{forward.13} parent=1 // pred_check_branch
      %35 = sbr.rel (0) target = $region17
    $region16: #{forward.13} parent=1 // pred_region
      %36 = dma.done [#allocation3], 2304
    $region17: #{forward.13} parent=1 // pred_fallthru
      _
    // Predicated region
    $region18: #{forward.13} parent=1 // pred_check
      _
    $region19: #{forward.13} parent=1 // pred_check_branch
      %38 = sbr.rel (0) target = $region21
    $region20: #{forward.13} parent=1 // pred_region
      %39 = dma.done [#allocation5], 16
    $region21: #{forward.13} parent=1 // pred_fallthru
      _
    %v41 = vld [vmem:[%s0] sm:$0xff]
    %v42 = vld [vmem:[%s0 + $0x8] sm:$0xf]
    %v43 = vld [vmem:[%s0 + $0xc] sm:$0xff]
    %v44 = vld [vmem:[%s0 + $0x14] sm:$0xf]
    %v45 = vld [vmem:[%s0 + $0x18] sm:$0xff]
    %v46 = vld [vmem:[%s0 + $0x20] sm:$0xf]
    %v47 = vld [vmem:[%s0 + $0x24] sm:$0xff]
    %v48 = vld [vmem:[%s0 + $0x2c] sm:$0xf]
    %v49 = vld [vmem:[%s0 + $0x30] sm:$0xff]
    %v50 = vld [vmem:[%s0 + $0x38] sm:$0xf]
    %v51 = vld [vmem:[%s0 + $0x3c] sm:$0xff]
    %v52 = vld [vmem:[%s0 + $0x44] sm:$0xf]
    %v53 = vld [vmem:[%s0 + $0x48] sm:$0xff]
    %v54 = vld [vmem:[%s0 + $0x50] sm:$0xf]
    %v55 = vld [vmem:[%s0 + $0x54] sm:$0xff]
    %v56 = vld [vmem:[%s0 + $0x5c] sm:$0xf]
    %v57 = vld [vmem:[%s0 + $0x60] sm:$0xff]
    %v58 = vld [vmem:[%s0 + $0x68] sm:$0xf]
    %v59 = vld [vmem:[#allocation2] sm:$0xf]
    %v60 = vld [vmem:[#allocation2 + $0x4] sm:$0xf]
    %v61 = vld [vmem:[#allocation2 + $0x8] sm:$0xf]
    %v62 = vld [vmem:[#allocation2 + $0xc] sm:$0xf]
    %v63 = vld [vmem:[#allocation2 + $0x10] sm:$0xf]
    %v64 = vld [vmem:[#allocation2 + $0x14] sm:$0xf]
    %v65 = vld [vmem:[#allocation2 + $0x18] sm:$0xf]
    %v66 = vld [vmem:[#allocation2 + $0x1c] sm:$0xf]
    %v67 = vld [vmem:[#allocation2 + $0x20] sm:$0xf]
    %v68 = vld [vmem:[#allocation2 + $0x24] sm:$0xf]
    %v69 = vld [vmem:[#allocation2 + $0x28] sm:$0xf]
    %v70 = vld [vmem:[#allocation2 + $0x2c] sm:$0xf]
    %v71 = vld [vmem:[#allocation2 + $0x30] sm:$0xf]
    %v72 = vld [vmem:[#allocation2 + $0x34] sm:$0xf]
    %v73 = vld [vmem:[#allocation2 + $0x38] sm:$0xf]
    %v74 = vld [vmem:[#allocation2 + $0x3c] sm:$0xf]
    %v75 = vld [vmem:[#allocation2 + $0x40] sm:$0xf]
    %v76 = vld [vmem:[#allocation2 + $0x44] sm:$0xf]
    %v77 = vld [vmem:[#allocation2 + $0x48] sm:$0xf]
    %v78 = vld [vmem:[#allocation2 + $0x4c] sm:$0xf]
    %v79 = vld [vmem:[#allocation2 + $0x50] sm:$0xf]
    %v80 = vld [vmem:[#allocation2 + $0x54] sm:$0xf]
    %v81 = vld [vmem:[#allocation2 + $0x58] sm:$0xf]
    %v82 = vld [vmem:[#allocation2 + $0x5c] sm:$0xf]
    %v83 = vld [vmem:[#allocation2 + $0x60] sm:$0xf]
    %v84 = vld [vmem:[#allocation2 + $0x64] sm:$0xf]
    %v85 = vld [vmem:[#allocation2 + $0x68] sm:$0xf]
    %v86 = vld [vmem:[#allocation2 + $0x6c] sm:$0xf]
    %v87 = vld [vmem:[#allocation2 + $0x70] sm:$0xf]
    %v88 = vld [vmem:[#allocation2 + $0x74] sm:$0xf]
    %v89 = vld [vmem:[#allocation2 + $0x78] sm:$0xf]
    %v90 = vld [vmem:[#allocation2 + $0x7c] sm:$0xf]
    %v91 = vld [vmem:[#allocation2 + $0x80] sm:$0xf]
    %v92 = vld [vmem:[#allocation2 + $0x84] sm:$0xf]
    %v93 = vld [vmem:[#allocation2 + $0x88] sm:$0xf]
    %v94 = vld [vmem:[#allocation2 + $0x8c] sm:$0xf]
    %v95 = vld [vmem:[#allocation4] sm:$0x1]
    %v97 = vlaneseq
    %v98 = vshrl.u32 %v97, 7
    %v99 = vsub.s32 0, %v98
    %v100 = vrot.slane %v95, %v99
    %v120 = vunpack.c.l.b16 %v41
    %v121 = vunpack.c.h.b16 %v41
    %v122 = vunpack.c.l.b16 %v42
    %v123 = vunpack.c.l.b16 %v43
    %v124 = vunpack.c.h.b16 %v43
    %v125 = vunpack.c.l.b16 %v44
    %v126 = vunpack.c.l.b16 %v45
    %v127 = vunpack.c.h.b16 %v45
    %v128 = vunpack.c.l.b16 %v46
    %v129 = vunpack.c.l.b16 %v47
    %v130 = vunpack.c.h.b16 %v47
    %v131 = vunpack.c.l.b16 %v48
    %v132 = vunpack.c.l.b16 %v49
    %v133 = vunpack.c.h.b16 %v49
    %v134 = vunpack.c.l.b16 %v50
    %v135 = vunpack.c.l.b16 %v51
    %v136 = vunpack.c.h.b16 %v51
    %v137 = vunpack.c.l.b16 %v52
    %v138 = vunpack.c.l.b16 %v53
    %v139 = vunpack.c.h.b16 %v53
    %v140 = vunpack.c.l.b16 %v54
    %v141 = vunpack.c.l.b16 %v55
    %v142 = vunpack.c.h.b16 %v55
    %v143 = vunpack.c.l.b16 %v56
    %v144 = vunpack.c.l.b16 %v57
    %v145 = vunpack.c.h.b16 %v57
    %v146 = vunpack.c.l.b16 %v58
    %v147 = vpack.c.b16 %v123, %v120
    %v148 = vpack.c.b16 %v124, %v121
    %v149 = vpack.c.b16 %v125, %v122
    %v150 = vpack.c.b16 %v129, %v126
    %v151 = vpack.c.b16 %v130, %v127
    %v152 = vpack.c.b16 %v131, %v128
    %v153 = vpack.c.b16 %v135, %v132
    %v154 = vpack.c.b16 %v136, %v133
    %v155 = vpack.c.b16 %v137, %v134
    %v156 = vpack.c.b16 %v141, %v138
    %v157 = vpack.c.b16 %v142, %v139
    %v158 = vpack.c.b16 %v143, %v140
    %v159 = vpack.c.b16 %v144, %v144
    %v160 = vpack.c.b16 %v145, %v145
    %v161 = vpack.c.b16 %v146, %v146
    %v208 = vunpack.c.l.b16 %v59
    %v209 = vunpack.c.l.b16 %v60
    %v210 = vunpack.c.l.b16 %v61
    %v211 = vunpack.c.l.b16 %v62
    %v212 = vunpack.c.l.b16 %v63
    %v213 = vunpack.c.l.b16 %v64
    %v214 = vunpack.c.l.b16 %v65
    %v215 = vunpack.c.l.b16 %v66
    %v216 = vunpack.c.l.b16 %v67
    %v217 = vunpack.c.l.b16 %v68
    %v218 = vunpack.c.l.b16 %v69
    %v219 = vunpack.c.l.b16 %v70
    %v220 = vunpack.c.l.b16 %v71
    %v221 = vunpack.c.l.b16 %v72
    %v222 = vunpack.c.l.b16 %v73
    %v223 = vunpack.c.l.b16 %v74
    %v224 = vunpack.c.l.b16 %v75
    %v225 = vunpack.c.l.b16 %v76
    %v226 = vunpack.c.l.b16 %v77
    %v227 = vunpack.c.l.b16 %v78
    %v228 = vunpack.c.l.b16 %v79
    %v229 = vunpack.c.l.b16 %v80
    %v230 = vunpack.c.l.b16 %v81
    %v231 = vunpack.c.l.b16 %v82
    %v232 = vunpack.c.l.b16 %v83
    %v233 = vunpack.c.l.b16 %v84
    %v234 = vunpack.c.l.b16 %v85
    %v235 = vunpack.c.l.b16 %v86
    %v236 = vunpack.c.l.b16 %v87
    %v237 = vunpack.c.l.b16 %v88
    %v238 = vunpack.c.l.b16 %v89
    %v239 = vunpack.c.l.b16 %v90
    %v240 = vunpack.c.l.b16 %v91
    %v241 = vunpack.c.l.b16 %v92
    %v242 = vunpack.c.l.b16 %v93
    %v243 = vunpack.c.l.b16 %v94
    %v244 = vpack.c.b16 %v209, %v208
    %v245 = vpack.c.b16 %v211, %v210
    %v246 = vpack.c.b16 %v213, %v212
    %v247 = vpack.c.b16 %v215, %v214
    %v248 = vpack.c.b16 %v217, %v216
    %v249 = vpack.c.b16 %v219, %v218
    %v250 = vpack.c.b16 %v221, %v220
    %v251 = vpack.c.b16 %v223, %v222
    %v252 = vpack.c.b16 %v225, %v224
    %v253 = vpack.c.b16 %v227, %v226
    %v254 = vpack.c.b16 %v229, %v228
    %v255 = vpack.c.b16 %v231, %v230
    %v256 = vpack.c.b16 %v233, %v232
    %v257 = vpack.c.b16 %v235, %v234
    %v258 = vpack.c.b16 %v237, %v236
    %v259 = vpack.c.b16 %v239, %v238
    %v260 = vpack.c.b16 %v241, %v240
    %v261 = vpack.c.b16 %v243, %v242
    %vm280 = vcmask 261120
    %v282 = vsel %vm280, %v149, 0
    %v285 = vsel %vm280, %v152, 0
    %v288 = vsel %vm280, %v155, 0
    %v291 = vsel %vm280, %v158, 0
    %v294 = vsel %vm280, %v161, 0
    %296 = vmatprep.subr.bf16.mxu0 0
    %297 = vmatpush1.bf16.msra.mxu0 %v244
    %298 = vmatprep.subr.bf16.mxu0 0
    %299 = vmatpush1.bf16.msra.mxu0 %v245
    %300 = vmatprep.subr.bf16.mxu0 0
    %301 = vmatpush1.bf16.msra.mxu0 %v246
    %302 = vmatprep.subr.bf16.mxu0 0
    %303 = vmatpush1.bf16.msra.mxu0 %v247
    %304 = vmatprep.subr.bf16.mxu0 0
    %305 = vmatpush1.bf16.msra.mxu0 %v248
    %306 = vmatprep.subr.bf16.mxu0 0
    %307 = vmatpush1.bf16.msra.mxu0 %v249
    %308 = vmatprep.subr.bf16.mxu0 0
    %309 = vmatpush1.bf16.msra.mxu0 %v250
    %310 = vmatprep.subr.bf16.mxu0 0
    %311 = vmatpush1.bf16.msra.mxu0 %v251
    %312 = vmatprep.subr.bf16.mxu0 0
    %313 = vmatpush1.bf16.msra.mxu0 %v252
    %314 = vmatprep.subr.bf16.mxu0 0
    %315 = vmatpush1.bf16.msra.mxu0 %v253
    %316 = vmatprep.subr.bf16.mxu0 0
    %317 = vmatpush1.bf16.msra.mxu0 %v254
    %318 = vmatprep.subr.bf16.mxu0 0
    %319 = vmatpush1.bf16.msra.mxu0 %v255
    %320 = vmatprep.subr.bf16.mxu0 0
    %321 = vmatpush1.bf16.msra.mxu0 %v256
    %322 = vmatprep.subr.bf16.mxu0 0
    %323 = vmatpush1.bf16.msra.mxu0 %v257
    %324 = vmatprep.subr.bf16.mxu0 0
    %325 = vmatpush1.bf16.msra.mxu0 %v258
    %326 = vmatprep.subr.bf16.mxu0 0
    %327 = vmatpush1.bf16.msra.mxu0 %v259
    %328 = vmatprep.mubr.bf16.mxu0 %v148
    %329 = vmatmul.mubr.bf16.gmra.mrb[0].mxu0 %v147
    %v330 = vpop.f32.mrb[0].mxu0
    %v331 = vadd.f32 %v100, %v330
    %v332 = vpop.f32.mrb[0].mxu0
    %v333 = vpop.f32.mrb[0].mxu0
    %v334 = vadd.f32 %v100, %v333
    %v335 = vpop.f32.mrb[0].mxu0
    %336 = vmatprep.mubr.bf16.mxu0 %v151
    %337 = vmatmul.mubr.bf16.gmra.mrb[0].mxu0 %v150
    %v338 = vpop.f32.mrb[0].mxu0
    %v339 = vadd.f32 %v100, %v338
    %v340 = vpop.f32.mrb[0].mxu0
    %v341 = vpop.f32.mrb[0].mxu0
    %v342 = vadd.f32 %v100, %v341
    %v343 = vpop.f32.mrb[0].mxu0
    %344 = vmatprep.mubr.bf16.mxu0 %v154
    %345 = vmatmul.mubr.bf16.gmra.mrb[0].mxu0 %v153
    %v346 = vpop.f32.mrb[0].mxu0
    %v347 = vadd.f32 %v100, %v346
    %v348 = vpop.f32.mrb[0].mxu0
    %v349 = vpop.f32.mrb[0].mxu0
    %v350 = vadd.f32 %v100, %v349
    %v351 = vpop.f32.mrb[0].mxu0
    %352 = vmatprep.mubr.bf16.mxu0 %v157
    %353 = vmatmul.mubr.bf16.gmra.mrb[0].mxu0 %v156
    %v354 = vpop.f32.mrb[0].mxu0
    %v355 = vadd.f32 %v100, %v354
    %v356 = vpop.f32.mrb[0].mxu0
    %v357 = vpop.f32.mrb[0].mxu0
    %v358 = vadd.f32 %v100, %v357
    %v359 = vpop.f32.mrb[0].mxu0
    %360 = vmatprep.mubr.bf16.mxu0 %v160
    %361 = vmatmul.mubr.bf16.gmra.mrb[0].mxu0 %v159
    %v362 = vpop.f32.mrb[0].mxu0
    %v363 = vadd.f32 %v100, %v362
    %v364 = vpop.f32.mrb[0].mxu0
    %v365 = vpop.f32.mrb[0].mxu0
    %v366 = vpop.f32.mrb[0].mxu0
    %367 = vdwg.mxu0
    %368 = vmatprep.subr.bf16.mxu0 0
    %369 = vmatpush1.bf16.msra.mxu0 %v260
    %370 = vmatprep.subr.bf16.mxu0 0
    %371 = vmatpush1.bf16.msra.mxu0 %v261
    %372 = vmatprep.subr.bf16.mxu0 0
    %373 = vmatpush1.bf16.msra.mxu0 0
    %374 = vmatprep.subr.bf16.mxu0 0
    %375 = vmatpush1.bf16.msra.mxu0 0
    %376 = vmatprep.subr.bf16.mxu0 0
    %377 = vmatpush1.bf16.msra.mxu0 0
    %378 = vmatprep.subr.bf16.mxu0 0
    %379 = vmatpush1.bf16.msra.mxu0 0
    %380 = vmatprep.subr.bf16.mxu0 0
    %381 = vmatpush1.bf16.msra.mxu0 0
    %382 = vmatprep.subr.bf16.mxu0 0
    %383 = vmatpush1.bf16.msra.mxu0 0
    %384 = vmatprep.subr.bf16.mxu0 0
    %385 = vmatpush1.bf16.msra.mxu0 0
    %386 = vmatprep.subr.bf16.mxu0 0
    %387 = vmatpush1.bf16.msra.mxu0 0
    %388 = vmatprep.subr.bf16.mxu0 0
    %389 = vmatpush1.bf16.msra.mxu0 0
    %390 = vmatprep.subr.bf16.mxu0 0
    %391 = vmatpush1.bf16.msra.mxu0 0
    %392 = vmatprep.subr.bf16.mxu0 0
    %393 = vmatpush1.bf16.msra.mxu0 0
    %394 = vmatprep.subr.bf16.mxu0 0
    %395 = vmatpush1.bf16.msra.mxu0 0
    %396 = vmatprep.subr.bf16.mxu0 0
    %397 = vmatpush1.bf16.msra.mxu0 0
    %398 = vmatprep.subr.bf16.mxu0 0
    %399 = vmatpush1.bf16.msra.mxu0 0
    %400 = vmatprep.mubr.bf16.mxu0 0
    %401 = vmatmul.mubr.bf16.gmra.mrb[0].mxu0 %v282
    %v402 = vpop.f32.mrb[0].mxu0
    %v403 = vadd.f32 %v331, %v402
    %v404 = vpop.f32.mrb[0].mxu0
    %v405 = vpop.f32.mrb[0].mxu0
    %v406 = vadd.f32 %v334, %v405
    %v407 = vpop.f32.mrb[0].mxu0
    %408 = vmatprep.mubr.bf16.mxu0 0
    %409 = vmatmul.mubr.bf16.gmra.mrb[0].mxu0 %v285
    %v410 = vpop.f32.mrb[0].mxu0
    %v411 = vadd.f32 %v339, %v410
    %v412 = vpop.f32.mrb[0].mxu0
    %v413 = vpop.f32.mrb[0].mxu0
    %v414 = vadd.f32 %v342, %v413
    %v415 = vpop.f32.mrb[0].mxu0
    %416 = vmatprep.mubr.bf16.mxu0 0
    %417 = vmatmul.mubr.bf16.gmra.mrb[0].mxu0 %v288
    %v418 = vpop.f32.mrb[0].mxu0
    %v419 = vadd.f32 %v347, %v418
    %v420 = vpop.f32.mrb[0].mxu0
    %v421 = vpop.f32.mrb[0].mxu0
    %v422 = vadd.f32 %v350, %v421
    %v423 = vpop.f32.mrb[0].mxu0
    %424 = vmatprep.mubr.bf16.mxu0 0
    %425 = vmatmul.mubr.bf16.gmra.mrb[0].mxu0 %v291
    %v426 = vpop.f32.mrb[0].mxu0
    %v427 = vadd.f32 %v355, %v426
    %v428 = vpop.f32.mrb[0].mxu0
    %v429 = vpop.f32.mrb[0].mxu0
    %v430 = vadd.f32 %v358, %v429
    %v431 = vpop.f32.mrb[0].mxu0
    %432 = vmatprep.mubr.bf16.mxu0 0
    %433 = vmatmul.mubr.bf16.gmra.mrb[0].mxu0 %v294
    %v434 = vpop.f32.mrb[0].mxu0
    %v435 = vadd.f32 %v363, %v434
    %v436 = vpop.f32.mrb[0].mxu0
    %v437 = vpop.f32.mrb[0].mxu0
    %v438 = vpop.f32.mrb[0].mxu0
    %439 = vdwg.mxu0
    %vm440 = vcmp.gt.f32.partialorder %v403, 0.0
    %vm441 = vcmp.gt.f32.partialorder %v406, 0.0
    %vm442 = vcmp.gt.f32.partialorder %v411, 0.0
    %vm443 = vcmp.gt.f32.partialorder %v414, 0.0
    %vm444 = vcmp.gt.f32.partialorder %v419, 0.0
    %vm445 = vcmp.gt.f32.partialorder %v422, 0.0
    %vm446 = vcmp.gt.f32.partialorder %v427, 0.0
    %vm447 = vcmp.gt.f32.partialorder %v430, 0.0
    %vm448 = vcmp.gt.f32.partialorder %v435, 0.0
    %v449 = vmul.f32 %v403, 0.01
    %v450 = vmul.f32 %v406, 0.01
    %v451 = vmul.f32 %v411, 0.01
    %v452 = vmul.f32 %v414, 0.01
    %v453 = vmul.f32 %v419, 0.01
    %v454 = vmul.f32 %v422, 0.01
    %v455 = vmul.f32 %v427, 0.01
    %v456 = vmul.f32 %v430, 0.01
    %v457 = vmul.f32 %v435, 0.01
    %v458 = vsel %vm440, %v403, %v449
    %v459 = vsel %vm441, %v406, %v450
    %v460 = vsel %vm442, %v411, %v451
    %v461 = vsel %vm443, %v414, %v452
    %v462 = vsel %vm444, %v419, %v453
    %v463 = vsel %vm445, %v422, %v454
    %v464 = vsel %vm446, %v427, %v455
    %v465 = vsel %vm447, %v430, %v456
    %v466 = vsel %vm448, %v435, %v457
    %467 = vst [vmem:[%s3] sm:$0xff] %v458
    %468 = vst [vmem:[%s3 + $0x8] sm:$0xff] %v459
    %469 = vst [vmem:[%s3 + $0x10] sm:$0xff] %v460
    %470 = vst [vmem:[%s3 + $0x18] sm:$0xff] %v461
    %471 = vst [vmem:[%s3 + $0x20] sm:$0xff] %v462
    %472 = vst [vmem:[%s3 + $0x28] sm:$0xff] %v463
    %473 = vst [vmem:[%s3 + $0x30] sm:$0xff] %v464
    %474 = vst [vmem:[%s3 + $0x38] sm:$0xff] %v465
    %475 = vst [vmem:[%s3 + $0x40] sm:$0xff] %v466
    // Predicated region
    $region22: #{forward.13} parent=1 // pred_check
      _
    $region23: #{forward.13} parent=1 // pred_check_branch
      %477 = sbr.rel (0) target = $region25
    $region24: #{forward.13} parent=1 // pred_region
      _
    $region25: #{forward.13} parent=1 // pred_fallthru
      _
    // Predicated region
    $region26: #{forward.13} parent=1 // pred_check
      _
    $region27: #{forward.13} parent=1 // pred_check_branch
      %479 = sbr.rel (0) target = $region29
    $region28: #{forward.13} parent=1 // pred_region
      _
    $region29: #{forward.13} parent=1 // pred_fallthru
      _
    %480 = vsyncpa [#allocation3], 1
    %481 = vsyncpa [#allocation5], 1

// kernel: forward.14
$region0: #{forward.14}
  #allocation0 [shape = 'u32[]', space=smem, size = 0x4, offset = 0x4, fixed_abs, tag = 'smem constant byte address 0x4 - core index']
  #allocation1 [shape = 'u32[144,128]{1,0:T(1,128)}', space=vmem, size = 0x12000, scoped, tag = 'internal scratch']
  %s0 = inlined_call_operand.vmem [shape: bf16[32,576], index: 0, kind: input, shape index: {}]
  %s1 = inlined_call_operand.hbm [shape: bf16[576,128], index: 1, kind: input, shape index: {}]
  %s2 = inlined_call_operand.hbm [shape: f32[1,128], index: 2, kind: input, shape index: {}]
  %s3 = inlined_call_operand.vmem [shape: f32[32,128], index: 3, kind: output, shape index: {}]
  %s4 = sld [smem:[#allocation0]]
  $region30: #{forward.14} parent=0
    _
  %s6 = ssub.s32 1, %s4
  %s7 = scalar_select 0, %s6, %s4
  $region1: #{forward.14} parent=0
    #allocation2 [shape = 'u8[147456]{0}', space=vmem, size = 0x24000, scoped, tag = 'input window, operand 1, single buffered']
    #allocation3 [shape = 's32[1]{0}', space=sflag, size = 0x4, scoped, tag = 'scoped memory for forward.14']
    #allocation4 [shape = 'u8[512]{0}', space=vmem, size = 0x400, scoped, tag = 'input window, operand 2, single buffered']
    #allocation5 [shape = 's32[1]{0}', space=sflag, size = 0x4, scoped, tag = 'scoped memory for forward.14']
    %8 = vsyncpa [#allocation3], 0
    %9 = vsyncpa [#allocation5], 0
    // Predicated region
    $region2: #{forward.14} parent=1 // pred_check
      _
    $region3: #{forward.14} parent=1 // pred_check_branch
      %11 = sbr.rel (0) target = $region5
    $region4: #{forward.14} parent=1 // pred_region
      _
    $region5: #{forward.14} parent=1 // pred_fallthru
      _
    // Predicated region
    $region6: #{forward.14} parent=1 // pred_check
      _
    $region7: #{forward.14} parent=1 // pred_check_branch
      %13 = sbr.rel (0) target = $region9
    $region8: #{forward.14} parent=1 // pred_region
      %s15 = ssub.s32 4608, 4608
      %16 = vsyncadd [#allocation3], %s15
      %s17 = sshll.u32 [#allocation2], 4
      %s18 = int_to_ptr.vmem [resolvable:$true] %s17
      %23 = dma.hbm_to_vmem [thread:$0]  %s1, 4608, %s18, [#allocation3], 64, 64, 4
    $region9: #{forward.14} parent=1 // pred_fallthru
      _
    // Predicated region
    $region10: #{forward.14} parent=1 // pred_check
      _
    $region11: #{forward.14} parent=1 // pred_check_branch
      %25 = sbr.rel (0) target = $region13
    $region12: #{forward.14} parent=1 // pred_region
      %s27 = ssub.s32 16, 16
      %28 = vsyncadd [#allocation5], %s27
      %s30 = sshll.u32 [#allocation4], 4
      %s31 = int_to_ptr.vmem [resolvable:$true] %s30
      %33 = dma.hbm_to_vmem [thread:$0]  %s2, 16, %s31, [#allocation5]
    $region13: #{forward.14} parent=1 // pred_fallthru
      _
    // Predicated region
    $region14: #{forward.14} parent=1 // pred_check
      _
    $region15: #{forward.14} parent=1 // pred_check_branch
      %35 = sbr.rel (0) target = $region17
    $region16: #{forward.14} parent=1 // pred_region
      %36 = dma.done [#allocation3], 4608
    $region17: #{forward.14} parent=1 // pred_fallthru
      _
    // Predicated region
    $region18: #{forward.14} parent=1 // pred_check
      _
    $region19: #{forward.14} parent=1 // pred_check_branch
      %38 = sbr.rel (0) target = $region21
    $region20: #{forward.14} parent=1 // pred_region
      %39 = dma.done [#allocation5], 16
    $region21: #{forward.14} parent=1 // pred_fallthru
      _
    %v41 = vld [vmem:[%s0] sm:$0xff]
    %v42 = vld [vmem:[%s0 + $0x8] sm:$0xff]
    %v43 = vld [vmem:[%s0 + $0x10] sm:$0xf]
    %v44 = vld [vmem:[%s0 + $0x14] sm:$0xff]
    %v45 = vld [vmem:[%s0 + $0x1c] sm:$0xff]
    %v46 = vld [vmem:[%s0 + $0x24] sm:$0xf]
    %v47 = vld [vmem:[%s0 + $0x28] sm:$0xff]
    %v48 = vld [vmem:[%s0 + $0x30] sm:$0xff]
    %v49 = vld [vmem:[%s0 + $0x38] sm:$0xf]
    %v50 = vld [vmem:[%s0 + $0x3c] sm:$0xff]
    %v51 = vld [vmem:[%s0 + $0x44] sm:$0xff]
    %v52 = vld [vmem:[%s0 + $0x4c] sm:$0xf]
    %v53 = vld [vmem:[#allocation2] sm:$0xf]
    %v54 = vld [vmem:[#allocation2 + $0x4] sm:$0xf]
    %v55 = vld [vmem:[#allocation2 + $0x8] sm:$0xf]
    %v56 = vld [vmem:[#allocation2 + $0xc] sm:$0xf]
    %v57 = vld [vmem:[#allocation2 + $0x10] sm:$0xf]
    %v58 = vld [vmem:[#allocation2 + $0x14] sm:$0xf]
    %v59 = vld [vmem:[#allocation2 + $0x18] sm:$0xf]
    %v60 = vld [vmem:[#allocation2 + $0x1c] sm:$0xf]
    %v61 = vld [vmem:[#allocation2 + $0x20] sm:$0xf]
    %v62 = vld [vmem:[#allocation2 + $0x24] sm:$0xf]
    %v63 = vld [vmem:[#allocation2 + $0x28] sm:$0xf]
    %v64 = vld [vmem:[#allocation2 + $0x2c] sm:$0xf]
    %v65 = vld [vmem:[#allocation2 + $0x30] sm:$0xf]
    %v66 = vld [vmem:[#allocation2 + $0x34] sm:$0xf]
    %v67 = vld [vmem:[#allocation2 + $0x38] sm:$0xf]
    %v68 = vld [vmem:[#allocation2 + $0x3c] sm:$0xf]
    %v69 = vld [vmem:[#allocation2 + $0x40] sm:$0xf]
    %v70 = vld [vmem:[#allocation2 + $0x44] sm:$0xf]
    %v71 = vld [vmem:[#allocation2 + $0x48] sm:$0xf]
    %v72 = vld [vmem:[#allocation2 + $0x4c] sm:$0xf]
    %v73 = vld [vmem:[#allocation2 + $0x50] sm:$0xf]
    %v74 = vld [vmem:[#allocation2 + $0x54] sm:$0xf]
    %v75 = vld [vmem:[#allocation2 + $0x58] sm:$0xf]
    %v76 = vld [vmem:[#allocation2 + $0x5c] sm:$0xf]
    %v77 = vld [vmem:[#allocation2 + $0x60] sm:$0xf]
    %v78 = vld [vmem:[#allocation2 + $0x64] sm:$0xf]
    %v79 = vld [vmem:[#allocation2 + $0x68] sm:$0xf]
    %v80 = vld [vmem:[#allocation2 + $0x6c] sm:$0xf]
    %v81 = vld [vmem:[#allocation2 + $0x70] sm:$0xf]
    %v82 = vld [vmem:[#allocation2 + $0x74] sm:$0xf]
    %v83 = vld [vmem:[#allocation2 + $0x78] sm:$0xf]
    %v84 = vld [vmem:[#allocation2 + $0x7c] sm:$0xf]
    %v85 = vld [vmem:[#allocation2 + $0x80] sm:$0xf]
    %v86 = vld [vmem:[#allocation2 + $0x84] sm:$0xf]
    %v87 = vld [vmem:[#allocation2 + $0x88] sm:$0xf]
    %v88 = vld [vmem:[#allocation2 + $0x8c] sm:$0xf]
    %v89 = vld [vmem:[#allocation2 + $0x90] sm:$0xf]
    %v90 = vld [vmem:[#allocation2 + $0x94] sm:$0xf]
    %v91 = vld [vmem:[#allocation2 + $0x98] sm:$0xf]
    %v92 = vld [vmem:[#allocation2 + $0x9c] sm:$0xf]
    %v93 = vld [vmem:[#allocation2 + $0xa0] sm:$0xf]
    %v94 = vld [vmem:[#allocation2 + $0xa4] sm:$0xf]
    %v95 = vld [vmem:[#allocation2 + $0xa8] sm:$0xf]
    %v96 = vld [vmem:[#allocation2 + $0xac] sm:$0xf]
    %v97 = vld [vmem:[#allocation2 + $0xb0] sm:$0xf]
    %v98 = vld [vmem:[#allocation2 + $0xb4] sm:$0xf]
    %v99 = vld [vmem:[#allocation2 + $0xb8] sm:$0xf]
    %v100 = vld [vmem:[#allocation2 + $0xbc] sm:$0xf]
    %v101 = vld [vmem:[#allocation2 + $0xc0] sm:$0xf]
    %v102 = vld [vmem:[#allocation2 + $0xc4] sm:$0xf]
    %v103 = vld [vmem:[#allocation2 + $0xc8] sm:$0xf]
    %v104 = vld [vmem:[#allocation2 + $0xcc] sm:$0xf]
    %v105 = vld [vmem:[#allocation2 + $0xd0] sm:$0xf]
    %v106 = vld [vmem:[#allocation2 + $0xd4] sm:$0xf]
    %v107 = vld [vmem:[#allocation2 + $0xd8] sm:$0xf]
    %v108 = vld [vmem:[#allocation2 + $0xdc] sm:$0xf]
    %v109 = vld [vmem:[#allocation2 + $0xe0] sm:$0xf]
    %v110 = vld [vmem:[#allocation2 + $0xe4] sm:$0xf]
    %v111 = vld [vmem:[#allocation2 + $0xe8] sm:$0xf]
    %v112 = vld [vmem:[#allocation2 + $0xec] sm:$0xf]
    %v113 = vld [vmem:[#allocation2 + $0xf0] sm:$0xf]
    %v114 = vld [vmem:[#allocation2 + $0xf4] sm:$0xf]
    %v115 = vld [vmem:[#allocation2 + $0xf8] sm:$0xf]
    %v116 = vld [vmem:[#allocation2 + $0xfc] sm:$0xf]
    %v117 = vld [vmem:[#allocation2 + $0x100] sm:$0xf]
    %v118 = vld [vmem:[#allocation2 + $0x104] sm:$0xf]
    %v119 = vld [vmem:[#allocation2 + $0x108] sm:$0xf]
    %v120 = vld [vmem:[#allocation2 + $0x10c] sm:$0xf]
    %v121 = vld [vmem:[#allocation2 + $0x110] sm:$0xf]
    %v122 = vld [vmem:[#allocation2 + $0x114] sm:$0xf]
    %v123 = vld [vmem:[#allocation2 + $0x118] sm:$0xf]
    %v124 = vld [vmem:[#allocation2 + $0x11c] sm:$0xf]
    %v125 = vld [vmem:[#allocation4] sm:$0x1]
    %v127 = vlaneseq
    %v128 = vshrl.u32 %v127, 7
    %v129 = vsub.s32 0, %v128
    %v130 = vrot.slane %v125, %v129
    %v144 = vunpack.c.l.b16 %v41
    %v145 = vunpack.c.h.b16 %v41
    %v146 = vunpack.c.l.b16 %v42
    %v147 = vunpack.c.h.b16 %v42
    %v148 = vunpack.c.l.b16 %v43
    %v149 = vunpack.c.l.b16 %v44
    %v150 = vunpack.c.h.b16 %v44
    %v151 = vunpack.c.l.b16 %v45
    %v152 = vunpack.c.h.b16 %v45
    %v153 = vunpack.c.l.b16 %v46
    %v154 = vunpack.c.l.b16 %v47
    %v155 = vunpack.c.h.b16 %v47
    %v156 = vunpack.c.l.b16 %v48
    %v157 = vunpack.c.h.b16 %v48
    %v158 = vunpack.c.l.b16 %v49
    %v159 = vunpack.c.l.b16 %v50
    %v160 = vunpack.c.h.b16 %v50
    %v161 = vunpack.c.l.b16 %v51
    %v162 = vunpack.c.h.b16 %v51
    %v163 = vunpack.c.l.b16 %v52
    %v164 = vpack.c.b16 %v149, %v144
    %v165 = vpack.c.b16 %v150, %v145
    %v166 = vpack.c.b16 %v151, %v146
    %v167 = vpack.c.b16 %v152, %v147
    %v168 = vpack.c.b16 %v153, %v148
    %v169 = vpack.c.b16 %v159, %v154
    %v170 = vpack.c.b16 %v160, %v155
    %v171 = vpack.c.b16 %v161, %v156
    %v172 = vpack.c.b16 %v162, %v157
    %v173 = vpack.c.b16 %v163, %v158
    %v254 = vunpack.c.l.b16 %v53
    %v255 = vunpack.c.l.b16 %v54
    %v256 = vunpack.c.l.b16 %v55
    %v257 = vunpack.c.l.b16 %v56
    %v258 = vunpack.c.l.b16 %v57
    %v259 = vunpack.c.l.b16 %v58
    %v260 = vunpack.c.l.b16 %v59
    %v261 = vunpack.c.l.b16 %v60
    %v262 = vunpack.c.l.b16 %v61
    %v263 = vunpack.c.l.b16 %v62
    %v264 = vunpack.c.l.b16 %v63
    %v265 = vunpack.c.l.b16 %v64
    %v266 = vunpack.c.l.b16 %v65
    %v267 = vunpack.c.l.b16 %v66
    %v268 = vunpack.c.l.b16 %v67
    %v269 = vunpack.c.l.b16 %v68
    %v270 = vunpack.c.l.b16 %v69
    %v271 = vunpack.c.l.b16 %v70
    %v272 = vunpack.c.l.b16 %v71
    %v273 = vunpack.c.l.b16 %v72
    %v274 = vunpack.c.l.b16 %v73
    %v275 = vunpack.c.l.b16 %v74
    %v276 = vunpack.c.l.b16 %v75
    %v277 = vunpack.c.l.b16 %v76
    %v278 = vunpack.c.l.b16 %v77
    %v279 = vunpack.c.l.b16 %v78
    %v280 = vunpack.c.l.b16 %v79
    %v281 = vunpack.c.l.b16 %v80
    %v282 = vunpack.c.l.b16 %v81
    %v283 = vunpack.c.l.b16 %v82
    %v284 = vunpack.c.l.b16 %v83
    %v285 = vunpack.c.l.b16 %v84
    %v286 = vunpack.c.l.b16 %v85
    %v287 = vunpack.c.l.b16 %v86
    %v288 = vunpack.c.l.b16 %v87
    %v289 = vunpack.c.l.b16 %v88
    %v290 = vunpack.c.l.b16 %v89
    %v291 = vunpack.c.l.b16 %v90
    %v292 = vunpack.c.l.b16 %v91
    %v293 = vunpack.c.l.b16 %v92
    %v294 = vunpack.c.l.b16 %v93
    %v295 = vunpack.c.l.b16 %v94
    %v296 = vunpack.c.l.b16 %v95
    %v297 = vunpack.c.l.b16 %v96
    %v298 = vunpack.c.l.b16 %v97
    %v299 = vunpack.c.l.b16 %v98
    %v300 = vunpack.c.l.b16 %v99
    %v301 = vunpack.c.l.b16 %v100
    %v302 = vunpack.c.l.b16 %v101
    %v303 = vunpack.c.l.b16 %v102
    %v304 = vunpack.c.l.b16 %v103
    %v305 = vunpack.c.l.b16 %v104
    %v306 = vunpack.c.l.b16 %v105
    %v307 = vunpack.c.l.b16 %v106
    %v308 = vunpack.c.l.b16 %v107
    %v309 = vunpack.c.l.b16 %v108
    %v310 = vunpack.c.l.b16 %v109
    %v311 = vunpack.c.l.b16 %v110
    %v312 = vunpack.c.l.b16 %v111
    %v313 = vunpack.c.l.b16 %v112
    %v314 = vunpack.c.l.b16 %v113
    %v315 = vunpack.c.l.b16 %v114
    %v316 = vunpack.c.l.b16 %v115
    %v317 = vunpack.c.l.b16 %v116
    %v318 = vunpack.c.l.b16 %v117
    %v319 = vunpack.c.l.b16 %v118
    %v320 = vunpack.c.l.b16 %v119
    %v321 = vunpack.c.l.b16 %v120
    %v322 = vunpack.c.l.b16 %v121
    %v323 = vunpack.c.l.b16 %v122
    %v324 = vunpack.c.l.b16 %v123
    %v325 = vunpack.c.l.b16 %v124
    %v326 = vpack.c.b16 %v255, %v254
    %v327 = vpack.c.b16 %v257, %v256
    %v328 = vpack.c.b16 %v259, %v258
    %v329 = vpack.c.b16 %v261, %v260
    %v330 = vpack.c.b16 %v263, %v262
    %v331 = vpack.c.b16 %v265, %v264
    %v332 = vpack.c.b16 %v267, %v266
    %v333 = vpack.c.b16 %v269, %v268
    %v334 = vpack.c.b16 %v271, %v270
    %v335 = vpack.c.b16 %v273, %v272
    %v336 = vpack.c.b16 %v275, %v274
    %v337 = vpack.c.b16 %v277, %v276
    %v338 = vpack.c.b16 %v279, %v278
    %v339 = vpack.c.b16 %v281, %v280
    %v340 = vpack.c.b16 %v283, %v282
    %v341 = vpack.c.b16 %v285, %v284
    %v342 = vpack.c.b16 %v287, %v286
    %v343 = vpack.c.b16 %v289, %v288
    %v344 = vpack.c.b16 %v291, %v290
    %v345 = vpack.c.b16 %v293, %v292
    %v346 = vpack.c.b16 %v295, %v294
    %v347 = vpack.c.b16 %v297, %v296
    %v348 = vpack.c.b16 %v299, %v298
    %v349 = vpack.c.b16 %v301, %v300
    %v350 = vpack.c.b16 %v303, %v302
    %v351 = vpack.c.b16 %v305, %v304
    %v352 = vpack.c.b16 %v307, %v306
    %v353 = vpack.c.b16 %v309, %v308
    %v354 = vpack.c.b16 %v311, %v310
    %v355 = vpack.c.b16 %v313, %v312
    %v356 = vpack.c.b16 %v315, %v314
    %v357 = vpack.c.b16 %v317, %v316
    %v358 = vpack.c.b16 %v319, %v318
    %v359 = vpack.c.b16 %v321, %v320
    %v360 = vpack.c.b16 %v323, %v322
    %v361 = vpack.c.b16 %v325, %v324
    %vm398 = vcmask 523264
    %v400 = vsel %vm398, %v168, 0
    %v403 = vsel %vm398, %v173, 0
    %405 = vmatprep.subr.bf16.mxu0 0
    %406 = vmatpush1.bf16.msra.mxu0 %v326
    %407 = vmatprep.subr.bf16.mxu0 0
    %408 = vmatpush1.bf16.msra.mxu0 %v327
    %409 = vmatprep.subr.bf16.mxu0 0
    %410 = vmatpush1.bf16.msra.mxu0 %v328
    %411 = vmatprep.subr.bf16.mxu0 0
    %412 = vmatpush1.bf16.msra.mxu0 %v329
    %413 = vmatprep.subr.bf16.mxu0 0
    %414 = vmatpush1.bf16.msra.mxu0 %v330
    %415 = vmatprep.subr.bf16.mxu0 0
    %416 = vmatpush1.bf16.msra.mxu0 %v331
    %417 = vmatprep.subr.bf16.mxu0 0
    %418 = vmatpush1.bf16.msra.mxu0 %v332
    %419 = vmatprep.subr.bf16.mxu0 0
    %420 = vmatpush1.bf16.msra.mxu0 %v333
    %421 = vmatprep.subr.bf16.mxu0 0
    %422 = vmatpush1.bf16.msra.mxu0 %v334
    %423 = vmatprep.subr.bf16.mxu0 0
    %424 = vmatpush1.bf16.msra.mxu0 %v335
    %425 = vmatprep.subr.bf16.mxu0 0
    %426 = vmatpush1.bf16.msra.mxu0 %v336
    %427 = vmatprep.subr.bf16.mxu0 0
    %428 = vmatpush1.bf16.msra.mxu0 %v337
    %429 = vmatprep.subr.bf16.mxu0 0
    %430 = vmatpush1.bf16.msra.mxu0 %v338
    %431 = vmatprep.subr.bf16.mxu0 0
    %432 = vmatpush1.bf16.msra.mxu0 %v339
    %433 = vmatprep.subr.bf16.mxu0 0
    %434 = vmatpush1.bf16.msra.mxu0 %v340
    %435 = vmatprep.subr.bf16.mxu0 0
    %436 = vmatpush1.bf16.msra.mxu0 %v341
    %437 = vmatprep.mubr.bf16.mxu0 %v165
    %438 = vmatmul.mubr.bf16.gmra.mrb[0].mxu0 %v164
    %v439 = vpop.f32.mrb[0].mxu0
    %v440 = vadd.f32 %v130, %v439
    %v441 = vpop.f32.mrb[0].mxu0
    %v442 = vpop.f32.mrb[0].mxu0
    %v443 = vadd.f32 %v130, %v442
    %v444 = vpop.f32.mrb[0].mxu0
    %445 = vmatprep.mubr.bf16.mxu0 %v170
    %446 = vmatmul.mubr.bf16.gmra.mrb[0].mxu0 %v169
    %v447 = vpop.f32.mrb[0].mxu0
    %v448 = vadd.f32 %v130, %v447
    %v449 = vpop.f32.mrb[0].mxu0
    %v450 = vpop.f32.mrb[0].mxu0
    %v451 = vadd.f32 %v130, %v450
    %v452 = vpop.f32.mrb[0].mxu0
    %453 = vdwg.mxu0
    %454 = vmatprep.subr.bf16.mxu0 0
    %455 = vmatpush1.bf16.msra.mxu0 %v342
    %456 = vmatprep.subr.bf16.mxu0 0
    %457 = vmatpush1.bf16.msra.mxu0 %v343
    %458 = vmatprep.subr.bf16.mxu0 0
    %459 = vmatpush1.bf16.msra.mxu0 %v344
    %460 = vmatprep.subr.bf16.mxu0 0
    %461 = vmatpush1.bf16.msra.mxu0 %v345
    %462 = vmatprep.subr.bf16.mxu0 0
    %463 = vmatpush1.bf16.msra.mxu0 %v346
    %464 = vmatprep.subr.bf16.mxu0 0
    %465 = vmatpush1.bf16.msra.mxu0 %v347
    %466 = vmatprep.subr.bf16.mxu0 0
    %467 = vmatpush1.bf16.msra.mxu0 %v348
    %468 = vmatprep.subr.bf16.mxu0 0
    %469 = vmatpush1.bf16.msra.mxu0 %v349
    %470 = vmatprep.subr.bf16.mxu0 0
    %471 = vmatpush1.bf16.msra.mxu0 %v350
    %472 = vmatprep.subr.bf16.mxu0 0
    %473 = vmatpush1.bf16.msra.mxu0 %v351
    %474 = vmatprep.subr.bf16.mxu0 0
    %475 = vmatpush1.bf16.msra.mxu0 %v352
    %476 = vmatprep.subr.bf16.mxu0 0
    %477 = vmatpush1.bf16.msra.mxu0 %v353
    %478 = vmatprep.subr.bf16.mxu0 0
    %479 = vmatpush1.bf16.msra.mxu0 %v354
    %480 = vmatprep.subr.bf16.mxu0 0
    %481 = vmatpush1.bf16.msra.mxu0 %v355
    %482 = vmatprep.subr.bf16.mxu0 0
    %483 = vmatpush1.bf16.msra.mxu0 %v356
    %484 = vmatprep.subr.bf16.mxu0 0
    %485 = vmatpush1.bf16.msra.mxu0 %v357
    %486 = vmatprep.mubr.bf16.mxu0 %v167
    %487 = vmatmul.mubr.bf16.gmra.mrb[0].mxu0 %v166
    %v488 = vpop.f32.mrb[0].mxu0
    %v489 = vadd.f32 %v440, %v488
    %v490 = vpop.f32.mrb[0].mxu0
    %v491 = vpop.f32.mrb[0].mxu0
    %v492 = vadd.f32 %v443, %v491
    %v493 = vpop.f32.mrb[0].mxu0
    %494 = vmatprep.mubr.bf16.mxu0 %v172
    %495 = vmatmul.mubr.bf16.gmra.mrb[0].mxu0 %v171
    %v496 = vpop.f32.mrb[0].mxu0
    %v497 = vadd.f32 %v448, %v496
    %v498 = vpop.f32.mrb[0].mxu0
    %v499 = vpop.f32.mrb[0].mxu0
    %v500 = vadd.f32 %v451, %v499
    %v501 = vpop.f32.mrb[0].mxu0
    %502 = vdwg.mxu0
    %503 = vmatprep.subr.bf16.mxu0 0
    %504 = vmatpush1.bf16.msra.mxu0 %v358
    %505 = vmatprep.subr.bf16.mxu0 0
    %506 = vmatpush1.bf16.msra.mxu0 %v359
    %507 = vmatprep.subr.bf16.mxu0 0
    %508 = vmatpush1.bf16.msra.mxu0 %v360
    %509 = vmatprep.subr.bf16.mxu0 0
    %510 = vmatpush1.bf16.msra.mxu0 %v361
    %511 = vmatprep.subr.bf16.mxu0 0
    %512 = vmatpush1.bf16.msra.mxu0 0
    %513 = vmatprep.subr.bf16.mxu0 0
    %514 = vmatpush1.bf16.msra.mxu0 0
    %515 = vmatprep.subr.bf16.mxu0 0
    %516 = vmatpush1.bf16.msra.mxu0 0
    %517 = vmatprep.subr.bf16.mxu0 0
    %518 = vmatpush1.bf16.msra.mxu0 0
    %519 = vmatprep.subr.bf16.mxu0 0
    %520 = vmatpush1.bf16.msra.mxu0 0
    %521 = vmatprep.subr.bf16.mxu0 0
    %522 = vmatpush1.bf16.msra.mxu0 0
    %523 = vmatprep.subr.bf16.mxu0 0
    %524 = vmatpush1.bf16.msra.mxu0 0
    %525 = vmatprep.subr.bf16.mxu0 0
    %526 = vmatpush1.bf16.msra.mxu0 0
    %527 = vmatprep.subr.bf16.mxu0 0
    %528 = vmatpush1.bf16.msra.mxu0 0
    %529 = vmatprep.subr.bf16.mxu0 0
    %530 = vmatpush1.bf16.msra.mxu0 0
    %531 = vmatprep.subr.bf16.mxu0 0
    %532 = vmatpush1.bf16.msra.mxu0 0
    %533 = vmatprep.subr.bf16.mxu0 0
    %534 = vmatpush1.bf16.msra.mxu0 0
    %535 = vmatprep.mubr.bf16.mxu0 0
    %536 = vmatmul.mubr.bf16.gmra.mrb[0].mxu0 %v400
    %v537 = vpop.f32.mrb[0].mxu0
    %v538 = vadd.f32 %v489, %v537
    %v539 = vpop.f32.mrb[0].mxu0
    %v540 = vpop.f32.mrb[0].mxu0
    %v541 = vadd.f32 %v492, %v540
    %v542 = vpop.f32.mrb[0].mxu0
    %543 = vmatprep.mubr.bf16.mxu0 0
    %544 = vmatmul.mubr.bf16.gmra.mrb[0].mxu0 %v403
    %v545 = vpop.f32.mrb[0].mxu0
    %v546 = vadd.f32 %v497, %v545
    %v547 = vpop.f32.mrb[0].mxu0
    %v548 = vpop.f32.mrb[0].mxu0
    %v549 = vadd.f32 %v500, %v548
    %v550 = vpop.f32.mrb[0].mxu0
    %551 = vdwg.mxu0
    %vm552 = vcmp.gt.f32.partialorder %v538, 0.0
    %vm553 = vcmp.gt.f32.partialorder %v541, 0.0
    %vm554 = vcmp.gt.f32.partialorder %v546, 0.0
    %vm555 = vcmp.gt.f32.partialorder %v549, 0.0
    %v556 = vmul.f32 %v538, 0.01
    %v557 = vmul.f32 %v541, 0.01
    %v558 = vmul.f32 %v546, 0.01
    %v559 = vmul.f32 %v549, 0.01
    %v560 = vsel %vm552, %v538, %v556
    %v561 = vsel %vm553, %v541, %v557
    %v562 = vsel %vm554, %v546, %v558
    %v563 = vsel %vm555, %v549, %v559
    %564 = vst [vmem:[%s3] sm:$0xff] %v560
    %565 = vst [vmem:[%s3 + $0x8] sm:$0xff] %v561
    %566 = vst [vmem:[%s3 + $0x10] sm:$0xff] %v562
    %567 = vst [vmem:[%s3 + $0x18] sm:$0xff] %v563
    // Predicated region
    $region22: #{forward.14} parent=1 // pred_check
      _
    $region23: #{forward.14} parent=1 // pred_check_branch
      %569 = sbr.rel (0) target = $region25
    $region24: #{forward.14} parent=1 // pred_region
      _
    $region25: #{forward.14} parent=1 // pred_fallthru
      _
    // Predicated region
    $region26: #{forward.14} parent=1 // pred_check
      _
    $region27: #{forward.14} parent=1 // pred_check_branch
      %571 = sbr.rel (0) target = $region29
    $region28: #{forward.14} parent=1 // pred_region
      _
    $region29: #{forward.14} parent=1 // pred_fallthru
      _
    %572 = vsyncpa [#allocation3], 1
    %573 = vsyncpa [#allocation5], 1

// kernel: forward.15
$region0: #{forward.15}
  #allocation0 [shape = 'u32[]', space=smem, size = 0x4, offset = 0x4, fixed_abs, tag = 'smem constant byte address 0x4 - core index']
  #allocation1 [shape = 'u32[144,128]{1,0:T(1,128)}', space=vmem, size = 0x12000, scoped, tag = 'internal scratch']
  %s0 = inlined_call_operand.vmem [shape: bf16[8,1152], index: 0, kind: input, shape index: {}]
  %s1 = inlined_call_operand.vmem [shape: bf16[1152,256], index: 1, kind: input, shape index: {}]
  %s2 = inlined_call_operand.hbm [shape: f32[1,256], index: 2, kind: input, shape index: {}]
  %s3 = inlined_call_operand.vmem [shape: f32[8,256], index: 3, kind: output, shape index: {}]
  %s4 = sld [smem:[#allocation0]]
  $region26: #{forward.15} parent=0
    _
  %s6 = ssub.s32 1, %s4
  %s7 = scalar_select 0, %s6, %s4
  $region1: #{forward.15} parent=0
    #allocation2 [shape = 'u8[1024]{0}', space=vmem, size = 0x400, scoped, tag = 'input window, operand 2, single buffered']
    #allocation3 [shape = 's32[1]{0}', space=sflag, size = 0x4, scoped, tag = 'scoped memory for forward.15']
    %8 = vsyncpa [#allocation3], 0
    // Predicated region
    $region2: #{forward.15} parent=1 // pred_check
      _
    $region3: #{forward.15} parent=1 // pred_check_branch
      %10 = sbr.rel (0) target = $region5
    $region4: #{forward.15} parent=1 // pred_region
      _
    $region5: #{forward.15} parent=1 // pred_fallthru
      _
    // Predicated region
    $region6: #{forward.15} parent=1 // pred_check
      _
    $region7: #{forward.15} parent=1 // pred_check_branch
      %12 = sbr.rel (0) target = $region9
    $region8: #{forward.15} parent=1 // pred_region
      _
    $region9: #{forward.15} parent=1 // pred_fallthru
      _
    // Predicated region
    $region10: #{forward.15} parent=1 // pred_check
      _
    $region11: #{forward.15} parent=1 // pred_check_branch
      %14 = sbr.rel (0) target = $region13
    $region12: #{forward.15} parent=1 // pred_region
      %s16 = ssub.s32 32, 32
      %17 = vsyncadd [#allocation3], %s16
      %s19 = sshll.u32 [#allocation2], 4
      %s20 = int_to_ptr.vmem [resolvable:$true] %s19
      %22 = dma.hbm_to_vmem [thread:$0]  %s2, 32, %s20, [#allocation3]
    $region13: #{forward.15} parent=1 // pred_fallthru
      _
    // Predicated region
    $region14: #{forward.15} parent=1 // pred_check
      _
    $region15: #{forward.15} parent=1 // pred_check_branch
      %24 = sbr.rel (0) target = $region17
    $region16: #{forward.15} parent=1 // pred_region
      %25 = dma.done [#allocation3], 32
    $region17: #{forward.15} parent=1 // pred_fallthru
      _
    %v27 = vld [vmem:[%s0] sm:$0xff]
    %v28 = vld [vmem:[%s0 + $0x8] sm:$0xff]
    %v29 = vld [vmem:[%s0 + $0x10] sm:$0xff]
    %v30 = vld [vmem:[%s0 + $0x18] sm:$0xff]
    %v31 = vld [vmem:[%s0 + $0x20] sm:$0xf]
    %v32 = vld [vmem:[%s1] sm:$0xff]
    %v33 = vld [vmem:[%s1 + $0x8] sm:$0xff]
    %v34 = vld [vmem:[%s1 + $0x10] sm:$0xff]
    %v35 = vld [vmem:[%s1 + $0x18] sm:$0xff]
    %v36 = vld [vmem:[%s1 + $0x20] sm:$0xff]
    %v37 = vld [vmem:[%s1 + $0x28] sm:$0xff]
    %v38 = vld [vmem:[%s1 + $0x30] sm:$0xff]
    %v39 = vld [vmem:[%s1 + $0x38] sm:$0xff]
    %v40 = vld [vmem:[%s1 + $0x40] sm:$0xff]
    %v41 = vld [vmem:[%s1 + $0x48] sm:$0xff]
    %v42 = vld [vmem:[%s1 + $0x50] sm:$0xff]
    %v43 = vld [vmem:[%s1 + $0x58] sm:$0xff]
    %v44 = vld [vmem:[%s1 + $0x60] sm:$0xff]
    %v45 = vld [vmem:[%s1 + $0x68] sm:$0xff]
    %v46 = vld [vmem:[%s1 + $0x70] sm:$0xff]
    %v47 = vld [vmem:[%s1 + $0x78] sm:$0xff]
    %v48 = vld [vmem:[%s1 + $0x80] sm:$0xff]
    %v49 = vld [vmem:[%s1 + $0x88] sm:$0xff]
    %v50 = vld [vmem:[%s1 + $0x90] sm:$0xff]
    %v51 = vld [vmem:[%s1 + $0x98] sm:$0xff]
    %v52 = vld [vmem:[%s1 + $0xa0] sm:$0xff]
    %v53 = vld [vmem:[%s1 + $0xa8] sm:$0xff]
    %v54 = vld [vmem:[%s1 + $0xb0] sm:$0xff]
    %v55 = vld [vmem:[%s1 + $0xb8] sm:$0xff]
    %v56 = vld [vmem:[%s1 + $0xc0] sm:$0xff]
    %v57 = vld [vmem:[%s1 + $0xc8] sm:$0xff]
    %v58 = vld [vmem:[%s1 + $0xd0] sm:$0xff]
    %v59 = vld [vmem:[%s1 + $0xd8] sm:$0xff]
    %v60 = vld [vmem:[%s1 + $0xe0] sm:$0xff]
    %v61 = vld [vmem:[%s1 + $0xe8] sm:$0xff]
    %v62 = vld [vmem:[%s1 + $0xf0] sm:$0xff]
    %v63 = vld [vmem:[%s1 + $0xf8] sm:$0xff]
    %v64 = vld [vmem:[%s1 + $0x100] sm:$0xff]
    %v65 = vld [vmem:[%s1 + $0x108] sm:$0xff]
    %v66 = vld [vmem:[%s1 + $0x110] sm:$0xff]
    %v67 = vld [vmem:[%s1 + $0x118] sm:$0xff]
    %v68 = vld [vmem:[%s1 + $0x120] sm:$0xff]
    %v69 = vld [vmem:[%s1 + $0x128] sm:$0xff]
    %v70 = vld [vmem:[%s1 + $0x130] sm:$0xff]
    %v71 = vld [vmem:[%s1 + $0x138] sm:$0xff]
    %v72 = vld [vmem:[%s1 + $0x140] sm:$0xff]
    %v73 = vld [vmem:[%s1 + $0x148] sm:$0xff]
    %v74 = vld [vmem:[%s1 + $0x150] sm:$0xff]
    %v75 = vld [vmem:[%s1 + $0x158] sm:$0xff]
    %v76 = vld [vmem:[%s1 + $0x160] sm:$0xff]
    %v77 = vld [vmem:[%s1 + $0x168] sm:$0xff]
    %v78 = vld [vmem:[%s1 + $0x170] sm:$0xff]
    %v79 = vld [vmem:[%s1 + $0x178] sm:$0xff]
    %v80 = vld [vmem:[%s1 + $0x180] sm:$0xff]
    %v81 = vld [vmem:[%s1 + $0x188] sm:$0xff]
    %v82 = vld [vmem:[%s1 + $0x190] sm:$0xff]
    %v83 = vld [vmem:[%s1 + $0x198] sm:$0xff]
    %v84 = vld [vmem:[%s1 + $0x1a0] sm:$0xff]
    %v85 = vld [vmem:[%s1 + $0x1a8] sm:$0xff]
    %v86 = vld [vmem:[%s1 + $0x1b0] sm:$0xff]
    %v87 = vld [vmem:[%s1 + $0x1b8] sm:$0xff]
    %v88 = vld [vmem:[%s1 + $0x1c0] sm:$0xff]
    %v89 = vld [vmem:[%s1 + $0x1c8] sm:$0xff]
    %v90 = vld [vmem:[%s1 + $0x1d0] sm:$0xff]
    %v91 = vld [vmem:[%s1 + $0x1d8] sm:$0xff]
    %v92 = vld [vmem:[%s1 + $0x1e0] sm:$0xff]
    %v93 = vld [vmem:[%s1 + $0x1e8] sm:$0xff]
    %v94 = vld [vmem:[%s1 + $0x1f0] sm:$0xff]
    %v95 = vld [vmem:[%s1 + $0x1f8] sm:$0xff]
    %v96 = vld [vmem:[%s1 + $0x200] sm:$0xff]
    %v97 = vld [vmem:[%s1 + $0x208] sm:$0xff]
    %v98 = vld [vmem:[%s1 + $0x210] sm:$0xff]
    %v99 = vld [vmem:[%s1 + $0x218] sm:$0xff]
    %v100 = vld [vmem:[%s1 + $0x220] sm:$0xff]
    %v101 = vld [vmem:[%s1 + $0x228] sm:$0xff]
    %v102 = vld [vmem:[%s1 + $0x230] sm:$0xff]
    %v103 = vld [vmem:[%s1 + $0x238] sm:$0xff]
    %v104 = vld [vmem:[%s1 + $0x240] sm:$0xff]
    %v105 = vld [vmem:[%s1 + $0x248] sm:$0xff]
    %v106 = vld [vmem:[%s1 + $0x250] sm:$0xff]
    %v107 = vld [vmem:[%s1 + $0x258] sm:$0xff]
    %v108 = vld [vmem:[%s1 + $0x260] sm:$0xff]
    %v109 = vld [vmem:[%s1 + $0x268] sm:$0xff]
    %v110 = vld [vmem:[%s1 + $0x270] sm:$0xff]
    %v111 = vld [vmem:[%s1 + $0x278] sm:$0xff]
    %v112 = vld [vmem:[%s1 + $0x280] sm:$0xff]
    %v113 = vld [vmem:[%s1 + $0x288] sm:$0xff]
    %v114 = vld [vmem:[%s1 + $0x290] sm:$0xff]
    %v115 = vld [vmem:[%s1 + $0x298] sm:$0xff]
    %v116 = vld [vmem:[%s1 + $0x2a0] sm:$0xff]
    %v117 = vld [vmem:[%s1 + $0x2a8] sm:$0xff]
    %v118 = vld [vmem:[%s1 + $0x2b0] sm:$0xff]
    %v119 = vld [vmem:[%s1 + $0x2b8] sm:$0xff]
    %v120 = vld [vmem:[%s1 + $0x2c0] sm:$0xff]
    %v121 = vld [vmem:[%s1 + $0x2c8] sm:$0xff]
    %v122 = vld [vmem:[%s1 + $0x2d0] sm:$0xff]
    %v123 = vld [vmem:[%s1 + $0x2d8] sm:$0xff]
    %v124 = vld [vmem:[%s1 + $0x2e0] sm:$0xff]
    %v125 = vld [vmem:[%s1 + $0x2e8] sm:$0xff]
    %v126 = vld [vmem:[%s1 + $0x2f0] sm:$0xff]
    %v127 = vld [vmem:[%s1 + $0x2f8] sm:$0xff]
    %v128 = vld [vmem:[%s1 + $0x300] sm:$0xff]
    %v129 = vld [vmem:[%s1 + $0x308] sm:$0xff]
    %v130 = vld [vmem:[%s1 + $0x310] sm:$0xff]
    %v131 = vld [vmem:[%s1 + $0x318] sm:$0xff]
    %v132 = vld [vmem:[%s1 + $0x320] sm:$0xff]
    %v133 = vld [vmem:[%s1 + $0x328] sm:$0xff]
    %v134 = vld [vmem:[%s1 + $0x330] sm:$0xff]
    %v135 = vld [vmem:[%s1 + $0x338] sm:$0xff]
    %v136 = vld [vmem:[%s1 + $0x340] sm:$0xff]
    %v137 = vld [vmem:[%s1 + $0x348] sm:$0xff]
    %v138 = vld [vmem:[%s1 + $0x350] sm:$0xff]
    %v139 = vld [vmem:[%s1 + $0x358] sm:$0xff]
    %v140 = vld [vmem:[%s1 + $0x360] sm:$0xff]
    %v141 = vld [vmem:[%s1 + $0x368] sm:$0xff]
    %v142 = vld [vmem:[%s1 + $0x370] sm:$0xff]
    %v143 = vld [vmem:[%s1 + $0x378] sm:$0xff]
    %v144 = vld [vmem:[%s1 + $0x380] sm:$0xff]
    %v145 = vld [vmem:[%s1 + $0x388] sm:$0xff]
    %v146 = vld [vmem:[%s1 + $0x390] sm:$0xff]
    %v147 = vld [vmem:[%s1 + $0x398] sm:$0xff]
    %v148 = vld [vmem:[%s1 + $0x3a0] sm:$0xff]
    %v149 = vld [vmem:[%s1 + $0x3a8] sm:$0xff]
    %v150 = vld [vmem:[%s1 + $0x3b0] sm:$0xff]
    %v151 = vld [vmem:[%s1 + $0x3b8] sm:$0xff]
    %v152 = vld [vmem:[%s1 + $0x3c0] sm:$0xff]
    %v153 = vld [vmem:[%s1 + $0x3c8] sm:$0xff]
    %v154 = vld [vmem:[%s1 + $0x3d0] sm:$0xff]
    %v155 = vld [vmem:[%s1 + $0x3d8] sm:$0xff]
    %v156 = vld [vmem:[%s1 + $0x3e0] sm:$0xff]
    %v157 = vld [vmem:[%s1 + $0x3e8] sm:$0xff]
    %v158 = vld [vmem:[%s1 + $0x3f0] sm:$0xff]
    %v159 = vld [vmem:[%s1 + $0x3f8] sm:$0xff]
    %v160 = vld [vmem:[%s1 + $0x400] sm:$0xff]
    %v161 = vld [vmem:[%s1 + $0x408] sm:$0xff]
    %v162 = vld [vmem:[%s1 + $0x410] sm:$0xff]
    %v163 = vld [vmem:[%s1 + $0x418] sm:$0xff]
    %v164 = vld [vmem:[%s1 + $0x420] sm:$0xff]
    %v165 = vld [vmem:[%s1 + $0x428] sm:$0xff]
    %v166 = vld [vmem:[%s1 + $0x430] sm:$0xff]
    %v167 = vld [vmem:[%s1 + $0x438] sm:$0xff]
    %v168 = vld [vmem:[%s1 + $0x440] sm:$0xff]
    %v169 = vld [vmem:[%s1 + $0x448] sm:$0xff]
    %v170 = vld [vmem:[%s1 + $0x450] sm:$0xff]
    %v171 = vld [vmem:[%s1 + $0x458] sm:$0xff]
    %v172 = vld [vmem:[%s1 + $0x460] sm:$0xff]
    %v173 = vld [vmem:[%s1 + $0x468] sm:$0xff]
    %v174 = vld [vmem:[%s1 + $0x470] sm:$0xff]
    %v175 = vld [vmem:[%s1 + $0x478] sm:$0xff]
    %v176 = vld [vmem:[#allocation2] sm:$0x3]
    %v178 = vlaneseq
    %v179 = vshrl.u32 %v178, 7
    %v180 = vsub.s32 0, %v179
    %v181 = vrot.slane %v176, %v180
    %v182 = vlaneseq
    %v183 = vshrl.u32 %v182, 7
    %v184 = vsub.s32 1, %v183
    %v185 = vrot.slane %v176, %v184
    %v193 = vunpack.c.l.b16 %v27
    %v194 = vunpack.c.h.b16 %v27
    %v195 = vunpack.c.l.b16 %v28
    %v196 = vunpack.c.h.b16 %v28
    %v197 = vunpack.c.l.b16 %v29
    %v198 = vunpack.c.h.b16 %v29
    %v199 = vunpack.c.l.b16 %v30
    %v200 = vunpack.c.h.b16 %v30
    %v201 = vunpack.c.l.b16 %v31
    %v202 = vpack.c.b16 %v193, %v193
    %v203 = vpack.c.b16 %v194, %v194
    %v204 = vpack.c.b16 %v195, %v195
    %v205 = vpack.c.b16 %v196, %v196
    %v206 = vpack.c.b16 %v197, %v197
    %v207 = vpack.c.b16 %v198, %v198
    %v208 = vpack.c.b16 %v199, %v199
    %v209 = vpack.c.b16 %v200, %v200
    %v210 = vpack.c.b16 %v201, %v201
    %v364 = vunpack.c.l.b16 %v32
    %v365 = vunpack.c.h.b16 %v32
    %v366 = vunpack.c.l.b16 %v33
    %v367 = vunpack.c.h.b16 %v33
    %v368 = vunpack.c.l.b16 %v34
    %v369 = vunpack.c.h.b16 %v34
    %v370 = vunpack.c.l.b16 %v35
    %v371 = vunpack.c.h.b16 %v35
    %v372 = vunpack.c.l.b16 %v36
    %v373 = vunpack.c.h.b16 %v36
    %v374 = vunpack.c.l.b16 %v37
    %v375 = vunpack.c.h.b16 %v37
    %v376 = vunpack.c.l.b16 %v38
    %v377 = vunpack.c.h.b16 %v38
    %v378 = vunpack.c.l.b16 %v39
    %v379 = vunpack.c.h.b16 %v39
    %v380 = vunpack.c.l.b16 %v40
    %v381 = vunpack.c.h.b16 %v40
    %v382 = vunpack.c.l.b16 %v41
    %v383 = vunpack.c.h.b16 %v41
    %v384 = vunpack.c.l.b16 %v42
    %v385 = vunpack.c.h.b16 %v42
    %v386 = vunpack.c.l.b16 %v43
    %v387 = vunpack.c.h.b16 %v43
    %v388 = vunpack.c.l.b16 %v44
    %v389 = vunpack.c.h.b16 %v44
    %v390 = vunpack.c.l.b16 %v45
    %v391 = vunpack.c.h.b16 %v45
    %v392 = vunpack.c.l.b16 %v46
    %v393 = vunpack.c.h.b16 %v46
    %v394 = vunpack.c.l.b16 %v47
    %v395 = vunpack.c.h.b16 %v47
    %v396 = vunpack.c.l.b16 %v48
    %v397 = vunpack.c.h.b16 %v48
    %v398 = vunpack.c.l.b16 %v49
    %v399 = vunpack.c.h.b16 %v49
    %v400 = vunpack.c.l.b16 %v50
    %v401 = vunpack.c.h.b16 %v50
    %v402 = vunpack.c.l.b16 %v51
    %v403 = vunpack.c.h.b16 %v51
    %v404 = vunpack.c.l.b16 %v52
    %v405 = vunpack.c.h.b16 %v52
    %v406 = vunpack.c.l.b16 %v53
    %v407 = vunpack.c.h.b16 %v53
    %v408 = vunpack.c.l.b16 %v54
    %v409 = vunpack.c.h.b16 %v54
    %v410 = vunpack.c.l.b16 %v55
    %v411 = vunpack.c.h.b16 %v55
    %v412 = vunpack.c.l.b16 %v56
    %v413 = vunpack.c.h.b16 %v56
    %v414 = vunpack.c.l.b16 %v57
    %v415 = vunpack.c.h.b16 %v57
    %v416 = vunpack.c.l.b16 %v58
    %v417 = vunpack.c.h.b16 %v58
    %v418 = vunpack.c.l.b16 %v59
    %v419 = vunpack.c.h.b16 %v59
    %v420 = vunpack.c.l.b16 %v60
    %v421 = vunpack.c.h.b16 %v60
    %v422 = vunpack.c.l.b16 %v61
    %v423 = vunpack.c.h.b16 %v61
    %v424 = vunpack.c.l.b16 %v62
    %v425 = vunpack.c.h.b16 %v62
    %v426 = vunpack.c.l.b16 %v63
    %v427 = vunpack.c.h.b16 %v63
    %v428 = vunpack.c.l.b16 %v64
    %v429 = vunpack.c.h.b16 %v64
    %v430 = vunpack.c.l.b16 %v65
    %v431 = vunpack.c.h.b16 %v65
    %v432 = vunpack.c.l.b16 %v66
    %v433 = vunpack.c.h.b16 %v66
    %v434 = vunpack.c.l.b16 %v67
    %v435 = vunpack.c.h.b16 %v67
    %v436 = vunpack.c.l.b16 %v68
    %v437 = vunpack.c.h.b16 %v68
    %v438 = vunpack.c.l.b16 %v69
    %v439 = vunpack.c.h.b16 %v69
    %v440 = vunpack.c.l.b16 %v70
    %v441 = vunpack.c.h.b16 %v70
    %v442 = vunpack.c.l.b16 %v71
    %v443 = vunpack.c.h.b16 %v71
    %v444 = vunpack.c.l.b16 %v72
    %v445 = vunpack.c.h.b16 %v72
    %v446 = vunpack.c.l.b16 %v73
    %v447 = vunpack.c.h.b16 %v73
    %v448 = vunpack.c.l.b16 %v74
    %v449 = vunpack.c.h.b16 %v74
    %v450 = vunpack.c.l.b16 %v75
    %v451 = vunpack.c.h.b16 %v75
    %v452 = vunpack.c.l.b16 %v76
    %v453 = vunpack.c.h.b16 %v76
    %v454 = vunpack.c.l.b16 %v77
    %v455 = vunpack.c.h.b16 %v77
    %v456 = vunpack.c.l.b16 %v78
    %v457 = vunpack.c.h.b16 %v78
    %v458 = vunpack.c.l.b16 %v79
    %v459 = vunpack.c.h.b16 %v79
    %v460 = vunpack.c.l.b16 %v80
    %v461 = vunpack.c.h.b16 %v80
    %v462 = vunpack.c.l.b16 %v81
    %v463 = vunpack.c.h.b16 %v81
    %v464 = vunpack.c.l.b16 %v82
    %v465 = vunpack.c.h.b16 %v82
    %v466 = vunpack.c.l.b16 %v83
    %v467 = vunpack.c.h.b16 %v83
    %v468 = vunpack.c.l.b16 %v84
    %v469 = vunpack.c.h.b16 %v84
    %v470 = vunpack.c.l.b16 %v85
    %v471 = vunpack.c.h.b16 %v85
    %v472 = vunpack.c.l.b16 %v86
    %v473 = vunpack.c.h.b16 %v86
    %v474 = vunpack.c.l.b16 %v87
    %v475 = vunpack.c.h.b16 %v87
    %v476 = vunpack.c.l.b16 %v88
    %v477 = vunpack.c.h.b16 %v88
    %v478 = vunpack.c.l.b16 %v89
    %v479 = vunpack.c.h.b16 %v89
    %v480 = vunpack.c.l.b16 %v90
    %v481 = vunpack.c.h.b16 %v90
    %v482 = vunpack.c.l.b16 %v91
    %v483 = vunpack.c.h.b16 %v91
    %v484 = vunpack.c.l.b16 %v92
    %v485 = vunpack.c.h.b16 %v92
    %v486 = vunpack.c.l.b16 %v93
    %v487 = vunpack.c.h.b16 %v93
    %v488 = vunpack.c.l.b16 %v94
    %v489 = vunpack.c.h.b16 %v94
    %v490 = vunpack.c.l.b16 %v95
    %v491 = vunpack.c.h.b16 %v95
    %v492 = vunpack.c.l.b16 %v96
    %v493 = vunpack.c.h.b16 %v96
    %v494 = vunpack.c.l.b16 %v97
    %v495 = vunpack.c.h.b16 %v97
    %v496 = vunpack.c.l.b16 %v98
    %v497 = vunpack.c.h.b16 %v98
    %v498 = vunpack.c.l.b16 %v99
    %v499 = vunpack.c.h.b16 %v99
    %v500 = vunpack.c.l.b16 %v100
    %v501 = vunpack.c.h.b16 %v100
    %v502 = vunpack.c.l.b16 %v101
    %v503 = vunpack.c.h.b16 %v101
    %v504 = vunpack.c.l.b16 %v102
    %v505 = vunpack.c.h.b16 %v102
    %v506 = vunpack.c.l.b16 %v103
    %v507 = vunpack.c.h.b16 %v103
    %v508 = vunpack.c.l.b16 %v104
    %v509 = vunpack.c.h.b16 %v104
    %v510 = vunpack.c.l.b16 %v105
    %v511 = vunpack.c.h.b16 %v105
    %v512 = vunpack.c.l.b16 %v106
    %v513 = vunpack.c.h.b16 %v106
    %v514 = vunpack.c.l.b16 %v107
    %v515 = vunpack.c.h.b16 %v107
    %v516 = vunpack.c.l.b16 %v108
    %v517 = vunpack.c.h.b16 %v108
    %v518 = vunpack.c.l.b16 %v109
    %v519 = vunpack.c.h.b16 %v109
    %v520 = vunpack.c.l.b16 %v110
    %v521 = vunpack.c.h.b16 %v110
    %v522 = vunpack.c.l.b16 %v111
    %v523 = vunpack.c.h.b16 %v111
    %v524 = vunpack.c.l.b16 %v112
    %v525 = vunpack.c.h.b16 %v112
    %v526 = vunpack.c.l.b16 %v113
    %v527 = vunpack.c.h.b16 %v113
    %v528 = vunpack.c.l.b16 %v114
    %v529 = vunpack.c.h.b16 %v114
    %v530 = vunpack.c.l.b16 %v115
    %v531 = vunpack.c.h.b16 %v115
    %v532 = vunpack.c.l.b16 %v116
    %v533 = vunpack.c.h.b16 %v116
    %v534 = vunpack.c.l.b16 %v117
    %v535 = vunpack.c.h.b16 %v117
    %v536 = vunpack.c.l.b16 %v118
    %v537 = vunpack.c.h.b16 %v118
    %v538 = vunpack.c.l.b16 %v119
    %v539 = vunpack.c.h.b16 %v119
    %v540 = vunpack.c.l.b16 %v120
    %v541 = vunpack.c.h.b16 %v120
    %v542 = vunpack.c.l.b16 %v121
    %v543 = vunpack.c.h.b16 %v121
    %v544 = vunpack.c.l.b16 %v122
    %v545 = vunpack.c.h.b16 %v122
    %v546 = vunpack.c.l.b16 %v123
    %v547 = vunpack.c.h.b16 %v123
    %v548 = vunpack.c.l.b16 %v124
    %v549 = vunpack.c.h.b16 %v124
    %v550 = vunpack.c.l.b16 %v125
    %v551 = vunpack.c.h.b16 %v125
    %v552 = vunpack.c.l.b16 %v126
    %v553 = vunpack.c.h.b16 %v126
    %v554 = vunpack.c.l.b16 %v127
    %v555 = vunpack.c.h.b16 %v127
    %v556 = vunpack.c.l.b16 %v128
    %v557 = vunpack.c.h.b16 %v128
    %v558 = vunpack.c.l.b16 %v129
    %v559 = vunpack.c.h.b16 %v129
    %v560 = vunpack.c.l.b16 %v130
    %v561 = vunpack.c.h.b16 %v130
    %v562 = vunpack.c.l.b16 %v131
    %v563 = vunpack.c.h.b16 %v131
    %v564 = vunpack.c.l.b16 %v132
    %v565 = vunpack.c.h.b16 %v132
    %v566 = vunpack.c.l.b16 %v133
    %v567 = vunpack.c.h.b16 %v133
    %v568 = vunpack.c.l.b16 %v134
    %v569 = vunpack.c.h.b16 %v134
    %v570 = vunpack.c.l.b16 %v135
    %v571 = vunpack.c.h.b16 %v135
    %v572 = vunpack.c.l.b16 %v136
    %v573 = vunpack.c.h.b16 %v136
    %v574 = vunpack.c.l.b16 %v137
    %v575 = vunpack.c.h.b16 %v137
    %v576 = vunpack.c.l.b16 %v138
    %v577 = vunpack.c.h.b16 %v138
    %v578 = vunpack.c.l.b16 %v139
    %v579 = vunpack.c.h.b16 %v139
    %v580 = vunpack.c.l.b16 %v140
    %v581 = vunpack.c.h.b16 %v140
    %v582 = vunpack.c.l.b16 %v141
    %v583 = vunpack.c.h.b16 %v141
    %v584 = vunpack.c.l.b16 %v142
    %v585 = vunpack.c.h.b16 %v142
    %v586 = vunpack.c.l.b16 %v143
    %v587 = vunpack.c.h.b16 %v143
    %v588 = vunpack.c.l.b16 %v144
    %v589 = vunpack.c.h.b16 %v144
    %v590 = vunpack.c.l.b16 %v145
    %v591 = vunpack.c.h.b16 %v145
    %v592 = vunpack.c.l.b16 %v146
    %v593 = vunpack.c.h.b16 %v146
    %v594 = vunpack.c.l.b16 %v147
    %v595 = vunpack.c.h.b16 %v147
    %v596 = vunpack.c.l.b16 %v148
    %v597 = vunpack.c.h.b16 %v148
    %v598 = vunpack.c.l.b16 %v149
    %v599 = vunpack.c.h.b16 %v149
    %v600 = vunpack.c.l.b16 %v150
    %v601 = vunpack.c.h.b16 %v150
    %v602 = vunpack.c.l.b16 %v151
    %v603 = vunpack.c.h.b16 %v151
    %v604 = vunpack.c.l.b16 %v152
    %v605 = vunpack.c.h.b16 %v152
    %v606 = vunpack.c.l.b16 %v153
    %v607 = vunpack.c.h.b16 %v153
    %v608 = vunpack.c.l.b16 %v154
    %v609 = vunpack.c.h.b16 %v154
    %v610 = vunpack.c.l.b16 %v155
    %v611 = vunpack.c.h.b16 %v155
    %v612 = vunpack.c.l.b16 %v156
    %v613 = vunpack.c.h.b16 %v156
    %v614 = vunpack.c.l.b16 %v157
    %v615 = vunpack.c.h.b16 %v157
    %v616 = vunpack.c.l.b16 %v158
    %v617 = vunpack.c.h.b16 %v158
    %v618 = vunpack.c.l.b16 %v159
    %v619 = vunpack.c.h.b16 %v159
    %v620 = vunpack.c.l.b16 %v160
    %v621 = vunpack.c.h.b16 %v160
    %v622 = vunpack.c.l.b16 %v161
    %v623 = vunpack.c.h.b16 %v161
    %v624 = vunpack.c.l.b16 %v162
    %v625 = vunpack.c.h.b16 %v162
    %v626 = vunpack.c.l.b16 %v163
    %v627 = vunpack.c.h.b16 %v163
    %v628 = vunpack.c.l.b16 %v164
    %v629 = vunpack.c.h.b16 %v164
    %v630 = vunpack.c.l.b16 %v165
    %v631 = vunpack.c.h.b16 %v165
    %v632 = vunpack.c.l.b16 %v166
    %v633 = vunpack.c.h.b16 %v166
    %v634 = vunpack.c.l.b16 %v167
    %v635 = vunpack.c.h.b16 %v167
    %v636 = vunpack.c.l.b16 %v168
    %v637 = vunpack.c.h.b16 %v168
    %v638 = vunpack.c.l.b16 %v169
    %v639 = vunpack.c.h.b16 %v169
    %v640 = vunpack.c.l.b16 %v170
    %v641 = vunpack.c.h.b16 %v170
    %v642 = vunpack.c.l.b16 %v171
    %v643 = vunpack.c.h.b16 %v171
    %v644 = vunpack.c.l.b16 %v172
    %v645 = vunpack.c.h.b16 %v172
    %v646 = vunpack.c.l.b16 %v173
    %v647 = vunpack.c.h.b16 %v173
    %v648 = vunpack.c.l.b16 %v174
    %v649 = vunpack.c.h.b16 %v174
    %v650 = vunpack.c.l.b16 %v175
    %v651 = vunpack.c.h.b16 %v175
    %v652 = vpack.c.b16 %v366, %v364
    %v653 = vpack.c.b16 %v367, %v365
    %v654 = vpack.c.b16 %v370, %v368
    %v655 = vpack.c.b16 %v371, %v369
    %v656 = vpack.c.b16 %v374, %v372
    %v657 = vpack.c.b16 %v375, %v373
    %v658 = vpack.c.b16 %v378, %v376
    %v659 = vpack.c.b16 %v379, %v377
    %v660 = vpack.c.b16 %v382, %v380
    %v661 = vpack.c.b16 %v383, %v381
    %v662 = vpack.c.b16 %v386, %v384
    %v663 = vpack.c.b16 %v387, %v385
    %v664 = vpack.c.b16 %v390, %v388
    %v665 = vpack.c.b16 %v391, %v389
    %v666 = vpack.c.b16 %v394, %v392
    %v667 = vpack.c.b16 %v395, %v393
    %v668 = vpack.c.b16 %v398, %v396
    %v669 = vpack.c.b16 %v399, %v397
    %v670 = vpack.c.b16 %v402, %v400
    %v671 = vpack.c.b16 %v403, %v401
    %v672 = vpack.c.b16 %v406, %v404
    %v673 = vpack.c.b16 %v407, %v405
    %v674 = vpack.c.b16 %v410, %v408
    %v675 = vpack.c.b16 %v411, %v409
    %v676 = vpack.c.b16 %v414, %v412
    %v677 = vpack.c.b16 %v415, %v413
    %v678 = vpack.c.b16 %v418, %v416
    %v679 = vpack.c.b16 %v419, %v417
    %v680 = vpack.c.b16 %v422, %v420
    %v681 = vpack.c.b16 %v423, %v421
    %v682 = vpack.c.b16 %v426, %v424
    %v683 = vpack.c.b16 %v427, %v425
    %v684 = vpack.c.b16 %v430, %v428
    %v685 = vpack.c.b16 %v431, %v429
    %v686 = vpack.c.b16 %v434, %v432
    %v687 = vpack.c.b16 %v435, %v433
    %v688 = vpack.c.b16 %v438, %v436
    %v689 = vpack.c.b16 %v439, %v437
    %v690 = vpack.c.b16 %v442, %v440
    %v691 = vpack.c.b16 %v443, %v441
    %v692 = vpack.c.b16 %v446, %v444
    %v693 = vpack.c.b16 %v447, %v445
    %v694 = vpack.c.b16 %v450, %v448
    %v695 = vpack.c.b16 %v451, %v449
    %v696 = vpack.c.b16 %v454, %v452
    %v697 = vpack.c.b16 %v455, %v453
    %v698 = vpack.c.b16 %v458, %v456
    %v699 = vpack.c.b16 %v459, %v457
    %v700 = vpack.c.b16 %v462, %v460
    %v701 = vpack.c.b16 %v463, %v461
    %v702 = vpack.c.b16 %v466, %v464
    %v703 = vpack.c.b16 %v467, %v465
    %v704 = vpack.c.b16 %v470, %v468
    %v705 = vpack.c.b16 %v471, %v469
    %v706 = vpack.c.b16 %v474, %v472
    %v707 = vpack.c.b16 %v475, %v473
    %v708 = vpack.c.b16 %v478, %v476
    %v709 = vpack.c.b16 %v479, %v477
    %v710 = vpack.c.b16 %v482, %v480
    %v711 = vpack.c.b16 %v483, %v481
    %v712 = vpack.c.b16 %v486, %v484
    %v713 = vpack.c.b16 %v487, %v485
    %v714 = vpack.c.b16 %v490, %v488
    %v715 = vpack.c.b16 %v491, %v489
    %v716 = vpack.c.b16 %v494, %v492
    %v717 = vpack.c.b16 %v495, %v493
    %v718 = vpack.c.b16 %v498, %v496
    %v719 = vpack.c.b16 %v499, %v497
    %v720 = vpack.c.b16 %v502, %v500
    %v721 = vpack.c.b16 %v503, %v501
    %v722 = vpack.c.b16 %v506, %v504
    %v723 = vpack.c.b16 %v507, %v505
    %v724 = vpack.c.b16 %v510, %v508
    %v725 = vpack.c.b16 %v511, %v509
    %v726 = vpack.c.b16 %v514, %v512
    %v727 = vpack.c.b16 %v515, %v513
    %v728 = vpack.c.b16 %v518, %v516
    %v729 = vpack.c.b16 %v519, %v517
    %v730 = vpack.c.b16 %v522, %v520
    %v731 = vpack.c.b16 %v523, %v521
    %v732 = vpack.c.b16 %v526, %v524
    %v733 = vpack.c.b16 %v527, %v525
    %v734 = vpack.c.b16 %v530, %v528
    %v735 = vpack.c.b16 %v531, %v529
    %v736 = vpack.c.b16 %v534, %v532
    %v737 = vpack.c.b16 %v535, %v533
    %v738 = vpack.c.b16 %v538, %v536
    %v739 = vpack.c.b16 %v539, %v537
    %v740 = vpack.c.b16 %v542, %v540
    %v741 = vpack.c.b16 %v543, %v541
    %v742 = vpack.c.b16 %v546, %v544
    %v743 = vpack.c.b16 %v547, %v545
    %v744 = vpack.c.b16 %v550, %v548
    %v745 = vpack.c.b16 %v551, %v549
    %v746 = vpack.c.b16 %v554, %v552
    %v747 = vpack.c.b16 %v555, %v553
    %v748 = vpack.c.b16 %v558, %v556
    %v749 = vpack.c.b16 %v559, %v557
    %v750 = vpack.c.b16 %v562, %v560
    %v751 = vpack.c.b16 %v563, %v561
    %v752 = vpack.c.b16 %v566, %v564
    %v753 = vpack.c.b16 %v567, %v565
    %v754 = vpack.c.b16 %v570, %v568
    %v755 = vpack.c.b16 %v571, %v569
    %v756 = vpack.c.b16 %v574, %v572
    %v757 = vpack.c.b16 %v575, %v573
    %v758 = vpack.c.b16 %v578, %v576
    %v759 = vpack.c.b16 %v579, %v577
    %v760 = vpack.c.b16 %v582, %v580
    %v761 = vpack.c.b16 %v583, %v581
    %v762 = vpack.c.b16 %v586, %v584
    %v763 = vpack.c.b16 %v587, %v585
    %v764 = vpack.c.b16 %v590, %v588
    %v765 = vpack.c.b16 %v591, %v589
    %v766 = vpack.c.b16 %v594, %v592
    %v767 = vpack.c.b16 %v595, %v593
    %v768 = vpack.c.b16 %v598, %v596
    %v769 = vpack.c.b16 %v599, %v597
    %v770 = vpack.c.b16 %v602, %v600
    %v771 = vpack.c.b16 %v603, %v601
    %v772 = vpack.c.b16 %v606, %v604
    %v773 = vpack.c.b16 %v607, %v605
    %v774 = vpack.c.b16 %v610, %v608
    %v775 = vpack.c.b16 %v611, %v609
    %v776 = vpack.c.b16 %v614, %v612
    %v777 = vpack.c.b16 %v615, %v613
    %v778 = vpack.c.b16 %v618, %v616
    %v779 = vpack.c.b16 %v619, %v617
    %v780 = vpack.c.b16 %v622, %v620
    %v781 = vpack.c.b16 %v623, %v621
    %v782 = vpack.c.b16 %v626, %v624
    %v783 = vpack.c.b16 %v627, %v625
    %v784 = vpack.c.b16 %v630, %v628
    %v785 = vpack.c.b16 %v631, %v629
    %v786 = vpack.c.b16 %v634, %v632
    %v787 = vpack.c.b16 %v635, %v633
    %v788 = vpack.c.b16 %v638, %v636
    %v789 = vpack.c.b16 %v639, %v637
    %v790 = vpack.c.b16 %v642, %v640
    %v791 = vpack.c.b16 %v643, %v641
    %v792 = vpack.c.b16 %v646, %v644
    %v793 = vpack.c.b16 %v647, %v645
    %v794 = vpack.c.b16 %v650, %v648
    %v795 = vpack.c.b16 %v651, %v649
    %940 = vmatprep.subr.bf16.mxu0 %v653
    %941 = vmatpush1.bf16.msra.mxu0 %v652
    %942 = vmatprep.subr.bf16.mxu0 %v655
    %943 = vmatpush1.bf16.msra.mxu0 %v654
    %944 = vmatprep.subr.bf16.mxu0 %v657
    %945 = vmatpush1.bf16.msra.mxu0 %v656
    %946 = vmatprep.subr.bf16.mxu0 %v659
    %947 = vmatpush1.bf16.msra.mxu0 %v658
    %948 = vmatprep.subr.bf16.mxu0 %v661
    %949 = vmatpush1.bf16.msra.mxu0 %v660
    %950 = vmatprep.subr.bf16.mxu0 %v663
    %951 = vmatpush1.bf16.msra.mxu0 %v662
    %952 = vmatprep.subr.bf16.mxu0 %v665
    %953 = vmatpush1.bf16.msra.mxu0 %v664
    %954 = vmatprep.subr.bf16.mxu0 %v667
    %955 = vmatpush1.bf16.msra.mxu0 %v666
    %956 = vmatprep.subr.bf16.mxu0 %v669
    %957 = vmatpush1.bf16.msra.mxu0 %v668
    %958 = vmatprep.subr.bf16.mxu0 %v671
    %959 = vmatpush1.bf16.msra.mxu0 %v670
    %960 = vmatprep.subr.bf16.mxu0 %v673
    %961 = vmatpush1.bf16.msra.mxu0 %v672
    %962 = vmatprep.subr.bf16.mxu0 %v675
    %963 = vmatpush1.bf16.msra.mxu0 %v674
    %964 = vmatprep.subr.bf16.mxu0 %v677
    %965 = vmatpush1.bf16.msra.mxu0 %v676
    %966 = vmatprep.subr.bf16.mxu0 %v679
    %967 = vmatpush1.bf16.msra.mxu0 %v678
    %968 = vmatprep.subr.bf16.mxu0 %v681
    %969 = vmatpush1.bf16.msra.mxu0 %v680
    %970 = vmatprep.subr.bf16.mxu0 %v683
    %971 = vmatpush1.bf16.msra.mxu0 %v682
    %972 = vmatprep.mubr.bf16.mxu0 %v203
    %973 = vmatmul.mubr.bf16.gmra.mrb[0].mxu0 %v202
    %v974 = vpop.f32.mrb[0].mxu0
    %v975 = vadd.f32 %v181, %v974
    %v976 = vpop.f32.mrb[0].mxu0
    %v977 = vadd.f32 %v185, %v976
    %v978 = vpop.f32.mrb[0].mxu0
    %v979 = vpop.f32.mrb[0].mxu0
    %980 = vdwg.mxu0
    %981 = vmatprep.subr.bf16.mxu0 %v685
    %982 = vmatpush1.bf16.msra.mxu0 %v684
    %983 = vmatprep.subr.bf16.mxu0 %v687
    %984 = vmatpush1.bf16.msra.mxu0 %v686
    %985 = vmatprep.subr.bf16.mxu0 %v689
    %986 = vmatpush1.bf16.msra.mxu0 %v688
    %987 = vmatprep.subr.bf16.mxu0 %v691
    %988 = vmatpush1.bf16.msra.mxu0 %v690
    %989 = vmatprep.subr.bf16.mxu0 %v693
    %990 = vmatpush1.bf16.msra.mxu0 %v692
    %991 = vmatprep.subr.bf16.mxu0 %v695
    %992 = vmatpush1.bf16.msra.mxu0 %v694
    %993 = vmatprep.subr.bf16.mxu0 %v697
    %994 = vmatpush1.bf16.msra.mxu0 %v696
    %995 = vmatprep.subr.bf16.mxu0 %v699
    %996 = vmatpush1.bf16.msra.mxu0 %v698
    %997 = vmatprep.subr.bf16.mxu0 %v701
    %998 = vmatpush1.bf16.msra.mxu0 %v700
    %999 = vmatprep.subr.bf16.mxu0 %v703
    %1000 = vmatpush1.bf16.msra.mxu0 %v702
    %1001 = vmatprep.subr.bf16.mxu0 %v705
    %1002 = vmatpush1.bf16.msra.mxu0 %v704
    %1003 = vmatprep.subr.bf16.mxu0 %v707
    %1004 = vmatpush1.bf16.msra.mxu0 %v706
    %1005 = vmatprep.subr.bf16.mxu0 %v709
    %1006 = vmatpush1.bf16.msra.mxu0 %v708
    %1007 = vmatprep.subr.bf16.mxu0 %v711
    %1008 = vmatpush1.bf16.msra.mxu0 %v710
    %1009 = vmatprep.subr.bf16.mxu0 %v713
    %1010 = vmatpush1.bf16.msra.mxu0 %v712
    %1011 = vmatprep.subr.bf16.mxu0 %v715
    %1012 = vmatpush1.bf16.msra.mxu0 %v714
    %1013 = vmatprep.mubr.bf16.mxu0 %v205
    %1014 = vmatmul.mubr.bf16.gmra.mrb[0].mxu0 %v204
    %v1015 = vpop.f32.mrb[0].mxu0
    %v1016 = vadd.f32 %v975, %v1015
    %v1017 = vpop.f32.mrb[0].mxu0
    %v1018 = vadd.f32 %v977, %v1017
    %v1019 = vpop.f32.mrb[0].mxu0
    %v1020 = vpop.f32.mrb[0].mxu0
    %1021 = vdwg.mxu0
    %1022 = vmatprep.subr.bf16.mxu0 %v717
    %1023 = vmatpush1.bf16.msra.mxu0 %v716
    %1024 = vmatprep.subr.bf16.mxu0 %v719
    %1025 = vmatpush1.bf16.msra.mxu0 %v718
    %1026 = vmatprep.subr.bf16.mxu0 %v721
    %1027 = vmatpush1.bf16.msra.mxu0 %v720
    %1028 = vmatprep.subr.bf16.mxu0 %v723
    %1029 = vmatpush1.bf16.msra.mxu0 %v722
    %1030 = vmatprep.subr.bf16.mxu0 %v725
    %1031 = vmatpush1.bf16.msra.mxu0 %v724
    %1032 = vmatprep.subr.bf16.mxu0 %v727
    %1033 = vmatpush1.bf16.msra.mxu0 %v726
    %1034 = vmatprep.subr.bf16.mxu0 %v729
    %1035 = vmatpush1.bf16.msra.mxu0 %v728
    %1036 = vmatprep.subr.bf16.mxu0 %v731
    %1037 = vmatpush1.bf16.msra.mxu0 %v730
    %1038 = vmatprep.subr.bf16.mxu0 %v733
    %1039 = vmatpush1.bf16.msra.mxu0 %v732
    %1040 = vmatprep.subr.bf16.mxu0 %v735
    %1041 = vmatpush1.bf16.msra.mxu0 %v734
    %1042 = vmatprep.subr.bf16.mxu0 %v737
    %1043 = vmatpush1.bf16.msra.mxu0 %v736
    %1044 = vmatprep.subr.bf16.mxu0 %v739
    %1045 = vmatpush1.bf16.msra.mxu0 %v738
    %1046 = vmatprep.subr.bf16.mxu0 %v741
    %1047 = vmatpush1.bf16.msra.mxu0 %v740
    %1048 = vmatprep.subr.bf16.mxu0 %v743
    %1049 = vmatpush1.bf16.msra.mxu0 %v742
    %1050 = vmatprep.subr.bf16.mxu0 %v745
    %1051 = vmatpush1.bf16.msra.mxu0 %v744
    %1052 = vmatprep.subr.bf16.mxu0 %v747
    %1053 = vmatpush1.bf16.msra.mxu0 %v746
    %1054 = vmatprep.mubr.bf16.mxu0 %v207
    %1055 = vmatmul.mubr.bf16.gmra.mrb[0].mxu0 %v206
    %v1056 = vpop.f32.mrb[0].mxu0
    %v1057 = vadd.f32 %v1016, %v1056
    %v1058 = vpop.f32.mrb[0].mxu0
    %v1059 = vadd.f32 %v1018, %v1058
    %v1060 = vpop.f32.mrb[0].mxu0
    %v1061 = vpop.f32.mrb[0].mxu0
    %1062 = vdwg.mxu0
    %1063 = vmatprep.subr.bf16.mxu0 %v749
    %1064 = vmatpush1.bf16.msra.mxu0 %v748
    %1065 = vmatprep.subr.bf16.mxu0 %v751
    %1066 = vmatpush1.bf16.msra.mxu0 %v750
    %1067 = vmatprep.subr.bf16.mxu0 %v753
    %1068 = vmatpush1.bf16.msra.mxu0 %v752
    %1069 = vmatprep.subr.bf16.mxu0 %v755
    %1070 = vmatpush1.bf16.msra.mxu0 %v754
    %1071 = vmatprep.subr.bf16.mxu0 %v757
    %1072 = vmatpush1.bf16.msra.mxu0 %v756
    %1073 = vmatprep.subr.bf16.mxu0 %v759
    %1074 = vmatpush1.bf16.msra.mxu0 %v758
    %1075 = vmatprep.subr.bf16.mxu0 %v761
    %1076 = vmatpush1.bf16.msra.mxu0 %v760
    %1077 = vmatprep.subr.bf16.mxu0 %v763
    %1078 = vmatpush1.bf16.msra.mxu0 %v762
    %1079 = vmatprep.subr.bf16.mxu0 %v765
    %1080 = vmatpush1.bf16.msra.mxu0 %v764
    %1081 = vmatprep.subr.bf16.mxu0 %v767
    %1082 = vmatpush1.bf16.msra.mxu0 %v766
    %1083 = vmatprep.subr.bf16.mxu0 %v769
    %1084 = vmatpush1.bf16.msra.mxu0 %v768
    %1085 = vmatprep.subr.bf16.mxu0 %v771
    %1086 = vmatpush1.bf16.msra.mxu0 %v770
    %1087 = vmatprep.subr.bf16.mxu0 %v773
    %1088 = vmatpush1.bf16.msra.mxu0 %v772
    %1089 = vmatprep.subr.bf16.mxu0 %v775
    %1090 = vmatpush1.bf16.msra.mxu0 %v774
    %1091 = vmatprep.subr.bf16.mxu0 %v777
    %1092 = vmatpush1.bf16.msra.mxu0 %v776
    %1093 = vmatprep.subr.bf16.mxu0 %v779
    %1094 = vmatpush1.bf16.msra.mxu0 %v778
    %1095 = vmatprep.mubr.bf16.mxu0 %v209
    %1096 = vmatmul.mubr.bf16.gmra.mrb[0].mxu0 %v208
    %v1097 = vpop.f32.mrb[0].mxu0
    %v1098 = vadd.f32 %v1057, %v1097
    %v1099 = vpop.f32.mrb[0].mxu0
    %v1100 = vadd.f32 %v1059, %v1099
    %v1101 = vpop.f32.mrb[0].mxu0
    %v1102 = vpop.f32.mrb[0].mxu0
    %1103 = vdwg.mxu0
    %1104 = vmatprep.subr.bf16.mxu0 %v781
    %1105 = vmatpush1.bf16.msra.mxu0 %v780
    %1106 = vmatprep.subr.bf16.mxu0 %v783
    %1107 = vmatpush1.bf16.msra.mxu0 %v782
    %1108 = vmatprep.subr.bf16.mxu0 %v785
    %1109 = vmatpush1.bf16.msra.mxu0 %v784
    %1110 = vmatprep.subr.bf16.mxu0 %v787
    %1111 = vmatpush1.bf16.msra.mxu0 %v786
    %1112 = vmatprep.subr.bf16.mxu0 %v789
    %1113 = vmatpush1.bf16.msra.mxu0 %v788
    %1114 = vmatprep.subr.bf16.mxu0 %v791
    %1115 = vmatpush1.bf16.msra.mxu0 %v790
    %1116 = vmatprep.subr.bf16.mxu0 %v793
    %1117 = vmatpush1.bf16.msra.mxu0 %v792
    %1118 = vmatprep.subr.bf16.mxu0 %v795
    %1119 = vmatpush1.bf16.msra.mxu0 %v794
    %1120 = vmatprep.subr.bf16.mxu0 0
    %1121 = vmatpush1.bf16.msra.mxu0 0
    %1122 = vmatprep.subr.bf16.mxu0 0
    %1123 = vmatpush1.bf16.msra.mxu0 0
    %1124 = vmatprep.subr.bf16.mxu0 0
    %1125 = vmatpush1.bf16.msra.mxu0 0
    %1126 = vmatprep.subr.bf16.mxu0 0
    %1127 = vmatpush1.bf16.msra.mxu0 0
    %1128 = vmatprep.subr.bf16.mxu0 0
    %1129 = vmatpush1.bf16.msra.mxu0 0
    %1130 = vmatprep.subr.bf16.mxu0 0
    %1131 = vmatpush1.bf16.msra.mxu0 0
    %1132 = vmatprep.subr.bf16.mxu0 0
    %1133 = vmatpush1.bf16.msra.mxu0 0
    %1134 = vmatprep.subr.bf16.mxu0 0
    %1135 = vmatpush1.bf16.msra.mxu0 0
    %1136 = vmatprep.mubr.bf16.mxu0 0
    %1137 = vmatmul.mubr.bf16.gmra.mrb[0].mxu0 %v210
    %v1138 = vpop.f32.mrb[0].mxu0
    %v1139 = vadd.f32 %v1098, %v1138
    %v1140 = vpop.f32.mrb[0].mxu0
    %v1141 = vadd.f32 %v1100, %v1140
    %v1142 = vpop.f32.mrb[0].mxu0
    %v1143 = vpop.f32.mrb[0].mxu0
    %1144 = vdwg.mxu0
    %vm1145 = vcmp.gt.f32.partialorder %v1139, 0.0
    %vm1146 = vcmp.gt.f32.partialorder %v1141, 0.0
    %v1147 = vmul.f32 %v1139, 0.01
    %v1148 = vmul.f32 %v1141, 0.01
    %v1149 = vsel %vm1145, %v1139, %v1147
    %v1150 = vsel %vm1146, %v1141, %v1148
    %1151 = vst [vmem:[%s3] sm:$0xff] %v1149
    %1152 = vst [vmem:[%s3 + $0x8] sm:$0xff] %v1150
    // Predicated region
    $region18: #{forward.15} parent=1 // pred_check
      _
    $region19: #{forward.15} parent=1 // pred_check_branch
      %1154 = sbr.rel (0) target = $region21
    $region20: #{forward.15} parent=1 // pred_region
      _
    $region21: #{forward.15} parent=1 // pred_fallthru
      _
    // Predicated region
    $region22: #{forward.15} parent=1 // pred_check
      _
    $region23: #{forward.15} parent=1 // pred_check_branch
      %1156 = sbr.rel (0) target = $region25
    $region24: #{forward.15} parent=1 // pred_region
      _
    $region25: #{forward.15} parent=1 // pred_fallthru
      _
    %1157 = vsyncpa [#allocation3], 1

// kernel: forward.16
$region0: #{forward.16}
  #allocation0 [shape = 'u32[]', space=smem, size = 0x4, offset = 0x4, fixed_abs, tag = 'smem constant byte address 0x4 - core index']
  #allocation1 [shape = 'u32[144,128]{1,0:T(1,128)}', space=vmem, size = 0x12000, scoped, tag = 'internal scratch']
  %s0 = inlined_call_operand.vmem [shape: bf16[8,1024], index: 0, kind: input, shape index: {}]
  %s1 = inlined_call_operand.vmem [shape: bf16[1024,1024], index: 1, kind: input, shape index: {}]
  %s2 = inlined_call_operand.vmem [shape: f32[1,1024], index: 2, kind: input, shape index: {}]
  %s3 = inlined_call_operand.vmem [shape: f32[8,1024], index: 3, kind: output, shape index: {}]
  %s4 = sld [smem:[#allocation0]]
  $region83: #{forward.16} parent=0
    _
  %s6 = ssub.s32 1, %s4
  %s7 = scalar_select 0, %s6, %s4
  $region1: #{forward.16} parent=0
    #allocation2 [shape = 'u8[1048576]{0}', space=vmem, size = 0x100000, scoped, tag = 'input window, operand 1']
    loop: start=0, step=1, limit=6
    $region2: #{forward.16} parent=1 // loop_pre_header
      _
    $region3: #{forward.16} parent=1 // loop_header
      %s9 = sphi 0, %s13
      %p10 = scmp.ge.s32.totalorder %s9, 6
      %s16 = sphi 0, %s28
      %s17 = sphi 0, %s24
      %s18 = sphi 0, %s16
      %s19 = sphi 0, %s17
      %s20 = sphi 0, %s18
      %s21 = sphi 0, %s19
      %s31 = sphi 0, %s33
      %s34 = sphi 0, %s31
      %s35 = sphi 0, %s34
      %s51 = sphi 0, %s35
      %s57 = sphi 0, %s59
      %s60 = sphi 0, %s57
      %s61 = sphi 0, %s60
      %s77 = sphi 0, %s61
      %s83 = sphi 0, %s85
      %s86 = sphi 0, %s83
      %s87 = sphi 0, %s86
      %s103 = sphi 0, %s87
      %s111 = sphi 0, %s113
      %s114 = sphi 0, %s111
      %s115 = sphi 0, %s114
      %s131 = sphi 0, %s115
    $region4: #{forward.16} parent=1 // loop_header_branch
      %12 = sbr.rel (%p10) target = $region8
    $region5: #{forward.16} parent=1 // loop_body
      %s14 = ssub.s32 %s9, 1
      %s15 = ssub.s32 %s9, 2
      %s22 = sadd.s32 1, %s17
      %p23 = scmp.ge.s32.totalorder %s22, 4
      %s24 = scalar_select %p23, 0, %s22
      %s25 = sadd.s32 1, %s16
      %s26 = scalar_select %p23, %s25, %s16
      %p27 = scmp.ge.s32.totalorder %s26, 1
      %s28 = scalar_select %p27, 0, %s26
      %s29 = ssub.s32 %s16, %s28
      %p30 = scmp.eq.s32.totalorder %s29, 0
      %s32 = sadd.s32 %s31, 1
      %s33 = scalar_select %p30, %s31, %s32
      %p36 = pneg %p30
      %p37 = scmp.eq.s32.totalorder %s9, 3
      %p38 = por %p36, %p37
      %p39 = scmp.ne.s32.totalorder %s31, %s34
      %p40 = scmp.eq.s32.totalorder %s9, 0
      %p41 = por %p39, %p40
      %p42 = scmp.ne.s32.totalorder %s31, %s34
      %p43 = scmp.eq.s32.totalorder %s14, 3
      %p44 = por %p42, %p43
      %p45 = scmp.ne.s32.totalorder %s34, %s35
      %p46 = scmp.eq.s32.totalorder %s14, 0
      %p47 = por %p45, %p46
      %p48 = scmp.ne.s32.totalorder %s34, %s35
      %p49 = scmp.eq.s32.totalorder %s15, 3
      %p50 = por %p48, %p49
      %p52 = scmp.ne.s32.totalorder %s35, %s51
      %p53 = scmp.eq.s32.totalorder %s15, 0
      %p54 = por %p52, %p53
      %s55 = ssub.s32 %s17, %s24
      %p56 = scmp.eq.s32.totalorder %s55, 0
      %s58 = sadd.s32 %s57, 1
      %s59 = scalar_select %p56, %s57, %s58
      %p62 = pneg %p56
      %p63 = scmp.eq.s32.totalorder %s9, 3
      %p64 = por %p62, %p63
      %p65 = scmp.ne.s32.totalorder %s57, %s60
      %p66 = scmp.eq.s32.totalorder %s9, 0
      %p67 = por %p65, %p66
      %p68 = scmp.ne.s32.totalorder %s57, %s60
      %p69 = scmp.eq.s32.totalorder %s14, 3
      %p70 = por %p68, %p69
      %p71 = scmp.ne.s32.totalorder %s60, %s61
      %p72 = scmp.eq.s32.totalorder %s14, 0
      %p73 = por %p71, %p72
      %p74 = scmp.ne.s32.totalorder %s60, %s61
      %p75 = scmp.eq.s32.totalorder %s15, 3
      %p76 = por %p74, %p75
      %p78 = scmp.ne.s32.totalorder %s61, %s77
      %p79 = scmp.eq.s32.totalorder %s15, 0
      %p80 = por %p78, %p79
      %s81 = ssub.s32 %s17, %s24
      %p82 = scmp.eq.s32.totalorder %s81, 0
      %s84 = sadd.s32 %s83, 1
      %s85 = scalar_select %p82, %s83, %s84
      %p88 = pneg %p82
      %p89 = scmp.eq.s32.totalorder %s9, 3
      %p90 = por %p88, %p89
      %p91 = scmp.ne.s32.totalorder %s83, %s86
      %p92 = scmp.eq.s32.totalorder %s9, 0
      %p93 = por %p91, %p92
      %p94 = scmp.ne.s32.totalorder %s83, %s86
      %p95 = scmp.eq.s32.totalorder %s14, 3
      %p96 = por %p94, %p95
      %p97 = scmp.ne.s32.totalorder %s86, %s87
      %p98 = scmp.eq.s32.totalorder %s14, 0
      %p99 = por %p97, %p98
      %p100 = scmp.ne.s32.totalorder %s86, %s87
      %p101 = scmp.eq.s32.totalorder %s15, 3
      %p102 = por %p100, %p101
      %p104 = scmp.ne.s32.totalorder %s87, %s103
      %p105 = scmp.eq.s32.totalorder %s15, 0
      %p106 = por %p104, %p105
      %s107 = ssub.s32 %s16, %s28
      %s108 = ssub.s32 %s17, %s24
      %s109 = sor.u32 %s107, %s108
      %p110 = scmp.eq.s32.totalorder %s109, 0
      %s112 = sadd.s32 %s111, 1
      %s113 = scalar_select %p110, %s111, %s112
      %p116 = pneg %p110
      %p117 = scmp.eq.s32.totalorder %s9, 3
      %p118 = por %p116, %p117
      %p119 = scmp.ne.s32.totalorder %s111, %s114
      %p120 = scmp.eq.s32.totalorder %s9, 0
      %p121 = por %p119, %p120
      %p122 = scmp.ne.s32.totalorder %s111, %s114
      %p123 = scmp.eq.s32.totalorder %s14, 3
      %p124 = por %p122, %p123
      %p125 = scmp.ne.s32.totalorder %s114, %s115
      %p126 = scmp.eq.s32.totalorder %s14, 0
      %p127 = por %p125, %p126
      %p128 = scmp.ne.s32.totalorder %s114, %s115
      %p129 = scmp.eq.s32.totalorder %s15, 3
      %p130 = por %p128, %p129
      %p132 = scmp.ne.s32.totalorder %s115, %s131
      %p133 = scmp.eq.s32.totalorder %s15, 0
      %p134 = por %p132, %p133
      %p135 = scmp.le.s32.totalorder 1, %s9
      %p136 = scmp.lt.s32.totalorder %s9, 5
      %p137 = pnand %p135, %p136
      %p138 = pneg %p137
      // Predicated region
      $region9: #{forward.16} parent=5 // pred_check
        _
      $region10: #{forward.16} parent=5 // pred_check_branch
        %140 = sbr.rel (%p137) target = $region12
      $region11: #{forward.16} parent=5 // pred_region
        %s141 = ssub.s32 %s9, 1
        // Predicated region
        $region13: #{forward.16} parent=11 // pred_check
          %p142 = pneg %p47
        $region14: #{forward.16} parent=11 // pred_check_branch
          %144 = sbr.rel (%p142) target = $region16
        $region15: #{forward.16} parent=11 // pred_region
          %p145 = scmp.lt.s32.totalorder %s18, 0
          %s146 = scalar_select %p145, %s18, 0
          %s147 = smul.addr %s146, 8
          %s148 = smul.addr %s147, 4
          %s149 = scalar_lea.vmem %s0, %s148
        $region16: #{forward.16} parent=11 // pred_fallthru
          _
      $region12: #{forward.16} parent=5 // pred_fallthru
        _
      %p150 = scmp.lt.s32.totalorder %s9, 4
      // Predicated region
      $region17: #{forward.16} parent=5 // pred_check
        %p151 = pneg %p150
      $region18: #{forward.16} parent=5 // pred_check_branch
        %153 = sbr.rel (%p151) target = $region20
      $region19: #{forward.16} parent=5 // pred_region
        // Predicated region
        $region21: #{forward.16} parent=19 // pred_check
          %p154 = pneg %p67
        $region22: #{forward.16} parent=19 // pred_check_branch
          %156 = sbr.rel (%p154) target = $region24
        $region23: #{forward.16} parent=19 // pred_region
          %s157 = sand.u32 %s57, 1
          %s158 = sand.u32 %s57, 1
          %s159 = smul.addr %s158, 1024
          %s160 = scalar_lea.vmem [#allocation2], %s159
          %s161 = smul.u32 2, %s17
          %s162 = smul.addr %s161, 4
          %s163 = scalar_lea.vmem %s1, %s162
          // Predicated region
          $region25: #{forward.16} parent=23 // pred_check
            _
          $region26: #{forward.16} parent=23 // pred_check_branch
            %165 = sbr.rel (0) target = $region28
          $region27: #{forward.16} parent=23 // pred_region
            // Predicated region
            $region29: #{forward.16} parent=27 // pred_check
              _
            $region30: #{forward.16} parent=27 // pred_check_branch
              %167 = sbr.rel (0) target = $region32
            $region31: #{forward.16} parent=27 // pred_region
              // Predicated region
              $region44: #{forward.16} parent=31 // pred_check
                _
              $region45: #{forward.16} parent=31 // pred_check_branch
                %436 = sbr.rel (0) target = $region47
              $region46: #{forward.16} parent=31 // pred_region
                loop: start=0, step=1, limit=1
                $region48: #{forward.16} parent=46 // loop_pre_header
                  _
                $region49: #{forward.16} parent=46 // loop_header
                  %s438 = sphi 0, %s442
                  %p439 = scmp.ge.s32.totalorder %s438, 1
                  %s443 = sphi %s163, %s163
                  %s444 = sphi %s160, %s160
                $region50: #{forward.16} parent=46 // loop_header_branch
                  %441 = sbr.rel (%p439) target = $region54
                $region51: #{forward.16} parent=46 // loop_body
                  %v445 = vld [vmem:[%s443] sm:$0xff]
                  %446 = vst [vmem:[%s444] sm:$0xff] %v445
                  %v447 = vld [vmem:[%s443 + $0x20] sm:$0xff]
                  %448 = vst [vmem:[%s444 + $0x8] sm:$0xff] %v447
                  %v449 = vld [vmem:[%s443 + $0x40] sm:$0xff]
                  %450 = vst [vmem:[%s444 + $0x10] sm:$0xff] %v449
                  %v451 = vld [vmem:[%s443 + $0x60] sm:$0xff]
                  %452 = vst [vmem:[%s444 + $0x18] sm:$0xff] %v451
                  %v453 = vld [vmem:[%s443 + $0x80] sm:$0xff]
                  %454 = vst [vmem:[%s444 + $0x20] sm:$0xff] %v453
                  %v455 = vld [vmem:[%s443 + $0xa0] sm:$0xff]
                  %456 = vst [vmem:[%s444 + $0x28] sm:$0xff] %v455
                  %v457 = vld [vmem:[%s443 + $0xc0] sm:$0xff]
                  %458 = vst [vmem:[%s444 + $0x30] sm:$0xff] %v457
                  %v459 = vld [vmem:[%s443 + $0xe0] sm:$0xff]
                  %460 = vst [vmem:[%s444 + $0x38] sm:$0xff] %v459
                  %v461 = vld [vmem:[%s443 + $0x100] sm:$0xff]
                  %462 = vst [vmem:[%s444 + $0x40] sm:$0xff] %v461
                  %v463 = vld [vmem:[%s443 + $0x120] sm:$0xff]
                  %464 = vst [vmem:[%s444 + $0x48] sm:$0xff] %v463
                  %v465 = vld [vmem:[%s443 + $0x140] sm:$0xff]
                  %466 = vst [vmem:[%s444 + $0x50] sm:$0xff] %v465
                  %v467 = vld [vmem:[%s443 + $0x160] sm:$0xff]
                  %468 = vst [vmem:[%s444 + $0x58] sm:$0xff] %v467
                  %v469 = vld [vmem:[%s443 + $0x180] sm:$0xff]
                  %470 = vst [vmem:[%s444 + $0x60] sm:$0xff] %v469
                  %v471 = vld [vmem:[%s443 + $0x1a0] sm:$0xff]
                  %472 = vst [vmem:[%s444 + $0x68] sm:$0xff] %v471
                  %v473 = vld [vmem:[%s443 + $0x1c0] sm:$0xff]
                  %474 = vst [vmem:[%s444 + $0x70] sm:$0xff] %v473
                  %v475 = vld [vmem:[%s443 + $0x1e0] sm:$0xff]
                  %476 = vst [vmem:[%s444 + $0x78] sm:$0xff] %v475
                  %v477 = vld [vmem:[%s443 + $0x200] sm:$0xff]
                  %478 = vst [vmem:[%s444 + $0x80] sm:$0xff] %v477
                  %v479 = vld [vmem:[%s443 + $0x220] sm:$0xff]
                  %480 = vst [vmem:[%s444 + $0x88] sm:$0xff] %v479
                  %v481 = vld [vmem:[%s443 + $0x240] sm:$0xff]
                  %482 = vst [vmem:[%s444 + $0x90] sm:$0xff] %v481
                  %v483 = vld [vmem:[%s443 + $0x260] sm:$0xff]
                  %484 = vst [vmem:[%s444 + $0x98] sm:$0xff] %v483
                  %v485 = vld [vmem:[%s443 + $0x280] sm:$0xff]
                  %486 = vst [vmem:[%s444 + $0xa0] sm:$0xff] %v485
                  %v487 = vld [vmem:[%s443 + $0x2a0] sm:$0xff]
                  %488 = vst [vmem:[%s444 + $0xa8] sm:$0xff] %v487
                  %v489 = vld [vmem:[%s443 + $0x2c0] sm:$0xff]
                  %490 = vst [vmem:[%s444 + $0xb0] sm:$0xff] %v489
                  %v491 = vld [vmem:[%s443 + $0x2e0] sm:$0xff]
                  %492 = vst [vmem:[%s444 + $0xb8] sm:$0xff] %v491
                  %v493 = vld [vmem:[%s443 + $0x300] sm:$0xff]
                  %494 = vst [vmem:[%s444 + $0xc0] sm:$0xff] %v493
                  %v495 = vld [vmem:[%s443 + $0x320] sm:$0xff]
                  %496 = vst [vmem:[%s444 + $0xc8] sm:$0xff] %v495
                  %v497 = vld [vmem:[%s443 + $0x340] sm:$0xff]
                  %498 = vst [vmem:[%s444 + $0xd0] sm:$0xff] %v497
                  %v499 = vld [vmem:[%s443 + $0x360] sm:$0xff]
                  %500 = vst [vmem:[%s444 + $0xd8] sm:$0xff] %v499
                  %v501 = vld [vmem:[%s443 + $0x380] sm:$0xff]
                  %502 = vst [vmem:[%s444 + $0xe0] sm:$0xff] %v501
                  %v503 = vld [vmem:[%s443 + $0x3a0] sm:$0xff]
                  %504 = vst [vmem:[%s444 + $0xe8] sm:$0xff] %v503
                  %v505 = vld [vmem:[%s443 + $0x3c0] sm:$0xff]
                  %506 = vst [vmem:[%s444 + $0xf0] sm:$0xff] %v505
                  %v507 = vld [vmem:[%s443 + $0x3e0] sm:$0xff]
                  %508 = vst [vmem:[%s444 + $0xf8] sm:$0xff] %v507
                  %v509 = vld [vmem:[%s443 + $0x400] sm:$0xff]
                  %510 = vst [vmem:[%s444 + $0x100] sm:$0xff] %v509
                  %v511 = vld [vmem:[%s443 + $0x420] sm:$0xff]
                  %512 = vst [vmem:[%s444 + $0x108] sm:$0xff] %v511
                  %v513 = vld [vmem:[%s443 + $0x440] sm:$0xff]
                  %514 = vst [vmem:[%s444 + $0x110] sm:$0xff] %v513
                  %v515 = vld [vmem:[%s443 + $0x460] sm:$0xff]
                  %516 = vst [vmem:[%s444 + $0x118] sm:$0xff] %v515
                  %v517 = vld [vmem:[%s443 + $0x480] sm:$0xff]
                  %518 = vst [vmem:[%s444 + $0x120] sm:$0xff] %v517
                  %v519 = vld [vmem:[%s443 + $0x4a0] sm:$0xff]
                  %520 = vst [vmem:[%s444 + $0x128] sm:$0xff] %v519
                  %v521 = vld [vmem:[%s443 + $0x4c0] sm:$0xff]
                  %522 = vst [vmem:[%s444 + $0x130] sm:$0xff] %v521
                  %v523 = vld [vmem:[%s443 + $0x4e0] sm:$0xff]
                  %524 = vst [vmem:[%s444 + $0x138] sm:$0xff] %v523
                  %v525 = vld [vmem:[%s443 + $0x500] sm:$0xff]
                  %526 = vst [vmem:[%s444 + $0x140] sm:$0xff] %v525
                  %v527 = vld [vmem:[%s443 + $0x520] sm:$0xff]
                  %528 = vst [vmem:[%s444 + $0x148] sm:$0xff] %v527
                  %v529 = vld [vmem:[%s443 + $0x540] sm:$0xff]
                  %530 = vst [vmem:[%s444 + $0x150] sm:$0xff] %v529
                  %v531 = vld [vmem:[%s443 + $0x560] sm:$0xff]
                  %532 = vst [vmem:[%s444 + $0x158] sm:$0xff] %v531
                  %v533 = vld [vmem:[%s443 + $0x580] sm:$0xff]
                  %534 = vst [vmem:[%s444 + $0x160] sm:$0xff] %v533
                  %v535 = vld [vmem:[%s443 + $0x5a0] sm:$0xff]
                  %536 = vst [vmem:[%s444 + $0x168] sm:$0xff] %v535
                  %v537 = vld [vmem:[%s443 + $0x5c0] sm:$0xff]
                  %538 = vst [vmem:[%s444 + $0x170] sm:$0xff] %v537
                  %v539 = vld [vmem:[%s443 + $0x5e0] sm:$0xff]
                  %540 = vst [vmem:[%s444 + $0x178] sm:$0xff] %v539
                  %v541 = vld [vmem:[%s443 + $0x600] sm:$0xff]
                  %542 = vst [vmem:[%s444 + $0x180] sm:$0xff] %v541
                  %v543 = vld [vmem:[%s443 + $0x620] sm:$0xff]
                  %544 = vst [vmem:[%s444 + $0x188] sm:$0xff] %v543
                  %v545 = vld [vmem:[%s443 + $0x640] sm:$0xff]
                  %546 = vst [vmem:[%s444 + $0x190] sm:$0xff] %v545
                  %v547 = vld [vmem:[%s443 + $0x660] sm:$0xff]
                  %548 = vst [vmem:[%s444 + $0x198] sm:$0xff] %v547
                  %v549 = vld [vmem:[%s443 + $0x680] sm:$0xff]
                  %550 = vst [vmem:[%s444 + $0x1a0] sm:$0xff] %v549
                  %v551 = vld [vmem:[%s443 + $0x6a0] sm:$0xff]
                  %552 = vst [vmem:[%s444 + $0x1a8] sm:$0xff] %v551
                  %v553 = vld [vmem:[%s443 + $0x6c0] sm:$0xff]
                  %554 = vst [vmem:[%s444 + $0x1b0] sm:$0xff] %v553
                  %v555 = vld [vmem:[%s443 + $0x6e0] sm:$0xff]
                  %556 = vst [vmem:[%s444 + $0x1b8] sm:$0xff] %v555
                  %v557 = vld [vmem:[%s443 + $0x700] sm:$0xff]
                  %558 = vst [vmem:[%s444 + $0x1c0] sm:$0xff] %v557
                  %v559 = vld [vmem:[%s443 + $0x720] sm:$0xff]
                  %560 = vst [vmem:[%s444 + $0x1c8] sm:$0xff] %v559
                  %v561 = vld [vmem:[%s443 + $0x740] sm:$0xff]
                  %562 = vst [vmem:[%s444 + $0x1d0] sm:$0xff] %v561
                  %v563 = vld [vmem:[%s443 + $0x760] sm:$0xff]
                  %564 = vst [vmem:[%s444 + $0x1d8] sm:$0xff] %v563
                  %v565 = vld [vmem:[%s443 + $0x780] sm:$0xff]
                  %566 = vst [vmem:[%s444 + $0x1e0] sm:$0xff] %v565
                  %v567 = vld [vmem:[%s443 + $0x7a0] sm:$0xff]
                  %568 = vst [vmem:[%s444 + $0x1e8] sm:$0xff] %v567
                  %v569 = vld [vmem:[%s443 + $0x7c0] sm:$0xff]
                  %570 = vst [vmem:[%s444 + $0x1f0] sm:$0xff] %v569
                  %v571 = vld [vmem:[%s443 + $0x7e0] sm:$0xff]
                  %572 = vst [vmem:[%s444 + $0x1f8] sm:$0xff] %v571
                  %v573 = vld [vmem:[%s443 + $0x800] sm:$0xff]
                  %574 = vst [vmem:[%s444 + $0x200] sm:$0xff] %v573
                  %v575 = vld [vmem:[%s443 + $0x820] sm:$0xff]
                  %576 = vst [vmem:[%s444 + $0x208] sm:$0xff] %v575
                  %v577 = vld [vmem:[%s443 + $0x840] sm:$0xff]
                  %578 = vst [vmem:[%s444 + $0x210] sm:$0xff] %v577
                  %v579 = vld [vmem:[%s443 + $0x860] sm:$0xff]
                  %580 = vst [vmem:[%s444 + $0x218] sm:$0xff] %v579
                  %v581 = vld [vmem:[%s443 + $0x880] sm:$0xff]
                  %582 = vst [vmem:[%s444 + $0x220] sm:$0xff] %v581
                  %v583 = vld [vmem:[%s443 + $0x8a0] sm:$0xff]
                  %584 = vst [vmem:[%s444 + $0x228] sm:$0xff] %v583
                  %v585 = vld [vmem:[%s443 + $0x8c0] sm:$0xff]
                  %586 = vst [vmem:[%s444 + $0x230] sm:$0xff] %v585
                  %v587 = vld [vmem:[%s443 + $0x8e0] sm:$0xff]
                  %588 = vst [vmem:[%s444 + $0x238] sm:$0xff] %v587
                  %v589 = vld [vmem:[%s443 + $0x900] sm:$0xff]
                  %590 = vst [vmem:[%s444 + $0x240] sm:$0xff] %v589
                  %v591 = vld [vmem:[%s443 + $0x920] sm:$0xff]
                  %592 = vst [vmem:[%s444 + $0x248] sm:$0xff] %v591
                  %v593 = vld [vmem:[%s443 + $0x940] sm:$0xff]
                  %594 = vst [vmem:[%s444 + $0x250] sm:$0xff] %v593
                  %v595 = vld [vmem:[%s443 + $0x960] sm:$0xff]
                  %596 = vst [vmem:[%s444 + $0x258] sm:$0xff] %v595
                  %v597 = vld [vmem:[%s443 + $0x980] sm:$0xff]
                  %598 = vst [vmem:[%s444 + $0x260] sm:$0xff] %v597
                  %v599 = vld [vmem:[%s443 + $0x9a0] sm:$0xff]
                  %600 = vst [vmem:[%s444 + $0x268] sm:$0xff] %v599
                  %v601 = vld [vmem:[%s443 + $0x9c0] sm:$0xff]
                  %602 = vst [vmem:[%s444 + $0x270] sm:$0xff] %v601
                  %v603 = vld [vmem:[%s443 + $0x9e0] sm:$0xff]
                  %604 = vst [vmem:[%s444 + $0x278] sm:$0xff] %v603
                  %v605 = vld [vmem:[%s443 + $0xa00] sm:$0xff]
                  %606 = vst [vmem:[%s444 + $0x280] sm:$0xff] %v605
                  %v607 = vld [vmem:[%s443 + $0xa20] sm:$0xff]
                  %608 = vst [vmem:[%s444 + $0x288] sm:$0xff] %v607
                  %v609 = vld [vmem:[%s443 + $0xa40] sm:$0xff]
                  %610 = vst [vmem:[%s444 + $0x290] sm:$0xff] %v609
                  %v611 = vld [vmem:[%s443 + $0xa60] sm:$0xff]
                  %612 = vst [vmem:[%s444 + $0x298] sm:$0xff] %v611
                  %v613 = vld [vmem:[%s443 + $0xa80] sm:$0xff]
                  %614 = vst [vmem:[%s444 + $0x2a0] sm:$0xff] %v613
                  %v615 = vld [vmem:[%s443 + $0xaa0] sm:$0xff]
                  %616 = vst [vmem:[%s444 + $0x2a8] sm:$0xff] %v615
                  %v617 = vld [vmem:[%s443 + $0xac0] sm:$0xff]
                  %618 = vst [vmem:[%s444 + $0x2b0] sm:$0xff] %v617
                  %v619 = vld [vmem:[%s443 + $0xae0] sm:$0xff]
                  %620 = vst [vmem:[%s444 + $0x2b8] sm:$0xff] %v619
                  %v621 = vld [vmem:[%s443 + $0xb00] sm:$0xff]
                  %622 = vst [vmem:[%s444 + $0x2c0] sm:$0xff] %v621
                  %v623 = vld [vmem:[%s443 + $0xb20] sm:$0xff]
                  %624 = vst [vmem:[%s444 + $0x2c8] sm:$0xff] %v623
                  %v625 = vld [vmem:[%s443 + $0xb40] sm:$0xff]
                  %626 = vst [vmem:[%s444 + $0x2d0] sm:$0xff] %v625
                  %v627 = vld [vmem:[%s443 + $0xb60] sm:$0xff]
                  %628 = vst [vmem:[%s444 + $0x2d8] sm:$0xff] %v627
                  %v629 = vld [vmem:[%s443 + $0xb80] sm:$0xff]
                  %630 = vst [vmem:[%s444 + $0x2e0] sm:$0xff] %v629
                  %v631 = vld [vmem:[%s443 + $0xba0] sm:$0xff]
                  %632 = vst [vmem:[%s444 + $0x2e8] sm:$0xff] %v631
                  %v633 = vld [vmem:[%s443 + $0xbc0] sm:$0xff]
                  %634 = vst [vmem:[%s444 + $0x2f0] sm:$0xff] %v633
                  %v635 = vld [vmem:[%s443 + $0xbe0] sm:$0xff]
                  %636 = vst [vmem:[%s444 + $0x2f8] sm:$0xff] %v635
                  %v637 = vld [vmem:[%s443 + $0xc00] sm:$0xff]
                  %638 = vst [vmem:[%s444 + $0x300] sm:$0xff] %v637
                  %v639 = vld [vmem:[%s443 + $0xc20] sm:$0xff]
                  %640 = vst [vmem:[%s444 + $0x308] sm:$0xff] %v639
                  %v641 = vld [vmem:[%s443 + $0xc40] sm:$0xff]
                  %642 = vst [vmem:[%s444 + $0x310] sm:$0xff] %v641
                  %v643 = vld [vmem:[%s443 + $0xc60] sm:$0xff]
                  %644 = vst [vmem:[%s444 + $0x318] sm:$0xff] %v643
                  %v645 = vld [vmem:[%s443 + $0xc80] sm:$0xff]
                  %646 = vst [vmem:[%s444 + $0x320] sm:$0xff] %v645
                  %v647 = vld [vmem:[%s443 + $0xca0] sm:$0xff]
                  %648 = vst [vmem:[%s444 + $0x328] sm:$0xff] %v647
                  %v649 = vld [vmem:[%s443 + $0xcc0] sm:$0xff]
                  %650 = vst [vmem:[%s444 + $0x330] sm:$0xff] %v649
                  %v651 = vld [vmem:[%s443 + $0xce0] sm:$0xff]
                  %652 = vst [vmem:[%s444 + $0x338] sm:$0xff] %v651
                  %v653 = vld [vmem:[%s443 + $0xd00] sm:$0xff]
                  %654 = vst [vmem:[%s444 + $0x340] sm:$0xff] %v653
                  %v655 = vld [vmem:[%s443 + $0xd20] sm:$0xff]
                  %656 = vst [vmem:[%s444 + $0x348] sm:$0xff] %v655
                  %v657 = vld [vmem:[%s443 + $0xd40] sm:$0xff]
                  %658 = vst [vmem:[%s444 + $0x350] sm:$0xff] %v657
                  %v659 = vld [vmem:[%s443 + $0xd60] sm:$0xff]
                  %660 = vst [vmem:[%s444 + $0x358] sm:$0xff] %v659
                  %v661 = vld [vmem:[%s443 + $0xd80] sm:$0xff]
                  %662 = vst [vmem:[%s444 + $0x360] sm:$0xff] %v661
                  %v663 = vld [vmem:[%s443 + $0xda0] sm:$0xff]
                  %664 = vst [vmem:[%s444 + $0x368] sm:$0xff] %v663
                  %v665 = vld [vmem:[%s443 + $0xdc0] sm:$0xff]
                  %666 = vst [vmem:[%s444 + $0x370] sm:$0xff] %v665
                  %v667 = vld [vmem:[%s443 + $0xde0] sm:$0xff]
                  %668 = vst [vmem:[%s444 + $0x378] sm:$0xff] %v667
                  %v669 = vld [vmem:[%s443 + $0xe00] sm:$0xff]
                  %670 = vst [vmem:[%s444 + $0x380] sm:$0xff] %v669
                  %v671 = vld [vmem:[%s443 + $0xe20] sm:$0xff]
                  %672 = vst [vmem:[%s444 + $0x388] sm:$0xff] %v671
                  %v673 = vld [vmem:[%s443 + $0xe40] sm:$0xff]
                  %674 = vst [vmem:[%s444 + $0x390] sm:$0xff] %v673
                  %v675 = vld [vmem:[%s443 + $0xe60] sm:$0xff]
                  %676 = vst [vmem:[%s444 + $0x398] sm:$0xff] %v675
                  %v677 = vld [vmem:[%s443 + $0xe80] sm:$0xff]
                  %678 = vst [vmem:[%s444 + $0x3a0] sm:$0xff] %v677
                  %v679 = vld [vmem:[%s443 + $0xea0] sm:$0xff]
                  %680 = vst [vmem:[%s444 + $0x3a8] sm:$0xff] %v679
                  %v681 = vld [vmem:[%s443 + $0xec0] sm:$0xff]
                  %682 = vst [vmem:[%s444 + $0x3b0] sm:$0xff] %v681
                  %v683 = vld [vmem:[%s443 + $0xee0] sm:$0xff]
                  %684 = vst [vmem:[%s444 + $0x3b8] sm:$0xff] %v683
                  %v685 = vld [vmem:[%s443 + $0xf00] sm:$0xff]
                  %686 = vst [vmem:[%s444 + $0x3c0] sm:$0xff] %v685
                  %v687 = vld [vmem:[%s443 + $0xf20] sm:$0xff]
                  %688 = vst [vmem:[%s444 + $0x3c8] sm:$0xff] %v687
                  %v689 = vld [vmem:[%s443 + $0xf40] sm:$0xff]
                  %690 = vst [vmem:[%s444 + $0x3d0] sm:$0xff] %v689
                  %v691 = vld [vmem:[%s443 + $0xf60] sm:$0xff]
                  %692 = vst [vmem:[%s444 + $0x3d8] sm:$0xff] %v691
                  %v693 = vld [vmem:[%s443 + $0xf80] sm:$0xff]
                  %694 = vst [vmem:[%s444 + $0x3e0] sm:$0xff] %v693
                  %v695 = vld [vmem:[%s443 + $0xfa0] sm:$0xff]
                  %696 = vst [vmem:[%s444 + $0x3e8] sm:$0xff] %v695
                  %v697 = vld [vmem:[%s443 + $0xfc0] sm:$0xff]
                  %698 = vst [vmem:[%s444 + $0x3f0] sm:$0xff] %v697
                  %v699 = vld [vmem:[%s443 + $0xfe0] sm:$0xff]
                  %700 = vst [vmem:[%s444 + $0x3f8] sm:$0xff] %v699
                $region52: #{forward.16} parent=46 // loop_footer
                  %s442 = sadd.s32 1, %s438
                $region53: #{forward.16} parent=46 // loop_footer_branch
                  %437 = sbr.rel target = $region49
                $region54: #{forward.16} parent=46 // loop_exit
                  _
              $region47: #{forward.16} parent=31 // pred_fallthru
                _
              // Predicated region
              $region55: #{forward.16} parent=31 // pred_check
                _
              $region56: #{forward.16} parent=31 // pred_check_branch
                %702 = sbr.rel target = $region58
              $region57: #{forward.16} parent=31 // pred_region
                _
              $region58: #{forward.16} parent=31 // pred_fallthru
                _
            $region32: #{forward.16} parent=27 // pred_fallthru
              _
            // Predicated region
            $region33: #{forward.16} parent=27 // pred_check
              _
            $region34: #{forward.16} parent=27 // pred_check_branch
              %169 = sbr.rel target = $region36
            $region35: #{forward.16} parent=27 // pred_region
              loop: start=0, step=1, limit=1
              $region37: #{forward.16} parent=35 // loop_pre_header
                _
              $region38: #{forward.16} parent=35 // loop_header
                %s172 = sphi 0, %s176
                %p173 = scmp.ge.s32.totalorder %s172, 1
                %s177 = sphi %s163, %s163
                %s178 = sphi %s160, %s160
              $region39: #{forward.16} parent=35 // loop_header_branch
                %175 = sbr.rel (%p173) target = $region43
              $region40: #{forward.16} parent=35 // loop_body
                %v179 = vld [vmem:[%s177] sm:$0xff]
                %180 = vst [vmem:[%s178] sm:$0xff] %v179
                %v181 = vld [vmem:[%s177 + $0x20] sm:$0xff]
                %182 = vst [vmem:[%s178 + $0x8] sm:$0xff] %v181
                %v183 = vld [vmem:[%s177 + $0x40] sm:$0xff]
                %184 = vst [vmem:[%s178 + $0x10] sm:$0xff] %v183
                %v185 = vld [vmem:[%s177 + $0x60] sm:$0xff]
                %186 = vst [vmem:[%s178 + $0x18] sm:$0xff] %v185
                %v187 = vld [vmem:[%s177 + $0x80] sm:$0xff]
                %188 = vst [vmem:[%s178 + $0x20] sm:$0xff] %v187
                %v189 = vld [vmem:[%s177 + $0xa0] sm:$0xff]
                %190 = vst [vmem:[%s178 + $0x28] sm:$0xff] %v189
                %v191 = vld [vmem:[%s177 + $0xc0] sm:$0xff]
                %192 = vst [vmem:[%s178 + $0x30] sm:$0xff] %v191
                %v193 = vld [vmem:[%s177 + $0xe0] sm:$0xff]
                %194 = vst [vmem:[%s178 + $0x38] sm:$0xff] %v193
                %v195 = vld [vmem:[%s177 + $0x100] sm:$0xff]
                %196 = vst [vmem:[%s178 + $0x40] sm:$0xff] %v195
                %v197 = vld [vmem:[%s177 + $0x120] sm:$0xff]
                %198 = vst [vmem:[%s178 + $0x48] sm:$0xff] %v197
                %v199 = vld [vmem:[%s177 + $0x140] sm:$0xff]
                %200 = vst [vmem:[%s178 + $0x50] sm:$0xff] %v199
                %v201 = vld [vmem:[%s177 + $0x160] sm:$0xff]
                %202 = vst [vmem:[%s178 + $0x58] sm:$0xff] %v201
                %v203 = vld [vmem:[%s177 + $0x180] sm:$0xff]
                %204 = vst [vmem:[%s178 + $0x60] sm:$0xff] %v203
                %v205 = vld [vmem:[%s177 + $0x1a0] sm:$0xff]
                %206 = vst [vmem:[%s178 + $0x68] sm:$0xff] %v205
                %v207 = vld [vmem:[%s177 + $0x1c0] sm:$0xff]
                %208 = vst [vmem:[%s178 + $0x70] sm:$0xff] %v207
                %v209 = vld [vmem:[%s177 + $0x1e0] sm:$0xff]
                %210 = vst [vmem:[%s178 + $0x78] sm:$0xff] %v209
                %v211 = vld [vmem:[%s177 + $0x200] sm:$0xff]
                %212 = vst [vmem:[%s178 + $0x80] sm:$0xff] %v211
                %v213 = vld [vmem:[%s177 + $0x220] sm:$0xff]
                %214 = vst [vmem:[%s178 + $0x88] sm:$0xff] %v213
                %v215 = vld [vmem:[%s177 + $0x240] sm:$0xff]
                %216 = vst [vmem:[%s178 + $0x90] sm:$0xff] %v215
                %v217 = vld [vmem:[%s177 + $0x260] sm:$0xff]
                %218 = vst [vmem:[%s178 + $0x98] sm:$0xff] %v217
                %v219 = vld [vmem:[%s177 + $0x280] sm:$0xff]
                %220 = vst [vmem:[%s178 + $0xa0] sm:$0xff] %v219
                %v221 = vld [vmem:[%s177 + $0x2a0] sm:$0xff]
                %222 = vst [vmem:[%s178 + $0xa8] sm:$0xff] %v221
                %v223 = vld [vmem:[%s177 + $0x2c0] sm:$0xff]
                %224 = vst [vmem:[%s178 + $0xb0] sm:$0xff] %v223
                %v225 = vld [vmem:[%s177 + $0x2e0] sm:$0xff]
                %226 = vst [vmem:[%s178 + $0xb8] sm:$0xff] %v225
                %v227 = vld [vmem:[%s177 + $0x300] sm:$0xff]
                %228 = vst [vmem:[%s178 + $0xc0] sm:$0xff] %v227
                %v229 = vld [vmem:[%s177 + $0x320] sm:$0xff]
                %230 = vst [vmem:[%s178 + $0xc8] sm:$0xff] %v229
                %v231 = vld [vmem:[%s177 + $0x340] sm:$0xff]
                %232 = vst [vmem:[%s178 + $0xd0] sm:$0xff] %v231
                %v233 = vld [vmem:[%s177 + $0x360] sm:$0xff]
                %234 = vst [vmem:[%s178 + $0xd8] sm:$0xff] %v233
                %v235 = vld [vmem:[%s177 + $0x380] sm:$0xff]
                %236 = vst [vmem:[%s178 + $0xe0] sm:$0xff] %v235
                %v237 = vld [vmem:[%s177 + $0x3a0] sm:$0xff]
                %238 = vst [vmem:[%s178 + $0xe8] sm:$0xff] %v237
                %v239 = vld [vmem:[%s177 + $0x3c0] sm:$0xff]
                %240 = vst [vmem:[%s178 + $0xf0] sm:$0xff] %v239
                %v241 = vld [vmem:[%s177 + $0x3e0] sm:$0xff]
                %242 = vst [vmem:[%s178 + $0xf8] sm:$0xff] %v241
                %v243 = vld [vmem:[%s177 + $0x400] sm:$0xff]
                %244 = vst [vmem:[%s178 + $0x100] sm:$0xff] %v243
                %v245 = vld [vmem:[%s177 + $0x420] sm:$0xff]
                %246 = vst [vmem:[%s178 + $0x108] sm:$0xff] %v245
                %v247 = vld [vmem:[%s177 + $0x440] sm:$0xff]
                %248 = vst [vmem:[%s178 + $0x110] sm:$0xff] %v247
                %v249 = vld [vmem:[%s177 + $0x460] sm:$0xff]
                %250 = vst [vmem:[%s178 + $0x118] sm:$0xff] %v249
                %v251 = vld [vmem:[%s177 + $0x480] sm:$0xff]
                %252 = vst [vmem:[%s178 + $0x120] sm:$0xff] %v251
                %v253 = vld [vmem:[%s177 + $0x4a0] sm:$0xff]
                %254 = vst [vmem:[%s178 + $0x128] sm:$0xff] %v253
                %v255 = vld [vmem:[%s177 + $0x4c0] sm:$0xff]
                %256 = vst [vmem:[%s178 + $0x130] sm:$0xff] %v255
                %v257 = vld [vmem:[%s177 + $0x4e0] sm:$0xff]
                %258 = vst [vmem:[%s178 + $0x138] sm:$0xff] %v257
                %v259 = vld [vmem:[%s177 + $0x500] sm:$0xff]
                %260 = vst [vmem:[%s178 + $0x140] sm:$0xff] %v259
                %v261 = vld [vmem:[%s177 + $0x520] sm:$0xff]
                %262 = vst [vmem:[%s178 + $0x148] sm:$0xff] %v261
                %v263 = vld [vmem:[%s177 + $0x540] sm:$0xff]
                %264 = vst [vmem:[%s178 + $0x150] sm:$0xff] %v263
                %v265 = vld [vmem:[%s177 + $0x560] sm:$0xff]
                %266 = vst [vmem:[%s178 + $0x158] sm:$0xff] %v265
                %v267 = vld [vmem:[%s177 + $0x580] sm:$0xff]
                %268 = vst [vmem:[%s178 + $0x160] sm:$0xff] %v267
                %v269 = vld [vmem:[%s177 + $0x5a0] sm:$0xff]
                %270 = vst [vmem:[%s178 + $0x168] sm:$0xff] %v269
                %v271 = vld [vmem:[%s177 + $0x5c0] sm:$0xff]
                %272 = vst [vmem:[%s178 + $0x170] sm:$0xff] %v271
                %v273 = vld [vmem:[%s177 + $0x5e0] sm:$0xff]
                %274 = vst [vmem:[%s178 + $0x178] sm:$0xff] %v273
                %v275 = vld [vmem:[%s177 + $0x600] sm:$0xff]
                %276 = vst [vmem:[%s178 + $0x180] sm:$0xff] %v275
                %v277 = vld [vmem:[%s177 + $0x620] sm:$0xff]
                %278 = vst [vmem:[%s178 + $0x188] sm:$0xff] %v277
                %v279 = vld [vmem:[%s177 + $0x640] sm:$0xff]
                %280 = vst [vmem:[%s178 + $0x190] sm:$0xff] %v279
                %v281 = vld [vmem:[%s177 + $0x660] sm:$0xff]
                %282 = vst [vmem:[%s178 + $0x198] sm:$0xff] %v281
                %v283 = vld [vmem:[%s177 + $0x680] sm:$0xff]
                %284 = vst [vmem:[%s178 + $0x1a0] sm:$0xff] %v283
                %v285 = vld [vmem:[%s177 + $0x6a0] sm:$0xff]
                %286 = vst [vmem:[%s178 + $0x1a8] sm:$0xff] %v285
                %v287 = vld [vmem:[%s177 + $0x6c0] sm:$0xff]
                %288 = vst [vmem:[%s178 + $0x1b0] sm:$0xff] %v287
                %v289 = vld [vmem:[%s177 + $0x6e0] sm:$0xff]
                %290 = vst [vmem:[%s178 + $0x1b8] sm:$0xff] %v289
                %v291 = vld [vmem:[%s177 + $0x700] sm:$0xff]
                %292 = vst [vmem:[%s178 + $0x1c0] sm:$0xff] %v291
                %v293 = vld [vmem:[%s177 + $0x720] sm:$0xff]
                %294 = vst [vmem:[%s178 + $0x1c8] sm:$0xff] %v293
                %v295 = vld [vmem:[%s177 + $0x740] sm:$0xff]
                %296 = vst [vmem:[%s178 + $0x1d0] sm:$0xff] %v295
                %v297 = vld [vmem:[%s177 + $0x760] sm:$0xff]
                %298 = vst [vmem:[%s178 + $0x1d8] sm:$0xff] %v297
                %v299 = vld [vmem:[%s177 + $0x780] sm:$0xff]
                %300 = vst [vmem:[%s178 + $0x1e0] sm:$0xff] %v299
                %v301 = vld [vmem:[%s177 + $0x7a0] sm:$0xff]
                %302 = vst [vmem:[%s178 + $0x1e8] sm:$0xff] %v301
                %v303 = vld [vmem:[%s177 + $0x7c0] sm:$0xff]
                %304 = vst [vmem:[%s178 + $0x1f0] sm:$0xff] %v303
                %v305 = vld [vmem:[%s177 + $0x7e0] sm:$0xff]
                %306 = vst [vmem:[%s178 + $0x1f8] sm:$0xff] %v305
                %v307 = vld [vmem:[%s177 + $0x800] sm:$0xff]
                %308 = vst [vmem:[%s178 + $0x200] sm:$0xff] %v307
                %v309 = vld [vmem:[%s177 + $0x820] sm:$0xff]
                %310 = vst [vmem:[%s178 + $0x208] sm:$0xff] %v309
                %v311 = vld [vmem:[%s177 + $0x840] sm:$0xff]
                %312 = vst [vmem:[%s178 + $0x210] sm:$0xff] %v311
                %v313 = vld [vmem:[%s177 + $0x860] sm:$0xff]
                %314 = vst [vmem:[%s178 + $0x218] sm:$0xff] %v313
                %v315 = vld [vmem:[%s177 + $0x880] sm:$0xff]
                %316 = vst [vmem:[%s178 + $0x220] sm:$0xff] %v315
                %v317 = vld [vmem:[%s177 + $0x8a0] sm:$0xff]
                %318 = vst [vmem:[%s178 + $0x228] sm:$0xff] %v317
                %v319 = vld [vmem:[%s177 + $0x8c0] sm:$0xff]
                %320 = vst [vmem:[%s178 + $0x230] sm:$0xff] %v319
                %v321 = vld [vmem:[%s177 + $0x8e0] sm:$0xff]
                %322 = vst [vmem:[%s178 + $0x238] sm:$0xff] %v321
                %v323 = vld [vmem:[%s177 + $0x900] sm:$0xff]
                %324 = vst [vmem:[%s178 + $0x240] sm:$0xff] %v323
                %v325 = vld [vmem:[%s177 + $0x920] sm:$0xff]
                %326 = vst [vmem:[%s178 + $0x248] sm:$0xff] %v325
                %v327 = vld [vmem:[%s177 + $0x940] sm:$0xff]
                %328 = vst [vmem:[%s178 + $0x250] sm:$0xff] %v327
                %v329 = vld [vmem:[%s177 + $0x960] sm:$0xff]
                %330 = vst [vmem:[%s178 + $0x258] sm:$0xff] %v329
                %v331 = vld [vmem:[%s177 + $0x980] sm:$0xff]
                %332 = vst [vmem:[%s178 + $0x260] sm:$0xff] %v331
                %v333 = vld [vmem:[%s177 + $0x9a0] sm:$0xff]
                %334 = vst [vmem:[%s178 + $0x268] sm:$0xff] %v333
                %v335 = vld [vmem:[%s177 + $0x9c0] sm:$0xff]
                %336 = vst [vmem:[%s178 + $0x270] sm:$0xff] %v335
                %v337 = vld [vmem:[%s177 + $0x9e0] sm:$0xff]
                %338 = vst [vmem:[%s178 + $0x278] sm:$0xff] %v337
                %v339 = vld [vmem:[%s177 + $0xa00] sm:$0xff]
                %340 = vst [vmem:[%s178 + $0x280] sm:$0xff] %v339
                %v341 = vld [vmem:[%s177 + $0xa20] sm:$0xff]
                %342 = vst [vmem:[%s178 + $0x288] sm:$0xff] %v341
                %v343 = vld [vmem:[%s177 + $0xa40] sm:$0xff]
                %344 = vst [vmem:[%s178 + $0x290] sm:$0xff] %v343
                %v345 = vld [vmem:[%s177 + $0xa60] sm:$0xff]
                %346 = vst [vmem:[%s178 + $0x298] sm:$0xff] %v345
                %v347 = vld [vmem:[%s177 + $0xa80] sm:$0xff]
                %348 = vst [vmem:[%s178 + $0x2a0] sm:$0xff] %v347
                %v349 = vld [vmem:[%s177 + $0xaa0] sm:$0xff]
                %350 = vst [vmem:[%s178 + $0x2a8] sm:$0xff] %v349
                %v351 = vld [vmem:[%s177 + $0xac0] sm:$0xff]
                %352 = vst [vmem:[%s178 + $0x2b0] sm:$0xff] %v351
                %v353 = vld [vmem:[%s177 + $0xae0] sm:$0xff]
                %354 = vst [vmem:[%s178 + $0x2b8] sm:$0xff] %v353
                %v355 = vld [vmem:[%s177 + $0xb00] sm:$0xff]
                %356 = vst [vmem:[%s178 + $0x2c0] sm:$0xff] %v355
                %v357 = vld [vmem:[%s177 + $0xb20] sm:$0xff]
                %358 = vst [vmem:[%s178 + $0x2c8] sm:$0xff] %v357
                %v359 = vld [vmem:[%s177 + $0xb40] sm:$0xff]
                %360 = vst [vmem:[%s178 + $0x2d0] sm:$0xff] %v359
                %v361 = vld [vmem:[%s177 + $0xb60] sm:$0xff]
                %362 = vst [vmem:[%s178 + $0x2d8] sm:$0xff] %v361
                %v363 = vld [vmem:[%s177 + $0xb80] sm:$0xff]
                %364 = vst [vmem:[%s178 + $0x2e0] sm:$0xff] %v363
                %v365 = vld [vmem:[%s177 + $0xba0] sm:$0xff]
                %366 = vst [vmem:[%s178 + $0x2e8] sm:$0xff] %v365
                %v367 = vld [vmem:[%s177 + $0xbc0] sm:$0xff]
                %368 = vst [vmem:[%s178 + $0x2f0] sm:$0xff] %v367
                %v369 = vld [vmem:[%s177 + $0xbe0] sm:$0xff]
                %370 = vst [vmem:[%s178 + $0x2f8] sm:$0xff] %v369
                %v371 = vld [vmem:[%s177 + $0xc00] sm:$0xff]
                %372 = vst [vmem:[%s178 + $0x300] sm:$0xff] %v371
                %v373 = vld [vmem:[%s177 + $0xc20] sm:$0xff]
                %374 = vst [vmem:[%s178 + $0x308] sm:$0xff] %v373
                %v375 = vld [vmem:[%s177 + $0xc40] sm:$0xff]
                %376 = vst [vmem:[%s178 + $0x310] sm:$0xff] %v375
                %v377 = vld [vmem:[%s177 + $0xc60] sm:$0xff]
                %378 = vst [vmem:[%s178 + $0x318] sm:$0xff] %v377
                %v379 = vld [vmem:[%s177 + $0xc80] sm:$0xff]
                %380 = vst [vmem:[%s178 + $0x320] sm:$0xff] %v379
                %v381 = vld [vmem:[%s177 + $0xca0] sm:$0xff]
                %382 = vst [vmem:[%s178 + $0x328] sm:$0xff] %v381
                %v383 = vld [vmem:[%s177 + $0xcc0] sm:$0xff]
                %384 = vst [vmem:[%s178 + $0x330] sm:$0xff] %v383
                %v385 = vld [vmem:[%s177 + $0xce0] sm:$0xff]
                %386 = vst [vmem:[%s178 + $0x338] sm:$0xff] %v385
                %v387 = vld [vmem:[%s177 + $0xd00] sm:$0xff]
                %388 = vst [vmem:[%s178 + $0x340] sm:$0xff] %v387
                %v389 = vld [vmem:[%s177 + $0xd20] sm:$0xff]
                %390 = vst [vmem:[%s178 + $0x348] sm:$0xff] %v389
                %v391 = vld [vmem:[%s177 + $0xd40] sm:$0xff]
                %392 = vst [vmem:[%s178 + $0x350] sm:$0xff] %v391
                %v393 = vld [vmem:[%s177 + $0xd60] sm:$0xff]
                %394 = vst [vmem:[%s178 + $0x358] sm:$0xff] %v393
                %v395 = vld [vmem:[%s177 + $0xd80] sm:$0xff]
                %396 = vst [vmem:[%s178 + $0x360] sm:$0xff] %v395
                %v397 = vld [vmem:[%s177 + $0xda0] sm:$0xff]
                %398 = vst [vmem:[%s178 + $0x368] sm:$0xff] %v397
                %v399 = vld [vmem:[%s177 + $0xdc0] sm:$0xff]
                %400 = vst [vmem:[%s178 + $0x370] sm:$0xff] %v399
                %v401 = vld [vmem:[%s177 + $0xde0] sm:$0xff]
                %402 = vst [vmem:[%s178 + $0x378] sm:$0xff] %v401
                %v403 = vld [vmem:[%s177 + $0xe00] sm:$0xff]
                %404 = vst [vmem:[%s178 + $0x380] sm:$0xff] %v403
                %v405 = vld [vmem:[%s177 + $0xe20] sm:$0xff]
                %406 = vst [vmem:[%s178 + $0x388] sm:$0xff] %v405
                %v407 = vld [vmem:[%s177 + $0xe40] sm:$0xff]
                %408 = vst [vmem:[%s178 + $0x390] sm:$0xff] %v407
                %v409 = vld [vmem:[%s177 + $0xe60] sm:$0xff]
                %410 = vst [vmem:[%s178 + $0x398] sm:$0xff] %v409
                %v411 = vld [vmem:[%s177 + $0xe80] sm:$0xff]
                %412 = vst [vmem:[%s178 + $0x3a0] sm:$0xff] %v411
                %v413 = vld [vmem:[%s177 + $0xea0] sm:$0xff]
                %414 = vst [vmem:[%s178 + $0x3a8] sm:$0xff] %v413
                %v415 = vld [vmem:[%s177 + $0xec0] sm:$0xff]
                %416 = vst [vmem:[%s178 + $0x3b0] sm:$0xff] %v415
                %v417 = vld [vmem:[%s177 + $0xee0] sm:$0xff]
                %418 = vst [vmem:[%s178 + $0x3b8] sm:$0xff] %v417
                %v419 = vld [vmem:[%s177 + $0xf00] sm:$0xff]
                %420 = vst [vmem:[%s178 + $0x3c0] sm:$0xff] %v419
                %v421 = vld [vmem:[%s177 + $0xf20] sm:$0xff]
                %422 = vst [vmem:[%s178 + $0x3c8] sm:$0xff] %v421
                %v423 = vld [vmem:[%s177 + $0xf40] sm:$0xff]
                %424 = vst [vmem:[%s178 + $0x3d0] sm:$0xff] %v423
                %v425 = vld [vmem:[%s177 + $0xf60] sm:$0xff]
                %426 = vst [vmem:[%s178 + $0x3d8] sm:$0xff] %v425
                %v427 = vld [vmem:[%s177 + $0xf80] sm:$0xff]
                %428 = vst [vmem:[%s178 + $0x3e0] sm:$0xff] %v427
                %v429 = vld [vmem:[%s177 + $0xfa0] sm:$0xff]
                %430 = vst [vmem:[%s178 + $0x3e8] sm:$0xff] %v429
                %v431 = vld [vmem:[%s177 + $0xfc0] sm:$0xff]
                %432 = vst [vmem:[%s178 + $0x3f0] sm:$0xff] %v431
                %v433 = vld [vmem:[%s177 + $0xfe0] sm:$0xff]
                %434 = vst [vmem:[%s178 + $0x3f8] sm:$0xff] %v433
              $region41: #{forward.16} parent=35 // loop_footer
                %s176 = sadd.s32 1, %s172
              $region42: #{forward.16} parent=35 // loop_footer_branch
                %171 = sbr.rel target = $region38
              $region43: #{forward.16} parent=35 // loop_exit
                _
            $region36: #{forward.16} parent=27 // pred_fallthru
              _
          $region28: #{forward.16} parent=23 // pred_fallthru
            _
          %703 = vnop
        $region24: #{forward.16} parent=19 // pred_fallthru
          _
        // Predicated region
        $region59: #{forward.16} parent=19 // pred_check
          %p704 = pneg %p93
        $region60: #{forward.16} parent=19 // pred_check_branch
          %706 = sbr.rel (%p704) target = $region62
        $region61: #{forward.16} parent=19 // pred_region
          %s707 = smul.u32 2, %s17
          %p708 = scmp.lt.s32.totalorder %s707, 7
          %s709 = scalar_select %p708, %s707, 7
          %s710 = scalar_lea.vmem %s2, %s709
          %s711 = smul.u32 2, %s17
        $region62: #{forward.16} parent=19 // pred_fallthru
          _
      $region20: #{forward.16} parent=5 // pred_fallthru
        _
      %p712 = scmp.le.s32.totalorder 1, %s9
      %p713 = scmp.lt.s32.totalorder %s9, 5
      %p714 = pnand %p712, %p713
      %p715 = pneg %p714
      // Predicated region
      $region63: #{forward.16} parent=5 // pred_check
        _
      $region64: #{forward.16} parent=5 // pred_check_branch
        %717 = sbr.rel (%p714) target = $region66
      $region65: #{forward.16} parent=5 // pred_region
        %s718 = ssub.s32 %s9, 1
        %s719 = sand.u32 %s60, 1
        %s720 = sand.u32 %s60, 1
        %s721 = smul.addr %s720, 1024
        %s722 = scalar_lea.vmem [#allocation2], %s721
        // Predicated region
        $region67: #{forward.16} parent=65 // pred_check
          %p723 = pneg %p73
        $region68: #{forward.16} parent=65 // pred_check_branch
          %725 = sbr.rel (%p723) target = $region70
        $region69: #{forward.16} parent=65 // pred_region
          _
        $region70: #{forward.16} parent=65 // pred_fallthru
          _
        %p726 = scmp.lt.s32.totalorder %s18, 0
        %s727 = scalar_select %p726, %s18, 0
        %s728 = smul.addr %s727, 8
        %s729 = smul.addr %s728, 4
        %s730 = scalar_lea.vmem %s0, %s729
        %p731 = pneg %p47
        %p732 = pneg %p44
        %s733 = sand.u32 %s60, 1
        %s734 = sand.u32 %s60, 1
        %s735 = smul.addr %s734, 1024
        %s736 = scalar_lea.vmem [#allocation2], %s735
        %p737 = pneg %p73
        %p738 = pneg %p70
        %s739 = smul.u32 2, %s19
        %p740 = scmp.lt.s32.totalorder %s739, 7
        %s741 = scalar_select %p740, %s739, 7
        %s742 = scalar_lea.vmem %s2, %s741
        %p743 = pneg %p99
        %p744 = pneg %p96
        %p745 = pneg %p127
        %p746 = pneg %p124
        %s747 = smul.u32 2, %s19
        %p748 = scmp.lt.s32.totalorder %s18, 0
        %s749 = scalar_select %p748, %s18, 0
        %p750 = scmp.lt.s32.totalorder %s747, 7
        %s751 = scalar_select %p750, %s747, 7
        %s752 = smul.addr %s749, 8
        %s753 = sadd.s32 %s751, %s752
        %s754 = smul.addr %s753, 8
        %s755 = scalar_lea.vmem %s3, %s754
        %p756 = scmp.lt.s32.totalorder %s18, 0
        %s757 = scalar_select %p756, %s18, 0
        %s758 = smul.addr %s757, 8
        %s759 = smul.addr %s758, 4
        %s760 = scalar_lea.vmem %s0, %s759
        %s761 = smul.u32 2, %s19
        %s762 = smul.u32 2, %s19
        %p763 = scmp.lt.s32.totalorder %s762, 7
        %s764 = scalar_select %p763, %s762, 7
        %s765 = scalar_lea.vmem %s2, %s764
        %s766 = smul.u32 2, %s19
        %s767 = smul.u32 2, %s19
        %p768 = scmp.lt.s32.totalorder %s18, 0
        %s769 = scalar_select %p768, %s18, 0
        %p770 = scmp.lt.s32.totalorder %s767, 7
        %s771 = scalar_select %p770, %s767, 7
        %s772 = smul.addr %s769, 8
        %s773 = sadd.s32 %s771, %s772
        %s774 = smul.addr %s773, 8
        %s775 = scalar_lea.vmem %s3, %s774
        %s776 = smul.u32 2, %s19
        %v777 = vld [vmem:[%s760] sm:$0xff]
        %v778 = vld [vmem:[%s760 + $0x8] sm:$0xff]
        %v779 = vld [vmem:[%s760 + $0x10] sm:$0xff]
        %v780 = vld [vmem:[%s760 + $0x18] sm:$0xff]
        %v781 = vld [vmem:[%s722] sm:$0xff]
        %v782 = vld [vmem:[%s722 + $0x8] sm:$0xff]
        %v783 = vld [vmem:[%s722 + $0x10] sm:$0xff]
        %v784 = vld [vmem:[%s722 + $0x18] sm:$0xff]
        %v785 = vld [vmem:[%s722 + $0x20] sm:$0xff]
        %v786 = vld [vmem:[%s722 + $0x28] sm:$0xff]
        %v787 = vld [vmem:[%s722 + $0x30] sm:$0xff]
        %v788 = vld [vmem:[%s722 + $0x38] sm:$0xff]
        %v789 = vld [vmem:[%s722 + $0x40] sm:$0xff]
        %v790 = vld [vmem:[%s722 + $0x48] sm:$0xff]
        %v791 = vld [vmem:[%s722 + $0x50] sm:$0xff]
        %v792 = vld [vmem:[%s722 + $0x58] sm:$0xff]
        %v793 = vld [vmem:[%s722 + $0x60] sm:$0xff]
        %v794 = vld [vmem:[%s722 + $0x68] sm:$0xff]
        %v795 = vld [vmem:[%s722 + $0x70] sm:$0xff]
        %v796 = vld [vmem:[%s722 + $0x78] sm:$0xff]
        %v797 = vld [vmem:[%s722 + $0x80] sm:$0xff]
        %v798 = vld [vmem:[%s722 + $0x88] sm:$0xff]
        %v799 = vld [vmem:[%s722 + $0x90] sm:$0xff]
        %v800 = vld [vmem:[%s722 + $0x98] sm:$0xff]
        %v801 = vld [vmem:[%s722 + $0xa0] sm:$0xff]
        %v802 = vld [vmem:[%s722 + $0xa8] sm:$0xff]
        %v803 = vld [vmem:[%s722 + $0xb0] sm:$0xff]
        %v804 = vld [vmem:[%s722 + $0xb8] sm:$0xff]
        %v805 = vld [vmem:[%s722 + $0xc0] sm:$0xff]
        %v806 = vld [vmem:[%s722 + $0xc8] sm:$0xff]
        %v807 = vld [vmem:[%s722 + $0xd0] sm:$0xff]
        %v808 = vld [vmem:[%s722 + $0xd8] sm:$0xff]
        %v809 = vld [vmem:[%s722 + $0xe0] sm:$0xff]
        %v810 = vld [vmem:[%s722 + $0xe8] sm:$0xff]
        %v811 = vld [vmem:[%s722 + $0xf0] sm:$0xff]
        %v812 = vld [vmem:[%s722 + $0xf8] sm:$0xff]
        %v813 = vld [vmem:[%s722 + $0x100] sm:$0xff]
        %v814 = vld [vmem:[%s722 + $0x108] sm:$0xff]
        %v815 = vld [vmem:[%s722 + $0x110] sm:$0xff]
        %v816 = vld [vmem:[%s722 + $0x118] sm:$0xff]
        %v817 = vld [vmem:[%s722 + $0x120] sm:$0xff]
        %v818 = vld [vmem:[%s722 + $0x128] sm:$0xff]
        %v819 = vld [vmem:[%s722 + $0x130] sm:$0xff]
        %v820 = vld [vmem:[%s722 + $0x138] sm:$0xff]
        %v821 = vld [vmem:[%s722 + $0x140] sm:$0xff]
        %v822 = vld [vmem:[%s722 + $0x148] sm:$0xff]
        %v823 = vld [vmem:[%s722 + $0x150] sm:$0xff]
        %v824 = vld [vmem:[%s722 + $0x158] sm:$0xff]
        %v825 = vld [vmem:[%s722 + $0x160] sm:$0xff]
        %v826 = vld [vmem:[%s722 + $0x168] sm:$0xff]
        %v827 = vld [vmem:[%s722 + $0x170] sm:$0xff]
        %v828 = vld [vmem:[%s722 + $0x178] sm:$0xff]
        %v829 = vld [vmem:[%s722 + $0x180] sm:$0xff]
        %v830 = vld [vmem:[%s722 + $0x188] sm:$0xff]
        %v831 = vld [vmem:[%s722 + $0x190] sm:$0xff]
        %v832 = vld [vmem:[%s722 + $0x198] sm:$0xff]
        %v833 = vld [vmem:[%s722 + $0x1a0] sm:$0xff]
        %v834 = vld [vmem:[%s722 + $0x1a8] sm:$0xff]
        %v835 = vld [vmem:[%s722 + $0x1b0] sm:$0xff]
        %v836 = vld [vmem:[%s722 + $0x1b8] sm:$0xff]
        %v837 = vld [vmem:[%s722 + $0x1c0] sm:$0xff]
        %v838 = vld [vmem:[%s722 + $0x1c8] sm:$0xff]
        %v839 = vld [vmem:[%s722 + $0x1d0] sm:$0xff]
        %v840 = vld [vmem:[%s722 + $0x1d8] sm:$0xff]
        %v841 = vld [vmem:[%s722 + $0x1e0] sm:$0xff]
        %v842 = vld [vmem:[%s722 + $0x1e8] sm:$0xff]
        %v843 = vld [vmem:[%s722 + $0x1f0] sm:$0xff]
        %v844 = vld [vmem:[%s722 + $0x1f8] sm:$0xff]
        %v845 = vld [vmem:[%s722 + $0x200] sm:$0xff]
        %v846 = vld [vmem:[%s722 + $0x208] sm:$0xff]
        %v847 = vld [vmem:[%s722 + $0x210] sm:$0xff]
        %v848 = vld [vmem:[%s722 + $0x218] sm:$0xff]
        %v849 = vld [vmem:[%s722 + $0x220] sm:$0xff]
        %v850 = vld [vmem:[%s722 + $0x228] sm:$0xff]
        %v851 = vld [vmem:[%s722 + $0x230] sm:$0xff]
        %v852 = vld [vmem:[%s722 + $0x238] sm:$0xff]
        %v853 = vld [vmem:[%s722 + $0x240] sm:$0xff]
        %v854 = vld [vmem:[%s722 + $0x248] sm:$0xff]
        %v855 = vld [vmem:[%s722 + $0x250] sm:$0xff]
        %v856 = vld [vmem:[%s722 + $0x258] sm:$0xff]
        %v857 = vld [vmem:[%s722 + $0x260] sm:$0xff]
        %v858 = vld [vmem:[%s722 + $0x268] sm:$0xff]
        %v859 = vld [vmem:[%s722 + $0x270] sm:$0xff]
        %v860 = vld [vmem:[%s722 + $0x278] sm:$0xff]
        %v861 = vld [vmem:[%s722 + $0x280] sm:$0xff]
        %v862 = vld [vmem:[%s722 + $0x288] sm:$0xff]
        %v863 = vld [vmem:[%s722 + $0x290] sm:$0xff]
        %v864 = vld [vmem:[%s722 + $0x298] sm:$0xff]
        %v865 = vld [vmem:[%s722 + $0x2a0] sm:$0xff]
        %v866 = vld [vmem:[%s722 + $0x2a8] sm:$0xff]
        %v867 = vld [vmem:[%s722 + $0x2b0] sm:$0xff]
        %v868 = vld [vmem:[%s722 + $0x2b8] sm:$0xff]
        %v869 = vld [vmem:[%s722 + $0x2c0] sm:$0xff]
        %v870 = vld [vmem:[%s722 + $0x2c8] sm:$0xff]
        %v871 = vld [vmem:[%s722 + $0x2d0] sm:$0xff]
        %v872 = vld [vmem:[%s722 + $0x2d8] sm:$0xff]
        %v873 = vld [vmem:[%s722 + $0x2e0] sm:$0xff]
        %v874 = vld [vmem:[%s722 + $0x2e8] sm:$0xff]
        %v875 = vld [vmem:[%s722 + $0x2f0] sm:$0xff]
        %v876 = vld [vmem:[%s722 + $0x2f8] sm:$0xff]
        %v877 = vld [vmem:[%s722 + $0x300] sm:$0xff]
        %v878 = vld [vmem:[%s722 + $0x308] sm:$0xff]
        %v879 = vld [vmem:[%s722 + $0x310] sm:$0xff]
        %v880 = vld [vmem:[%s722 + $0x318] sm:$0xff]
        %v881 = vld [vmem:[%s722 + $0x320] sm:$0xff]
        %v882 = vld [vmem:[%s722 + $0x328] sm:$0xff]
        %v883 = vld [vmem:[%s722 + $0x330] sm:$0xff]
        %v884 = vld [vmem:[%s722 + $0x338] sm:$0xff]
        %v885 = vld [vmem:[%s722 + $0x340] sm:$0xff]
        %v886 = vld [vmem:[%s722 + $0x348] sm:$0xff]
        %v887 = vld [vmem:[%s722 + $0x350] sm:$0xff]
        %v888 = vld [vmem:[%s722 + $0x358] sm:$0xff]
        %v889 = vld [vmem:[%s722 + $0x360] sm:$0xff]
        %v890 = vld [vmem:[%s722 + $0x368] sm:$0xff]
        %v891 = vld [vmem:[%s722 + $0x370] sm:$0xff]
        %v892 = vld [vmem:[%s722 + $0x378] sm:$0xff]
        %v893 = vld [vmem:[%s722 + $0x380] sm:$0xff]
        %v894 = vld [vmem:[%s722 + $0x388] sm:$0xff]
        %v895 = vld [vmem:[%s722 + $0x390] sm:$0xff]
        %v896 = vld [vmem:[%s722 + $0x398] sm:$0xff]
        %v897 = vld [vmem:[%s722 + $0x3a0] sm:$0xff]
        %v898 = vld [vmem:[%s722 + $0x3a8] sm:$0xff]
        %v899 = vld [vmem:[%s722 + $0x3b0] sm:$0xff]
        %v900 = vld [vmem:[%s722 + $0x3b8] sm:$0xff]
        %v901 = vld [vmem:[%s722 + $0x3c0] sm:$0xff]
        %v902 = vld [vmem:[%s722 + $0x3c8] sm:$0xff]
        %v903 = vld [vmem:[%s722 + $0x3d0] sm:$0xff]
        %v904 = vld [vmem:[%s722 + $0x3d8] sm:$0xff]
        %v905 = vld [vmem:[%s722 + $0x3e0] sm:$0xff]
        %v906 = vld [vmem:[%s722 + $0x3e8] sm:$0xff]
        %v907 = vld [vmem:[%s722 + $0x3f0] sm:$0xff]
        %v908 = vld [vmem:[%s722 + $0x3f8] sm:$0xff]
        %v909 = vld [vmem:[%s765] sm:$0x3]
        %v911 = vlaneseq
        %v912 = vshrl.u32 %v911, 7
        %v913 = vsub.s32 0, %v912
        %v914 = vrot.slane %v909, %v913
        %v915 = vlaneseq
        %v916 = vshrl.u32 %v915, 7
        %v917 = vsub.s32 1, %v916
        %v918 = vrot.slane %v909, %v917
        %v925 = vunpack.c.l.b16 %v777
        %v926 = vunpack.c.h.b16 %v777
        %v927 = vunpack.c.l.b16 %v778
        %v928 = vunpack.c.h.b16 %v778
        %v929 = vunpack.c.l.b16 %v779
        %v930 = vunpack.c.h.b16 %v779
        %v931 = vunpack.c.l.b16 %v780
        %v932 = vunpack.c.h.b16 %v780
        %v933 = vpack.c.b16 %v925, %v925
        %v934 = vpack.c.b16 %v926, %v926
        %v935 = vpack.c.b16 %v927, %v927
        %v936 = vpack.c.b16 %v928, %v928
        %v937 = vpack.c.b16 %v929, %v929
        %v938 = vpack.c.b16 %v930, %v930
        %v939 = vpack.c.b16 %v931, %v931
        %v940 = vpack.c.b16 %v932, %v932
        %v1077 = vunpack.c.l.b16 %v781
        %v1078 = vunpack.c.h.b16 %v781
        %v1079 = vunpack.c.l.b16 %v782
        %v1080 = vunpack.c.h.b16 %v782
        %v1081 = vunpack.c.l.b16 %v783
        %v1082 = vunpack.c.h.b16 %v783
        %v1083 = vunpack.c.l.b16 %v784
        %v1084 = vunpack.c.h.b16 %v784
        %v1085 = vunpack.c.l.b16 %v785
        %v1086 = vunpack.c.h.b16 %v785
        %v1087 = vunpack.c.l.b16 %v786
        %v1088 = vunpack.c.h.b16 %v786
        %v1089 = vunpack.c.l.b16 %v787
        %v1090 = vunpack.c.h.b16 %v787
        %v1091 = vunpack.c.l.b16 %v788
        %v1092 = vunpack.c.h.b16 %v788
        %v1093 = vunpack.c.l.b16 %v789
        %v1094 = vunpack.c.h.b16 %v789
        %v1095 = vunpack.c.l.b16 %v790
        %v1096 = vunpack.c.h.b16 %v790
        %v1097 = vunpack.c.l.b16 %v791
        %v1098 = vunpack.c.h.b16 %v791
        %v1099 = vunpack.c.l.b16 %v792
        %v1100 = vunpack.c.h.b16 %v792
        %v1101 = vunpack.c.l.b16 %v793
        %v1102 = vunpack.c.h.b16 %v793
        %v1103 = vunpack.c.l.b16 %v794
        %v1104 = vunpack.c.h.b16 %v794
        %v1105 = vunpack.c.l.b16 %v795
        %v1106 = vunpack.c.h.b16 %v795
        %v1107 = vunpack.c.l.b16 %v796
        %v1108 = vunpack.c.h.b16 %v796
        %v1109 = vunpack.c.l.b16 %v797
        %v1110 = vunpack.c.h.b16 %v797
        %v1111 = vunpack.c.l.b16 %v798
        %v1112 = vunpack.c.h.b16 %v798
        %v1113 = vunpack.c.l.b16 %v799
        %v1114 = vunpack.c.h.b16 %v799
        %v1115 = vunpack.c.l.b16 %v800
        %v1116 = vunpack.c.h.b16 %v800
        %v1117 = vunpack.c.l.b16 %v801
        %v1118 = vunpack.c.h.b16 %v801
        %v1119 = vunpack.c.l.b16 %v802
        %v1120 = vunpack.c.h.b16 %v802
        %v1121 = vunpack.c.l.b16 %v803
        %v1122 = vunpack.c.h.b16 %v803
        %v1123 = vunpack.c.l.b16 %v804
        %v1124 = vunpack.c.h.b16 %v804
        %v1125 = vunpack.c.l.b16 %v805
        %v1126 = vunpack.c.h.b16 %v805
        %v1127 = vunpack.c.l.b16 %v806
        %v1128 = vunpack.c.h.b16 %v806
        %v1129 = vunpack.c.l.b16 %v807
        %v1130 = vunpack.c.h.b16 %v807
        %v1131 = vunpack.c.l.b16 %v808
        %v1132 = vunpack.c.h.b16 %v808
        %v1133 = vunpack.c.l.b16 %v809
        %v1134 = vunpack.c.h.b16 %v809
        %v1135 = vunpack.c.l.b16 %v810
        %v1136 = vunpack.c.h.b16 %v810
        %v1137 = vunpack.c.l.b16 %v811
        %v1138 = vunpack.c.h.b16 %v811
        %v1139 = vunpack.c.l.b16 %v812
        %v1140 = vunpack.c.h.b16 %v812
        %v1141 = vunpack.c.l.b16 %v813
        %v1142 = vunpack.c.h.b16 %v813
        %v1143 = vunpack.c.l.b16 %v814
        %v1144 = vunpack.c.h.b16 %v814
        %v1145 = vunpack.c.l.b16 %v815
        %v1146 = vunpack.c.h.b16 %v815
        %v1147 = vunpack.c.l.b16 %v816
        %v1148 = vunpack.c.h.b16 %v816
        %v1149 = vunpack.c.l.b16 %v817
        %v1150 = vunpack.c.h.b16 %v817
        %v1151 = vunpack.c.l.b16 %v818
        %v1152 = vunpack.c.h.b16 %v818
        %v1153 = vunpack.c.l.b16 %v819
        %v1154 = vunpack.c.h.b16 %v819
        %v1155 = vunpack.c.l.b16 %v820
        %v1156 = vunpack.c.h.b16 %v820
        %v1157 = vunpack.c.l.b16 %v821
        %v1158 = vunpack.c.h.b16 %v821
        %v1159 = vunpack.c.l.b16 %v822
        %v1160 = vunpack.c.h.b16 %v822
        %v1161 = vunpack.c.l.b16 %v823
        %v1162 = vunpack.c.h.b16 %v823
        %v1163 = vunpack.c.l.b16 %v824
        %v1164 = vunpack.c.h.b16 %v824
        %v1165 = vunpack.c.l.b16 %v825
        %v1166 = vunpack.c.h.b16 %v825
        %v1167 = vunpack.c.l.b16 %v826
        %v1168 = vunpack.c.h.b16 %v826
        %v1169 = vunpack.c.l.b16 %v827
        %v1170 = vunpack.c.h.b16 %v827
        %v1171 = vunpack.c.l.b16 %v828
        %v1172 = vunpack.c.h.b16 %v828
        %v1173 = vunpack.c.l.b16 %v829
        %v1174 = vunpack.c.h.b16 %v829
        %v1175 = vunpack.c.l.b16 %v830
        %v1176 = vunpack.c.h.b16 %v830
        %v1177 = vunpack.c.l.b16 %v831
        %v1178 = vunpack.c.h.b16 %v831
        %v1179 = vunpack.c.l.b16 %v832
        %v1180 = vunpack.c.h.b16 %v832
        %v1181 = vunpack.c.l.b16 %v833
        %v1182 = vunpack.c.h.b16 %v833
        %v1183 = vunpack.c.l.b16 %v834
        %v1184 = vunpack.c.h.b16 %v834
        %v1185 = vunpack.c.l.b16 %v835
        %v1186 = vunpack.c.h.b16 %v835
        %v1187 = vunpack.c.l.b16 %v836
        %v1188 = vunpack.c.h.b16 %v836
        %v1189 = vunpack.c.l.b16 %v837
        %v1190 = vunpack.c.h.b16 %v837
        %v1191 = vunpack.c.l.b16 %v838
        %v1192 = vunpack.c.h.b16 %v838
        %v1193 = vunpack.c.l.b16 %v839
        %v1194 = vunpack.c.h.b16 %v839
        %v1195 = vunpack.c.l.b16 %v840
        %v1196 = vunpack.c.h.b16 %v840
        %v1197 = vunpack.c.l.b16 %v841
        %v1198 = vunpack.c.h.b16 %v841
        %v1199 = vunpack.c.l.b16 %v842
        %v1200 = vunpack.c.h.b16 %v842
        %v1201 = vunpack.c.l.b16 %v843
        %v1202 = vunpack.c.h.b16 %v843
        %v1203 = vunpack.c.l.b16 %v844
        %v1204 = vunpack.c.h.b16 %v844
        %v1205 = vunpack.c.l.b16 %v845
        %v1206 = vunpack.c.h.b16 %v845
        %v1207 = vunpack.c.l.b16 %v846
        %v1208 = vunpack.c.h.b16 %v846
        %v1209 = vunpack.c.l.b16 %v847
        %v1210 = vunpack.c.h.b16 %v847
        %v1211 = vunpack.c.l.b16 %v848
        %v1212 = vunpack.c.h.b16 %v848
        %v1213 = vunpack.c.l.b16 %v849
        %v1214 = vunpack.c.h.b16 %v849
        %v1215 = vunpack.c.l.b16 %v850
        %v1216 = vunpack.c.h.b16 %v850
        %v1217 = vunpack.c.l.b16 %v851
        %v1218 = vunpack.c.h.b16 %v851
        %v1219 = vunpack.c.l.b16 %v852
        %v1220 = vunpack.c.h.b16 %v852
        %v1221 = vunpack.c.l.b16 %v853
        %v1222 = vunpack.c.h.b16 %v853
        %v1223 = vunpack.c.l.b16 %v854
        %v1224 = vunpack.c.h.b16 %v854
        %v1225 = vunpack.c.l.b16 %v855
        %v1226 = vunpack.c.h.b16 %v855
        %v1227 = vunpack.c.l.b16 %v856
        %v1228 = vunpack.c.h.b16 %v856
        %v1229 = vunpack.c.l.b16 %v857
        %v1230 = vunpack.c.h.b16 %v857
        %v1231 = vunpack.c.l.b16 %v858
        %v1232 = vunpack.c.h.b16 %v858
        %v1233 = vunpack.c.l.b16 %v859
        %v1234 = vunpack.c.h.b16 %v859
        %v1235 = vunpack.c.l.b16 %v860
        %v1236 = vunpack.c.h.b16 %v860
        %v1237 = vunpack.c.l.b16 %v861
        %v1238 = vunpack.c.h.b16 %v861
        %v1239 = vunpack.c.l.b16 %v862
        %v1240 = vunpack.c.h.b16 %v862
        %v1241 = vunpack.c.l.b16 %v863
        %v1242 = vunpack.c.h.b16 %v863
        %v1243 = vunpack.c.l.b16 %v864
        %v1244 = vunpack.c.h.b16 %v864
        %v1245 = vunpack.c.l.b16 %v865
        %v1246 = vunpack.c.h.b16 %v865
        %v1247 = vunpack.c.l.b16 %v866
        %v1248 = vunpack.c.h.b16 %v866
        %v1249 = vunpack.c.l.b16 %v867
        %v1250 = vunpack.c.h.b16 %v867
        %v1251 = vunpack.c.l.b16 %v868
        %v1252 = vunpack.c.h.b16 %v868
        %v1253 = vunpack.c.l.b16 %v869
        %v1254 = vunpack.c.h.b16 %v869
        %v1255 = vunpack.c.l.b16 %v870
        %v1256 = vunpack.c.h.b16 %v870
        %v1257 = vunpack.c.l.b16 %v871
        %v1258 = vunpack.c.h.b16 %v871
        %v1259 = vunpack.c.l.b16 %v872
        %v1260 = vunpack.c.h.b16 %v872
        %v1261 = vunpack.c.l.b16 %v873
        %v1262 = vunpack.c.h.b16 %v873
        %v1263 = vunpack.c.l.b16 %v874
        %v1264 = vunpack.c.h.b16 %v874
        %v1265 = vunpack.c.l.b16 %v875
        %v1266 = vunpack.c.h.b16 %v875
        %v1267 = vunpack.c.l.b16 %v876
        %v1268 = vunpack.c.h.b16 %v876
        %v1269 = vunpack.c.l.b16 %v877
        %v1270 = vunpack.c.h.b16 %v877
        %v1271 = vunpack.c.l.b16 %v878
        %v1272 = vunpack.c.h.b16 %v878
        %v1273 = vunpack.c.l.b16 %v879
        %v1274 = vunpack.c.h.b16 %v879
        %v1275 = vunpack.c.l.b16 %v880
        %v1276 = vunpack.c.h.b16 %v880
        %v1277 = vunpack.c.l.b16 %v881
        %v1278 = vunpack.c.h.b16 %v881
        %v1279 = vunpack.c.l.b16 %v882
        %v1280 = vunpack.c.h.b16 %v882
        %v1281 = vunpack.c.l.b16 %v883
        %v1282 = vunpack.c.h.b16 %v883
        %v1283 = vunpack.c.l.b16 %v884
        %v1284 = vunpack.c.h.b16 %v884
        %v1285 = vunpack.c.l.b16 %v885
        %v1286 = vunpack.c.h.b16 %v885
        %v1287 = vunpack.c.l.b16 %v886
        %v1288 = vunpack.c.h.b16 %v886
        %v1289 = vunpack.c.l.b16 %v887
        %v1290 = vunpack.c.h.b16 %v887
        %v1291 = vunpack.c.l.b16 %v888
        %v1292 = vunpack.c.h.b16 %v888
        %v1293 = vunpack.c.l.b16 %v889
        %v1294 = vunpack.c.h.b16 %v889
        %v1295 = vunpack.c.l.b16 %v890
        %v1296 = vunpack.c.h.b16 %v890
        %v1297 = vunpack.c.l.b16 %v891
        %v1298 = vunpack.c.h.b16 %v891
        %v1299 = vunpack.c.l.b16 %v892
        %v1300 = vunpack.c.h.b16 %v892
        %v1301 = vunpack.c.l.b16 %v893
        %v1302 = vunpack.c.h.b16 %v893
        %v1303 = vunpack.c.l.b16 %v894
        %v1304 = vunpack.c.h.b16 %v894
        %v1305 = vunpack.c.l.b16 %v895
        %v1306 = vunpack.c.h.b16 %v895
        %v1307 = vunpack.c.l.b16 %v896
        %v1308 = vunpack.c.h.b16 %v896
        %v1309 = vunpack.c.l.b16 %v897
        %v1310 = vunpack.c.h.b16 %v897
        %v1311 = vunpack.c.l.b16 %v898
        %v1312 = vunpack.c.h.b16 %v898
        %v1313 = vunpack.c.l.b16 %v899
        %v1314 = vunpack.c.h.b16 %v899
        %v1315 = vunpack.c.l.b16 %v900
        %v1316 = vunpack.c.h.b16 %v900
        %v1317 = vunpack.c.l.b16 %v901
        %v1318 = vunpack.c.h.b16 %v901
        %v1319 = vunpack.c.l.b16 %v902
        %v1320 = vunpack.c.h.b16 %v902
        %v1321 = vunpack.c.l.b16 %v903
        %v1322 = vunpack.c.h.b16 %v903
        %v1323 = vunpack.c.l.b16 %v904
        %v1324 = vunpack.c.h.b16 %v904
        %v1325 = vunpack.c.l.b16 %v905
        %v1326 = vunpack.c.h.b16 %v905
        %v1327 = vunpack.c.l.b16 %v906
        %v1328 = vunpack.c.h.b16 %v906
        %v1329 = vunpack.c.l.b16 %v907
        %v1330 = vunpack.c.h.b16 %v907
        %v1331 = vunpack.c.l.b16 %v908
        %v1332 = vunpack.c.h.b16 %v908
        %v1333 = vpack.c.b16 %v1079, %v1077
        %v1334 = vpack.c.b16 %v1080, %v1078
        %v1335 = vpack.c.b16 %v1083, %v1081
        %v1336 = vpack.c.b16 %v1084, %v1082
        %v1337 = vpack.c.b16 %v1087, %v1085
        %v1338 = vpack.c.b16 %v1088, %v1086
        %v1339 = vpack.c.b16 %v1091, %v1089
        %v1340 = vpack.c.b16 %v1092, %v1090
        %v1341 = vpack.c.b16 %v1095, %v1093
        %v1342 = vpack.c.b16 %v1096, %v1094
        %v1343 = vpack.c.b16 %v1099, %v1097
        %v1344 = vpack.c.b16 %v1100, %v1098
        %v1345 = vpack.c.b16 %v1103, %v1101
        %v1346 = vpack.c.b16 %v1104, %v1102
        %v1347 = vpack.c.b16 %v1107, %v1105
        %v1348 = vpack.c.b16 %v1108, %v1106
        %v1349 = vpack.c.b16 %v1111, %v1109
        %v1350 = vpack.c.b16 %v1112, %v1110
        %v1351 = vpack.c.b16 %v1115, %v1113
        %v1352 = vpack.c.b16 %v1116, %v1114
        %v1353 = vpack.c.b16 %v1119, %v1117
        %v1354 = vpack.c.b16 %v1120, %v1118
        %v1355 = vpack.c.b16 %v1123, %v1121
        %v1356 = vpack.c.b16 %v1124, %v1122
        %v1357 = vpack.c.b16 %v1127, %v1125
        %v1358 = vpack.c.b16 %v1128, %v1126
        %v1359 = vpack.c.b16 %v1131, %v1129
        %v1360 = vpack.c.b16 %v1132, %v1130
        %v1361 = vpack.c.b16 %v1135, %v1133
        %v1362 = vpack.c.b16 %v1136, %v1134
        %v1363 = vpack.c.b16 %v1139, %v1137
        %v1364 = vpack.c.b16 %v1140, %v1138
        %v1365 = vpack.c.b16 %v1143, %v1141
        %v1366 = vpack.c.b16 %v1144, %v1142
        %v1367 = vpack.c.b16 %v1147, %v1145
        %v1368 = vpack.c.b16 %v1148, %v1146
        %v1369 = vpack.c.b16 %v1151, %v1149
        %v1370 = vpack.c.b16 %v1152, %v1150
        %v1371 = vpack.c.b16 %v1155, %v1153
        %v1372 = vpack.c.b16 %v1156, %v1154
        %v1373 = vpack.c.b16 %v1159, %v1157
        %v1374 = vpack.c.b16 %v1160, %v1158
        %v1375 = vpack.c.b16 %v1163, %v1161
        %v1376 = vpack.c.b16 %v1164, %v1162
        %v1377 = vpack.c.b16 %v1167, %v1165
        %v1378 = vpack.c.b16 %v1168, %v1166
        %v1379 = vpack.c.b16 %v1171, %v1169
        %v1380 = vpack.c.b16 %v1172, %v1170
        %v1381 = vpack.c.b16 %v1175, %v1173
        %v1382 = vpack.c.b16 %v1176, %v1174
        %v1383 = vpack.c.b16 %v1179, %v1177
        %v1384 = vpack.c.b16 %v1180, %v1178
        %v1385 = vpack.c.b16 %v1183, %v1181
        %v1386 = vpack.c.b16 %v1184, %v1182
        %v1387 = vpack.c.b16 %v1187, %v1185
        %v1388 = vpack.c.b16 %v1188, %v1186
        %v1389 = vpack.c.b16 %v1191, %v1189
        %v1390 = vpack.c.b16 %v1192, %v1190
        %v1391 = vpack.c.b16 %v1195, %v1193
        %v1392 = vpack.c.b16 %v1196, %v1194
        %v1393 = vpack.c.b16 %v1199, %v1197
        %v1394 = vpack.c.b16 %v1200, %v1198
        %v1395 = vpack.c.b16 %v1203, %v1201
        %v1396 = vpack.c.b16 %v1204, %v1202
        %v1397 = vpack.c.b16 %v1207, %v1205
        %v1398 = vpack.c.b16 %v1208, %v1206
        %v1399 = vpack.c.b16 %v1211, %v1209
        %v1400 = vpack.c.b16 %v1212, %v1210
        %v1401 = vpack.c.b16 %v1215, %v1213
        %v1402 = vpack.c.b16 %v1216, %v1214
        %v1403 = vpack.c.b16 %v1219, %v1217
        %v1404 = vpack.c.b16 %v1220, %v1218
        %v1405 = vpack.c.b16 %v1223, %v1221
        %v1406 = vpack.c.b16 %v1224, %v1222
        %v1407 = vpack.c.b16 %v1227, %v1225
        %v1408 = vpack.c.b16 %v1228, %v1226
        %v1409 = vpack.c.b16 %v1231, %v1229
        %v1410 = vpack.c.b16 %v1232, %v1230
        %v1411 = vpack.c.b16 %v1235, %v1233
        %v1412 = vpack.c.b16 %v1236, %v1234
        %v1413 = vpack.c.b16 %v1239, %v1237
        %v1414 = vpack.c.b16 %v1240, %v1238
        %v1415 = vpack.c.b16 %v1243, %v1241
        %v1416 = vpack.c.b16 %v1244, %v1242
        %v1417 = vpack.c.b16 %v1247, %v1245
        %v1418 = vpack.c.b16 %v1248, %v1246
        %v1419 = vpack.c.b16 %v1251, %v1249
        %v1420 = vpack.c.b16 %v1252, %v1250
        %v1421 = vpack.c.b16 %v1255, %v1253
        %v1422 = vpack.c.b16 %v1256, %v1254
        %v1423 = vpack.c.b16 %v1259, %v1257
        %v1424 = vpack.c.b16 %v1260, %v1258
        %v1425 = vpack.c.b16 %v1263, %v1261
        %v1426 = vpack.c.b16 %v1264, %v1262
        %v1427 = vpack.c.b16 %v1267, %v1265
        %v1428 = vpack.c.b16 %v1268, %v1266
        %v1429 = vpack.c.b16 %v1271, %v1269
        %v1430 = vpack.c.b16 %v1272, %v1270
        %v1431 = vpack.c.b16 %v1275, %v1273
        %v1432 = vpack.c.b16 %v1276, %v1274
        %v1433 = vpack.c.b16 %v1279, %v1277
        %v1434 = vpack.c.b16 %v1280, %v1278
        %v1435 = vpack.c.b16 %v1283, %v1281
        %v1436 = vpack.c.b16 %v1284, %v1282
        %v1437 = vpack.c.b16 %v1287, %v1285
        %v1438 = vpack.c.b16 %v1288, %v1286
        %v1439 = vpack.c.b16 %v1291, %v1289
        %v1440 = vpack.c.b16 %v1292, %v1290
        %v1441 = vpack.c.b16 %v1295, %v1293
        %v1442 = vpack.c.b16 %v1296, %v1294
        %v1443 = vpack.c.b16 %v1299, %v1297
        %v1444 = vpack.c.b16 %v1300, %v1298
        %v1445 = vpack.c.b16 %v1303, %v1301
        %v1446 = vpack.c.b16 %v1304, %v1302
        %v1447 = vpack.c.b16 %v1307, %v1305
        %v1448 = vpack.c.b16 %v1308, %v1306
        %v1449 = vpack.c.b16 %v1311, %v1309
        %v1450 = vpack.c.b16 %v1312, %v1310
        %v1451 = vpack.c.b16 %v1315, %v1313
        %v1452 = vpack.c.b16 %v1316, %v1314
        %v1453 = vpack.c.b16 %v1319, %v1317
        %v1454 = vpack.c.b16 %v1320, %v1318
        %v1455 = vpack.c.b16 %v1323, %v1321
        %v1456 = vpack.c.b16 %v1324, %v1322
        %v1457 = vpack.c.b16 %v1327, %v1325
        %v1458 = vpack.c.b16 %v1328, %v1326
        %v1459 = vpack.c.b16 %v1331, %v1329
        %v1460 = vpack.c.b16 %v1332, %v1330
        %1589 = vmatprep.subr.bf16.mxu0 %v1334
        %1590 = vmatpush1.bf16.msra.mxu0 %v1333
        %1591 = vmatprep.subr.bf16.mxu0 %v1336
        %1592 = vmatpush1.bf16.msra.mxu0 %v1335
        %1593 = vmatprep.subr.bf16.mxu0 %v1338
        %1594 = vmatpush1.bf16.msra.mxu0 %v1337
        %1595 = vmatprep.subr.bf16.mxu0 %v1340
        %1596 = vmatpush1.bf16.msra.mxu0 %v1339
        %1597 = vmatprep.subr.bf16.mxu0 %v1342
        %1598 = vmatpush1.bf16.msra.mxu0 %v1341
        %1599 = vmatprep.subr.bf16.mxu0 %v1344
        %1600 = vmatpush1.bf16.msra.mxu0 %v1343
        %1601 = vmatprep.subr.bf16.mxu0 %v1346
        %1602 = vmatpush1.bf16.msra.mxu0 %v1345
        %1603 = vmatprep.subr.bf16.mxu0 %v1348
        %1604 = vmatpush1.bf16.msra.mxu0 %v1347
        %1605 = vmatprep.subr.bf16.mxu0 %v1350
        %1606 = vmatpush1.bf16.msra.mxu0 %v1349
        %1607 = vmatprep.subr.bf16.mxu0 %v1352
        %1608 = vmatpush1.bf16.msra.mxu0 %v1351
        %1609 = vmatprep.subr.bf16.mxu0 %v1354
        %1610 = vmatpush1.bf16.msra.mxu0 %v1353
        %1611 = vmatprep.subr.bf16.mxu0 %v1356
        %1612 = vmatpush1.bf16.msra.mxu0 %v1355
        %1613 = vmatprep.subr.bf16.mxu0 %v1358
        %1614 = vmatpush1.bf16.msra.mxu0 %v1357
        %1615 = vmatprep.subr.bf16.mxu0 %v1360
        %1616 = vmatpush1.bf16.msra.mxu0 %v1359
        %1617 = vmatprep.subr.bf16.mxu0 %v1362
        %1618 = vmatpush1.bf16.msra.mxu0 %v1361
        %1619 = vmatprep.subr.bf16.mxu0 %v1364
        %1620 = vmatpush1.bf16.msra.mxu0 %v1363
        %1621 = vmatprep.mubr.bf16.mxu0 %v934
        %1622 = vmatmul.mubr.bf16.gmra.mrb[0].mxu0 %v933
        %v1623 = vpop.f32.mrb[0].mxu0
        %v1624 = vadd.f32 %v914, %v1623
        %v1625 = vpop.f32.mrb[0].mxu0
        %v1626 = vadd.f32 %v918, %v1625
        %v1627 = vpop.f32.mrb[0].mxu0
        %v1628 = vpop.f32.mrb[0].mxu0
        %1629 = vdwg.mxu0
        %1630 = vmatprep.subr.bf16.mxu0 %v1366
        %1631 = vmatpush1.bf16.msra.mxu0 %v1365
        %1632 = vmatprep.subr.bf16.mxu0 %v1368
        %1633 = vmatpush1.bf16.msra.mxu0 %v1367
        %1634 = vmatprep.subr.bf16.mxu0 %v1370
        %1635 = vmatpush1.bf16.msra.mxu0 %v1369
        %1636 = vmatprep.subr.bf16.mxu0 %v1372
        %1637 = vmatpush1.bf16.msra.mxu0 %v1371
        %1638 = vmatprep.subr.bf16.mxu0 %v1374
        %1639 = vmatpush1.bf16.msra.mxu0 %v1373
        %1640 = vmatprep.subr.bf16.mxu0 %v1376
        %1641 = vmatpush1.bf16.msra.mxu0 %v1375
        %1642 = vmatprep.subr.bf16.mxu0 %v1378
        %1643 = vmatpush1.bf16.msra.mxu0 %v1377
        %1644 = vmatprep.subr.bf16.mxu0 %v1380
        %1645 = vmatpush1.bf16.msra.mxu0 %v1379
        %1646 = vmatprep.subr.bf16.mxu0 %v1382
        %1647 = vmatpush1.bf16.msra.mxu0 %v1381
        %1648 = vmatprep.subr.bf16.mxu0 %v1384
        %1649 = vmatpush1.bf16.msra.mxu0 %v1383
        %1650 = vmatprep.subr.bf16.mxu0 %v1386
        %1651 = vmatpush1.bf16.msra.mxu0 %v1385
        %1652 = vmatprep.subr.bf16.mxu0 %v1388
        %1653 = vmatpush1.bf16.msra.mxu0 %v1387
        %1654 = vmatprep.subr.bf16.mxu0 %v1390
        %1655 = vmatpush1.bf16.msra.mxu0 %v1389
        %1656 = vmatprep.subr.bf16.mxu0 %v1392
        %1657 = vmatpush1.bf16.msra.mxu0 %v1391
        %1658 = vmatprep.subr.bf16.mxu0 %v1394
        %1659 = vmatpush1.bf16.msra.mxu0 %v1393
        %1660 = vmatprep.subr.bf16.mxu0 %v1396
        %1661 = vmatpush1.bf16.msra.mxu0 %v1395
        %1662 = vmatprep.mubr.bf16.mxu0 %v936
        %1663 = vmatmul.mubr.bf16.gmra.mrb[0].mxu0 %v935
        %v1664 = vpop.f32.mrb[0].mxu0
        %v1665 = vadd.f32 %v1624, %v1664
        %v1666 = vpop.f32.mrb[0].mxu0
        %v1667 = vadd.f32 %v1626, %v1666
        %v1668 = vpop.f32.mrb[0].mxu0
        %v1669 = vpop.f32.mrb[0].mxu0
        %1670 = vdwg.mxu0
        %1671 = vmatprep.subr.bf16.mxu0 %v1398
        %1672 = vmatpush1.bf16.msra.mxu0 %v1397
        %1673 = vmatprep.subr.bf16.mxu0 %v1400
        %1674 = vmatpush1.bf16.msra.mxu0 %v1399
        %1675 = vmatprep.subr.bf16.mxu0 %v1402
        %1676 = vmatpush1.bf16.msra.mxu0 %v1401
        %1677 = vmatprep.subr.bf16.mxu0 %v1404
        %1678 = vmatpush1.bf16.msra.mxu0 %v1403
        %1679 = vmatprep.subr.bf16.mxu0 %v1406
        %1680 = vmatpush1.bf16.msra.mxu0 %v1405
        %1681 = vmatprep.subr.bf16.mxu0 %v1408
        %1682 = vmatpush1.bf16.msra.mxu0 %v1407
        %1683 = vmatprep.subr.bf16.mxu0 %v1410
        %1684 = vmatpush1.bf16.msra.mxu0 %v1409
        %1685 = vmatprep.subr.bf16.mxu0 %v1412
        %1686 = vmatpush1.bf16.msra.mxu0 %v1411
        %1687 = vmatprep.subr.bf16.mxu0 %v1414
        %1688 = vmatpush1.bf16.msra.mxu0 %v1413
        %1689 = vmatprep.subr.bf16.mxu0 %v1416
        %1690 = vmatpush1.bf16.msra.mxu0 %v1415
        %1691 = vmatprep.subr.bf16.mxu0 %v1418
        %1692 = vmatpush1.bf16.msra.mxu0 %v1417
        %1693 = vmatprep.subr.bf16.mxu0 %v1420
        %1694 = vmatpush1.bf16.msra.mxu0 %v1419
        %1695 = vmatprep.subr.bf16.mxu0 %v1422
        %1696 = vmatpush1.bf16.msra.mxu0 %v1421
        %1697 = vmatprep.subr.bf16.mxu0 %v1424
        %1698 = vmatpush1.bf16.msra.mxu0 %v1423
        %1699 = vmatprep.subr.bf16.mxu0 %v1426
        %1700 = vmatpush1.bf16.msra.mxu0 %v1425
        %1701 = vmatprep.subr.bf16.mxu0 %v1428
        %1702 = vmatpush1.bf16.msra.mxu0 %v1427
        %1703 = vmatprep.mubr.bf16.mxu0 %v938
        %1704 = vmatmul.mubr.bf16.gmra.mrb[0].mxu0 %v937
        %v1705 = vpop.f32.mrb[0].mxu0
        %v1706 = vadd.f32 %v1665, %v1705
        %v1707 = vpop.f32.mrb[0].mxu0
        %v1708 = vadd.f32 %v1667, %v1707
        %v1709 = vpop.f32.mrb[0].mxu0
        %v1710 = vpop.f32.mrb[0].mxu0
        %1711 = vdwg.mxu0
        %1712 = vmatprep.subr.bf16.mxu0 %v1430
        %1713 = vmatpush1.bf16.msra.mxu0 %v1429
        %1714 = vmatprep.subr.bf16.mxu0 %v1432
        %1715 = vmatpush1.bf16.msra.mxu0 %v1431
        %1716 = vmatprep.subr.bf16.mxu0 %v1434
        %1717 = vmatpush1.bf16.msra.mxu0 %v1433
        %1718 = vmatprep.subr.bf16.mxu0 %v1436
        %1719 = vmatpush1.bf16.msra.mxu0 %v1435
        %1720 = vmatprep.subr.bf16.mxu0 %v1438
        %1721 = vmatpush1.bf16.msra.mxu0 %v1437
        %1722 = vmatprep.subr.bf16.mxu0 %v1440
        %1723 = vmatpush1.bf16.msra.mxu0 %v1439
        %1724 = vmatprep.subr.bf16.mxu0 %v1442
        %1725 = vmatpush1.bf16.msra.mxu0 %v1441
        %1726 = vmatprep.subr.bf16.mxu0 %v1444
        %1727 = vmatpush1.bf16.msra.mxu0 %v1443
        %1728 = vmatprep.subr.bf16.mxu0 %v1446
        %1729 = vmatpush1.bf16.msra.mxu0 %v1445
        %1730 = vmatprep.subr.bf16.mxu0 %v1448
        %1731 = vmatpush1.bf16.msra.mxu0 %v1447
        %1732 = vmatprep.subr.bf16.mxu0 %v1450
        %1733 = vmatpush1.bf16.msra.mxu0 %v1449
        %1734 = vmatprep.subr.bf16.mxu0 %v1452
        %1735 = vmatpush1.bf16.msra.mxu0 %v1451
        %1736 = vmatprep.subr.bf16.mxu0 %v1454
        %1737 = vmatpush1.bf16.msra.mxu0 %v1453
        %1738 = vmatprep.subr.bf16.mxu0 %v1456
        %1739 = vmatpush1.bf16.msra.mxu0 %v1455
        %1740 = vmatprep.subr.bf16.mxu0 %v1458
        %1741 = vmatpush1.bf16.msra.mxu0 %v1457
        %1742 = vmatprep.subr.bf16.mxu0 %v1460
        %1743 = vmatpush1.bf16.msra.mxu0 %v1459
        %1744 = vmatprep.mubr.bf16.mxu0 %v940
        %1745 = vmatmul.mubr.bf16.gmra.mrb[0].mxu0 %v939
        %v1746 = vpop.f32.mrb[0].mxu0
        %v1747 = vadd.f32 %v1706, %v1746
        %v1748 = vpop.f32.mrb[0].mxu0
        %v1749 = vadd.f32 %v1708, %v1748
        %v1750 = vpop.f32.mrb[0].mxu0
        %v1751 = vpop.f32.mrb[0].mxu0
        %1752 = vdwg.mxu0
        %vm1753 = vcmp.gt.f32.partialorder %v1747, 0.0
        %vm1754 = vcmp.gt.f32.partialorder %v1749, 0.0
        %v1755 = vmul.f32 %v1747, 0.01
        %v1756 = vmul.f32 %v1749, 0.01
        %v1757 = vsel %vm1753, %v1747, %v1755
        %v1758 = vsel %vm1754, %v1749, %v1756
        %1759 = vst [vmem:[%s775] sm:$0xff] %v1757
        %1760 = vst [vmem:[%s775 + $0x8] sm:$0xff] %v1758
        %s1761 = smul.u32 2, %s19
        %p1762 = scmp.lt.s32.totalorder %s18, 0
        %s1763 = scalar_select %p1762, %s18, 0
        %p1764 = scmp.lt.s32.totalorder %s1761, 7
        %s1765 = scalar_select %p1764, %s1761, 7
        %s1766 = smul.addr %s1763, 8
        %s1767 = sadd.s32 %s1765, %s1766
        %s1768 = smul.addr %s1767, 8
        %s1769 = scalar_lea.vmem %s3, %s1768
        // Predicated region
        $region71: #{forward.16} parent=65 // pred_check
          %p1770 = pneg %p124
        $region72: #{forward.16} parent=65 // pred_check_branch
          %1772 = sbr.rel (%p1770) target = $region74
        $region73: #{forward.16} parent=65 // pred_region
          %s1773 = smul.u32 2, %s19
        $region74: #{forward.16} parent=65 // pred_fallthru
          _
      $region66: #{forward.16} parent=5 // pred_fallthru
        _
      %p1774 = scmp.le.s32.totalorder 2, %s9
      // Predicated region
      $region75: #{forward.16} parent=5 // pred_check
        %p1775 = pneg %p1774
      $region76: #{forward.16} parent=5 // pred_check_branch
        %1777 = sbr.rel (%p1775) target = $region78
      $region77: #{forward.16} parent=5 // pred_region
        %s1778 = ssub.s32 %s9, 2
        // Predicated region
        $region79: #{forward.16} parent=77 // pred_check
          %p1779 = pneg %p130
        $region80: #{forward.16} parent=77 // pred_check_branch
          %1781 = sbr.rel (%p1779) target = $region82
        $region81: #{forward.16} parent=77 // pred_region
          %s1782 = smul.u32 2, %s21
          %p1783 = scmp.lt.s32.totalorder %s20, 0
          %s1784 = scalar_select %p1783, %s20, 0
          %p1785 = scmp.lt.s32.totalorder %s1782, 7
          %s1786 = scalar_select %p1785, %s1782, 7
          %s1787 = smul.addr %s1784, 8
          %s1788 = sadd.s32 %s1786, %s1787
          %s1789 = smul.addr %s1788, 8
          %s1790 = scalar_lea.vmem %s3, %s1789
        $region82: #{forward.16} parent=77 // pred_fallthru
          _
      $region78: #{forward.16} parent=5 // pred_fallthru
        _
    $region6: #{forward.16} parent=1 // loop_footer
      %s13 = sadd.s32 1, %s9
    $region7: #{forward.16} parent=1 // loop_footer_branch
      %8 = sbr.rel target = $region3
    $region8: #{forward.16} parent=1 // loop_exit
      _

// kernel: forward.17
$region0: #{forward.17}
  #allocation0 [shape = 'u32[]', space=smem, size = 0x4, offset = 0x4, fixed_abs, tag = 'smem constant byte address 0x4 - core index']
  #allocation1 [shape = 'u32[144,128]{1,0:T(1,128)}', space=vmem, size = 0x12000, scoped, tag = 'internal scratch']
  %s0 = inlined_call_operand.vmem [shape: bf16[8,1024], index: 0, kind: input, shape index: {}]
  %s1 = inlined_call_operand.vmem [shape: bf16[1024,128], index: 1, kind: input, shape index: {}]
  %s2 = inlined_call_operand.vmem [shape: f32[1,128], index: 2, kind: input, shape index: {}]
  %s3 = inlined_call_operand.vmem [shape: f32[8,128], index: 3, kind: output, shape index: {}]
  %s4 = sld [smem:[#allocation0]]
  $region22: #{forward.17} parent=0
    _
  %s6 = ssub.s32 1, %s4
  %s7 = scalar_select 0, %s6, %s4
  // Predicated region
  $region2: #{forward.17} parent=0 // pred_check
    _
  $region3: #{forward.17} parent=0 // pred_check_branch
    %9 = sbr.rel (0) target = $region5
  $region4: #{forward.17} parent=0 // pred_region
    _
  $region5: #{forward.17} parent=0 // pred_fallthru
    _
  // Predicated region
  $region6: #{forward.17} parent=0 // pred_check
    _
  $region7: #{forward.17} parent=0 // pred_check_branch
    %11 = sbr.rel (0) target = $region9
  $region8: #{forward.17} parent=0 // pred_region
    _
  $region9: #{forward.17} parent=0 // pred_fallthru
    _
  // Predicated region
  $region10: #{forward.17} parent=0 // pred_check
    _
  $region11: #{forward.17} parent=0 // pred_check_branch
    %13 = sbr.rel (0) target = $region13
  $region12: #{forward.17} parent=0 // pred_region
    _
  $region13: #{forward.17} parent=0 // pred_fallthru
    _
  %v15 = vld [vmem:[%s0] sm:$0xff]
  %v16 = vld [vmem:[%s0 + $0x8] sm:$0xff]
  %v17 = vld [vmem:[%s0 + $0x10] sm:$0xff]
  %v18 = vld [vmem:[%s0 + $0x18] sm:$0xff]
  %v19 = vld [vmem:[%s1] sm:$0xf]
  %v20 = vld [vmem:[%s1 + $0x4] sm:$0xf]
  %v21 = vld [vmem:[%s1 + $0x8] sm:$0xf]
  %v22 = vld [vmem:[%s1 + $0xc] sm:$0xf]
  %v23 = vld [vmem:[%s1 + $0x10] sm:$0xf]
  %v24 = vld [vmem:[%s1 + $0x14] sm:$0xf]
  %v25 = vld [vmem:[%s1 + $0x18] sm:$0xf]
  %v26 = vld [vmem:[%s1 + $0x1c] sm:$0xf]
  %v27 = vld [vmem:[%s1 + $0x20] sm:$0xf]
  %v28 = vld [vmem:[%s1 + $0x24] sm:$0xf]
  %v29 = vld [vmem:[%s1 + $0x28] sm:$0xf]
  %v30 = vld [vmem:[%s1 + $0x2c] sm:$0xf]
  %v31 = vld [vmem:[%s1 + $0x30] sm:$0xf]
  %v32 = vld [vmem:[%s1 + $0x34] sm:$0xf]
  %v33 = vld [vmem:[%s1 + $0x38] sm:$0xf]
  %v34 = vld [vmem:[%s1 + $0x3c] sm:$0xf]
  %v35 = vld [vmem:[%s1 + $0x40] sm:$0xf]
  %v36 = vld [vmem:[%s1 + $0x44] sm:$0xf]
  %v37 = vld [vmem:[%s1 + $0x48] sm:$0xf]
  %v38 = vld [vmem:[%s1 + $0x4c] sm:$0xf]
  %v39 = vld [vmem:[%s1 + $0x50] sm:$0xf]
  %v40 = vld [vmem:[%s1 + $0x54] sm:$0xf]
  %v41 = vld [vmem:[%s1 + $0x58] sm:$0xf]
  %v42 = vld [vmem:[%s1 + $0x5c] sm:$0xf]
  %v43 = vld [vmem:[%s1 + $0x60] sm:$0xf]
  %v44 = vld [vmem:[%s1 + $0x64] sm:$0xf]
  %v45 = vld [vmem:[%s1 + $0x68] sm:$0xf]
  %v46 = vld [vmem:[%s1 + $0x6c] sm:$0xf]
  %v47 = vld [vmem:[%s1 + $0x70] sm:$0xf]
  %v48 = vld [vmem:[%s1 + $0x74] sm:$0xf]
  %v49 = vld [vmem:[%s1 + $0x78] sm:$0xf]
  %v50 = vld [vmem:[%s1 + $0x7c] sm:$0xf]
  %v51 = vld [vmem:[%s1 + $0x80] sm:$0xf]
  %v52 = vld [vmem:[%s1 + $0x84] sm:$0xf]
  %v53 = vld [vmem:[%s1 + $0x88] sm:$0xf]
  %v54 = vld [vmem:[%s1 + $0x8c] sm:$0xf]
  %v55 = vld [vmem:[%s1 + $0x90] sm:$0xf]
  %v56 = vld [vmem:[%s1 + $0x94] sm:$0xf]
  %v57 = vld [vmem:[%s1 + $0x98] sm:$0xf]
  %v58 = vld [vmem:[%s1 + $0x9c] sm:$0xf]
  %v59 = vld [vmem:[%s1 + $0xa0] sm:$0xf]
  %v60 = vld [vmem:[%s1 + $0xa4] sm:$0xf]
  %v61 = vld [vmem:[%s1 + $0xa8] sm:$0xf]
  %v62 = vld [vmem:[%s1 + $0xac] sm:$0xf]
  %v63 = vld [vmem:[%s1 + $0xb0] sm:$0xf]
  %v64 = vld [vmem:[%s1 + $0xb4] sm:$0xf]
  %v65 = vld [vmem:[%s1 + $0xb8] sm:$0xf]
  %v66 = vld [vmem:[%s1 + $0xbc] sm:$0xf]
  %v67 = vld [vmem:[%s1 + $0xc0] sm:$0xf]
  %v68 = vld [vmem:[%s1 + $0xc4] sm:$0xf]
  %v69 = vld [vmem:[%s1 + $0xc8] sm:$0xf]
  %v70 = vld [vmem:[%s1 + $0xcc] sm:$0xf]
  %v71 = vld [vmem:[%s1 + $0xd0] sm:$0xf]
  %v72 = vld [vmem:[%s1 + $0xd4] sm:$0xf]
  %v73 = vld [vmem:[%s1 + $0xd8] sm:$0xf]
  %v74 = vld [vmem:[%s1 + $0xdc] sm:$0xf]
  %v75 = vld [vmem:[%s1 + $0xe0] sm:$0xf]
  %v76 = vld [vmem:[%s1 + $0xe4] sm:$0xf]
  %v77 = vld [vmem:[%s1 + $0xe8] sm:$0xf]
  %v78 = vld [vmem:[%s1 + $0xec] sm:$0xf]
  %v79 = vld [vmem:[%s1 + $0xf0] sm:$0xf]
  %v80 = vld [vmem:[%s1 + $0xf4] sm:$0xf]
  %v81 = vld [vmem:[%s1 + $0xf8] sm:$0xf]
  %v82 = vld [vmem:[%s1 + $0xfc] sm:$0xf]
  %v83 = vld [vmem:[%s1 + $0x100] sm:$0xf]
  %v84 = vld [vmem:[%s1 + $0x104] sm:$0xf]
  %v85 = vld [vmem:[%s1 + $0x108] sm:$0xf]
  %v86 = vld [vmem:[%s1 + $0x10c] sm:$0xf]
  %v87 = vld [vmem:[%s1 + $0x110] sm:$0xf]
  %v88 = vld [vmem:[%s1 + $0x114] sm:$0xf]
  %v89 = vld [vmem:[%s1 + $0x118] sm:$0xf]
  %v90 = vld [vmem:[%s1 + $0x11c] sm:$0xf]
  %v91 = vld [vmem:[%s1 + $0x120] sm:$0xf]
  %v92 = vld [vmem:[%s1 + $0x124] sm:$0xf]
  %v93 = vld [vmem:[%s1 + $0x128] sm:$0xf]
  %v94 = vld [vmem:[%s1 + $0x12c] sm:$0xf]
  %v95 = vld [vmem:[%s1 + $0x130] sm:$0xf]
  %v96 = vld [vmem:[%s1 + $0x134] sm:$0xf]
  %v97 = vld [vmem:[%s1 + $0x138] sm:$0xf]
  %v98 = vld [vmem:[%s1 + $0x13c] sm:$0xf]
  %v99 = vld [vmem:[%s1 + $0x140] sm:$0xf]
  %v100 = vld [vmem:[%s1 + $0x144] sm:$0xf]
  %v101 = vld [vmem:[%s1 + $0x148] sm:$0xf]
  %v102 = vld [vmem:[%s1 + $0x14c] sm:$0xf]
  %v103 = vld [vmem:[%s1 + $0x150] sm:$0xf]
  %v104 = vld [vmem:[%s1 + $0x154] sm:$0xf]
  %v105 = vld [vmem:[%s1 + $0x158] sm:$0xf]
  %v106 = vld [vmem:[%s1 + $0x15c] sm:$0xf]
  %v107 = vld [vmem:[%s1 + $0x160] sm:$0xf]
  %v108 = vld [vmem:[%s1 + $0x164] sm:$0xf]
  %v109 = vld [vmem:[%s1 + $0x168] sm:$0xf]
  %v110 = vld [vmem:[%s1 + $0x16c] sm:$0xf]
  %v111 = vld [vmem:[%s1 + $0x170] sm:$0xf]
  %v112 = vld [vmem:[%s1 + $0x174] sm:$0xf]
  %v113 = vld [vmem:[%s1 + $0x178] sm:$0xf]
  %v114 = vld [vmem:[%s1 + $0x17c] sm:$0xf]
  %v115 = vld [vmem:[%s1 + $0x180] sm:$0xf]
  %v116 = vld [vmem:[%s1 + $0x184] sm:$0xf]
  %v117 = vld [vmem:[%s1 + $0x188] sm:$0xf]
  %v118 = vld [vmem:[%s1 + $0x18c] sm:$0xf]
  %v119 = vld [vmem:[%s1 + $0x190] sm:$0xf]
  %v120 = vld [vmem:[%s1 + $0x194] sm:$0xf]
  %v121 = vld [vmem:[%s1 + $0x198] sm:$0xf]
  %v122 = vld [vmem:[%s1 + $0x19c] sm:$0xf]
  %v123 = vld [vmem:[%s1 + $0x1a0] sm:$0xf]
  %v124 = vld [vmem:[%s1 + $0x1a4] sm:$0xf]
  %v125 = vld [vmem:[%s1 + $0x1a8] sm:$0xf]
  %v126 = vld [vmem:[%s1 + $0x1ac] sm:$0xf]
  %v127 = vld [vmem:[%s1 + $0x1b0] sm:$0xf]
  %v128 = vld [vmem:[%s1 + $0x1b4] sm:$0xf]
  %v129 = vld [vmem:[%s1 + $0x1b8] sm:$0xf]
  %v130 = vld [vmem:[%s1 + $0x1bc] sm:$0xf]
  %v131 = vld [vmem:[%s1 + $0x1c0] sm:$0xf]
  %v132 = vld [vmem:[%s1 + $0x1c4] sm:$0xf]
  %v133 = vld [vmem:[%s1 + $0x1c8] sm:$0xf]
  %v134 = vld [vmem:[%s1 + $0x1cc] sm:$0xf]
  %v135 = vld [vmem:[%s1 + $0x1d0] sm:$0xf]
  %v136 = vld [vmem:[%s1 + $0x1d4] sm:$0xf]
  %v137 = vld [vmem:[%s1 + $0x1d8] sm:$0xf]
  %v138 = vld [vmem:[%s1 + $0x1dc] sm:$0xf]
  %v139 = vld [vmem:[%s1 + $0x1e0] sm:$0xf]
  %v140 = vld [vmem:[%s1 + $0x1e4] sm:$0xf]
  %v141 = vld [vmem:[%s1 + $0x1e8] sm:$0xf]
  %v142 = vld [vmem:[%s1 + $0x1ec] sm:$0xf]
  %v143 = vld [vmem:[%s1 + $0x1f0] sm:$0xf]
  %v144 = vld [vmem:[%s1 + $0x1f4] sm:$0xf]
  %v145 = vld [vmem:[%s1 + $0x1f8] sm:$0xf]
  %v146 = vld [vmem:[%s1 + $0x1fc] sm:$0xf]
  %v147 = vld [vmem:[%s2] sm:$0x1]
  %v149 = vlaneseq
  %v150 = vshrl.u32 %v149, 7
  %v151 = vsub.s32 0, %v150
  %v152 = vrot.slane %v147, %v151
  %v158 = vunpack.c.l.b16 %v15
  %v159 = vunpack.c.h.b16 %v15
  %v160 = vunpack.c.l.b16 %v16
  %v161 = vunpack.c.h.b16 %v16
  %v162 = vunpack.c.l.b16 %v17
  %v163 = vunpack.c.h.b16 %v17
  %v164 = vunpack.c.l.b16 %v18
  %v165 = vunpack.c.h.b16 %v18
  %v166 = vpack.c.b16 %v158, %v158
  %v167 = vpack.c.b16 %v159, %v159
  %v168 = vpack.c.b16 %v160, %v160
  %v169 = vpack.c.b16 %v161, %v161
  %v170 = vpack.c.b16 %v162, %v162
  %v171 = vpack.c.b16 %v163, %v163
  %v172 = vpack.c.b16 %v164, %v164
  %v173 = vpack.c.b16 %v165, %v165
  %v310 = vunpack.c.l.b16 %v19
  %v311 = vunpack.c.l.b16 %v20
  %v312 = vunpack.c.l.b16 %v21
  %v313 = vunpack.c.l.b16 %v22
  %v314 = vunpack.c.l.b16 %v23
  %v315 = vunpack.c.l.b16 %v24
  %v316 = vunpack.c.l.b16 %v25
  %v317 = vunpack.c.l.b16 %v26
  %v318 = vunpack.c.l.b16 %v27
  %v319 = vunpack.c.l.b16 %v28
  %v320 = vunpack.c.l.b16 %v29
  %v321 = vunpack.c.l.b16 %v30
  %v322 = vunpack.c.l.b16 %v31
  %v323 = vunpack.c.l.b16 %v32
  %v324 = vunpack.c.l.b16 %v33
  %v325 = vunpack.c.l.b16 %v34
  %v326 = vunpack.c.l.b16 %v35
  %v327 = vunpack.c.l.b16 %v36
  %v328 = vunpack.c.l.b16 %v37
  %v329 = vunpack.c.l.b16 %v38
  %v330 = vunpack.c.l.b16 %v39
  %v331 = vunpack.c.l.b16 %v40
  %v332 = vunpack.c.l.b16 %v41
  %v333 = vunpack.c.l.b16 %v42
  %v334 = vunpack.c.l.b16 %v43
  %v335 = vunpack.c.l.b16 %v44
  %v336 = vunpack.c.l.b16 %v45
  %v337 = vunpack.c.l.b16 %v46
  %v338 = vunpack.c.l.b16 %v47
  %v339 = vunpack.c.l.b16 %v48
  %v340 = vunpack.c.l.b16 %v49
  %v341 = vunpack.c.l.b16 %v50
  %v342 = vunpack.c.l.b16 %v51
  %v343 = vunpack.c.l.b16 %v52
  %v344 = vunpack.c.l.b16 %v53
  %v345 = vunpack.c.l.b16 %v54
  %v346 = vunpack.c.l.b16 %v55
  %v347 = vunpack.c.l.b16 %v56
  %v348 = vunpack.c.l.b16 %v57
  %v349 = vunpack.c.l.b16 %v58
  %v350 = vunpack.c.l.b16 %v59
  %v351 = vunpack.c.l.b16 %v60
  %v352 = vunpack.c.l.b16 %v61
  %v353 = vunpack.c.l.b16 %v62
  %v354 = vunpack.c.l.b16 %v63
  %v355 = vunpack.c.l.b16 %v64
  %v356 = vunpack.c.l.b16 %v65
  %v357 = vunpack.c.l.b16 %v66
  %v358 = vunpack.c.l.b16 %v67
  %v359 = vunpack.c.l.b16 %v68
  %v360 = vunpack.c.l.b16 %v69
  %v361 = vunpack.c.l.b16 %v70
  %v362 = vunpack.c.l.b16 %v71
  %v363 = vunpack.c.l.b16 %v72
  %v364 = vunpack.c.l.b16 %v73
  %v365 = vunpack.c.l.b16 %v74
  %v366 = vunpack.c.l.b16 %v75
  %v367 = vunpack.c.l.b16 %v76
  %v368 = vunpack.c.l.b16 %v77
  %v369 = vunpack.c.l.b16 %v78
  %v370 = vunpack.c.l.b16 %v79
  %v371 = vunpack.c.l.b16 %v80
  %v372 = vunpack.c.l.b16 %v81
  %v373 = vunpack.c.l.b16 %v82
  %v374 = vunpack.c.l.b16 %v83
  %v375 = vunpack.c.l.b16 %v84
  %v376 = vunpack.c.l.b16 %v85
  %v377 = vunpack.c.l.b16 %v86
  %v378 = vunpack.c.l.b16 %v87
  %v379 = vunpack.c.l.b16 %v88
  %v380 = vunpack.c.l.b16 %v89
  %v381 = vunpack.c.l.b16 %v90
  %v382 = vunpack.c.l.b16 %v91
  %v383 = vunpack.c.l.b16 %v92
  %v384 = vunpack.c.l.b16 %v93
  %v385 = vunpack.c.l.b16 %v94
  %v386 = vunpack.c.l.b16 %v95
  %v387 = vunpack.c.l.b16 %v96
  %v388 = vunpack.c.l.b16 %v97
  %v389 = vunpack.c.l.b16 %v98
  %v390 = vunpack.c.l.b16 %v99
  %v391 = vunpack.c.l.b16 %v100
  %v392 = vunpack.c.l.b16 %v101
  %v393 = vunpack.c.l.b16 %v102
  %v394 = vunpack.c.l.b16 %v103
  %v395 = vunpack.c.l.b16 %v104
  %v396 = vunpack.c.l.b16 %v105
  %v397 = vunpack.c.l.b16 %v106
  %v398 = vunpack.c.l.b16 %v107
  %v399 = vunpack.c.l.b16 %v108
  %v400 = vunpack.c.l.b16 %v109
  %v401 = vunpack.c.l.b16 %v110
  %v402 = vunpack.c.l.b16 %v111
  %v403 = vunpack.c.l.b16 %v112
  %v404 = vunpack.c.l.b16 %v113
  %v405 = vunpack.c.l.b16 %v114
  %v406 = vunpack.c.l.b16 %v115
  %v407 = vunpack.c.l.b16 %v116
  %v408 = vunpack.c.l.b16 %v117
  %v409 = vunpack.c.l.b16 %v118
  %v410 = vunpack.c.l.b16 %v119
  %v411 = vunpack.c.l.b16 %v120
  %v412 = vunpack.c.l.b16 %v121
  %v413 = vunpack.c.l.b16 %v122
  %v414 = vunpack.c.l.b16 %v123
  %v415 = vunpack.c.l.b16 %v124
  %v416 = vunpack.c.l.b16 %v125
  %v417 = vunpack.c.l.b16 %v126
  %v418 = vunpack.c.l.b16 %v127
  %v419 = vunpack.c.l.b16 %v128
  %v420 = vunpack.c.l.b16 %v129
  %v421 = vunpack.c.l.b16 %v130
  %v422 = vunpack.c.l.b16 %v131
  %v423 = vunpack.c.l.b16 %v132
  %v424 = vunpack.c.l.b16 %v133
  %v425 = vunpack.c.l.b16 %v134
  %v426 = vunpack.c.l.b16 %v135
  %v427 = vunpack.c.l.b16 %v136
  %v428 = vunpack.c.l.b16 %v137
  %v429 = vunpack.c.l.b16 %v138
  %v430 = vunpack.c.l.b16 %v139
  %v431 = vunpack.c.l.b16 %v140
  %v432 = vunpack.c.l.b16 %v141
  %v433 = vunpack.c.l.b16 %v142
  %v434 = vunpack.c.l.b16 %v143
  %v435 = vunpack.c.l.b16 %v144
  %v436 = vunpack.c.l.b16 %v145
  %v437 = vunpack.c.l.b16 %v146
  %v438 = vpack.c.b16 %v311, %v310
  %v439 = vpack.c.b16 %v313, %v312
  %v440 = vpack.c.b16 %v315, %v314
  %v441 = vpack.c.b16 %v317, %v316
  %v442 = vpack.c.b16 %v319, %v318
  %v443 = vpack.c.b16 %v321, %v320
  %v444 = vpack.c.b16 %v323, %v322
  %v445 = vpack.c.b16 %v325, %v324
  %v446 = vpack.c.b16 %v327, %v326
  %v447 = vpack.c.b16 %v329, %v328
  %v448 = vpack.c.b16 %v331, %v330
  %v449 = vpack.c.b16 %v333, %v332
  %v450 = vpack.c.b16 %v335, %v334
  %v451 = vpack.c.b16 %v337, %v336
  %v452 = vpack.c.b16 %v339, %v338
  %v453 = vpack.c.b16 %v341, %v340
  %v454 = vpack.c.b16 %v343, %v342
  %v455 = vpack.c.b16 %v345, %v344
  %v456 = vpack.c.b16 %v347, %v346
  %v457 = vpack.c.b16 %v349, %v348
  %v458 = vpack.c.b16 %v351, %v350
  %v459 = vpack.c.b16 %v353, %v352
  %v460 = vpack.c.b16 %v355, %v354
  %v461 = vpack.c.b16 %v357, %v356
  %v462 = vpack.c.b16 %v359, %v358
  %v463 = vpack.c.b16 %v361, %v360
  %v464 = vpack.c.b16 %v363, %v362
  %v465 = vpack.c.b16 %v365, %v364
  %v466 = vpack.c.b16 %v367, %v366
  %v467 = vpack.c.b16 %v369, %v368
  %v468 = vpack.c.b16 %v371, %v370
  %v469 = vpack.c.b16 %v373, %v372
  %v470 = vpack.c.b16 %v375, %v374
  %v471 = vpack.c.b16 %v377, %v376
  %v472 = vpack.c.b16 %v379, %v378
  %v473 = vpack.c.b16 %v381, %v380
  %v474 = vpack.c.b16 %v383, %v382
  %v475 = vpack.c.b16 %v385, %v384
  %v476 = vpack.c.b16 %v387, %v386
  %v477 = vpack.c.b16 %v389, %v388
  %v478 = vpack.c.b16 %v391, %v390
  %v479 = vpack.c.b16 %v393, %v392
  %v480 = vpack.c.b16 %v395, %v394
  %v481 = vpack.c.b16 %v397, %v396
  %v482 = vpack.c.b16 %v399, %v398
  %v483 = vpack.c.b16 %v401, %v400
  %v484 = vpack.c.b16 %v403, %v402
  %v485 = vpack.c.b16 %v405, %v404
  %v486 = vpack.c.b16 %v407, %v406
  %v487 = vpack.c.b16 %v409, %v408
  %v488 = vpack.c.b16 %v411, %v410
  %v489 = vpack.c.b16 %v413, %v412
  %v490 = vpack.c.b16 %v415, %v414
  %v491 = vpack.c.b16 %v417, %v416
  %v492 = vpack.c.b16 %v419, %v418
  %v493 = vpack.c.b16 %v421, %v420
  %v494 = vpack.c.b16 %v423, %v422
  %v495 = vpack.c.b16 %v425, %v424
  %v496 = vpack.c.b16 %v427, %v426
  %v497 = vpack.c.b16 %v429, %v428
  %v498 = vpack.c.b16 %v431, %v430
  %v499 = vpack.c.b16 %v433, %v432
  %v500 = vpack.c.b16 %v435, %v434
  %v501 = vpack.c.b16 %v437, %v436
  %566 = vmatprep.subr.bf16.mxu0 0
  %567 = vmatpush1.bf16.msra.mxu0 %v438
  %568 = vmatprep.subr.bf16.mxu0 0
  %569 = vmatpush1.bf16.msra.mxu0 %v439
  %570 = vmatprep.subr.bf16.mxu0 0
  %571 = vmatpush1.bf16.msra.mxu0 %v440
  %572 = vmatprep.subr.bf16.mxu0 0
  %573 = vmatpush1.bf16.msra.mxu0 %v441
  %574 = vmatprep.subr.bf16.mxu0 0
  %575 = vmatpush1.bf16.msra.mxu0 %v442
  %576 = vmatprep.subr.bf16.mxu0 0
  %577 = vmatpush1.bf16.msra.mxu0 %v443
  %578 = vmatprep.subr.bf16.mxu0 0
  %579 = vmatpush1.bf16.msra.mxu0 %v444
  %580 = vmatprep.subr.bf16.mxu0 0
  %581 = vmatpush1.bf16.msra.mxu0 %v445
  %582 = vmatprep.subr.bf16.mxu0 0
  %583 = vmatpush1.bf16.msra.mxu0 %v446
  %584 = vmatprep.subr.bf16.mxu0 0
  %585 = vmatpush1.bf16.msra.mxu0 %v447
  %586 = vmatprep.subr.bf16.mxu0 0
  %587 = vmatpush1.bf16.msra.mxu0 %v448
  %588 = vmatprep.subr.bf16.mxu0 0
  %589 = vmatpush1.bf16.msra.mxu0 %v449
  %590 = vmatprep.subr.bf16.mxu0 0
  %591 = vmatpush1.bf16.msra.mxu0 %v450
  %592 = vmatprep.subr.bf16.mxu0 0
  %593 = vmatpush1.bf16.msra.mxu0 %v451
  %594 = vmatprep.subr.bf16.mxu0 0
  %595 = vmatpush1.bf16.msra.mxu0 %v452
  %596 = vmatprep.subr.bf16.mxu0 0
  %597 = vmatpush1.bf16.msra.mxu0 %v453
  %598 = vmatprep.mubr.bf16.mxu0 %v167
  %599 = vmatmul.mubr.bf16.gmra.mrb[0].mxu0 %v166
  %v600 = vpop.f32.mrb[0].mxu0
  %v601 = vadd.f32 %v152, %v600
  %v602 = vpop.f32.mrb[0].mxu0
  %v603 = vpop.f32.mrb[0].mxu0
  %v604 = vpop.f32.mrb[0].mxu0
  %605 = vdwg.mxu0
  %606 = vmatprep.subr.bf16.mxu0 0
  %607 = vmatpush1.bf16.msra.mxu0 %v454
  %608 = vmatprep.subr.bf16.mxu0 0
  %609 = vmatpush1.bf16.msra.mxu0 %v455
  %610 = vmatprep.subr.bf16.mxu0 0
  %611 = vmatpush1.bf16.msra.mxu0 %v456
  %612 = vmatprep.subr.bf16.mxu0 0
  %613 = vmatpush1.bf16.msra.mxu0 %v457
  %614 = vmatprep.subr.bf16.mxu0 0
  %615 = vmatpush1.bf16.msra.mxu0 %v458
  %616 = vmatprep.subr.bf16.mxu0 0
  %617 = vmatpush1.bf16.msra.mxu0 %v459
  %618 = vmatprep.subr.bf16.mxu0 0
  %619 = vmatpush1.bf16.msra.mxu0 %v460
  %620 = vmatprep.subr.bf16.mxu0 0
  %621 = vmatpush1.bf16.msra.mxu0 %v461
  %622 = vmatprep.subr.bf16.mxu0 0
  %623 = vmatpush1.bf16.msra.mxu0 %v462
  %624 = vmatprep.subr.bf16.mxu0 0
  %625 = vmatpush1.bf16.msra.mxu0 %v463
  %626 = vmatprep.subr.bf16.mxu0 0
  %627 = vmatpush1.bf16.msra.mxu0 %v464
  %628 = vmatprep.subr.bf16.mxu0 0
  %629 = vmatpush1.bf16.msra.mxu0 %v465
  %630 = vmatprep.subr.bf16.mxu0 0
  %631 = vmatpush1.bf16.msra.mxu0 %v466
  %632 = vmatprep.subr.bf16.mxu0 0
  %633 = vmatpush1.bf16.msra.mxu0 %v467
  %634 = vmatprep.subr.bf16.mxu0 0
  %635 = vmatpush1.bf16.msra.mxu0 %v468
  %636 = vmatprep.subr.bf16.mxu0 0
  %637 = vmatpush1.bf16.msra.mxu0 %v469
  %638 = vmatprep.mubr.bf16.mxu0 %v169
  %639 = vmatmul.mubr.bf16.gmra.mrb[0].mxu0 %v168
  %v640 = vpop.f32.mrb[0].mxu0
  %v641 = vadd.f32 %v601, %v640
  %v642 = vpop.f32.mrb[0].mxu0
  %v643 = vpop.f32.mrb[0].mxu0
  %v644 = vpop.f32.mrb[0].mxu0
  %645 = vdwg.mxu0
  %646 = vmatprep.subr.bf16.mxu0 0
  %647 = vmatpush1.bf16.msra.mxu0 %v470
  %648 = vmatprep.subr.bf16.mxu0 0
  %649 = vmatpush1.bf16.msra.mxu0 %v471
  %650 = vmatprep.subr.bf16.mxu0 0
  %651 = vmatpush1.bf16.msra.mxu0 %v472
  %652 = vmatprep.subr.bf16.mxu0 0
  %653 = vmatpush1.bf16.msra.mxu0 %v473
  %654 = vmatprep.subr.bf16.mxu0 0
  %655 = vmatpush1.bf16.msra.mxu0 %v474
  %656 = vmatprep.subr.bf16.mxu0 0
  %657 = vmatpush1.bf16.msra.mxu0 %v475
  %658 = vmatprep.subr.bf16.mxu0 0
  %659 = vmatpush1.bf16.msra.mxu0 %v476
  %660 = vmatprep.subr.bf16.mxu0 0
  %661 = vmatpush1.bf16.msra.mxu0 %v477
  %662 = vmatprep.subr.bf16.mxu0 0
  %663 = vmatpush1.bf16.msra.mxu0 %v478
  %664 = vmatprep.subr.bf16.mxu0 0
  %665 = vmatpush1.bf16.msra.mxu0 %v479
  %666 = vmatprep.subr.bf16.mxu0 0
  %667 = vmatpush1.bf16.msra.mxu0 %v480
  %668 = vmatprep.subr.bf16.mxu0 0
  %669 = vmatpush1.bf16.msra.mxu0 %v481
  %670 = vmatprep.subr.bf16.mxu0 0
  %671 = vmatpush1.bf16.msra.mxu0 %v482
  %672 = vmatprep.subr.bf16.mxu0 0
  %673 = vmatpush1.bf16.msra.mxu0 %v483
  %674 = vmatprep.subr.bf16.mxu0 0
  %675 = vmatpush1.bf16.msra.mxu0 %v484
  %676 = vmatprep.subr.bf16.mxu0 0
  %677 = vmatpush1.bf16.msra.mxu0 %v485
  %678 = vmatprep.mubr.bf16.mxu0 %v171
  %679 = vmatmul.mubr.bf16.gmra.mrb[0].mxu0 %v170
  %v680 = vpop.f32.mrb[0].mxu0
  %v681 = vadd.f32 %v641, %v680
  %v682 = vpop.f32.mrb[0].mxu0
  %v683 = vpop.f32.mrb[0].mxu0
  %v684 = vpop.f32.mrb[0].mxu0
  %685 = vdwg.mxu0
  %686 = vmatprep.subr.bf16.mxu0 0
  %687 = vmatpush1.bf16.msra.mxu0 %v486
  %688 = vmatprep.subr.bf16.mxu0 0
  %689 = vmatpush1.bf16.msra.mxu0 %v487
  %690 = vmatprep.subr.bf16.mxu0 0
  %691 = vmatpush1.bf16.msra.mxu0 %v488
  %692 = vmatprep.subr.bf16.mxu0 0
  %693 = vmatpush1.bf16.msra.mxu0 %v489
  %694 = vmatprep.subr.bf16.mxu0 0
  %695 = vmatpush1.bf16.msra.mxu0 %v490
  %696 = vmatprep.subr.bf16.mxu0 0
  %697 = vmatpush1.bf16.msra.mxu0 %v491
  %698 = vmatprep.subr.bf16.mxu0 0
  %699 = vmatpush1.bf16.msra.mxu0 %v492
  %700 = vmatprep.subr.bf16.mxu0 0
  %701 = vmatpush1.bf16.msra.mxu0 %v493
  %702 = vmatprep.subr.bf16.mxu0 0
  %703 = vmatpush1.bf16.msra.mxu0 %v494
  %704 = vmatprep.subr.bf16.mxu0 0
  %705 = vmatpush1.bf16.msra.mxu0 %v495
  %706 = vmatprep.subr.bf16.mxu0 0
  %707 = vmatpush1.bf16.msra.mxu0 %v496
  %708 = vmatprep.subr.bf16.mxu0 0
  %709 = vmatpush1.bf16.msra.mxu0 %v497
  %710 = vmatprep.subr.bf16.mxu0 0
  %711 = vmatpush1.bf16.msra.mxu0 %v498
  %712 = vmatprep.subr.bf16.mxu0 0
  %713 = vmatpush1.bf16.msra.mxu0 %v499
  %714 = vmatprep.subr.bf16.mxu0 0
  %715 = vmatpush1.bf16.msra.mxu0 %v500
  %716 = vmatprep.subr.bf16.mxu0 0
  %717 = vmatpush1.bf16.msra.mxu0 %v501
  %718 = vmatprep.mubr.bf16.mxu0 %v173
  %719 = vmatmul.mubr.bf16.gmra.mrb[0].mxu0 %v172
  %v720 = vpop.f32.mrb[0].mxu0
  %v721 = vadd.f32 %v681, %v720
  %v722 = vpop.f32.mrb[0].mxu0
  %v723 = vpop.f32.mrb[0].mxu0
  %v724 = vpop.f32.mrb[0].mxu0
  %725 = vdwg.mxu0
  %726 = vst [vmem:[%s3] sm:$0xff] %v721
  // Predicated region
  $region14: #{forward.17} parent=0 // pred_check
    _
  $region15: #{forward.17} parent=0 // pred_check_branch
    %728 = sbr.rel (0) target = $region17
  $region16: #{forward.17} parent=0 // pred_region
    _
  $region17: #{forward.17} parent=0 // pred_fallthru
    _
  // Predicated region
  $region18: #{forward.17} parent=0 // pred_check
    _
  $region19: #{forward.17} parent=0 // pred_check_branch
    %730 = sbr.rel (0) target = $region21
  $region20: #{forward.17} parent=0 // pred_region
    _
  $region21: #{forward.17} parent=0 // pred_fallthru
    _

// kernel: forward.18
$region0: #{forward.18}
  #allocation0 [shape = 'u32[]', space=smem, size = 0x4, offset = 0x4, fixed_abs, tag = 'smem constant byte address 0x4 - core index']
  #allocation1 [shape = 'u32[144,128]{1,0:T(1,128)}', space=vmem, size = 0x12000, scoped, tag = 'internal scratch']
  %s0 = inlined_call_operand.vmem [shape: bf16[8,32], index: 0, kind: input, shape index: {}]
  %s1 = inlined_call_operand.vmem [shape: bf16[32,1024], index: 1, kind: input, shape index: {}]
  %s2 = inlined_call_operand.vmem [shape: f32[1,1024], index: 2, kind: input, shape index: {}]
  %s3 = inlined_call_operand.vmem [shape: f32[8,1024], index: 3, kind: output, shape index: {}]
  %s4 = sld [smem:[#allocation0]]
  $region83: #{forward.18} parent=0
    _
  %s6 = ssub.s32 1, %s4
  %s7 = scalar_select 0, %s6, %s4
  $region1: #{forward.18} parent=0
    #allocation2 [shape = 'u8[32768]{0}', space=vmem, size = 0x8000, scoped, tag = 'input window, operand 1']
    loop: start=0, step=1, limit=6
    $region2: #{forward.18} parent=1 // loop_pre_header
      _
    $region3: #{forward.18} parent=1 // loop_header
      %s9 = sphi 0, %s13
      %p10 = scmp.ge.s32.totalorder %s9, 6
      %s16 = sphi 0, %s28
      %s17 = sphi 0, %s24
      %s18 = sphi 0, %s16
      %s19 = sphi 0, %s17
      %s20 = sphi 0, %s18
      %s21 = sphi 0, %s19
      %s31 = sphi 0, %s33
      %s34 = sphi 0, %s31
      %s35 = sphi 0, %s34
      %s51 = sphi 0, %s35
      %s57 = sphi 0, %s59
      %s60 = sphi 0, %s57
      %s61 = sphi 0, %s60
      %s77 = sphi 0, %s61
      %s83 = sphi 0, %s85
      %s86 = sphi 0, %s83
      %s87 = sphi 0, %s86
      %s103 = sphi 0, %s87
      %s111 = sphi 0, %s113
      %s114 = sphi 0, %s111
      %s115 = sphi 0, %s114
      %s131 = sphi 0, %s115
    $region4: #{forward.18} parent=1 // loop_header_branch
      %12 = sbr.rel (%p10) target = $region8
    $region5: #{forward.18} parent=1 // loop_body
      %s14 = ssub.s32 %s9, 1
      %s15 = ssub.s32 %s9, 2
      %s22 = sadd.s32 1, %s17
      %p23 = scmp.ge.s32.totalorder %s22, 4
      %s24 = scalar_select %p23, 0, %s22
      %s25 = sadd.s32 1, %s16
      %s26 = scalar_select %p23, %s25, %s16
      %p27 = scmp.ge.s32.totalorder %s26, 1
      %s28 = scalar_select %p27, 0, %s26
      %s29 = ssub.s32 %s16, %s28
      %p30 = scmp.eq.s32.totalorder %s29, 0
      %s32 = sadd.s32 %s31, 1
      %s33 = scalar_select %p30, %s31, %s32
      %p36 = pneg %p30
      %p37 = scmp.eq.s32.totalorder %s9, 3
      %p38 = por %p36, %p37
      %p39 = scmp.ne.s32.totalorder %s31, %s34
      %p40 = scmp.eq.s32.totalorder %s9, 0
      %p41 = por %p39, %p40
      %p42 = scmp.ne.s32.totalorder %s31, %s34
      %p43 = scmp.eq.s32.totalorder %s14, 3
      %p44 = por %p42, %p43
      %p45 = scmp.ne.s32.totalorder %s34, %s35
      %p46 = scmp.eq.s32.totalorder %s14, 0
      %p47 = por %p45, %p46
      %p48 = scmp.ne.s32.totalorder %s34, %s35
      %p49 = scmp.eq.s32.totalorder %s15, 3
      %p50 = por %p48, %p49
      %p52 = scmp.ne.s32.totalorder %s35, %s51
      %p53 = scmp.eq.s32.totalorder %s15, 0
      %p54 = por %p52, %p53
      %s55 = ssub.s32 %s17, %s24
      %p56 = scmp.eq.s32.totalorder %s55, 0
      %s58 = sadd.s32 %s57, 1
      %s59 = scalar_select %p56, %s57, %s58
      %p62 = pneg %p56
      %p63 = scmp.eq.s32.totalorder %s9, 3
      %p64 = por %p62, %p63
      %p65 = scmp.ne.s32.totalorder %s57, %s60
      %p66 = scmp.eq.s32.totalorder %s9, 0
      %p67 = por %p65, %p66
      %p68 = scmp.ne.s32.totalorder %s57, %s60
      %p69 = scmp.eq.s32.totalorder %s14, 3
      %p70 = por %p68, %p69
      %p71 = scmp.ne.s32.totalorder %s60, %s61
      %p72 = scmp.eq.s32.totalorder %s14, 0
      %p73 = por %p71, %p72
      %p74 = scmp.ne.s32.totalorder %s60, %s61
      %p75 = scmp.eq.s32.totalorder %s15, 3
      %p76 = por %p74, %p75
      %p78 = scmp.ne.s32.totalorder %s61, %s77
      %p79 = scmp.eq.s32.totalorder %s15, 0
      %p80 = por %p78, %p79
      %s81 = ssub.s32 %s17, %s24
      %p82 = scmp.eq.s32.totalorder %s81, 0
      %s84 = sadd.s32 %s83, 1
      %s85 = scalar_select %p82, %s83, %s84
      %p88 = pneg %p82
      %p89 = scmp.eq.s32.totalorder %s9, 3
      %p90 = por %p88, %p89
      %p91 = scmp.ne.s32.totalorder %s83, %s86
      %p92 = scmp.eq.s32.totalorder %s9, 0
      %p93 = por %p91, %p92
      %p94 = scmp.ne.s32.totalorder %s83, %s86
      %p95 = scmp.eq.s32.totalorder %s14, 3
      %p96 = por %p94, %p95
      %p97 = scmp.ne.s32.totalorder %s86, %s87
      %p98 = scmp.eq.s32.totalorder %s14, 0
      %p99 = por %p97, %p98
      %p100 = scmp.ne.s32.totalorder %s86, %s87
      %p101 = scmp.eq.s32.totalorder %s15, 3
      %p102 = por %p100, %p101
      %p104 = scmp.ne.s32.totalorder %s87, %s103
      %p105 = scmp.eq.s32.totalorder %s15, 0
      %p106 = por %p104, %p105
      %s107 = ssub.s32 %s16, %s28
      %s108 = ssub.s32 %s17, %s24
      %s109 = sor.u32 %s107, %s108
      %p110 = scmp.eq.s32.totalorder %s109, 0
      %s112 = sadd.s32 %s111, 1
      %s113 = scalar_select %p110, %s111, %s112
      %p116 = pneg %p110
      %p117 = scmp.eq.s32.totalorder %s9, 3
      %p118 = por %p116, %p117
      %p119 = scmp.ne.s32.totalorder %s111, %s114
      %p120 = scmp.eq.s32.totalorder %s9, 0
      %p121 = por %p119, %p120
      %p122 = scmp.ne.s32.totalorder %s111, %s114
      %p123 = scmp.eq.s32.totalorder %s14, 3
      %p124 = por %p122, %p123
      %p125 = scmp.ne.s32.totalorder %s114, %s115
      %p126 = scmp.eq.s32.totalorder %s14, 0
      %p127 = por %p125, %p126
      %p128 = scmp.ne.s32.totalorder %s114, %s115
      %p129 = scmp.eq.s32.totalorder %s15, 3
      %p130 = por %p128, %p129
      %p132 = scmp.ne.s32.totalorder %s115, %s131
      %p133 = scmp.eq.s32.totalorder %s15, 0
      %p134 = por %p132, %p133
      %p135 = scmp.le.s32.totalorder 1, %s9
      %p136 = scmp.lt.s32.totalorder %s9, 5
      %p137 = pnand %p135, %p136
      %p138 = pneg %p137
      // Predicated region
      $region9: #{forward.18} parent=5 // pred_check
        _
      $region10: #{forward.18} parent=5 // pred_check_branch
        %140 = sbr.rel (%p137) target = $region12
      $region11: #{forward.18} parent=5 // pred_region
        %s141 = ssub.s32 %s9, 1
        // Predicated region
        $region13: #{forward.18} parent=11 // pred_check
          %p142 = pneg %p47
        $region14: #{forward.18} parent=11 // pred_check_branch
          %144 = sbr.rel (%p142) target = $region16
        $region15: #{forward.18} parent=11 // pred_region
          %p145 = scmp.lt.s32.totalorder %s18, 0
          %s146 = scalar_select %p145, %s18, 0
          %s147 = smul.addr %s146, 4
          %s148 = scalar_lea.vmem %s0, %s147
        $region16: #{forward.18} parent=11 // pred_fallthru
          _
      $region12: #{forward.18} parent=5 // pred_fallthru
        _
      %p149 = scmp.lt.s32.totalorder %s9, 4
      // Predicated region
      $region17: #{forward.18} parent=5 // pred_check
        %p150 = pneg %p149
      $region18: #{forward.18} parent=5 // pred_check_branch
        %152 = sbr.rel (%p150) target = $region20
      $region19: #{forward.18} parent=5 // pred_region
        // Predicated region
        $region21: #{forward.18} parent=19 // pred_check
          %p153 = pneg %p67
        $region22: #{forward.18} parent=19 // pred_check_branch
          %155 = sbr.rel (%p153) target = $region24
        $region23: #{forward.18} parent=19 // pred_region
          %s156 = sand.u32 %s57, 1
          %s157 = sand.u32 %s57, 1
          %s158 = smul.addr %s157, 32
          %s159 = scalar_lea.vmem [#allocation2], %s158
          %s160 = smul.u32 2, %s17
          %s161 = smul.addr %s160, 4
          %s162 = scalar_lea.vmem %s1, %s161
          // Predicated region
          $region25: #{forward.18} parent=23 // pred_check
            _
          $region26: #{forward.18} parent=23 // pred_check_branch
            %164 = sbr.rel (0) target = $region28
          $region27: #{forward.18} parent=23 // pred_region
            // Predicated region
            $region29: #{forward.18} parent=27 // pred_check
              _
            $region30: #{forward.18} parent=27 // pred_check_branch
              %166 = sbr.rel (0) target = $region32
            $region31: #{forward.18} parent=27 // pred_region
              // Predicated region
              $region44: #{forward.18} parent=31 // pred_check
                _
              $region45: #{forward.18} parent=31 // pred_check_branch
                %187 = sbr.rel (0) target = $region47
              $region46: #{forward.18} parent=31 // pred_region
                loop: start=0, step=1, limit=1
                $region48: #{forward.18} parent=46 // loop_pre_header
                  _
                $region49: #{forward.18} parent=46 // loop_header
                  %s189 = sphi 0, %s193
                  %p190 = scmp.ge.s32.totalorder %s189, 1
                  %s194 = sphi %s162, %s162
                  %s195 = sphi %s159, %s159
                $region50: #{forward.18} parent=46 // loop_header_branch
                  %192 = sbr.rel (%p190) target = $region54
                $region51: #{forward.18} parent=46 // loop_body
                  %v196 = vld [vmem:[%s194] sm:$0xff]
                  %197 = vst [vmem:[%s195] sm:$0xff] %v196
                  %v198 = vld [vmem:[%s194 + $0x20] sm:$0xff]
                  %199 = vst [vmem:[%s195 + $0x8] sm:$0xff] %v198
                  %v200 = vld [vmem:[%s194 + $0x40] sm:$0xff]
                  %201 = vst [vmem:[%s195 + $0x10] sm:$0xff] %v200
                  %v202 = vld [vmem:[%s194 + $0x60] sm:$0xff]
                  %203 = vst [vmem:[%s195 + $0x18] sm:$0xff] %v202
                $region52: #{forward.18} parent=46 // loop_footer
                  %s193 = sadd.s32 1, %s189
                $region53: #{forward.18} parent=46 // loop_footer_branch
                  %188 = sbr.rel target = $region49
                $region54: #{forward.18} parent=46 // loop_exit
                  _
              $region47: #{forward.18} parent=31 // pred_fallthru
                _
              // Predicated region
              $region55: #{forward.18} parent=31 // pred_check
                _
              $region56: #{forward.18} parent=31 // pred_check_branch
                %205 = sbr.rel target = $region58
              $region57: #{forward.18} parent=31 // pred_region
                _
              $region58: #{forward.18} parent=31 // pred_fallthru
                _
            $region32: #{forward.18} parent=27 // pred_fallthru
              _
            // Predicated region
            $region33: #{forward.18} parent=27 // pred_check
              _
            $region34: #{forward.18} parent=27 // pred_check_branch
              %168 = sbr.rel target = $region36
            $region35: #{forward.18} parent=27 // pred_region
              loop: start=0, step=1, limit=1
              $region37: #{forward.18} parent=35 // loop_pre_header
                _
              $region38: #{forward.18} parent=35 // loop_header
                %s171 = sphi 0, %s175
                %p172 = scmp.ge.s32.totalorder %s171, 1
                %s176 = sphi %s162, %s162
                %s177 = sphi %s159, %s159
              $region39: #{forward.18} parent=35 // loop_header_branch
                %174 = sbr.rel (%p172) target = $region43
              $region40: #{forward.18} parent=35 // loop_body
                %v178 = vld [vmem:[%s176] sm:$0xff]
                %179 = vst [vmem:[%s177] sm:$0xff] %v178
                %v180 = vld [vmem:[%s176 + $0x20] sm:$0xff]
                %181 = vst [vmem:[%s177 + $0x8] sm:$0xff] %v180
                %v182 = vld [vmem:[%s176 + $0x40] sm:$0xff]
                %183 = vst [vmem:[%s177 + $0x10] sm:$0xff] %v182
                %v184 = vld [vmem:[%s176 + $0x60] sm:$0xff]
                %185 = vst [vmem:[%s177 + $0x18] sm:$0xff] %v184
              $region41: #{forward.18} parent=35 // loop_footer
                %s175 = sadd.s32 1, %s171
              $region42: #{forward.18} parent=35 // loop_footer_branch
                %170 = sbr.rel target = $region38
              $region43: #{forward.18} parent=35 // loop_exit
                _
            $region36: #{forward.18} parent=27 // pred_fallthru
              _
          $region28: #{forward.18} parent=23 // pred_fallthru
            _
          %206 = vnop
        $region24: #{forward.18} parent=19 // pred_fallthru
          _
        // Predicated region
        $region59: #{forward.18} parent=19 // pred_check
          %p207 = pneg %p93
        $region60: #{forward.18} parent=19 // pred_check_branch
          %209 = sbr.rel (%p207) target = $region62
        $region61: #{forward.18} parent=19 // pred_region
          %s210 = smul.u32 2, %s17
          %p211 = scmp.lt.s32.totalorder %s210, 7
          %s212 = scalar_select %p211, %s210, 7
          %s213 = scalar_lea.vmem %s2, %s212
          %s214 = smul.u32 2, %s17
        $region62: #{forward.18} parent=19 // pred_fallthru
          _
      $region20: #{forward.18} parent=5 // pred_fallthru
        _
      %p215 = scmp.le.s32.totalorder 1, %s9
      %p216 = scmp.lt.s32.totalorder %s9, 5
      %p217 = pnand %p215, %p216
      %p218 = pneg %p217
      // Predicated region
      $region63: #{forward.18} parent=5 // pred_check
        _
      $region64: #{forward.18} parent=5 // pred_check_branch
        %220 = sbr.rel (%p217) target = $region66
      $region65: #{forward.18} parent=5 // pred_region
        %s221 = ssub.s32 %s9, 1
        %s222 = sand.u32 %s60, 1
        %s223 = sand.u32 %s60, 1
        %s224 = smul.addr %s223, 32
        %s225 = scalar_lea.vmem [#allocation2], %s224
        // Predicated region
        $region67: #{forward.18} parent=65 // pred_check
          %p226 = pneg %p73
        $region68: #{forward.18} parent=65 // pred_check_branch
          %228 = sbr.rel (%p226) target = $region70
        $region69: #{forward.18} parent=65 // pred_region
          _
        $region70: #{forward.18} parent=65 // pred_fallthru
          _
        %p229 = scmp.lt.s32.totalorder %s18, 0
        %s230 = scalar_select %p229, %s18, 0
        %s231 = smul.addr %s230, 4
        %s232 = scalar_lea.vmem %s0, %s231
        %p233 = pneg %p47
        %p234 = pneg %p44
        %s235 = sand.u32 %s60, 1
        %s236 = sand.u32 %s60, 1
        %s237 = smul.addr %s236, 32
        %s238 = scalar_lea.vmem [#allocation2], %s237
        %p239 = pneg %p73
        %p240 = pneg %p70
        %s241 = smul.u32 2, %s19
        %p242 = scmp.lt.s32.totalorder %s241, 7
        %s243 = scalar_select %p242, %s241, 7
        %s244 = scalar_lea.vmem %s2, %s243
        %p245 = pneg %p99
        %p246 = pneg %p96
        %p247 = pneg %p127
        %p248 = pneg %p124
        %s249 = smul.u32 2, %s19
        %p250 = scmp.lt.s32.totalorder %s18, 0
        %s251 = scalar_select %p250, %s18, 0
        %p252 = scmp.lt.s32.totalorder %s249, 7
        %s253 = scalar_select %p252, %s249, 7
        %s254 = smul.addr %s251, 8
        %s255 = sadd.s32 %s253, %s254
        %s256 = smul.addr %s255, 8
        %s257 = scalar_lea.vmem %s3, %s256
        %p258 = scmp.lt.s32.totalorder %s18, 0
        %s259 = scalar_select %p258, %s18, 0
        %s260 = smul.addr %s259, 4
        %s261 = scalar_lea.vmem %s0, %s260
        %s262 = smul.u32 2, %s19
        %s263 = smul.u32 2, %s19
        %p264 = scmp.lt.s32.totalorder %s263, 7
        %s265 = scalar_select %p264, %s263, 7
        %s266 = scalar_lea.vmem %s2, %s265
        %s267 = smul.u32 2, %s19
        %s268 = smul.u32 2, %s19
        %p269 = scmp.lt.s32.totalorder %s18, 0
        %s270 = scalar_select %p269, %s18, 0
        %p271 = scmp.lt.s32.totalorder %s268, 7
        %s272 = scalar_select %p271, %s268, 7
        %s273 = smul.addr %s270, 8
        %s274 = sadd.s32 %s272, %s273
        %s275 = smul.addr %s274, 8
        %s276 = scalar_lea.vmem %s3, %s275
        %s277 = smul.u32 2, %s19
        %v279 = vld [vmem:[%s261] sm:$0xf]
        %v280 = vld [vmem:[%s225] sm:$0xff]
        %v281 = vld [vmem:[%s225 + $0x8] sm:$0xff]
        %v282 = vld [vmem:[%s225 + $0x10] sm:$0xff]
        %v283 = vld [vmem:[%s225 + $0x18] sm:$0xff]
        %v284 = vld [vmem:[%s266] sm:$0x3]
        %v286 = vlaneseq
        %v287 = vshrl.u32 %v286, 7
        %v288 = vsub.s32 0, %v287
        %v289 = vrot.slane %v284, %v288
        %v290 = vlaneseq
        %v291 = vshrl.u32 %v290, 7
        %v292 = vsub.s32 1, %v291
        %v293 = vrot.slane %v284, %v292
        %v300 = vunpack.c.l.b16 %v280
        %v301 = vunpack.c.h.b16 %v280
        %v302 = vunpack.c.l.b16 %v281
        %v303 = vunpack.c.h.b16 %v281
        %v304 = vunpack.c.l.b16 %v282
        %v305 = vunpack.c.h.b16 %v282
        %v306 = vunpack.c.l.b16 %v283
        %v307 = vunpack.c.h.b16 %v283
        %v308 = vpack.c.b16 %v302, %v300
        %v309 = vpack.c.b16 %v303, %v301
        %v310 = vpack.c.b16 %v306, %v304
        %v311 = vpack.c.b16 %v307, %v305
        %vm316 = vcmask 261120
        %v318 = vsel %vm316, %v279, 0
        %320 = vmatprep.subr.bf16.mxu0 %v309
        %321 = vmatpush1.bf16.msra.mxu0 %v308
        %322 = vmatprep.subr.bf16.mxu0 %v311
        %323 = vmatpush1.bf16.msra.mxu0 %v310
        %324 = vmatprep.subr.bf16.mxu0 0
        %325 = vmatpush1.bf16.msra.mxu0 0
        %326 = vmatprep.subr.bf16.mxu0 0
        %327 = vmatpush1.bf16.msra.mxu0 0
        %328 = vmatprep.subr.bf16.mxu0 0
        %329 = vmatpush1.bf16.msra.mxu0 0
        %330 = vmatprep.subr.bf16.mxu0 0
        %331 = vmatpush1.bf16.msra.mxu0 0
        %332 = vmatprep.subr.bf16.mxu0 0
        %333 = vmatpush1.bf16.msra.mxu0 0
        %334 = vmatprep.subr.bf16.mxu0 0
        %335 = vmatpush1.bf16.msra.mxu0 0
        %336 = vmatprep.subr.bf16.mxu0 0
        %337 = vmatpush1.bf16.msra.mxu0 0
        %338 = vmatprep.subr.bf16.mxu0 0
        %339 = vmatpush1.bf16.msra.mxu0 0
        %340 = vmatprep.subr.bf16.mxu0 0
        %341 = vmatpush1.bf16.msra.mxu0 0
        %342 = vmatprep.subr.bf16.mxu0 0
        %343 = vmatpush1.bf16.msra.mxu0 0
        %344 = vmatprep.subr.bf16.mxu0 0
        %345 = vmatpush1.bf16.msra.mxu0 0
        %346 = vmatprep.subr.bf16.mxu0 0
        %347 = vmatpush1.bf16.msra.mxu0 0
        %348 = vmatprep.subr.bf16.mxu0 0
        %349 = vmatpush1.bf16.msra.mxu0 0
        %350 = vmatprep.subr.bf16.mxu0 0
        %351 = vmatpush1.bf16.msra.mxu0 0
        %352 = vmatprep.mubr.bf16.mxu0 0
        %353 = vmatmul.mubr.bf16.gmra.mrb[0].mxu0 %v318
        %v354 = vpop.f32.mrb[0].mxu0
        %v355 = vadd.f32 %v289, %v354
        %v356 = vpop.f32.mrb[0].mxu0
        %v357 = vadd.f32 %v293, %v356
        %v358 = vpop.f32.mrb[0].mxu0
        %v359 = vpop.f32.mrb[0].mxu0
        %360 = vdwg.mxu0
        %361 = vst [vmem:[%s276] sm:$0xff] %v355
        %362 = vst [vmem:[%s276 + $0x8] sm:$0xff] %v357
        %s363 = smul.u32 2, %s19
        %p364 = scmp.lt.s32.totalorder %s18, 0
        %s365 = scalar_select %p364, %s18, 0
        %p366 = scmp.lt.s32.totalorder %s363, 7
        %s367 = scalar_select %p366, %s363, 7
        %s368 = smul.addr %s365, 8
        %s369 = sadd.s32 %s367, %s368
        %s370 = smul.addr %s369, 8
        %s371 = scalar_lea.vmem %s3, %s370
        // Predicated region
        $region71: #{forward.18} parent=65 // pred_check
          %p372 = pneg %p124
        $region72: #{forward.18} parent=65 // pred_check_branch
          %374 = sbr.rel (%p372) target = $region74
        $region73: #{forward.18} parent=65 // pred_region
          %s375 = smul.u32 2, %s19
        $region74: #{forward.18} parent=65 // pred_fallthru
          _
      $region66: #{forward.18} parent=5 // pred_fallthru
        _
      %p376 = scmp.le.s32.totalorder 2, %s9
      // Predicated region
      $region75: #{forward.18} parent=5 // pred_check
        %p377 = pneg %p376
      $region76: #{forward.18} parent=5 // pred_check_branch
        %379 = sbr.rel (%p377) target = $region78
      $region77: #{forward.18} parent=5 // pred_region
        %s380 = ssub.s32 %s9, 2
        // Predicated region
        $region79: #{forward.18} parent=77 // pred_check
          %p381 = pneg %p130
        $region80: #{forward.18} parent=77 // pred_check_branch
          %383 = sbr.rel (%p381) target = $region82
        $region81: #{forward.18} parent=77 // pred_region
          %s384 = smul.u32 2, %s21
          %p385 = scmp.lt.s32.totalorder %s20, 0
          %s386 = scalar_select %p385, %s20, 0
          %p387 = scmp.lt.s32.totalorder %s384, 7
          %s388 = scalar_select %p387, %s384, 7
          %s389 = smul.addr %s386, 8
          %s390 = sadd.s32 %s388, %s389
          %s391 = smul.addr %s390, 8
          %s392 = scalar_lea.vmem %s3, %s391
        $region82: #{forward.18} parent=77 // pred_fallthru
          _
      $region78: #{forward.18} parent=5 // pred_fallthru
        _
    $region6: #{forward.18} parent=1 // loop_footer
      %s13 = sadd.s32 1, %s9
    $region7: #{forward.18} parent=1 // loop_footer_branch
      %8 = sbr.rel target = $region3
    $region8: #{forward.18} parent=1 // loop_exit
      _

// kernel: forward.20
$region0: #{forward.20}
  #allocation0 [shape = 'u32[]', space=smem, size = 0x4, offset = 0x4, fixed_abs, tag = 'smem constant byte address 0x4 - core index']
  #allocation1 [shape = 'u32[144,128]{1,0:T(1,128)}', space=vmem, size = 0x12000, scoped, tag = 'internal scratch']
  %s0 = inlined_call_operand.vmem [shape: bf16[8,1024], index: 0, kind: input, shape index: {}]
  %s1 = inlined_call_operand.vmem [shape: bf16[1024,2048], index: 1, kind: input, shape index: {}]
  %s2 = inlined_call_operand.vmem [shape: f32[1,2048], index: 2, kind: input, shape index: {}]
  %s3 = inlined_call_operand.vmem [shape: f32[8,2048], index: 3, kind: output, shape index: {}]
  %s4 = sld [smem:[#allocation0]]
  $region83: #{forward.20} parent=0
    _
  %s6 = ssub.s32 1, %s4
  %s7 = scalar_select 0, %s6, %s4
  $region1: #{forward.20} parent=0
    #allocation2 [shape = 'u8[1048576]{0}', space=vmem, size = 0x100000, scoped, tag = 'input window, operand 1']
    loop: start=0, step=1, limit=10
    $region2: #{forward.20} parent=1 // loop_pre_header
      _
    $region3: #{forward.20} parent=1 // loop_header
      %s9 = sphi 0, %s13
      %p10 = scmp.ge.s32.totalorder %s9, 10
      %s16 = sphi 0, %s28
      %s17 = sphi 0, %s24
      %s18 = sphi 0, %s16
      %s19 = sphi 0, %s17
      %s20 = sphi 0, %s18
      %s21 = sphi 0, %s19
      %s31 = sphi 0, %s33
      %s34 = sphi 0, %s31
      %s35 = sphi 0, %s34
      %s51 = sphi 0, %s35
      %s57 = sphi 0, %s59
      %s60 = sphi 0, %s57
      %s61 = sphi 0, %s60
      %s77 = sphi 0, %s61
      %s83 = sphi 0, %s85
      %s86 = sphi 0, %s83
      %s87 = sphi 0, %s86
      %s103 = sphi 0, %s87
      %s111 = sphi 0, %s113
      %s114 = sphi 0, %s111
      %s115 = sphi 0, %s114
      %s131 = sphi 0, %s115
    $region4: #{forward.20} parent=1 // loop_header_branch
      %12 = sbr.rel (%p10) target = $region8
    $region5: #{forward.20} parent=1 // loop_body
      %s14 = ssub.s32 %s9, 1
      %s15 = ssub.s32 %s9, 2
      %s22 = sadd.s32 1, %s17
      %p23 = scmp.ge.s32.totalorder %s22, 8
      %s24 = scalar_select %p23, 0, %s22
      %s25 = sadd.s32 1, %s16
      %s26 = scalar_select %p23, %s25, %s16
      %p27 = scmp.ge.s32.totalorder %s26, 1
      %s28 = scalar_select %p27, 0, %s26
      %s29 = ssub.s32 %s16, %s28
      %p30 = scmp.eq.s32.totalorder %s29, 0
      %s32 = sadd.s32 %s31, 1
      %s33 = scalar_select %p30, %s31, %s32
      %p36 = pneg %p30
      %p37 = scmp.eq.s32.totalorder %s9, 7
      %p38 = por %p36, %p37
      %p39 = scmp.ne.s32.totalorder %s31, %s34
      %p40 = scmp.eq.s32.totalorder %s9, 0
      %p41 = por %p39, %p40
      %p42 = scmp.ne.s32.totalorder %s31, %s34
      %p43 = scmp.eq.s32.totalorder %s14, 7
      %p44 = por %p42, %p43
      %p45 = scmp.ne.s32.totalorder %s34, %s35
      %p46 = scmp.eq.s32.totalorder %s14, 0
      %p47 = por %p45, %p46
      %p48 = scmp.ne.s32.totalorder %s34, %s35
      %p49 = scmp.eq.s32.totalorder %s15, 7
      %p50 = por %p48, %p49
      %p52 = scmp.ne.s32.totalorder %s35, %s51
      %p53 = scmp.eq.s32.totalorder %s15, 0
      %p54 = por %p52, %p53
      %s55 = ssub.s32 %s17, %s24
      %p56 = scmp.eq.s32.totalorder %s55, 0
      %s58 = sadd.s32 %s57, 1
      %s59 = scalar_select %p56, %s57, %s58
      %p62 = pneg %p56
      %p63 = scmp.eq.s32.totalorder %s9, 7
      %p64 = por %p62, %p63
      %p65 = scmp.ne.s32.totalorder %s57, %s60
      %p66 = scmp.eq.s32.totalorder %s9, 0
      %p67 = por %p65, %p66
      %p68 = scmp.ne.s32.totalorder %s57, %s60
      %p69 = scmp.eq.s32.totalorder %s14, 7
      %p70 = por %p68, %p69
      %p71 = scmp.ne.s32.totalorder %s60, %s61
      %p72 = scmp.eq.s32.totalorder %s14, 0
      %p73 = por %p71, %p72
      %p74 = scmp.ne.s32.totalorder %s60, %s61
      %p75 = scmp.eq.s32.totalorder %s15, 7
      %p76 = por %p74, %p75
      %p78 = scmp.ne.s32.totalorder %s61, %s77
      %p79 = scmp.eq.s32.totalorder %s15, 0
      %p80 = por %p78, %p79
      %s81 = ssub.s32 %s17, %s24
      %p82 = scmp.eq.s32.totalorder %s81, 0
      %s84 = sadd.s32 %s83, 1
      %s85 = scalar_select %p82, %s83, %s84
      %p88 = pneg %p82
      %p89 = scmp.eq.s32.totalorder %s9, 7
      %p90 = por %p88, %p89
      %p91 = scmp.ne.s32.totalorder %s83, %s86
      %p92 = scmp.eq.s32.totalorder %s9, 0
      %p93 = por %p91, %p92
      %p94 = scmp.ne.s32.totalorder %s83, %s86
      %p95 = scmp.eq.s32.totalorder %s14, 7
      %p96 = por %p94, %p95
      %p97 = scmp.ne.s32.totalorder %s86, %s87
      %p98 = scmp.eq.s32.totalorder %s14, 0
      %p99 = por %p97, %p98
      %p100 = scmp.ne.s32.totalorder %s86, %s87
      %p101 = scmp.eq.s32.totalorder %s15, 7
      %p102 = por %p100, %p101
      %p104 = scmp.ne.s32.totalorder %s87, %s103
      %p105 = scmp.eq.s32.totalorder %s15, 0
      %p106 = por %p104, %p105
      %s107 = ssub.s32 %s16, %s28
      %s108 = ssub.s32 %s17, %s24
      %s109 = sor.u32 %s107, %s108
      %p110 = scmp.eq.s32.totalorder %s109, 0
      %s112 = sadd.s32 %s111, 1
      %s113 = scalar_select %p110, %s111, %s112
      %p116 = pneg %p110
      %p117 = scmp.eq.s32.totalorder %s9, 7
      %p118 = por %p116, %p117
      %p119 = scmp.ne.s32.totalorder %s111, %s114
      %p120 = scmp.eq.s32.totalorder %s9, 0
      %p121 = por %p119, %p120
      %p122 = scmp.ne.s32.totalorder %s111, %s114
      %p123 = scmp.eq.s32.totalorder %s14, 7
      %p124 = por %p122, %p123
      %p125 = scmp.ne.s32.totalorder %s114, %s115
      %p126 = scmp.eq.s32.totalorder %s14, 0
      %p127 = por %p125, %p126
      %p128 = scmp.ne.s32.totalorder %s114, %s115
      %p129 = scmp.eq.s32.totalorder %s15, 7
      %p130 = por %p128, %p129
      %p132 = scmp.ne.s32.totalorder %s115, %s131
      %p133 = scmp.eq.s32.totalorder %s15, 0
      %p134 = por %p132, %p133
      %p135 = scmp.le.s32.totalorder 1, %s9
      %p136 = scmp.lt.s32.totalorder %s9, 9
      %p137 = pnand %p135, %p136
      %p138 = pneg %p137
      // Predicated region
      $region9: #{forward.20} parent=5 // pred_check
        _
      $region10: #{forward.20} parent=5 // pred_check_branch
        %140 = sbr.rel (%p137) target = $region12
      $region11: #{forward.20} parent=5 // pred_region
        %s141 = ssub.s32 %s9, 1
        // Predicated region
        $region13: #{forward.20} parent=11 // pred_check
          %p142 = pneg %p47
        $region14: #{forward.20} parent=11 // pred_check_branch
          %144 = sbr.rel (%p142) target = $region16
        $region15: #{forward.20} parent=11 // pred_region
          %p145 = scmp.lt.s32.totalorder %s18, 0
          %s146 = scalar_select %p145, %s18, 0
          %s147 = smul.addr %s146, 8
          %s148 = smul.addr %s147, 4
          %s149 = scalar_lea.vmem %s0, %s148
        $region16: #{forward.20} parent=11 // pred_fallthru
          _
      $region12: #{forward.20} parent=5 // pred_fallthru
        _
      %p150 = scmp.lt.s32.totalorder %s9, 8
      // Predicated region
      $region17: #{forward.20} parent=5 // pred_check
        %p151 = pneg %p150
      $region18: #{forward.20} parent=5 // pred_check_branch
        %153 = sbr.rel (%p151) target = $region20
      $region19: #{forward.20} parent=5 // pred_region
        // Predicated region
        $region21: #{forward.20} parent=19 // pred_check
          %p154 = pneg %p67
        $region22: #{forward.20} parent=19 // pred_check_branch
          %156 = sbr.rel (%p154) target = $region24
        $region23: #{forward.20} parent=19 // pred_region
          %s157 = sand.u32 %s57, 1
          %s158 = sand.u32 %s57, 1
          %s159 = smul.addr %s158, 1024
          %s160 = scalar_lea.vmem [#allocation2], %s159
          %s161 = smul.u32 2, %s17
          %s162 = smul.addr %s161, 4
          %s163 = scalar_lea.vmem %s1, %s162
          // Predicated region
          $region25: #{forward.20} parent=23 // pred_check
            _
          $region26: #{forward.20} parent=23 // pred_check_branch
            %165 = sbr.rel (0) target = $region28
          $region27: #{forward.20} parent=23 // pred_region
            // Predicated region
            $region29: #{forward.20} parent=27 // pred_check
              _
            $region30: #{forward.20} parent=27 // pred_check_branch
              %167 = sbr.rel (0) target = $region32
            $region31: #{forward.20} parent=27 // pred_region
              // Predicated region
              $region44: #{forward.20} parent=31 // pred_check
                _
              $region45: #{forward.20} parent=31 // pred_check_branch
                %436 = sbr.rel (0) target = $region47
              $region46: #{forward.20} parent=31 // pred_region
                loop: start=0, step=1, limit=1
                $region48: #{forward.20} parent=46 // loop_pre_header
                  _
                $region49: #{forward.20} parent=46 // loop_header
                  %s438 = sphi 0, %s442
                  %p439 = scmp.ge.s32.totalorder %s438, 1
                  %s443 = sphi %s163, %s163
                  %s444 = sphi %s160, %s160
                $region50: #{forward.20} parent=46 // loop_header_branch
                  %441 = sbr.rel (%p439) target = $region54
                $region51: #{forward.20} parent=46 // loop_body
                  %v445 = vld [vmem:[%s443] sm:$0xff]
                  %446 = vst [vmem:[%s444] sm:$0xff] %v445
                  %v447 = vld [vmem:[%s443 + $0x40] sm:$0xff]
                  %448 = vst [vmem:[%s444 + $0x8] sm:$0xff] %v447
                  %v449 = vld [vmem:[%s443 + $0x80] sm:$0xff]
                  %450 = vst [vmem:[%s444 + $0x10] sm:$0xff] %v449
                  %v451 = vld [vmem:[%s443 + $0xc0] sm:$0xff]
                  %452 = vst [vmem:[%s444 + $0x18] sm:$0xff] %v451
                  %v453 = vld [vmem:[%s443 + $0x100] sm:$0xff]
                  %454 = vst [vmem:[%s444 + $0x20] sm:$0xff] %v453
                  %v455 = vld [vmem:[%s443 + $0x140] sm:$0xff]
                  %456 = vst [vmem:[%s444 + $0x28] sm:$0xff] %v455
                  %v457 = vld [vmem:[%s443 + $0x180] sm:$0xff]
                  %458 = vst [vmem:[%s444 + $0x30] sm:$0xff] %v457
                  %v459 = vld [vmem:[%s443 + $0x1c0] sm:$0xff]
                  %460 = vst [vmem:[%s444 + $0x38] sm:$0xff] %v459
                  %v461 = vld [vmem:[%s443 + $0x200] sm:$0xff]
                  %462 = vst [vmem:[%s444 + $0x40] sm:$0xff] %v461
                  %v463 = vld [vmem:[%s443 + $0x240] sm:$0xff]
                  %464 = vst [vmem:[%s444 + $0x48] sm:$0xff] %v463
                  %v465 = vld [vmem:[%s443 + $0x280] sm:$0xff]
                  %466 = vst [vmem:[%s444 + $0x50] sm:$0xff] %v465
                  %v467 = vld [vmem:[%s443 + $0x2c0] sm:$0xff]
                  %468 = vst [vmem:[%s444 + $0x58] sm:$0xff] %v467
                  %v469 = vld [vmem:[%s443 + $0x300] sm:$0xff]
                  %470 = vst [vmem:[%s444 + $0x60] sm:$0xff] %v469
                  %v471 = vld [vmem:[%s443 + $0x340] sm:$0xff]
                  %472 = vst [vmem:[%s444 + $0x68] sm:$0xff] %v471
                  %v473 = vld [vmem:[%s443 + $0x380] sm:$0xff]
                  %474 = vst [vmem:[%s444 + $0x70] sm:$0xff] %v473
                  %v475 = vld [vmem:[%s443 + $0x3c0] sm:$0xff]
                  %476 = vst [vmem:[%s444 + $0x78] sm:$0xff] %v475
                  %v477 = vld [vmem:[%s443 + $0x400] sm:$0xff]
                  %478 = vst [vmem:[%s444 + $0x80] sm:$0xff] %v477
                  %v479 = vld [vmem:[%s443 + $0x440] sm:$0xff]
                  %480 = vst [vmem:[%s444 + $0x88] sm:$0xff] %v479
                  %v481 = vld [vmem:[%s443 + $0x480] sm:$0xff]
                  %482 = vst [vmem:[%s444 + $0x90] sm:$0xff] %v481
                  %v483 = vld [vmem:[%s443 + $0x4c0] sm:$0xff]
                  %484 = vst [vmem:[%s444 + $0x98] sm:$0xff] %v483
                  %v485 = vld [vmem:[%s443 + $0x500] sm:$0xff]
                  %486 = vst [vmem:[%s444 + $0xa0] sm:$0xff] %v485
                  %v487 = vld [vmem:[%s443 + $0x540] sm:$0xff]
                  %488 = vst [vmem:[%s444 + $0xa8] sm:$0xff] %v487
                  %v489 = vld [vmem:[%s443 + $0x580] sm:$0xff]
                  %490 = vst [vmem:[%s444 + $0xb0] sm:$0xff] %v489
                  %v491 = vld [vmem:[%s443 + $0x5c0] sm:$0xff]
                  %492 = vst [vmem:[%s444 + $0xb8] sm:$0xff] %v491
                  %v493 = vld [vmem:[%s443 + $0x600] sm:$0xff]
                  %494 = vst [vmem:[%s444 + $0xc0] sm:$0xff] %v493
                  %v495 = vld [vmem:[%s443 + $0x640] sm:$0xff]
                  %496 = vst [vmem:[%s444 + $0xc8] sm:$0xff] %v495
                  %v497 = vld [vmem:[%s443 + $0x680] sm:$0xff]
                  %498 = vst [vmem:[%s444 + $0xd0] sm:$0xff] %v497
                  %v499 = vld [vmem:[%s443 + $0x6c0] sm:$0xff]
                  %500 = vst [vmem:[%s444 + $0xd8] sm:$0xff] %v499
                  %v501 = vld [vmem:[%s443 + $0x700] sm:$0xff]
                  %502 = vst [vmem:[%s444 + $0xe0] sm:$0xff] %v501
                  %v503 = vld [vmem:[%s443 + $0x740] sm:$0xff]
                  %504 = vst [vmem:[%s444 + $0xe8] sm:$0xff] %v503
                  %v505 = vld [vmem:[%s443 + $0x780] sm:$0xff]
                  %506 = vst [vmem:[%s444 + $0xf0] sm:$0xff] %v505
                  %v507 = vld [vmem:[%s443 + $0x7c0] sm:$0xff]
                  %508 = vst [vmem:[%s444 + $0xf8] sm:$0xff] %v507
                  %v509 = vld [vmem:[%s443 + $0x800] sm:$0xff]
                  %510 = vst [vmem:[%s444 + $0x100] sm:$0xff] %v509
                  %v511 = vld [vmem:[%s443 + $0x840] sm:$0xff]
                  %512 = vst [vmem:[%s444 + $0x108] sm:$0xff] %v511
                  %v513 = vld [vmem:[%s443 + $0x880] sm:$0xff]
                  %514 = vst [vmem:[%s444 + $0x110] sm:$0xff] %v513
                  %v515 = vld [vmem:[%s443 + $0x8c0] sm:$0xff]
                  %516 = vst [vmem:[%s444 + $0x118] sm:$0xff] %v515
                  %v517 = vld [vmem:[%s443 + $0x900] sm:$0xff]
                  %518 = vst [vmem:[%s444 + $0x120] sm:$0xff] %v517
                  %v519 = vld [vmem:[%s443 + $0x940] sm:$0xff]
                  %520 = vst [vmem:[%s444 + $0x128] sm:$0xff] %v519
                  %v521 = vld [vmem:[%s443 + $0x980] sm:$0xff]
                  %522 = vst [vmem:[%s444 + $0x130] sm:$0xff] %v521
                  %v523 = vld [vmem:[%s443 + $0x9c0] sm:$0xff]
                  %524 = vst [vmem:[%s444 + $0x138] sm:$0xff] %v523
                  %v525 = vld [vmem:[%s443 + $0xa00] sm:$0xff]
                  %526 = vst [vmem:[%s444 + $0x140] sm:$0xff] %v525
                  %v527 = vld [vmem:[%s443 + $0xa40] sm:$0xff]
                  %528 = vst [vmem:[%s444 + $0x148] sm:$0xff] %v527
                  %v529 = vld [vmem:[%s443 + $0xa80] sm:$0xff]
                  %530 = vst [vmem:[%s444 + $0x150] sm:$0xff] %v529
                  %v531 = vld [vmem:[%s443 + $0xac0] sm:$0xff]
                  %532 = vst [vmem:[%s444 + $0x158] sm:$0xff] %v531
                  %v533 = vld [vmem:[%s443 + $0xb00] sm:$0xff]
                  %534 = vst [vmem:[%s444 + $0x160] sm:$0xff] %v533
                  %v535 = vld [vmem:[%s443 + $0xb40] sm:$0xff]
                  %536 = vst [vmem:[%s444 + $0x168] sm:$0xff] %v535
                  %v537 = vld [vmem:[%s443 + $0xb80] sm:$0xff]
                  %538 = vst [vmem:[%s444 + $0x170] sm:$0xff] %v537
                  %v539 = vld [vmem:[%s443 + $0xbc0] sm:$0xff]
                  %540 = vst [vmem:[%s444 + $0x178] sm:$0xff] %v539
                  %v541 = vld [vmem:[%s443 + $0xc00] sm:$0xff]
                  %542 = vst [vmem:[%s444 + $0x180] sm:$0xff] %v541
                  %v543 = vld [vmem:[%s443 + $0xc40] sm:$0xff]
                  %544 = vst [vmem:[%s444 + $0x188] sm:$0xff] %v543
                  %v545 = vld [vmem:[%s443 + $0xc80] sm:$0xff]
                  %546 = vst [vmem:[%s444 + $0x190] sm:$0xff] %v545
                  %v547 = vld [vmem:[%s443 + $0xcc0] sm:$0xff]
                  %548 = vst [vmem:[%s444 + $0x198] sm:$0xff] %v547
                  %v549 = vld [vmem:[%s443 + $0xd00] sm:$0xff]
                  %550 = vst [vmem:[%s444 + $0x1a0] sm:$0xff] %v549
                  %v551 = vld [vmem:[%s443 + $0xd40] sm:$0xff]
                  %552 = vst [vmem:[%s444 + $0x1a8] sm:$0xff] %v551
                  %v553 = vld [vmem:[%s443 + $0xd80] sm:$0xff]
                  %554 = vst [vmem:[%s444 + $0x1b0] sm:$0xff] %v553
                  %v555 = vld [vmem:[%s443 + $0xdc0] sm:$0xff]
                  %556 = vst [vmem:[%s444 + $0x1b8] sm:$0xff] %v555
                  %v557 = vld [vmem:[%s443 + $0xe00] sm:$0xff]
                  %558 = vst [vmem:[%s444 + $0x1c0] sm:$0xff] %v557
                  %v559 = vld [vmem:[%s443 + $0xe40] sm:$0xff]
                  %560 = vst [vmem:[%s444 + $0x1c8] sm:$0xff] %v559
                  %v561 = vld [vmem:[%s443 + $0xe80] sm:$0xff]
                  %562 = vst [vmem:[%s444 + $0x1d0] sm:$0xff] %v561
                  %v563 = vld [vmem:[%s443 + $0xec0] sm:$0xff]
                  %564 = vst [vmem:[%s444 + $0x1d8] sm:$0xff] %v563
                  %v565 = vld [vmem:[%s443 + $0xf00] sm:$0xff]
                  %566 = vst [vmem:[%s444 + $0x1e0] sm:$0xff] %v565
                  %v567 = vld [vmem:[%s443 + $0xf40] sm:$0xff]
                  %568 = vst [vmem:[%s444 + $0x1e8] sm:$0xff] %v567
                  %v569 = vld [vmem:[%s443 + $0xf80] sm:$0xff]
                  %570 = vst [vmem:[%s444 + $0x1f0] sm:$0xff] %v569
                  %v571 = vld [vmem:[%s443 + $0xfc0] sm:$0xff]
                  %572 = vst [vmem:[%s444 + $0x1f8] sm:$0xff] %v571
                  %v573 = vld [vmem:[%s443 + $0x1000] sm:$0xff]
                  %574 = vst [vmem:[%s444 + $0x200] sm:$0xff] %v573
                  %v575 = vld [vmem:[%s443 + $0x1040] sm:$0xff]
                  %576 = vst [vmem:[%s444 + $0x208] sm:$0xff] %v575
                  %v577 = vld [vmem:[%s443 + $0x1080] sm:$0xff]
                  %578 = vst [vmem:[%s444 + $0x210] sm:$0xff] %v577
                  %v579 = vld [vmem:[%s443 + $0x10c0] sm:$0xff]
                  %580 = vst [vmem:[%s444 + $0x218] sm:$0xff] %v579
                  %v581 = vld [vmem:[%s443 + $0x1100] sm:$0xff]
                  %582 = vst [vmem:[%s444 + $0x220] sm:$0xff] %v581
                  %v583 = vld [vmem:[%s443 + $0x1140] sm:$0xff]
                  %584 = vst [vmem:[%s444 + $0x228] sm:$0xff] %v583
                  %v585 = vld [vmem:[%s443 + $0x1180] sm:$0xff]
                  %586 = vst [vmem:[%s444 + $0x230] sm:$0xff] %v585
                  %v587 = vld [vmem:[%s443 + $0x11c0] sm:$0xff]
                  %588 = vst [vmem:[%s444 + $0x238] sm:$0xff] %v587
                  %v589 = vld [vmem:[%s443 + $0x1200] sm:$0xff]
                  %590 = vst [vmem:[%s444 + $0x240] sm:$0xff] %v589
                  %v591 = vld [vmem:[%s443 + $0x1240] sm:$0xff]
                  %592 = vst [vmem:[%s444 + $0x248] sm:$0xff] %v591
                  %v593 = vld [vmem:[%s443 + $0x1280] sm:$0xff]
                  %594 = vst [vmem:[%s444 + $0x250] sm:$0xff] %v593
                  %v595 = vld [vmem:[%s443 + $0x12c0] sm:$0xff]
                  %596 = vst [vmem:[%s444 + $0x258] sm:$0xff] %v595
                  %v597 = vld [vmem:[%s443 + $0x1300] sm:$0xff]
                  %598 = vst [vmem:[%s444 + $0x260] sm:$0xff] %v597
                  %v599 = vld [vmem:[%s443 + $0x1340] sm:$0xff]
                  %600 = vst [vmem:[%s444 + $0x268] sm:$0xff] %v599
                  %v601 = vld [vmem:[%s443 + $0x1380] sm:$0xff]
                  %602 = vst [vmem:[%s444 + $0x270] sm:$0xff] %v601
                  %v603 = vld [vmem:[%s443 + $0x13c0] sm:$0xff]
                  %604 = vst [vmem:[%s444 + $0x278] sm:$0xff] %v603
                  %v605 = vld [vmem:[%s443 + $0x1400] sm:$0xff]
                  %606 = vst [vmem:[%s444 + $0x280] sm:$0xff] %v605
                  %v607 = vld [vmem:[%s443 + $0x1440] sm:$0xff]
                  %608 = vst [vmem:[%s444 + $0x288] sm:$0xff] %v607
                  %v609 = vld [vmem:[%s443 + $0x1480] sm:$0xff]
                  %610 = vst [vmem:[%s444 + $0x290] sm:$0xff] %v609
                  %v611 = vld [vmem:[%s443 + $0x14c0] sm:$0xff]
                  %612 = vst [vmem:[%s444 + $0x298] sm:$0xff] %v611
                  %v613 = vld [vmem:[%s443 + $0x1500] sm:$0xff]
                  %614 = vst [vmem:[%s444 + $0x2a0] sm:$0xff] %v613
                  %v615 = vld [vmem:[%s443 + $0x1540] sm:$0xff]
                  %616 = vst [vmem:[%s444 + $0x2a8] sm:$0xff] %v615
                  %v617 = vld [vmem:[%s443 + $0x1580] sm:$0xff]
                  %618 = vst [vmem:[%s444 + $0x2b0] sm:$0xff] %v617
                  %v619 = vld [vmem:[%s443 + $0x15c0] sm:$0xff]
                  %620 = vst [vmem:[%s444 + $0x2b8] sm:$0xff] %v619
                  %v621 = vld [vmem:[%s443 + $0x1600] sm:$0xff]
                  %622 = vst [vmem:[%s444 + $0x2c0] sm:$0xff] %v621
                  %v623 = vld [vmem:[%s443 + $0x1640] sm:$0xff]
                  %624 = vst [vmem:[%s444 + $0x2c8] sm:$0xff] %v623
                  %v625 = vld [vmem:[%s443 + $0x1680] sm:$0xff]
                  %626 = vst [vmem:[%s444 + $0x2d0] sm:$0xff] %v625
                  %v627 = vld [vmem:[%s443 + $0x16c0] sm:$0xff]
                  %628 = vst [vmem:[%s444 + $0x2d8] sm:$0xff] %v627
                  %v629 = vld [vmem:[%s443 + $0x1700] sm:$0xff]
                  %630 = vst [vmem:[%s444 + $0x2e0] sm:$0xff] %v629
                  %v631 = vld [vmem:[%s443 + $0x1740] sm:$0xff]
                  %632 = vst [vmem:[%s444 + $0x2e8] sm:$0xff] %v631
                  %v633 = vld [vmem:[%s443 + $0x1780] sm:$0xff]
                  %634 = vst [vmem:[%s444 + $0x2f0] sm:$0xff] %v633
                  %v635 = vld [vmem:[%s443 + $0x17c0] sm:$0xff]
                  %636 = vst [vmem:[%s444 + $0x2f8] sm:$0xff] %v635
                  %v637 = vld [vmem:[%s443 + $0x1800] sm:$0xff]
                  %638 = vst [vmem:[%s444 + $0x300] sm:$0xff] %v637
                  %v639 = vld [vmem:[%s443 + $0x1840] sm:$0xff]
                  %640 = vst [vmem:[%s444 + $0x308] sm:$0xff] %v639
                  %v641 = vld [vmem:[%s443 + $0x1880] sm:$0xff]
                  %642 = vst [vmem:[%s444 + $0x310] sm:$0xff] %v641
                  %v643 = vld [vmem:[%s443 + $0x18c0] sm:$0xff]
                  %644 = vst [vmem:[%s444 + $0x318] sm:$0xff] %v643
                  %v645 = vld [vmem:[%s443 + $0x1900] sm:$0xff]
                  %646 = vst [vmem:[%s444 + $0x320] sm:$0xff] %v645
                  %v647 = vld [vmem:[%s443 + $0x1940] sm:$0xff]
                  %648 = vst [vmem:[%s444 + $0x328] sm:$0xff] %v647
                  %v649 = vld [vmem:[%s443 + $0x1980] sm:$0xff]
                  %650 = vst [vmem:[%s444 + $0x330] sm:$0xff] %v649
                  %v651 = vld [vmem:[%s443 + $0x19c0] sm:$0xff]
                  %652 = vst [vmem:[%s444 + $0x338] sm:$0xff] %v651
                  %v653 = vld [vmem:[%s443 + $0x1a00] sm:$0xff]
                  %654 = vst [vmem:[%s444 + $0x340] sm:$0xff] %v653
                  %v655 = vld [vmem:[%s443 + $0x1a40] sm:$0xff]
                  %656 = vst [vmem:[%s444 + $0x348] sm:$0xff] %v655
                  %v657 = vld [vmem:[%s443 + $0x1a80] sm:$0xff]
                  %658 = vst [vmem:[%s444 + $0x350] sm:$0xff] %v657
                  %v659 = vld [vmem:[%s443 + $0x1ac0] sm:$0xff]
                  %660 = vst [vmem:[%s444 + $0x358] sm:$0xff] %v659
                  %v661 = vld [vmem:[%s443 + $0x1b00] sm:$0xff]
                  %662 = vst [vmem:[%s444 + $0x360] sm:$0xff] %v661
                  %v663 = vld [vmem:[%s443 + $0x1b40] sm:$0xff]
                  %664 = vst [vmem:[%s444 + $0x368] sm:$0xff] %v663
                  %v665 = vld [vmem:[%s443 + $0x1b80] sm:$0xff]
                  %666 = vst [vmem:[%s444 + $0x370] sm:$0xff] %v665
                  %v667 = vld [vmem:[%s443 + $0x1bc0] sm:$0xff]
                  %668 = vst [vmem:[%s444 + $0x378] sm:$0xff] %v667
                  %v669 = vld [vmem:[%s443 + $0x1c00] sm:$0xff]
                  %670 = vst [vmem:[%s444 + $0x380] sm:$0xff] %v669
                  %v671 = vld [vmem:[%s443 + $0x1c40] sm:$0xff]
                  %672 = vst [vmem:[%s444 + $0x388] sm:$0xff] %v671
                  %v673 = vld [vmem:[%s443 + $0x1c80] sm:$0xff]
                  %674 = vst [vmem:[%s444 + $0x390] sm:$0xff] %v673
                  %v675 = vld [vmem:[%s443 + $0x1cc0] sm:$0xff]
                  %676 = vst [vmem:[%s444 + $0x398] sm:$0xff] %v675
                  %v677 = vld [vmem:[%s443 + $0x1d00] sm:$0xff]
                  %678 = vst [vmem:[%s444 + $0x3a0] sm:$0xff] %v677
                  %v679 = vld [vmem:[%s443 + $0x1d40] sm:$0xff]
                  %680 = vst [vmem:[%s444 + $0x3a8] sm:$0xff] %v679
                  %v681 = vld [vmem:[%s443 + $0x1d80] sm:$0xff]
                  %682 = vst [vmem:[%s444 + $0x3b0] sm:$0xff] %v681
                  %v683 = vld [vmem:[%s443 + $0x1dc0] sm:$0xff]
                  %684 = vst [vmem:[%s444 + $0x3b8] sm:$0xff] %v683
                  %v685 = vld [vmem:[%s443 + $0x1e00] sm:$0xff]
                  %686 = vst [vmem:[%s444 + $0x3c0] sm:$0xff] %v685
                  %v687 = vld [vmem:[%s443 + $0x1e40] sm:$0xff]
                  %688 = vst [vmem:[%s444 + $0x3c8] sm:$0xff] %v687
                  %v689 = vld [vmem:[%s443 + $0x1e80] sm:$0xff]
                  %690 = vst [vmem:[%s444 + $0x3d0] sm:$0xff] %v689
                  %v691 = vld [vmem:[%s443 + $0x1ec0] sm:$0xff]
                  %692 = vst [vmem:[%s444 + $0x3d8] sm:$0xff] %v691
                  %v693 = vld [vmem:[%s443 + $0x1f00] sm:$0xff]
                  %694 = vst [vmem:[%s444 + $0x3e0] sm:$0xff] %v693
                  %v695 = vld [vmem:[%s443 + $0x1f40] sm:$0xff]
                  %696 = vst [vmem:[%s444 + $0x3e8] sm:$0xff] %v695
                  %v697 = vld [vmem:[%s443 + $0x1f80] sm:$0xff]
                  %698 = vst [vmem:[%s444 + $0x3f0] sm:$0xff] %v697
                  %v699 = vld [vmem:[%s443 + $0x1fc0] sm:$0xff]
                  %700 = vst [vmem:[%s444 + $0x3f8] sm:$0xff] %v699
                $region52: #{forward.20} parent=46 // loop_footer
                  %s442 = sadd.s32 1, %s438
                $region53: #{forward.20} parent=46 // loop_footer_branch
                  %437 = sbr.rel target = $region49
                $region54: #{forward.20} parent=46 // loop_exit
                  _
              $region47: #{forward.20} parent=31 // pred_fallthru
                _
              // Predicated region
              $region55: #{forward.20} parent=31 // pred_check
                _
              $region56: #{forward.20} parent=31 // pred_check_branch
                %702 = sbr.rel target = $region58
              $region57: #{forward.20} parent=31 // pred_region
                _
              $region58: #{forward.20} parent=31 // pred_fallthru
                _
            $region32: #{forward.20} parent=27 // pred_fallthru
              _
            // Predicated region
            $region33: #{forward.20} parent=27 // pred_check
              _
            $region34: #{forward.20} parent=27 // pred_check_branch
              %169 = sbr.rel target = $region36
            $region35: #{forward.20} parent=27 // pred_region
              loop: start=0, step=1, limit=1
              $region37: #{forward.20} parent=35 // loop_pre_header
                _
              $region38: #{forward.20} parent=35 // loop_header
                %s172 = sphi 0, %s176
                %p173 = scmp.ge.s32.totalorder %s172, 1
                %s177 = sphi %s163, %s163
                %s178 = sphi %s160, %s160
              $region39: #{forward.20} parent=35 // loop_header_branch
                %175 = sbr.rel (%p173) target = $region43
              $region40: #{forward.20} parent=35 // loop_body
                %v179 = vld [vmem:[%s177] sm:$0xff]
                %180 = vst [vmem:[%s178] sm:$0xff] %v179
                %v181 = vld [vmem:[%s177 + $0x40] sm:$0xff]
                %182 = vst [vmem:[%s178 + $0x8] sm:$0xff] %v181
                %v183 = vld [vmem:[%s177 + $0x80] sm:$0xff]
                %184 = vst [vmem:[%s178 + $0x10] sm:$0xff] %v183
                %v185 = vld [vmem:[%s177 + $0xc0] sm:$0xff]
                %186 = vst [vmem:[%s178 + $0x18] sm:$0xff] %v185
                %v187 = vld [vmem:[%s177 + $0x100] sm:$0xff]
                %188 = vst [vmem:[%s178 + $0x20] sm:$0xff] %v187
                %v189 = vld [vmem:[%s177 + $0x140] sm:$0xff]
                %190 = vst [vmem:[%s178 + $0x28] sm:$0xff] %v189
                %v191 = vld [vmem:[%s177 + $0x180] sm:$0xff]
                %192 = vst [vmem:[%s178 + $0x30] sm:$0xff] %v191
                %v193 = vld [vmem:[%s177 + $0x1c0] sm:$0xff]
                %194 = vst [vmem:[%s178 + $0x38] sm:$0xff] %v193
                %v195 = vld [vmem:[%s177 + $0x200] sm:$0xff]
                %196 = vst [vmem:[%s178 + $0x40] sm:$0xff] %v195
                %v197 = vld [vmem:[%s177 + $0x240] sm:$0xff]
                %198 = vst [vmem:[%s178 + $0x48] sm:$0xff] %v197
                %v199 = vld [vmem:[%s177 + $0x280] sm:$0xff]
                %200 = vst [vmem:[%s178 + $0x50] sm:$0xff] %v199
                %v201 = vld [vmem:[%s177 + $0x2c0] sm:$0xff]
                %202 = vst [vmem:[%s178 + $0x58] sm:$0xff] %v201
                %v203 = vld [vmem:[%s177 + $0x300] sm:$0xff]
                %204 = vst [vmem:[%s178 + $0x60] sm:$0xff] %v203
                %v205 = vld [vmem:[%s177 + $0x340] sm:$0xff]
                %206 = vst [vmem:[%s178 + $0x68] sm:$0xff] %v205
                %v207 = vld [vmem:[%s177 + $0x380] sm:$0xff]
                %208 = vst [vmem:[%s178 + $0x70] sm:$0xff] %v207
                %v209 = vld [vmem:[%s177 + $0x3c0] sm:$0xff]
                %210 = vst [vmem:[%s178 + $0x78] sm:$0xff] %v209
                %v211 = vld [vmem:[%s177 + $0x400] sm:$0xff]
                %212 = vst [vmem:[%s178 + $0x80] sm:$0xff] %v211
                %v213 = vld [vmem:[%s177 + $0x440] sm:$0xff]
                %214 = vst [vmem:[%s178 + $0x88] sm:$0xff] %v213
                %v215 = vld [vmem:[%s177 + $0x480] sm:$0xff]
                %216 = vst [vmem:[%s178 + $0x90] sm:$0xff] %v215
                %v217 = vld [vmem:[%s177 + $0x4c0] sm:$0xff]
                %218 = vst [vmem:[%s178 + $0x98] sm:$0xff] %v217
                %v219 = vld [vmem:[%s177 + $0x500] sm:$0xff]
                %220 = vst [vmem:[%s178 + $0xa0] sm:$0xff] %v219
                %v221 = vld [vmem:[%s177 + $0x540] sm:$0xff]
                %222 = vst [vmem:[%s178 + $0xa8] sm:$0xff] %v221
                %v223 = vld [vmem:[%s177 + $0x580] sm:$0xff]
                %224 = vst [vmem:[%s178 + $0xb0] sm:$0xff] %v223
                %v225 = vld [vmem:[%s177 + $0x5c0] sm:$0xff]
                %226 = vst [vmem:[%s178 + $0xb8] sm:$0xff] %v225
                %v227 = vld [vmem:[%s177 + $0x600] sm:$0xff]
                %228 = vst [vmem:[%s178 + $0xc0] sm:$0xff] %v227
                %v229 = vld [vmem:[%s177 + $0x640] sm:$0xff]
                %230 = vst [vmem:[%s178 + $0xc8] sm:$0xff] %v229
                %v231 = vld [vmem:[%s177 + $0x680] sm:$0xff]
                %232 = vst [vmem:[%s178 + $0xd0] sm:$0xff] %v231
                %v233 = vld [vmem:[%s177 + $0x6c0] sm:$0xff]
                %234 = vst [vmem:[%s178 + $0xd8] sm:$0xff] %v233
                %v235 = vld [vmem:[%s177 + $0x700] sm:$0xff]
                %236 = vst [vmem:[%s178 + $0xe0] sm:$0xff] %v235
                %v237 = vld [vmem:[%s177 + $0x740] sm:$0xff]
                %238 = vst [vmem:[%s178 + $0xe8] sm:$0xff] %v237
                %v239 = vld [vmem:[%s177 + $0x780] sm:$0xff]
                %240 = vst [vmem:[%s178 + $0xf0] sm:$0xff] %v239
                %v241 = vld [vmem:[%s177 + $0x7c0] sm:$0xff]
                %242 = vst [vmem:[%s178 + $0xf8] sm:$0xff] %v241
                %v243 = vld [vmem:[%s177 + $0x800] sm:$0xff]
                %244 = vst [vmem:[%s178 + $0x100] sm:$0xff] %v243
                %v245 = vld [vmem:[%s177 + $0x840] sm:$0xff]
                %246 = vst [vmem:[%s178 + $0x108] sm:$0xff] %v245
                %v247 = vld [vmem:[%s177 + $0x880] sm:$0xff]
                %248 = vst [vmem:[%s178 + $0x110] sm:$0xff] %v247
                %v249 = vld [vmem:[%s177 + $0x8c0] sm:$0xff]
                %250 = vst [vmem:[%s178 + $0x118] sm:$0xff] %v249
                %v251 = vld [vmem:[%s177 + $0x900] sm:$0xff]
                %252 = vst [vmem:[%s178 + $0x120] sm:$0xff] %v251
                %v253 = vld [vmem:[%s177 + $0x940] sm:$0xff]
                %254 = vst [vmem:[%s178 + $0x128] sm:$0xff] %v253
                %v255 = vld [vmem:[%s177 + $0x980] sm:$0xff]
                %256 = vst [vmem:[%s178 + $0x130] sm:$0xff] %v255
                %v257 = vld [vmem:[%s177 + $0x9c0] sm:$0xff]
                %258 = vst [vmem:[%s178 + $0x138] sm:$0xff] %v257
                %v259 = vld [vmem:[%s177 + $0xa00] sm:$0xff]
                %260 = vst [vmem:[%s178 + $0x140] sm:$0xff] %v259
                %v261 = vld [vmem:[%s177 + $0xa40] sm:$0xff]
                %262 = vst [vmem:[%s178 + $0x148] sm:$0xff] %v261
                %v263 = vld [vmem:[%s177 + $0xa80] sm:$0xff]
                %264 = vst [vmem:[%s178 + $0x150] sm:$0xff] %v263
                %v265 = vld [vmem:[%s177 + $0xac0] sm:$0xff]
                %266 = vst [vmem:[%s178 + $0x158] sm:$0xff] %v265
                %v267 = vld [vmem:[%s177 + $0xb00] sm:$0xff]
                %268 = vst [vmem:[%s178 + $0x160] sm:$0xff] %v267
                %v269 = vld [vmem:[%s177 + $0xb40] sm:$0xff]
                %270 = vst [vmem:[%s178 + $0x168] sm:$0xff] %v269
                %v271 = vld [vmem:[%s177 + $0xb80] sm:$0xff]
                %272 = vst [vmem:[%s178 + $0x170] sm:$0xff] %v271
                %v273 = vld [vmem:[%s177 + $0xbc0] sm:$0xff]
                %274 = vst [vmem:[%s178 + $0x178] sm:$0xff] %v273
                %v275 = vld [vmem:[%s177 + $0xc00] sm:$0xff]
                %276 = vst [vmem:[%s178 + $0x180] sm:$0xff] %v275
                %v277 = vld [vmem:[%s177 + $0xc40] sm:$0xff]
                %278 = vst [vmem:[%s178 + $0x188] sm:$0xff] %v277
                %v279 = vld [vmem:[%s177 + $0xc80] sm:$0xff]
                %280 = vst [vmem:[%s178 + $0x190] sm:$0xff] %v279
                %v281 = vld [vmem:[%s177 + $0xcc0] sm:$0xff]
                %282 = vst [vmem:[%s178 + $0x198] sm:$0xff] %v281
                %v283 = vld [vmem:[%s177 + $0xd00] sm:$0xff]
                %284 = vst [vmem:[%s178 + $0x1a0] sm:$0xff] %v283
                %v285 = vld [vmem:[%s177 + $0xd40] sm:$0xff]
                %286 = vst [vmem:[%s178 + $0x1a8] sm:$0xff] %v285
                %v287 = vld [vmem:[%s177 + $0xd80] sm:$0xff]
                %288 = vst [vmem:[%s178 + $0x1b0] sm:$0xff] %v287
                %v289 = vld [vmem:[%s177 + $0xdc0] sm:$0xff]
                %290 = vst [vmem:[%s178 + $0x1b8] sm:$0xff] %v289
                %v291 = vld [vmem:[%s177 + $0xe00] sm:$0xff]
                %292 = vst [vmem:[%s178 + $0x1c0] sm:$0xff] %v291
                %v293 = vld [vmem:[%s177 + $0xe40] sm:$0xff]
                %294 = vst [vmem:[%s178 + $0x1c8] sm:$0xff] %v293
                %v295 = vld [vmem:[%s177 + $0xe80] sm:$0xff]
                %296 = vst [vmem:[%s178 + $0x1d0] sm:$0xff] %v295
                %v297 = vld [vmem:[%s177 + $0xec0] sm:$0xff]
                %298 = vst [vmem:[%s178 + $0x1d8] sm:$0xff] %v297
                %v299 = vld [vmem:[%s177 + $0xf00] sm:$0xff]
                %300 = vst [vmem:[%s178 + $0x1e0] sm:$0xff] %v299
                %v301 = vld [vmem:[%s177 + $0xf40] sm:$0xff]
                %302 = vst [vmem:[%s178 + $0x1e8] sm:$0xff] %v301
                %v303 = vld [vmem:[%s177 + $0xf80] sm:$0xff]
                %304 = vst [vmem:[%s178 + $0x1f0] sm:$0xff] %v303
                %v305 = vld [vmem:[%s177 + $0xfc0] sm:$0xff]
                %306 = vst [vmem:[%s178 + $0x1f8] sm:$0xff] %v305
                %v307 = vld [vmem:[%s177 + $0x1000] sm:$0xff]
                %308 = vst [vmem:[%s178 + $0x200] sm:$0xff] %v307
                %v309 = vld [vmem:[%s177 + $0x1040] sm:$0xff]
                %310 = vst [vmem:[%s178 + $0x208] sm:$0xff] %v309
                %v311 = vld [vmem:[%s177 + $0x1080] sm:$0xff]
                %312 = vst [vmem:[%s178 + $0x210] sm:$0xff] %v311
                %v313 = vld [vmem:[%s177 + $0x10c0] sm:$0xff]
                %314 = vst [vmem:[%s178 + $0x218] sm:$0xff] %v313
                %v315 = vld [vmem:[%s177 + $0x1100] sm:$0xff]
                %316 = vst [vmem:[%s178 + $0x220] sm:$0xff] %v315
                %v317 = vld [vmem:[%s177 + $0x1140] sm:$0xff]
                %318 = vst [vmem:[%s178 + $0x228] sm:$0xff] %v317
                %v319 = vld [vmem:[%s177 + $0x1180] sm:$0xff]
                %320 = vst [vmem:[%s178 + $0x230] sm:$0xff] %v319
                %v321 = vld [vmem:[%s177 + $0x11c0] sm:$0xff]
                %322 = vst [vmem:[%s178 + $0x238] sm:$0xff] %v321
                %v323 = vld [vmem:[%s177 + $0x1200] sm:$0xff]
                %324 = vst [vmem:[%s178 + $0x240] sm:$0xff] %v323
                %v325 = vld [vmem:[%s177 + $0x1240] sm:$0xff]
                %326 = vst [vmem:[%s178 + $0x248] sm:$0xff] %v325
                %v327 = vld [vmem:[%s177 + $0x1280] sm:$0xff]
                %328 = vst [vmem:[%s178 + $0x250] sm:$0xff] %v327
                %v329 = vld [vmem:[%s177 + $0x12c0] sm:$0xff]
                %330 = vst [vmem:[%s178 + $0x258] sm:$0xff] %v329
                %v331 = vld [vmem:[%s177 + $0x1300] sm:$0xff]
                %332 = vst [vmem:[%s178 + $0x260] sm:$0xff] %v331
                %v333 = vld [vmem:[%s177 + $0x1340] sm:$0xff]
                %334 = vst [vmem:[%s178 + $0x268] sm:$0xff] %v333
                %v335 = vld [vmem:[%s177 + $0x1380] sm:$0xff]
                %336 = vst [vmem:[%s178 + $0x270] sm:$0xff] %v335
                %v337 = vld [vmem:[%s177 + $0x13c0] sm:$0xff]
                %338 = vst [vmem:[%s178 + $0x278] sm:$0xff] %v337
                %v339 = vld [vmem:[%s177 + $0x1400] sm:$0xff]
                %340 = vst [vmem:[%s178 + $0x280] sm:$0xff] %v339
                %v341 = vld [vmem:[%s177 + $0x1440] sm:$0xff]
                %342 = vst [vmem:[%s178 + $0x288] sm:$0xff] %v341
                %v343 = vld [vmem:[%s177 + $0x1480] sm:$0xff]
                %344 = vst [vmem:[%s178 + $0x290] sm:$0xff] %v343
                %v345 = vld [vmem:[%s177 + $0x14c0] sm:$0xff]
                %346 = vst [vmem:[%s178 + $0x298] sm:$0xff] %v345
                %v347 = vld [vmem:[%s177 + $0x1500] sm:$0xff]
                %348 = vst [vmem:[%s178 + $0x2a0] sm:$0xff] %v347
                %v349 = vld [vmem:[%s177 + $0x1540] sm:$0xff]
                %350 = vst [vmem:[%s178 + $0x2a8] sm:$0xff] %v349
                %v351 = vld [vmem:[%s177 + $0x1580] sm:$0xff]
                %352 = vst [vmem:[%s178 + $0x2b0] sm:$0xff] %v351
                %v353 = vld [vmem:[%s177 + $0x15c0] sm:$0xff]
                %354 = vst [vmem:[%s178 + $0x2b8] sm:$0xff] %v353
                %v355 = vld [vmem:[%s177 + $0x1600] sm:$0xff]
                %356 = vst [vmem:[%s178 + $0x2c0] sm:$0xff] %v355
                %v357 = vld [vmem:[%s177 + $0x1640] sm:$0xff]
                %358 = vst [vmem:[%s178 + $0x2c8] sm:$0xff] %v357
                %v359 = vld [vmem:[%s177 + $0x1680] sm:$0xff]
                %360 = vst [vmem:[%s178 + $0x2d0] sm:$0xff] %v359
                %v361 = vld [vmem:[%s177 + $0x16c0] sm:$0xff]
                %362 = vst [vmem:[%s178 + $0x2d8] sm:$0xff] %v361
                %v363 = vld [vmem:[%s177 + $0x1700] sm:$0xff]
                %364 = vst [vmem:[%s178 + $0x2e0] sm:$0xff] %v363
                %v365 = vld [vmem:[%s177 + $0x1740] sm:$0xff]
                %366 = vst [vmem:[%s178 + $0x2e8] sm:$0xff] %v365
                %v367 = vld [vmem:[%s177 + $0x1780] sm:$0xff]
                %368 = vst [vmem:[%s178 + $0x2f0] sm:$0xff] %v367
                %v369 = vld [vmem:[%s177 + $0x17c0] sm:$0xff]
                %370 = vst [vmem:[%s178 + $0x2f8] sm:$0xff] %v369
                %v371 = vld [vmem:[%s177 + $0x1800] sm:$0xff]
                %372 = vst [vmem:[%s178 + $0x300] sm:$0xff] %v371
                %v373 = vld [vmem:[%s177 + $0x1840] sm:$0xff]
                %374 = vst [vmem:[%s178 + $0x308] sm:$0xff] %v373
                %v375 = vld [vmem:[%s177 + $0x1880] sm:$0xff]
                %376 = vst [vmem:[%s178 + $0x310] sm:$0xff] %v375
                %v377 = vld [vmem:[%s177 + $0x18c0] sm:$0xff]
                %378 = vst [vmem:[%s178 + $0x318] sm:$0xff] %v377
                %v379 = vld [vmem:[%s177 + $0x1900] sm:$0xff]
                %380 = vst [vmem:[%s178 + $0x320] sm:$0xff] %v379
                %v381 = vld [vmem:[%s177 + $0x1940] sm:$0xff]
                %382 = vst [vmem:[%s178 + $0x328] sm:$0xff] %v381
                %v383 = vld [vmem:[%s177 + $0x1980] sm:$0xff]
                %384 = vst [vmem:[%s178 + $0x330] sm:$0xff] %v383
                %v385 = vld [vmem:[%s177 + $0x19c0] sm:$0xff]
                %386 = vst [vmem:[%s178 + $0x338] sm:$0xff] %v385
                %v387 = vld [vmem:[%s177 + $0x1a00] sm:$0xff]
                %388 = vst [vmem:[%s178 + $0x340] sm:$0xff] %v387
                %v389 = vld [vmem:[%s177 + $0x1a40] sm:$0xff]
                %390 = vst [vmem:[%s178 + $0x348] sm:$0xff] %v389
                %v391 = vld [vmem:[%s177 + $0x1a80] sm:$0xff]
                %392 = vst [vmem:[%s178 + $0x350] sm:$0xff] %v391
                %v393 = vld [vmem:[%s177 + $0x1ac0] sm:$0xff]
                %394 = vst [vmem:[%s178 + $0x358] sm:$0xff] %v393
                %v395 = vld [vmem:[%s177 + $0x1b00] sm:$0xff]
                %396 = vst [vmem:[%s178 + $0x360] sm:$0xff] %v395
                %v397 = vld [vmem:[%s177 + $0x1b40] sm:$0xff]
                %398 = vst [vmem:[%s178 + $0x368] sm:$0xff] %v397
                %v399 = vld [vmem:[%s177 + $0x1b80] sm:$0xff]
                %400 = vst [vmem:[%s178 + $0x370] sm:$0xff] %v399
                %v401 = vld [vmem:[%s177 + $0x1bc0] sm:$0xff]
                %402 = vst [vmem:[%s178 + $0x378] sm:$0xff] %v401
                %v403 = vld [vmem:[%s177 + $0x1c00] sm:$0xff]
                %404 = vst [vmem:[%s178 + $0x380] sm:$0xff] %v403
                %v405 = vld [vmem:[%s177 + $0x1c40] sm:$0xff]
                %406 = vst [vmem:[%s178 + $0x388] sm:$0xff] %v405
                %v407 = vld [vmem:[%s177 + $0x1c80] sm:$0xff]
                %408 = vst [vmem:[%s178 + $0x390] sm:$0xff] %v407
                %v409 = vld [vmem:[%s177 + $0x1cc0] sm:$0xff]
                %410 = vst [vmem:[%s178 + $0x398] sm:$0xff] %v409
                %v411 = vld [vmem:[%s177 + $0x1d00] sm:$0xff]
                %412 = vst [vmem:[%s178 + $0x3a0] sm:$0xff] %v411
                %v413 = vld [vmem:[%s177 + $0x1d40] sm:$0xff]
                %414 = vst [vmem:[%s178 + $0x3a8] sm:$0xff] %v413
                %v415 = vld [vmem:[%s177 + $0x1d80] sm:$0xff]
                %416 = vst [vmem:[%s178 + $0x3b0] sm:$0xff] %v415
                %v417 = vld [vmem:[%s177 + $0x1dc0] sm:$0xff]
                %418 = vst [vmem:[%s178 + $0x3b8] sm:$0xff] %v417
                %v419 = vld [vmem:[%s177 + $0x1e00] sm:$0xff]
                %420 = vst [vmem:[%s178 + $0x3c0] sm:$0xff] %v419
                %v421 = vld [vmem:[%s177 + $0x1e40] sm:$0xff]
                %422 = vst [vmem:[%s178 + $0x3c8] sm:$0xff] %v421
                %v423 = vld [vmem:[%s177 + $0x1e80] sm:$0xff]
                %424 = vst [vmem:[%s178 + $0x3d0] sm:$0xff] %v423
                %v425 = vld [vmem:[%s177 + $0x1ec0] sm:$0xff]
                %426 = vst [vmem:[%s178 + $0x3d8] sm:$0xff] %v425
                %v427 = vld [vmem:[%s177 + $0x1f00] sm:$0xff]
                %428 = vst [vmem:[%s178 + $0x3e0] sm:$0xff] %v427
                %v429 = vld [vmem:[%s177 + $0x1f40] sm:$0xff]
                %430 = vst [vmem:[%s178 + $0x3e8] sm:$0xff] %v429
                %v431 = vld [vmem:[%s177 + $0x1f80] sm:$0xff]
                %432 = vst [vmem:[%s178 + $0x3f0] sm:$0xff] %v431
                %v433 = vld [vmem:[%s177 + $0x1fc0] sm:$0xff]
                %434 = vst [vmem:[%s178 + $0x3f8] sm:$0xff] %v433
              $region41: #{forward.20} parent=35 // loop_footer
                %s176 = sadd.s32 1, %s172
              $region42: #{forward.20} parent=35 // loop_footer_branch
                %171 = sbr.rel target = $region38
              $region43: #{forward.20} parent=35 // loop_exit
                _
            $region36: #{forward.20} parent=27 // pred_fallthru
              _
          $region28: #{forward.20} parent=23 // pred_fallthru
            _
          %703 = vnop
        $region24: #{forward.20} parent=19 // pred_fallthru
          _
        // Predicated region
        $region59: #{forward.20} parent=19 // pred_check
          %p704 = pneg %p93
        $region60: #{forward.20} parent=19 // pred_check_branch
          %706 = sbr.rel (%p704) target = $region62
        $region61: #{forward.20} parent=19 // pred_region
          %s707 = smul.u32 2, %s17
          %p708 = scmp.lt.s32.totalorder %s707, 15
          %s709 = scalar_select %p708, %s707, 15
          %s710 = scalar_lea.vmem %s2, %s709
          %s711 = smul.u32 2, %s17
        $region62: #{forward.20} parent=19 // pred_fallthru
          _
      $region20: #{forward.20} parent=5 // pred_fallthru
        _
      %p712 = scmp.le.s32.totalorder 1, %s9
      %p713 = scmp.lt.s32.totalorder %s9, 9
      %p714 = pnand %p712, %p713
      %p715 = pneg %p714
      // Predicated region
      $region63: #{forward.20} parent=5 // pred_check
        _
      $region64: #{forward.20} parent=5 // pred_check_branch
        %717 = sbr.rel (%p714) target = $region66
      $region65: #{forward.20} parent=5 // pred_region
        %s718 = ssub.s32 %s9, 1
        %s719 = sand.u32 %s60, 1
        %s720 = sand.u32 %s60, 1
        %s721 = smul.addr %s720, 1024
        %s722 = scalar_lea.vmem [#allocation2], %s721
        // Predicated region
        $region67: #{forward.20} parent=65 // pred_check
          %p723 = pneg %p73
        $region68: #{forward.20} parent=65 // pred_check_branch
          %725 = sbr.rel (%p723) target = $region70
        $region69: #{forward.20} parent=65 // pred_region
          _
        $region70: #{forward.20} parent=65 // pred_fallthru
          _
        %p726 = scmp.lt.s32.totalorder %s18, 0
        %s727 = scalar_select %p726, %s18, 0
        %s728 = smul.addr %s727, 8
        %s729 = smul.addr %s728, 4
        %s730 = scalar_lea.vmem %s0, %s729
        %p731 = pneg %p47
        %p732 = pneg %p44
        %s733 = sand.u32 %s60, 1
        %s734 = sand.u32 %s60, 1
        %s735 = smul.addr %s734, 1024
        %s736 = scalar_lea.vmem [#allocation2], %s735
        %p737 = pneg %p73
        %p738 = pneg %p70
        %s739 = smul.u32 2, %s19
        %p740 = scmp.lt.s32.totalorder %s739, 15
        %s741 = scalar_select %p740, %s739, 15
        %s742 = scalar_lea.vmem %s2, %s741
        %p743 = pneg %p99
        %p744 = pneg %p96
        %p745 = pneg %p127
        %p746 = pneg %p124
        %s747 = smul.u32 2, %s19
        %p748 = scmp.lt.s32.totalorder %s18, 0
        %s749 = scalar_select %p748, %s18, 0
        %p750 = scmp.lt.s32.totalorder %s747, 15
        %s751 = scalar_select %p750, %s747, 15
        %s752 = smul.addr %s749, 16
        %s753 = sadd.s32 %s751, %s752
        %s754 = smul.addr %s753, 8
        %s755 = scalar_lea.vmem %s3, %s754
        %p756 = scmp.lt.s32.totalorder %s18, 0
        %s757 = scalar_select %p756, %s18, 0
        %s758 = smul.addr %s757, 8
        %s759 = smul.addr %s758, 4
        %s760 = scalar_lea.vmem %s0, %s759
        %s761 = smul.u32 2, %s19
        %s762 = smul.u32 2, %s19
        %p763 = scmp.lt.s32.totalorder %s762, 15
        %s764 = scalar_select %p763, %s762, 15
        %s765 = scalar_lea.vmem %s2, %s764
        %s766 = smul.u32 2, %s19
        %s767 = smul.u32 2, %s19
        %p768 = scmp.lt.s32.totalorder %s18, 0
        %s769 = scalar_select %p768, %s18, 0
        %p770 = scmp.lt.s32.totalorder %s767, 15
        %s771 = scalar_select %p770, %s767, 15
        %s772 = smul.addr %s769, 16
        %s773 = sadd.s32 %s771, %s772
        %s774 = smul.addr %s773, 8
        %s775 = scalar_lea.vmem %s3, %s774
        %s776 = smul.u32 2, %s19
        %v777 = vld [vmem:[%s760] sm:$0xff]
        %v778 = vld [vmem:[%s760 + $0x8] sm:$0xff]
        %v779 = vld [vmem:[%s760 + $0x10] sm:$0xff]
        %v780 = vld [vmem:[%s760 + $0x18] sm:$0xff]
        %v781 = vld [vmem:[%s722] sm:$0xff]
        %v782 = vld [vmem:[%s722 + $0x8] sm:$0xff]
        %v783 = vld [vmem:[%s722 + $0x10] sm:$0xff]
        %v784 = vld [vmem:[%s722 + $0x18] sm:$0xff]
        %v785 = vld [vmem:[%s722 + $0x20] sm:$0xff]
        %v786 = vld [vmem:[%s722 + $0x28] sm:$0xff]
        %v787 = vld [vmem:[%s722 + $0x30] sm:$0xff]
        %v788 = vld [vmem:[%s722 + $0x38] sm:$0xff]
        %v789 = vld [vmem:[%s722 + $0x40] sm:$0xff]
        %v790 = vld [vmem:[%s722 + $0x48] sm:$0xff]
        %v791 = vld [vmem:[%s722 + $0x50] sm:$0xff]
        %v792 = vld [vmem:[%s722 + $0x58] sm:$0xff]
        %v793 = vld [vmem:[%s722 + $0x60] sm:$0xff]
        %v794 = vld [vmem:[%s722 + $0x68] sm:$0xff]
        %v795 = vld [vmem:[%s722 + $0x70] sm:$0xff]
        %v796 = vld [vmem:[%s722 + $0x78] sm:$0xff]
        %v797 = vld [vmem:[%s722 + $0x80] sm:$0xff]
        %v798 = vld [vmem:[%s722 + $0x88] sm:$0xff]
        %v799 = vld [vmem:[%s722 + $0x90] sm:$0xff]
        %v800 = vld [vmem:[%s722 + $0x98] sm:$0xff]
        %v801 = vld [vmem:[%s722 + $0xa0] sm:$0xff]
        %v802 = vld [vmem:[%s722 + $0xa8] sm:$0xff]
        %v803 = vld [vmem:[%s722 + $0xb0] sm:$0xff]
        %v804 = vld [vmem:[%s722 + $0xb8] sm:$0xff]
        %v805 = vld [vmem:[%s722 + $0xc0] sm:$0xff]
        %v806 = vld [vmem:[%s722 + $0xc8] sm:$0xff]
        %v807 = vld [vmem:[%s722 + $0xd0] sm:$0xff]
        %v808 = vld [vmem:[%s722 + $0xd8] sm:$0xff]
        %v809 = vld [vmem:[%s722 + $0xe0] sm:$0xff]
        %v810 = vld [vmem:[%s722 + $0xe8] sm:$0xff]
        %v811 = vld [vmem:[%s722 + $0xf0] sm:$0xff]
        %v812 = vld [vmem:[%s722 + $0xf8] sm:$0xff]
        %v813 = vld [vmem:[%s722 + $0x100] sm:$0xff]
        %v814 = vld [vmem:[%s722 + $0x108] sm:$0xff]
        %v815 = vld [vmem:[%s722 + $0x110] sm:$0xff]
        %v816 = vld [vmem:[%s722 + $0x118] sm:$0xff]
        %v817 = vld [vmem:[%s722 + $0x120] sm:$0xff]
        %v818 = vld [vmem:[%s722 + $0x128] sm:$0xff]
        %v819 = vld [vmem:[%s722 + $0x130] sm:$0xff]
        %v820 = vld [vmem:[%s722 + $0x138] sm:$0xff]
        %v821 = vld [vmem:[%s722 + $0x140] sm:$0xff]
        %v822 = vld [vmem:[%s722 + $0x148] sm:$0xff]
        %v823 = vld [vmem:[%s722 + $0x150] sm:$0xff]
        %v824 = vld [vmem:[%s722 + $0x158] sm:$0xff]
        %v825 = vld [vmem:[%s722 + $0x160] sm:$0xff]
        %v826 = vld [vmem:[%s722 + $0x168] sm:$0xff]
        %v827 = vld [vmem:[%s722 + $0x170] sm:$0xff]
        %v828 = vld [vmem:[%s722 + $0x178] sm:$0xff]
        %v829 = vld [vmem:[%s722 + $0x180] sm:$0xff]
        %v830 = vld [vmem:[%s722 + $0x188] sm:$0xff]
        %v831 = vld [vmem:[%s722 + $0x190] sm:$0xff]
        %v832 = vld [vmem:[%s722 + $0x198] sm:$0xff]
        %v833 = vld [vmem:[%s722 + $0x1a0] sm:$0xff]
        %v834 = vld [vmem:[%s722 + $0x1a8] sm:$0xff]
        %v835 = vld [vmem:[%s722 + $0x1b0] sm:$0xff]
        %v836 = vld [vmem:[%s722 + $0x1b8] sm:$0xff]
        %v837 = vld [vmem:[%s722 + $0x1c0] sm:$0xff]
        %v838 = vld [vmem:[%s722 + $0x1c8] sm:$0xff]
        %v839 = vld [vmem:[%s722 + $0x1d0] sm:$0xff]
        %v840 = vld [vmem:[%s722 + $0x1d8] sm:$0xff]
        %v841 = vld [vmem:[%s722 + $0x1e0] sm:$0xff]
        %v842 = vld [vmem:[%s722 + $0x1e8] sm:$0xff]
        %v843 = vld [vmem:[%s722 + $0x1f0] sm:$0xff]
        %v844 = vld [vmem:[%s722 + $0x1f8] sm:$0xff]
        %v845 = vld [vmem:[%s722 + $0x200] sm:$0xff]
        %v846 = vld [vmem:[%s722 + $0x208] sm:$0xff]
        %v847 = vld [vmem:[%s722 + $0x210] sm:$0xff]
        %v848 = vld [vmem:[%s722 + $0x218] sm:$0xff]
        %v849 = vld [vmem:[%s722 + $0x220] sm:$0xff]
        %v850 = vld [vmem:[%s722 + $0x228] sm:$0xff]
        %v851 = vld [vmem:[%s722 + $0x230] sm:$0xff]
        %v852 = vld [vmem:[%s722 + $0x238] sm:$0xff]
        %v853 = vld [vmem:[%s722 + $0x240] sm:$0xff]
        %v854 = vld [vmem:[%s722 + $0x248] sm:$0xff]
        %v855 = vld [vmem:[%s722 + $0x250] sm:$0xff]
        %v856 = vld [vmem:[%s722 + $0x258] sm:$0xff]
        %v857 = vld [vmem:[%s722 + $0x260] sm:$0xff]
        %v858 = vld [vmem:[%s722 + $0x268] sm:$0xff]
        %v859 = vld [vmem:[%s722 + $0x270] sm:$0xff]
        %v860 = vld [vmem:[%s722 + $0x278] sm:$0xff]
        %v861 = vld [vmem:[%s722 + $0x280] sm:$0xff]
        %v862 = vld [vmem:[%s722 + $0x288] sm:$0xff]
        %v863 = vld [vmem:[%s722 + $0x290] sm:$0xff]
        %v864 = vld [vmem:[%s722 + $0x298] sm:$0xff]
        %v865 = vld [vmem:[%s722 + $0x2a0] sm:$0xff]
        %v866 = vld [vmem:[%s722 + $0x2a8] sm:$0xff]
        %v867 = vld [vmem:[%s722 + $0x2b0] sm:$0xff]
        %v868 = vld [vmem:[%s722 + $0x2b8] sm:$0xff]
        %v869 = vld [vmem:[%s722 + $0x2c0] sm:$0xff]
        %v870 = vld [vmem:[%s722 + $0x2c8] sm:$0xff]
        %v871 = vld [vmem:[%s722 + $0x2d0] sm:$0xff]
        %v872 = vld [vmem:[%s722 + $0x2d8] sm:$0xff]
        %v873 = vld [vmem:[%s722 + $0x2e0] sm:$0xff]
        %v874 = vld [vmem:[%s722 + $0x2e8] sm:$0xff]
        %v875 = vld [vmem:[%s722 + $0x2f0] sm:$0xff]
        %v876 = vld [vmem:[%s722 + $0x2f8] sm:$0xff]
        %v877 = vld [vmem:[%s722 + $0x300] sm:$0xff]
        %v878 = vld [vmem:[%s722 + $0x308] sm:$0xff]
        %v879 = vld [vmem:[%s722 + $0x310] sm:$0xff]
        %v880 = vld [vmem:[%s722 + $0x318] sm:$0xff]
        %v881 = vld [vmem:[%s722 + $0x320] sm:$0xff]
        %v882 = vld [vmem:[%s722 + $0x328] sm:$0xff]
        %v883 = vld [vmem:[%s722 + $0x330] sm:$0xff]
        %v884 = vld [vmem:[%s722 + $0x338] sm:$0xff]
        %v885 = vld [vmem:[%s722 + $0x340] sm:$0xff]
        %v886 = vld [vmem:[%s722 + $0x348] sm:$0xff]
        %v887 = vld [vmem:[%s722 + $0x350] sm:$0xff]
        %v888 = vld [vmem:[%s722 + $0x358] sm:$0xff]
        %v889 = vld [vmem:[%s722 + $0x360] sm:$0xff]
        %v890 = vld [vmem:[%s722 + $0x368] sm:$0xff]
        %v891 = vld [vmem:[%s722 + $0x370] sm:$0xff]
        %v892 = vld [vmem:[%s722 + $0x378] sm:$0xff]
        %v893 = vld [vmem:[%s722 + $0x380] sm:$0xff]
        %v894 = vld [vmem:[%s722 + $0x388] sm:$0xff]
        %v895 = vld [vmem:[%s722 + $0x390] sm:$0xff]
        %v896 = vld [vmem:[%s722 + $0x398] sm:$0xff]
        %v897 = vld [vmem:[%s722 + $0x3a0] sm:$0xff]
        %v898 = vld [vmem:[%s722 + $0x3a8] sm:$0xff]
        %v899 = vld [vmem:[%s722 + $0x3b0] sm:$0xff]
        %v900 = vld [vmem:[%s722 + $0x3b8] sm:$0xff]
        %v901 = vld [vmem:[%s722 + $0x3c0] sm:$0xff]
        %v902 = vld [vmem:[%s722 + $0x3c8] sm:$0xff]
        %v903 = vld [vmem:[%s722 + $0x3d0] sm:$0xff]
        %v904 = vld [vmem:[%s722 + $0x3d8] sm:$0xff]
        %v905 = vld [vmem:[%s722 + $0x3e0] sm:$0xff]
        %v906 = vld [vmem:[%s722 + $0x3e8] sm:$0xff]
        %v907 = vld [vmem:[%s722 + $0x3f0] sm:$0xff]
        %v908 = vld [vmem:[%s722 + $0x3f8] sm:$0xff]
        %v909 = vld [vmem:[%s765] sm:$0x3]
        %v911 = vlaneseq
        %v912 = vshrl.u32 %v911, 7
        %v913 = vsub.s32 0, %v912
        %v914 = vrot.slane %v909, %v913
        %v915 = vlaneseq
        %v916 = vshrl.u32 %v915, 7
        %v917 = vsub.s32 1, %v916
        %v918 = vrot.slane %v909, %v917
        %v925 = vunpack.c.l.b16 %v777
        %v926 = vunpack.c.h.b16 %v777
        %v927 = vunpack.c.l.b16 %v778
        %v928 = vunpack.c.h.b16 %v778
        %v929 = vunpack.c.l.b16 %v779
        %v930 = vunpack.c.h.b16 %v779
        %v931 = vunpack.c.l.b16 %v780
        %v932 = vunpack.c.h.b16 %v780
        %v933 = vpack.c.b16 %v925, %v925
        %v934 = vpack.c.b16 %v926, %v926
        %v935 = vpack.c.b16 %v927, %v927
        %v936 = vpack.c.b16 %v928, %v928
        %v937 = vpack.c.b16 %v929, %v929
        %v938 = vpack.c.b16 %v930, %v930
        %v939 = vpack.c.b16 %v931, %v931
        %v940 = vpack.c.b16 %v932, %v932
        %v1077 = vunpack.c.l.b16 %v781
        %v1078 = vunpack.c.h.b16 %v781
        %v1079 = vunpack.c.l.b16 %v782
        %v1080 = vunpack.c.h.b16 %v782
        %v1081 = vunpack.c.l.b16 %v783
        %v1082 = vunpack.c.h.b16 %v783
        %v1083 = vunpack.c.l.b16 %v784
        %v1084 = vunpack.c.h.b16 %v784
        %v1085 = vunpack.c.l.b16 %v785
        %v1086 = vunpack.c.h.b16 %v785
        %v1087 = vunpack.c.l.b16 %v786
        %v1088 = vunpack.c.h.b16 %v786
        %v1089 = vunpack.c.l.b16 %v787
        %v1090 = vunpack.c.h.b16 %v787
        %v1091 = vunpack.c.l.b16 %v788
        %v1092 = vunpack.c.h.b16 %v788
        %v1093 = vunpack.c.l.b16 %v789
        %v1094 = vunpack.c.h.b16 %v789
        %v1095 = vunpack.c.l.b16 %v790
        %v1096 = vunpack.c.h.b16 %v790
        %v1097 = vunpack.c.l.b16 %v791
        %v1098 = vunpack.c.h.b16 %v791
        %v1099 = vunpack.c.l.b16 %v792
        %v1100 = vunpack.c.h.b16 %v792
        %v1101 = vunpack.c.l.b16 %v793
        %v1102 = vunpack.c.h.b16 %v793
        %v1103 = vunpack.c.l.b16 %v794
        %v1104 = vunpack.c.h.b16 %v794
        %v1105 = vunpack.c.l.b16 %v795
        %v1106 = vunpack.c.h.b16 %v795
        %v1107 = vunpack.c.l.b16 %v796
        %v1108 = vunpack.c.h.b16 %v796
        %v1109 = vunpack.c.l.b16 %v797
        %v1110 = vunpack.c.h.b16 %v797
        %v1111 = vunpack.c.l.b16 %v798
        %v1112 = vunpack.c.h.b16 %v798
        %v1113 = vunpack.c.l.b16 %v799
        %v1114 = vunpack.c.h.b16 %v799
        %v1115 = vunpack.c.l.b16 %v800
        %v1116 = vunpack.c.h.b16 %v800
        %v1117 = vunpack.c.l.b16 %v801
        %v1118 = vunpack.c.h.b16 %v801
        %v1119 = vunpack.c.l.b16 %v802
        %v1120 = vunpack.c.h.b16 %v802
        %v1121 = vunpack.c.l.b16 %v803
        %v1122 = vunpack.c.h.b16 %v803
        %v1123 = vunpack.c.l.b16 %v804
        %v1124 = vunpack.c.h.b16 %v804
        %v1125 = vunpack.c.l.b16 %v805
        %v1126 = vunpack.c.h.b16 %v805
        %v1127 = vunpack.c.l.b16 %v806
        %v1128 = vunpack.c.h.b16 %v806
        %v1129 = vunpack.c.l.b16 %v807
        %v1130 = vunpack.c.h.b16 %v807
        %v1131 = vunpack.c.l.b16 %v808
        %v1132 = vunpack.c.h.b16 %v808
        %v1133 = vunpack.c.l.b16 %v809
        %v1134 = vunpack.c.h.b16 %v809
        %v1135 = vunpack.c.l.b16 %v810
        %v1136 = vunpack.c.h.b16 %v810
        %v1137 = vunpack.c.l.b16 %v811
        %v1138 = vunpack.c.h.b16 %v811
        %v1139 = vunpack.c.l.b16 %v812
        %v1140 = vunpack.c.h.b16 %v812
        %v1141 = vunpack.c.l.b16 %v813
        %v1142 = vunpack.c.h.b16 %v813
        %v1143 = vunpack.c.l.b16 %v814
        %v1144 = vunpack.c.h.b16 %v814
        %v1145 = vunpack.c.l.b16 %v815
        %v1146 = vunpack.c.h.b16 %v815
        %v1147 = vunpack.c.l.b16 %v816
        %v1148 = vunpack.c.h.b16 %v816
        %v1149 = vunpack.c.l.b16 %v817
        %v1150 = vunpack.c.h.b16 %v817
        %v1151 = vunpack.c.l.b16 %v818
        %v1152 = vunpack.c.h.b16 %v818
        %v1153 = vunpack.c.l.b16 %v819
        %v1154 = vunpack.c.h.b16 %v819
        %v1155 = vunpack.c.l.b16 %v820
        %v1156 = vunpack.c.h.b16 %v820
        %v1157 = vunpack.c.l.b16 %v821
        %v1158 = vunpack.c.h.b16 %v821
        %v1159 = vunpack.c.l.b16 %v822
        %v1160 = vunpack.c.h.b16 %v822
        %v1161 = vunpack.c.l.b16 %v823
        %v1162 = vunpack.c.h.b16 %v823
        %v1163 = vunpack.c.l.b16 %v824
        %v1164 = vunpack.c.h.b16 %v824
        %v1165 = vunpack.c.l.b16 %v825
        %v1166 = vunpack.c.h.b16 %v825
        %v1167 = vunpack.c.l.b16 %v826
        %v1168 = vunpack.c.h.b16 %v826
        %v1169 = vunpack.c.l.b16 %v827
        %v1170 = vunpack.c.h.b16 %v827
        %v1171 = vunpack.c.l.b16 %v828
        %v1172 = vunpack.c.h.b16 %v828
        %v1173 = vunpack.c.l.b16 %v829
        %v1174 = vunpack.c.h.b16 %v829
        %v1175 = vunpack.c.l.b16 %v830
        %v1176 = vunpack.c.h.b16 %v830
        %v1177 = vunpack.c.l.b16 %v831
        %v1178 = vunpack.c.h.b16 %v831
        %v1179 = vunpack.c.l.b16 %v832
        %v1180 = vunpack.c.h.b16 %v832
        %v1181 = vunpack.c.l.b16 %v833
        %v1182 = vunpack.c.h.b16 %v833
        %v1183 = vunpack.c.l.b16 %v834
        %v1184 = vunpack.c.h.b16 %v834
        %v1185 = vunpack.c.l.b16 %v835
        %v1186 = vunpack.c.h.b16 %v835
        %v1187 = vunpack.c.l.b16 %v836
        %v1188 = vunpack.c.h.b16 %v836
        %v1189 = vunpack.c.l.b16 %v837
        %v1190 = vunpack.c.h.b16 %v837
        %v1191 = vunpack.c.l.b16 %v838
        %v1192 = vunpack.c.h.b16 %v838
        %v1193 = vunpack.c.l.b16 %v839
        %v1194 = vunpack.c.h.b16 %v839
        %v1195 = vunpack.c.l.b16 %v840
        %v1196 = vunpack.c.h.b16 %v840
        %v1197 = vunpack.c.l.b16 %v841
        %v1198 = vunpack.c.h.b16 %v841
        %v1199 = vunpack.c.l.b16 %v842
        %v1200 = vunpack.c.h.b16 %v842
        %v1201 = vunpack.c.l.b16 %v843
        %v1202 = vunpack.c.h.b16 %v843
        %v1203 = vunpack.c.l.b16 %v844
        %v1204 = vunpack.c.h.b16 %v844
        %v1205 = vunpack.c.l.b16 %v845
        %v1206 = vunpack.c.h.b16 %v845
        %v1207 = vunpack.c.l.b16 %v846
        %v1208 = vunpack.c.h.b16 %v846
        %v1209 = vunpack.c.l.b16 %v847
        %v1210 = vunpack.c.h.b16 %v847
        %v1211 = vunpack.c.l.b16 %v848
        %v1212 = vunpack.c.h.b16 %v848
        %v1213 = vunpack.c.l.b16 %v849
        %v1214 = vunpack.c.h.b16 %v849
        %v1215 = vunpack.c.l.b16 %v850
        %v1216 = vunpack.c.h.b16 %v850
        %v1217 = vunpack.c.l.b16 %v851
        %v1218 = vunpack.c.h.b16 %v851
        %v1219 = vunpack.c.l.b16 %v852
        %v1220 = vunpack.c.h.b16 %v852
        %v1221 = vunpack.c.l.b16 %v853
        %v1222 = vunpack.c.h.b16 %v853
        %v1223 = vunpack.c.l.b16 %v854
        %v1224 = vunpack.c.h.b16 %v854
        %v1225 = vunpack.c.l.b16 %v855
        %v1226 = vunpack.c.h.b16 %v855
        %v1227 = vunpack.c.l.b16 %v856
        %v1228 = vunpack.c.h.b16 %v856
        %v1229 = vunpack.c.l.b16 %v857
        %v1230 = vunpack.c.h.b16 %v857
        %v1231 = vunpack.c.l.b16 %v858
        %v1232 = vunpack.c.h.b16 %v858
        %v1233 = vunpack.c.l.b16 %v859
        %v1234 = vunpack.c.h.b16 %v859
        %v1235 = vunpack.c.l.b16 %v860
        %v1236 = vunpack.c.h.b16 %v860
        %v1237 = vunpack.c.l.b16 %v861
        %v1238 = vunpack.c.h.b16 %v861
        %v1239 = vunpack.c.l.b16 %v862
        %v1240 = vunpack.c.h.b16 %v862
        %v1241 = vunpack.c.l.b16 %v863
        %v1242 = vunpack.c.h.b16 %v863
        %v1243 = vunpack.c.l.b16 %v864
        %v1244 = vunpack.c.h.b16 %v864
        %v1245 = vunpack.c.l.b16 %v865
        %v1246 = vunpack.c.h.b16 %v865
        %v1247 = vunpack.c.l.b16 %v866
        %v1248 = vunpack.c.h.b16 %v866
        %v1249 = vunpack.c.l.b16 %v867
        %v1250 = vunpack.c.h.b16 %v867
        %v1251 = vunpack.c.l.b16 %v868
        %v1252 = vunpack.c.h.b16 %v868
        %v1253 = vunpack.c.l.b16 %v869
        %v1254 = vunpack.c.h.b16 %v869
        %v1255 = vunpack.c.l.b16 %v870
        %v1256 = vunpack.c.h.b16 %v870
        %v1257 = vunpack.c.l.b16 %v871
        %v1258 = vunpack.c.h.b16 %v871
        %v1259 = vunpack.c.l.b16 %v872
        %v1260 = vunpack.c.h.b16 %v872
        %v1261 = vunpack.c.l.b16 %v873
        %v1262 = vunpack.c.h.b16 %v873
        %v1263 = vunpack.c.l.b16 %v874
        %v1264 = vunpack.c.h.b16 %v874
        %v1265 = vunpack.c.l.b16 %v875
        %v1266 = vunpack.c.h.b16 %v875
        %v1267 = vunpack.c.l.b16 %v876
        %v1268 = vunpack.c.h.b16 %v876
        %v1269 = vunpack.c.l.b16 %v877
        %v1270 = vunpack.c.h.b16 %v877
        %v1271 = vunpack.c.l.b16 %v878
        %v1272 = vunpack.c.h.b16 %v878
        %v1273 = vunpack.c.l.b16 %v879
        %v1274 = vunpack.c.h.b16 %v879
        %v1275 = vunpack.c.l.b16 %v880
        %v1276 = vunpack.c.h.b16 %v880
        %v1277 = vunpack.c.l.b16 %v881
        %v1278 = vunpack.c.h.b16 %v881
        %v1279 = vunpack.c.l.b16 %v882
        %v1280 = vunpack.c.h.b16 %v882
        %v1281 = vunpack.c.l.b16 %v883
        %v1282 = vunpack.c.h.b16 %v883
        %v1283 = vunpack.c.l.b16 %v884
        %v1284 = vunpack.c.h.b16 %v884
        %v1285 = vunpack.c.l.b16 %v885
        %v1286 = vunpack.c.h.b16 %v885
        %v1287 = vunpack.c.l.b16 %v886
        %v1288 = vunpack.c.h.b16 %v886
        %v1289 = vunpack.c.l.b16 %v887
        %v1290 = vunpack.c.h.b16 %v887
        %v1291 = vunpack.c.l.b16 %v888
        %v1292 = vunpack.c.h.b16 %v888
        %v1293 = vunpack.c.l.b16 %v889
        %v1294 = vunpack.c.h.b16 %v889
        %v1295 = vunpack.c.l.b16 %v890
        %v1296 = vunpack.c.h.b16 %v890
        %v1297 = vunpack.c.l.b16 %v891
        %v1298 = vunpack.c.h.b16 %v891
        %v1299 = vunpack.c.l.b16 %v892
        %v1300 = vunpack.c.h.b16 %v892
        %v1301 = vunpack.c.l.b16 %v893
        %v1302 = vunpack.c.h.b16 %v893
        %v1303 = vunpack.c.l.b16 %v894
        %v1304 = vunpack.c.h.b16 %v894
        %v1305 = vunpack.c.l.b16 %v895
        %v1306 = vunpack.c.h.b16 %v895
        %v1307 = vunpack.c.l.b16 %v896
        %v1308 = vunpack.c.h.b16 %v896
        %v1309 = vunpack.c.l.b16 %v897
        %v1310 = vunpack.c.h.b16 %v897
        %v1311 = vunpack.c.l.b16 %v898
        %v1312 = vunpack.c.h.b16 %v898
        %v1313 = vunpack.c.l.b16 %v899
        %v1314 = vunpack.c.h.b16 %v899
        %v1315 = vunpack.c.l.b16 %v900
        %v1316 = vunpack.c.h.b16 %v900
        %v1317 = vunpack.c.l.b16 %v901
        %v1318 = vunpack.c.h.b16 %v901
        %v1319 = vunpack.c.l.b16 %v902
        %v1320 = vunpack.c.h.b16 %v902
        %v1321 = vunpack.c.l.b16 %v903
        %v1322 = vunpack.c.h.b16 %v903
        %v1323 = vunpack.c.l.b16 %v904
        %v1324 = vunpack.c.h.b16 %v904
        %v1325 = vunpack.c.l.b16 %v905
        %v1326 = vunpack.c.h.b16 %v905
        %v1327 = vunpack.c.l.b16 %v906
        %v1328 = vunpack.c.h.b16 %v906
        %v1329 = vunpack.c.l.b16 %v907
        %v1330 = vunpack.c.h.b16 %v907
        %v1331 = vunpack.c.l.b16 %v908
        %v1332 = vunpack.c.h.b16 %v908
        %v1333 = vpack.c.b16 %v1079, %v1077
        %v1334 = vpack.c.b16 %v1080, %v1078
        %v1335 = vpack.c.b16 %v1083, %v1081
        %v1336 = vpack.c.b16 %v1084, %v1082
        %v1337 = vpack.c.b16 %v1087, %v1085
        %v1338 = vpack.c.b16 %v1088, %v1086
        %v1339 = vpack.c.b16 %v1091, %v1089
        %v1340 = vpack.c.b16 %v1092, %v1090
        %v1341 = vpack.c.b16 %v1095, %v1093
        %v1342 = vpack.c.b16 %v1096, %v1094
        %v1343 = vpack.c.b16 %v1099, %v1097
        %v1344 = vpack.c.b16 %v1100, %v1098
        %v1345 = vpack.c.b16 %v1103, %v1101
        %v1346 = vpack.c.b16 %v1104, %v1102
        %v1347 = vpack.c.b16 %v1107, %v1105
        %v1348 = vpack.c.b16 %v1108, %v1106
        %v1349 = vpack.c.b16 %v1111, %v1109
        %v1350 = vpack.c.b16 %v1112, %v1110
        %v1351 = vpack.c.b16 %v1115, %v1113
        %v1352 = vpack.c.b16 %v1116, %v1114
        %v1353 = vpack.c.b16 %v1119, %v1117
        %v1354 = vpack.c.b16 %v1120, %v1118
        %v1355 = vpack.c.b16 %v1123, %v1121
        %v1356 = vpack.c.b16 %v1124, %v1122
        %v1357 = vpack.c.b16 %v1127, %v1125
        %v1358 = vpack.c.b16 %v1128, %v1126
        %v1359 = vpack.c.b16 %v1131, %v1129
        %v1360 = vpack.c.b16 %v1132, %v1130
        %v1361 = vpack.c.b16 %v1135, %v1133
        %v1362 = vpack.c.b16 %v1136, %v1134
        %v1363 = vpack.c.b16 %v1139, %v1137
        %v1364 = vpack.c.b16 %v1140, %v1138
        %v1365 = vpack.c.b16 %v1143, %v1141
        %v1366 = vpack.c.b16 %v1144, %v1142
        %v1367 = vpack.c.b16 %v1147, %v1145
        %v1368 = vpack.c.b16 %v1148, %v1146
        %v1369 = vpack.c.b16 %v1151, %v1149
        %v1370 = vpack.c.b16 %v1152, %v1150
        %v1371 = vpack.c.b16 %v1155, %v1153
        %v1372 = vpack.c.b16 %v1156, %v1154
        %v1373 = vpack.c.b16 %v1159, %v1157
        %v1374 = vpack.c.b16 %v1160, %v1158
        %v1375 = vpack.c.b16 %v1163, %v1161
        %v1376 = vpack.c.b16 %v1164, %v1162
        %v1377 = vpack.c.b16 %v1167, %v1165
        %v1378 = vpack.c.b16 %v1168, %v1166
        %v1379 = vpack.c.b16 %v1171, %v1169
        %v1380 = vpack.c.b16 %v1172, %v1170
        %v1381 = vpack.c.b16 %v1175, %v1173
        %v1382 = vpack.c.b16 %v1176, %v1174
        %v1383 = vpack.c.b16 %v1179, %v1177
        %v1384 = vpack.c.b16 %v1180, %v1178
        %v1385 = vpack.c.b16 %v1183, %v1181
        %v1386 = vpack.c.b16 %v1184, %v1182
        %v1387 = vpack.c.b16 %v1187, %v1185
        %v1388 = vpack.c.b16 %v1188, %v1186
        %v1389 = vpack.c.b16 %v1191, %v1189
        %v1390 = vpack.c.b16 %v1192, %v1190
        %v1391 = vpack.c.b16 %v1195, %v1193
        %v1392 = vpack.c.b16 %v1196, %v1194
        %v1393 = vpack.c.b16 %v1199, %v1197
        %v1394 = vpack.c.b16 %v1200, %v1198
        %v1395 = vpack.c.b16 %v1203, %v1201
        %v1396 = vpack.c.b16 %v1204, %v1202
        %v1397 = vpack.c.b16 %v1207, %v1205
        %v1398 = vpack.c.b16 %v1208, %v1206
        %v1399 = vpack.c.b16 %v1211, %v1209
        %v1400 = vpack.c.b16 %v1212, %v1210
        %v1401 = vpack.c.b16 %v1215, %v1213
        %v1402 = vpack.c.b16 %v1216, %v1214
        %v1403 = vpack.c.b16 %v1219, %v1217
        %v1404 = vpack.c.b16 %v1220, %v1218
        %v1405 = vpack.c.b16 %v1223, %v1221
        %v1406 = vpack.c.b16 %v1224, %v1222
        %v1407 = vpack.c.b16 %v1227, %v1225
        %v1408 = vpack.c.b16 %v1228, %v1226
        %v1409 = vpack.c.b16 %v1231, %v1229
        %v1410 = vpack.c.b16 %v1232, %v1230
        %v1411 = vpack.c.b16 %v1235, %v1233
        %v1412 = vpack.c.b16 %v1236, %v1234
        %v1413 = vpack.c.b16 %v1239, %v1237
        %v1414 = vpack.c.b16 %v1240, %v1238
        %v1415 = vpack.c.b16 %v1243, %v1241
        %v1416 = vpack.c.b16 %v1244, %v1242
        %v1417 = vpack.c.b16 %v1247, %v1245
        %v1418 = vpack.c.b16 %v1248, %v1246
        %v1419 = vpack.c.b16 %v1251, %v1249
        %v1420 = vpack.c.b16 %v1252, %v1250
        %v1421 = vpack.c.b16 %v1255, %v1253
        %v1422 = vpack.c.b16 %v1256, %v1254
        %v1423 = vpack.c.b16 %v1259, %v1257
        %v1424 = vpack.c.b16 %v1260, %v1258
        %v1425 = vpack.c.b16 %v1263, %v1261
        %v1426 = vpack.c.b16 %v1264, %v1262
        %v1427 = vpack.c.b16 %v1267, %v1265
        %v1428 = vpack.c.b16 %v1268, %v1266
        %v1429 = vpack.c.b16 %v1271, %v1269
        %v1430 = vpack.c.b16 %v1272, %v1270
        %v1431 = vpack.c.b16 %v1275, %v1273
        %v1432 = vpack.c.b16 %v1276, %v1274
        %v1433 = vpack.c.b16 %v1279, %v1277
        %v1434 = vpack.c.b16 %v1280, %v1278
        %v1435 = vpack.c.b16 %v1283, %v1281
        %v1436 = vpack.c.b16 %v1284, %v1282
        %v1437 = vpack.c.b16 %v1287, %v1285
        %v1438 = vpack.c.b16 %v1288, %v1286
        %v1439 = vpack.c.b16 %v1291, %v1289
        %v1440 = vpack.c.b16 %v1292, %v1290
        %v1441 = vpack.c.b16 %v1295, %v1293
        %v1442 = vpack.c.b16 %v1296, %v1294
        %v1443 = vpack.c.b16 %v1299, %v1297
        %v1444 = vpack.c.b16 %v1300, %v1298
        %v1445 = vpack.c.b16 %v1303, %v1301
        %v1446 = vpack.c.b16 %v1304, %v1302
        %v1447 = vpack.c.b16 %v1307, %v1305
        %v1448 = vpack.c.b16 %v1308, %v1306
        %v1449 = vpack.c.b16 %v1311, %v1309
        %v1450 = vpack.c.b16 %v1312, %v1310
        %v1451 = vpack.c.b16 %v1315, %v1313
        %v1452 = vpack.c.b16 %v1316, %v1314
        %v1453 = vpack.c.b16 %v1319, %v1317
        %v1454 = vpack.c.b16 %v1320, %v1318
        %v1455 = vpack.c.b16 %v1323, %v1321
        %v1456 = vpack.c.b16 %v1324, %v1322
        %v1457 = vpack.c.b16 %v1327, %v1325
        %v1458 = vpack.c.b16 %v1328, %v1326
        %v1459 = vpack.c.b16 %v1331, %v1329
        %v1460 = vpack.c.b16 %v1332, %v1330
        %1589 = vmatprep.subr.bf16.mxu0 %v1334
        %1590 = vmatpush1.bf16.msra.mxu0 %v1333
        %1591 = vmatprep.subr.bf16.mxu0 %v1336
        %1592 = vmatpush1.bf16.msra.mxu0 %v1335
        %1593 = vmatprep.subr.bf16.mxu0 %v1338
        %1594 = vmatpush1.bf16.msra.mxu0 %v1337
        %1595 = vmatprep.subr.bf16.mxu0 %v1340
        %1596 = vmatpush1.bf16.msra.mxu0 %v1339
        %1597 = vmatprep.subr.bf16.mxu0 %v1342
        %1598 = vmatpush1.bf16.msra.mxu0 %v1341
        %1599 = vmatprep.subr.bf16.mxu0 %v1344
        %1600 = vmatpush1.bf16.msra.mxu0 %v1343
        %1601 = vmatprep.subr.bf16.mxu0 %v1346
        %1602 = vmatpush1.bf16.msra.mxu0 %v1345
        %1603 = vmatprep.subr.bf16.mxu0 %v1348
        %1604 = vmatpush1.bf16.msra.mxu0 %v1347
        %1605 = vmatprep.subr.bf16.mxu0 %v1350
        %1606 = vmatpush1.bf16.msra.mxu0 %v1349
        %1607 = vmatprep.subr.bf16.mxu0 %v1352
        %1608 = vmatpush1.bf16.msra.mxu0 %v1351
        %1609 = vmatprep.subr.bf16.mxu0 %v1354
        %1610 = vmatpush1.bf16.msra.mxu0 %v1353
        %1611 = vmatprep.subr.bf16.mxu0 %v1356
        %1612 = vmatpush1.bf16.msra.mxu0 %v1355
        %1613 = vmatprep.subr.bf16.mxu0 %v1358
        %1614 = vmatpush1.bf16.msra.mxu0 %v1357
        %1615 = vmatprep.subr.bf16.mxu0 %v1360
        %1616 = vmatpush1.bf16.msra.mxu0 %v1359
        %1617 = vmatprep.subr.bf16.mxu0 %v1362
        %1618 = vmatpush1.bf16.msra.mxu0 %v1361
        %1619 = vmatprep.subr.bf16.mxu0 %v1364
        %1620 = vmatpush1.bf16.msra.mxu0 %v1363
        %1621 = vmatprep.mubr.bf16.mxu0 %v934
        %1622 = vmatmul.mubr.bf16.gmra.mrb[0].mxu0 %v933
        %v1623 = vpop.f32.mrb[0].mxu0
        %v1624 = vadd.f32 %v914, %v1623
        %v1625 = vpop.f32.mrb[0].mxu0
        %v1626 = vadd.f32 %v918, %v1625
        %v1627 = vpop.f32.mrb[0].mxu0
        %v1628 = vpop.f32.mrb[0].mxu0
        %1629 = vdwg.mxu0
        %1630 = vmatprep.subr.bf16.mxu0 %v1366
        %1631 = vmatpush1.bf16.msra.mxu0 %v1365
        %1632 = vmatprep.subr.bf16.mxu0 %v1368
        %1633 = vmatpush1.bf16.msra.mxu0 %v1367
        %1634 = vmatprep.subr.bf16.mxu0 %v1370
        %1635 = vmatpush1.bf16.msra.mxu0 %v1369
        %1636 = vmatprep.subr.bf16.mxu0 %v1372
        %1637 = vmatpush1.bf16.msra.mxu0 %v1371
        %1638 = vmatprep.subr.bf16.mxu0 %v1374
        %1639 = vmatpush1.bf16.msra.mxu0 %v1373
        %1640 = vmatprep.subr.bf16.mxu0 %v1376
        %1641 = vmatpush1.bf16.msra.mxu0 %v1375
        %1642 = vmatprep.subr.bf16.mxu0 %v1378
        %1643 = vmatpush1.bf16.msra.mxu0 %v1377
        %1644 = vmatprep.subr.bf16.mxu0 %v1380
        %1645 = vmatpush1.bf16.msra.mxu0 %v1379
        %1646 = vmatprep.subr.bf16.mxu0 %v1382
        %1647 = vmatpush1.bf16.msra.mxu0 %v1381
        %1648 = vmatprep.subr.bf16.mxu0 %v1384
        %1649 = vmatpush1.bf16.msra.mxu0 %v1383
        %1650 = vmatprep.subr.bf16.mxu0 %v1386
        %1651 = vmatpush1.bf16.msra.mxu0 %v1385
        %1652 = vmatprep.subr.bf16.mxu0 %v1388
        %1653 = vmatpush1.bf16.msra.mxu0 %v1387
        %1654 = vmatprep.subr.bf16.mxu0 %v1390
        %1655 = vmatpush1.bf16.msra.mxu0 %v1389
        %1656 = vmatprep.subr.bf16.mxu0 %v1392
        %1657 = vmatpush1.bf16.msra.mxu0 %v1391
        %1658 = vmatprep.subr.bf16.mxu0 %v1394
        %1659 = vmatpush1.bf16.msra.mxu0 %v1393
        %1660 = vmatprep.subr.bf16.mxu0 %v1396
        %1661 = vmatpush1.bf16.msra.mxu0 %v1395
        %1662 = vmatprep.mubr.bf16.mxu0 %v936
        %1663 = vmatmul.mubr.bf16.gmra.mrb[0].mxu0 %v935
        %v1664 = vpop.f32.mrb[0].mxu0
        %v1665 = vadd.f32 %v1624, %v1664
        %v1666 = vpop.f32.mrb[0].mxu0
        %v1667 = vadd.f32 %v1626, %v1666
        %v1668 = vpop.f32.mrb[0].mxu0
        %v1669 = vpop.f32.mrb[0].mxu0
        %1670 = vdwg.mxu0
        %1671 = vmatprep.subr.bf16.mxu0 %v1398
        %1672 = vmatpush1.bf16.msra.mxu0 %v1397
        %1673 = vmatprep.subr.bf16.mxu0 %v1400
        %1674 = vmatpush1.bf16.msra.mxu0 %v1399
        %1675 = vmatprep.subr.bf16.mxu0 %v1402
        %1676 = vmatpush1.bf16.msra.mxu0 %v1401
        %1677 = vmatprep.subr.bf16.mxu0 %v1404
        %1678 = vmatpush1.bf16.msra.mxu0 %v1403
        %1679 = vmatprep.subr.bf16.mxu0 %v1406
        %1680 = vmatpush1.bf16.msra.mxu0 %v1405
        %1681 = vmatprep.subr.bf16.mxu0 %v1408
        %1682 = vmatpush1.bf16.msra.mxu0 %v1407
        %1683 = vmatprep.subr.bf16.mxu0 %v1410
        %1684 = vmatpush1.bf16.msra.mxu0 %v1409
        %1685 = vmatprep.subr.bf16.mxu0 %v1412
        %1686 = vmatpush1.bf16.msra.mxu0 %v1411
        %1687 = vmatprep.subr.bf16.mxu0 %v1414
        %1688 = vmatpush1.bf16.msra.mxu0 %v1413
        %1689 = vmatprep.subr.bf16.mxu0 %v1416
        %1690 = vmatpush1.bf16.msra.mxu0 %v1415
        %1691 = vmatprep.subr.bf16.mxu0 %v1418
        %1692 = vmatpush1.bf16.msra.mxu0 %v1417
        %1693 = vmatprep.subr.bf16.mxu0 %v1420
        %1694 = vmatpush1.bf16.msra.mxu0 %v1419
        %1695 = vmatprep.subr.bf16.mxu0 %v1422
        %1696 = vmatpush1.bf16.msra.mxu0 %v1421
        %1697 = vmatprep.subr.bf16.mxu0 %v1424
        %1698 = vmatpush1.bf16.msra.mxu0 %v1423
        %1699 = vmatprep.subr.bf16.mxu0 %v1426
        %1700 = vmatpush1.bf16.msra.mxu0 %v1425
        %1701 = vmatprep.subr.bf16.mxu0 %v1428
        %1702 = vmatpush1.bf16.msra.mxu0 %v1427
        %1703 = vmatprep.mubr.bf16.mxu0 %v938
        %1704 = vmatmul.mubr.bf16.gmra.mrb[0].mxu0 %v937
        %v1705 = vpop.f32.mrb[0].mxu0
        %v1706 = vadd.f32 %v1665, %v1705
        %v1707 = vpop.f32.mrb[0].mxu0
        %v1708 = vadd.f32 %v1667, %v1707
        %v1709 = vpop.f32.mrb[0].mxu0
        %v1710 = vpop.f32.mrb[0].mxu0
        %1711 = vdwg.mxu0
        %1712 = vmatprep.subr.bf16.mxu0 %v1430
        %1713 = vmatpush1.bf16.msra.mxu0 %v1429
        %1714 = vmatprep.subr.bf16.mxu0 %v1432
        %1715 = vmatpush1.bf16.msra.mxu0 %v1431
        %1716 = vmatprep.subr.bf16.mxu0 %v1434
        %1717 = vmatpush1.bf16.msra.mxu0 %v1433
        %1718 = vmatprep.subr.bf16.mxu0 %v1436
        %1719 = vmatpush1.bf16.msra.mxu0 %v1435
        %1720 = vmatprep.subr.bf16.mxu0 %v1438
        %1721 = vmatpush1.bf16.msra.mxu0 %v1437
        %1722 = vmatprep.subr.bf16.mxu0 %v1440
        %1723 = vmatpush1.bf16.msra.mxu0 %v1439
        %1724 = vmatprep.subr.bf16.mxu0 %v1442
        %1725 = vmatpush1.bf16.msra.mxu0 %v1441
        %1726 = vmatprep.subr.bf16.mxu0 %v1444
        %1727 = vmatpush1.bf16.msra.mxu0 %v1443
        %1728 = vmatprep.subr.bf16.mxu0 %v1446
        %1729 = vmatpush1.bf16.msra.mxu0 %v1445
        %1730 = vmatprep.subr.bf16.mxu0 %v1448
        %1731 = vmatpush1.bf16.msra.mxu0 %v1447
        %1732 = vmatprep.subr.bf16.mxu0 %v1450
        %1733 = vmatpush1.bf16.msra.mxu0 %v1449
        %1734 = vmatprep.subr.bf16.mxu0 %v1452
        %1735 = vmatpush1.bf16.msra.mxu0 %v1451
        %1736 = vmatprep.subr.bf16.mxu0 %v1454
        %1737 = vmatpush1.bf16.msra.mxu0 %v1453
        %1738 = vmatprep.subr.bf16.mxu0 %v1456
        %1739 = vmatpush1.bf16.msra.mxu0 %v1455
        %1740 = vmatprep.subr.bf16.mxu0 %v1458
        %1741 = vmatpush1.bf16.msra.mxu0 %v1457
        %1742 = vmatprep.subr.bf16.mxu0 %v1460
        %1743 = vmatpush1.bf16.msra.mxu0 %v1459
        %1744 = vmatprep.mubr.bf16.mxu0 %v940
        %1745 = vmatmul.mubr.bf16.gmra.mrb[0].mxu0 %v939
        %v1746 = vpop.f32.mrb[0].mxu0
        %v1747 = vadd.f32 %v1706, %v1746
        %v1748 = vpop.f32.mrb[0].mxu0
        %v1749 = vadd.f32 %v1708, %v1748
        %v1750 = vpop.f32.mrb[0].mxu0
        %v1751 = vpop.f32.mrb[0].mxu0
        %1752 = vdwg.mxu0
        %vm1753 = vcmp.gt.f32.partialorder %v1747, 0.0
        %vm1754 = vcmp.gt.f32.partialorder %v1749, 0.0
        %v1755 = vmul.f32 %v1747, 0.01
        %v1756 = vmul.f32 %v1749, 0.01
        %v1757 = vsel %vm1753, %v1747, %v1755
        %v1758 = vsel %vm1754, %v1749, %v1756
        %1759 = vst [vmem:[%s775] sm:$0xff] %v1757
        %1760 = vst [vmem:[%s775 + $0x8] sm:$0xff] %v1758
        %s1761 = smul.u32 2, %s19
        %p1762 = scmp.lt.s32.totalorder %s18, 0
        %s1763 = scalar_select %p1762, %s18, 0
        %p1764 = scmp.lt.s32.totalorder %s1761, 15
        %s1765 = scalar_select %p1764, %s1761, 15
        %s1766 = smul.addr %s1763, 16
        %s1767 = sadd.s32 %s1765, %s1766
        %s1768 = smul.addr %s1767, 8
        %s1769 = scalar_lea.vmem %s3, %s1768
        // Predicated region
        $region71: #{forward.20} parent=65 // pred_check
          %p1770 = pneg %p124
        $region72: #{forward.20} parent=65 // pred_check_branch
          %1772 = sbr.rel (%p1770) target = $region74
        $region73: #{forward.20} parent=65 // pred_region
          %s1773 = smul.u32 2, %s19
        $region74: #{forward.20} parent=65 // pred_fallthru
          _
      $region66: #{forward.20} parent=5 // pred_fallthru
        _
      %p1774 = scmp.le.s32.totalorder 2, %s9
      // Predicated region
      $region75: #{forward.20} parent=5 // pred_check
        %p1775 = pneg %p1774
      $region76: #{forward.20} parent=5 // pred_check_branch
        %1777 = sbr.rel (%p1775) target = $region78
      $region77: #{forward.20} parent=5 // pred_region
        %s1778 = ssub.s32 %s9, 2
        // Predicated region
        $region79: #{forward.20} parent=77 // pred_check
          %p1779 = pneg %p130
        $region80: #{forward.20} parent=77 // pred_check_branch
          %1781 = sbr.rel (%p1779) target = $region82
        $region81: #{forward.20} parent=77 // pred_region
          %s1782 = smul.u32 2, %s21
          %p1783 = scmp.lt.s32.totalorder %s20, 0
          %s1784 = scalar_select %p1783, %s20, 0
          %p1785 = scmp.lt.s32.totalorder %s1782, 15
          %s1786 = scalar_select %p1785, %s1782, 15
          %s1787 = smul.addr %s1784, 16
          %s1788 = sadd.s32 %s1786, %s1787
          %s1789 = smul.addr %s1788, 8
          %s1790 = scalar_lea.vmem %s3, %s1789
        $region82: #{forward.20} parent=77 // pred_fallthru
          _
      $region78: #{forward.20} parent=5 // pred_fallthru
        _
    $region6: #{forward.20} parent=1 // loop_footer
      %s13 = sadd.s32 1, %s9
    $region7: #{forward.20} parent=1 // loop_footer_branch
      %8 = sbr.rel target = $region3
    $region8: #{forward.20} parent=1 // loop_exit
      _

// kernel: forward.21
$region0: #{forward.21}
  #allocation0 [shape = 'u32[]', space=smem, size = 0x4, offset = 0x4, fixed_abs, tag = 'smem constant byte address 0x4 - core index']
  #allocation1 [shape = 'u32[144,128]{1,0:T(1,128)}', space=vmem, size = 0x12000, scoped, tag = 'internal scratch']
  %s0 = inlined_call_operand.vmem [shape: bf16[32,128], index: 0, kind: input, shape index: {}]
  %s1 = inlined_call_operand.vmem [shape: bf16[128,1664], index: 1, kind: input, shape index: {}]
  %s2 = inlined_call_operand.vmem [shape: f32[1,1664], index: 2, kind: input, shape index: {}]
  %s3 = inlined_call_operand.vmem [shape: f32[32,1664], index: 3, kind: output, shape index: {}]
  %s4 = sld [smem:[#allocation0]]
  $region120: #{forward.21} parent=0
    _
  %s6 = ssub.s32 1, %s4
  %s7 = scalar_select 0, %s6, %s4
  $region1: #{forward.21} parent=0
    #allocation2 [shape = 'u8[65536]{0}', space=vmem, size = 0x10000, scoped, tag = 'input window, operand 1']
    #allocation3 [shape = 'u8[32768]{0}', space=vmem, size = 0x8000, scoped, tag = 'output window, operand 0']
    loop: start=0, step=1, limit=15
    $region2: #{forward.21} parent=1 // loop_pre_header
      _
    $region3: #{forward.21} parent=1 // loop_header
      %s9 = sphi 0, %s13
      %p10 = scmp.ge.s32.totalorder %s9, 15
      %s16 = sphi 0, %s28
      %s17 = sphi 0, %s24
      %s18 = sphi 0, %s16
      %s19 = sphi 0, %s17
      %s20 = sphi 0, %s18
      %s21 = sphi 0, %s19
      %s31 = sphi 0, %s33
      %s34 = sphi 0, %s31
      %s35 = sphi 0, %s34
      %s51 = sphi 0, %s35
      %s57 = sphi 0, %s59
      %s60 = sphi 0, %s57
      %s61 = sphi 0, %s60
      %s77 = sphi 0, %s61
      %s83 = sphi 0, %s85
      %s86 = sphi 0, %s83
      %s87 = sphi 0, %s86
      %s103 = sphi 0, %s87
      %s111 = sphi 0, %s113
      %s114 = sphi 0, %s111
      %s115 = sphi 0, %s114
      %s131 = sphi 0, %s115
    $region4: #{forward.21} parent=1 // loop_header_branch
      %12 = sbr.rel (%p10) target = $region8
    $region5: #{forward.21} parent=1 // loop_body
      %s14 = ssub.s32 %s9, 1
      %s15 = ssub.s32 %s9, 2
      %s22 = sadd.s32 1, %s17
      %p23 = scmp.ge.s32.totalorder %s22, 13
      %s24 = scalar_select %p23, 0, %s22
      %s25 = sadd.s32 1, %s16
      %s26 = scalar_select %p23, %s25, %s16
      %p27 = scmp.ge.s32.totalorder %s26, 1
      %s28 = scalar_select %p27, 0, %s26
      %s29 = ssub.s32 %s16, %s28
      %p30 = scmp.eq.s32.totalorder %s29, 0
      %s32 = sadd.s32 %s31, 1
      %s33 = scalar_select %p30, %s31, %s32
      %p36 = pneg %p30
      %p37 = scmp.eq.s32.totalorder %s9, 12
      %p38 = por %p36, %p37
      %p39 = scmp.ne.s32.totalorder %s31, %s34
      %p40 = scmp.eq.s32.totalorder %s9, 0
      %p41 = por %p39, %p40
      %p42 = scmp.ne.s32.totalorder %s31, %s34
      %p43 = scmp.eq.s32.totalorder %s14, 12
      %p44 = por %p42, %p43
      %p45 = scmp.ne.s32.totalorder %s34, %s35
      %p46 = scmp.eq.s32.totalorder %s14, 0
      %p47 = por %p45, %p46
      %p48 = scmp.ne.s32.totalorder %s34, %s35
      %p49 = scmp.eq.s32.totalorder %s15, 12
      %p50 = por %p48, %p49
      %p52 = scmp.ne.s32.totalorder %s35, %s51
      %p53 = scmp.eq.s32.totalorder %s15, 0
      %p54 = por %p52, %p53
      %s55 = ssub.s32 %s17, %s24
      %p56 = scmp.eq.s32.totalorder %s55, 0
      %s58 = sadd.s32 %s57, 1
      %s59 = scalar_select %p56, %s57, %s58
      %p62 = pneg %p56
      %p63 = scmp.eq.s32.totalorder %s9, 12
      %p64 = por %p62, %p63
      %p65 = scmp.ne.s32.totalorder %s57, %s60
      %p66 = scmp.eq.s32.totalorder %s9, 0
      %p67 = por %p65, %p66
      %p68 = scmp.ne.s32.totalorder %s57, %s60
      %p69 = scmp.eq.s32.totalorder %s14, 12
      %p70 = por %p68, %p69
      %p71 = scmp.ne.s32.totalorder %s60, %s61
      %p72 = scmp.eq.s32.totalorder %s14, 0
      %p73 = por %p71, %p72
      %p74 = scmp.ne.s32.totalorder %s60, %s61
      %p75 = scmp.eq.s32.totalorder %s15, 12
      %p76 = por %p74, %p75
      %p78 = scmp.ne.s32.totalorder %s61, %s77
      %p79 = scmp.eq.s32.totalorder %s15, 0
      %p80 = por %p78, %p79
      %s81 = ssub.s32 %s17, %s24
      %p82 = scmp.eq.s32.totalorder %s81, 0
      %s84 = sadd.s32 %s83, 1
      %s85 = scalar_select %p82, %s83, %s84
      %p88 = pneg %p82
      %p89 = scmp.eq.s32.totalorder %s9, 12
      %p90 = por %p88, %p89
      %p91 = scmp.ne.s32.totalorder %s83, %s86
      %p92 = scmp.eq.s32.totalorder %s9, 0
      %p93 = por %p91, %p92
      %p94 = scmp.ne.s32.totalorder %s83, %s86
      %p95 = scmp.eq.s32.totalorder %s14, 12
      %p96 = por %p94, %p95
      %p97 = scmp.ne.s32.totalorder %s86, %s87
      %p98 = scmp.eq.s32.totalorder %s14, 0
      %p99 = por %p97, %p98
      %p100 = scmp.ne.s32.totalorder %s86, %s87
      %p101 = scmp.eq.s32.totalorder %s15, 12
      %p102 = por %p100, %p101
      %p104 = scmp.ne.s32.totalorder %s87, %s103
      %p105 = scmp.eq.s32.totalorder %s15, 0
      %p106 = por %p104, %p105
      %s107 = ssub.s32 %s16, %s28
      %s108 = ssub.s32 %s17, %s24
      %s109 = sor.u32 %s107, %s108
      %p110 = scmp.eq.s32.totalorder %s109, 0
      %s112 = sadd.s32 %s111, 1
      %s113 = scalar_select %p110, %s111, %s112
      %p116 = pneg %p110
      %p117 = scmp.eq.s32.totalorder %s9, 12
      %p118 = por %p116, %p117
      %p119 = scmp.ne.s32.totalorder %s111, %s114
      %p120 = scmp.eq.s32.totalorder %s9, 0
      %p121 = por %p119, %p120
      %p122 = scmp.ne.s32.totalorder %s111, %s114
      %p123 = scmp.eq.s32.totalorder %s14, 12
      %p124 = por %p122, %p123
      %p125 = scmp.ne.s32.totalorder %s114, %s115
      %p126 = scmp.eq.s32.totalorder %s14, 0
      %p127 = por %p125, %p126
      %p128 = scmp.ne.s32.totalorder %s114, %s115
      %p129 = scmp.eq.s32.totalorder %s15, 12
      %p130 = por %p128, %p129
      %p132 = scmp.ne.s32.totalorder %s115, %s131
      %p133 = scmp.eq.s32.totalorder %s15, 0
      %p134 = por %p132, %p133
      %p135 = scmp.le.s32.totalorder 1, %s9
      %p136 = scmp.lt.s32.totalorder %s9, 14
      %p137 = pnand %p135, %p136
      %p138 = pneg %p137
      // Predicated region
      $region9: #{forward.21} parent=5 // pred_check
        _
      $region10: #{forward.21} parent=5 // pred_check_branch
        %140 = sbr.rel (%p137) target = $region12
      $region11: #{forward.21} parent=5 // pred_region
        %s141 = ssub.s32 %s9, 1
        // Predicated region
        $region13: #{forward.21} parent=11 // pred_check
          %p142 = pneg %p47
        $region14: #{forward.21} parent=11 // pred_check_branch
          %144 = sbr.rel (%p142) target = $region16
        $region15: #{forward.21} parent=11 // pred_region
          %s145 = smul.u32 4, %s18
          %p146 = scmp.lt.s32.totalorder %s145, 3
          %s147 = scalar_select %p146, %s145, 3
          %s148 = smul.addr %s147, 4
          %s149 = scalar_lea.vmem %s0, %s148
          %s150 = smul.u32 4, %s18
        $region16: #{forward.21} parent=11 // pred_fallthru
          _
      $region12: #{forward.21} parent=5 // pred_fallthru
        _
      %p151 = scmp.lt.s32.totalorder %s9, 13
      // Predicated region
      $region17: #{forward.21} parent=5 // pred_check
        %p152 = pneg %p151
      $region18: #{forward.21} parent=5 // pred_check_branch
        %154 = sbr.rel (%p152) target = $region20
      $region19: #{forward.21} parent=5 // pred_region
        // Predicated region
        $region21: #{forward.21} parent=19 // pred_check
          %p155 = pneg %p67
        $region22: #{forward.21} parent=19 // pred_check_branch
          %157 = sbr.rel (%p155) target = $region24
        $region23: #{forward.21} parent=19 // pred_region
          %s158 = sand.u32 %s57, 1
          %s159 = sand.u32 %s57, 1
          %s160 = smul.addr %s159, 64
          %s161 = scalar_lea.vmem [#allocation2], %s160
          %s162 = smul.addr %s17, 4
          %s163 = scalar_lea.vmem %s1, %s162
          // Predicated region
          $region25: #{forward.21} parent=23 // pred_check
            _
          $region26: #{forward.21} parent=23 // pred_check_branch
            %165 = sbr.rel (0) target = $region28
          $region27: #{forward.21} parent=23 // pred_region
            // Predicated region
            $region29: #{forward.21} parent=27 // pred_check
              _
            $region30: #{forward.21} parent=27 // pred_check_branch
              %167 = sbr.rel target = $region32
            $region31: #{forward.21} parent=27 // pred_region
              // Predicated region
              $region44: #{forward.21} parent=31 // pred_check
                _
              $region45: #{forward.21} parent=31 // pred_check_branch
                %212 = sbr.rel (0) target = $region47
              $region46: #{forward.21} parent=31 // pred_region
                loop: start=0, step=1, limit=1
                $region48: #{forward.21} parent=46 // loop_pre_header
                  _
                $region49: #{forward.21} parent=46 // loop_header
                  %s214 = sphi 0, %s218
                  %p215 = scmp.ge.s32.totalorder %s214, 1
                  %s219 = sphi %s163, %s163
                  %s220 = sphi %s161, %s161
                $region50: #{forward.21} parent=46 // loop_header_branch
                  %217 = sbr.rel (%p215) target = $region54
                $region51: #{forward.21} parent=46 // loop_body
                  _
                $region52: #{forward.21} parent=46 // loop_footer
                  %s218 = sadd.s32 1, %s214
                $region53: #{forward.21} parent=46 // loop_footer_branch
                  %213 = sbr.rel target = $region49
                $region54: #{forward.21} parent=46 // loop_exit
                  _
                loop: start=0, step=1, limit=1
                $region55: #{forward.21} parent=46 // loop_pre_header
                  _
                $region56: #{forward.21} parent=46 // loop_header
                  %s223 = sphi 0, %s227
                  %p224 = scmp.ge.s32.totalorder %s223, 1
                  %s228 = sphi %s163, %s163
                  %s229 = sphi %s161, %s161
                $region57: #{forward.21} parent=46 // loop_header_branch
                  %226 = sbr.rel (%p224) target = $region61
                $region58: #{forward.21} parent=46 // loop_body
                  %v230 = vld [vmem:[%s228] sm:$0xf]
                  %231 = vst [vmem:[%s229] sm:$0xf] %v230
                  %v232 = vld [vmem:[%s228 + $0x34] sm:$0xf]
                  %233 = vst [vmem:[%s229 + $0x4] sm:$0xf] %v232
                  %v234 = vld [vmem:[%s228 + $0x68] sm:$0xf]
                  %235 = vst [vmem:[%s229 + $0x8] sm:$0xf] %v234
                  %v236 = vld [vmem:[%s228 + $0x9c] sm:$0xf]
                  %237 = vst [vmem:[%s229 + $0xc] sm:$0xf] %v236
                  %v238 = vld [vmem:[%s228 + $0xd0] sm:$0xf]
                  %239 = vst [vmem:[%s229 + $0x10] sm:$0xf] %v238
                  %v240 = vld [vmem:[%s228 + $0x104] sm:$0xf]
                  %241 = vst [vmem:[%s229 + $0x14] sm:$0xf] %v240
                  %v242 = vld [vmem:[%s228 + $0x138] sm:$0xf]
                  %243 = vst [vmem:[%s229 + $0x18] sm:$0xf] %v242
                  %v244 = vld [vmem:[%s228 + $0x16c] sm:$0xf]
                  %245 = vst [vmem:[%s229 + $0x1c] sm:$0xf] %v244
                  %v246 = vld [vmem:[%s228 + $0x1a0] sm:$0xf]
                  %247 = vst [vmem:[%s229 + $0x20] sm:$0xf] %v246
                  %v248 = vld [vmem:[%s228 + $0x1d4] sm:$0xf]
                  %249 = vst [vmem:[%s229 + $0x24] sm:$0xf] %v248
                  %v250 = vld [vmem:[%s228 + $0x208] sm:$0xf]
                  %251 = vst [vmem:[%s229 + $0x28] sm:$0xf] %v250
                  %v252 = vld [vmem:[%s228 + $0x23c] sm:$0xf]
                  %253 = vst [vmem:[%s229 + $0x2c] sm:$0xf] %v252
                  %v254 = vld [vmem:[%s228 + $0x270] sm:$0xf]
                  %255 = vst [vmem:[%s229 + $0x30] sm:$0xf] %v254
                  %v256 = vld [vmem:[%s228 + $0x2a4] sm:$0xf]
                  %257 = vst [vmem:[%s229 + $0x34] sm:$0xf] %v256
                  %v258 = vld [vmem:[%s228 + $0x2d8] sm:$0xf]
                  %259 = vst [vmem:[%s229 + $0x38] sm:$0xf] %v258
                  %v260 = vld [vmem:[%s228 + $0x30c] sm:$0xf]
                  %261 = vst [vmem:[%s229 + $0x3c] sm:$0xf] %v260
                $region59: #{forward.21} parent=46 // loop_footer
                  %s227 = sadd.s32 1, %s223
                $region60: #{forward.21} parent=46 // loop_footer_branch
                  %222 = sbr.rel target = $region56
                $region61: #{forward.21} parent=46 // loop_exit
                  _
              $region47: #{forward.21} parent=31 // pred_fallthru
                _
            $region32: #{forward.21} parent=27 // pred_fallthru
              _
            // Predicated region
            $region33: #{forward.21} parent=27 // pred_check
              _
            $region34: #{forward.21} parent=27 // pred_check_branch
              %169 = sbr.rel (0) target = $region36
            $region35: #{forward.21} parent=27 // pred_region
              loop: start=0, step=1, limit=1
              $region37: #{forward.21} parent=35 // loop_pre_header
                _
              $region38: #{forward.21} parent=35 // loop_header
                %s172 = sphi 0, %s176
                %p173 = scmp.ge.s32.totalorder %s172, 1
                %s177 = sphi %s163, %s163
                %s178 = sphi %s161, %s161
              $region39: #{forward.21} parent=35 // loop_header_branch
                %175 = sbr.rel (%p173) target = $region43
              $region40: #{forward.21} parent=35 // loop_body
                %v179 = vld [vmem:[%s177] sm:$0xf]
                %180 = vst [vmem:[%s178] sm:$0xf] %v179
                %v181 = vld [vmem:[%s177 + $0x34] sm:$0xf]
                %182 = vst [vmem:[%s178 + $0x4] sm:$0xf] %v181
                %v183 = vld [vmem:[%s177 + $0x68] sm:$0xf]
                %184 = vst [vmem:[%s178 + $0x8] sm:$0xf] %v183
                %v185 = vld [vmem:[%s177 + $0x9c] sm:$0xf]
                %186 = vst [vmem:[%s178 + $0xc] sm:$0xf] %v185
                %v187 = vld [vmem:[%s177 + $0xd0] sm:$0xf]
                %188 = vst [vmem:[%s178 + $0x10] sm:$0xf] %v187
                %v189 = vld [vmem:[%s177 + $0x104] sm:$0xf]
                %190 = vst [vmem:[%s178 + $0x14] sm:$0xf] %v189
                %v191 = vld [vmem:[%s177 + $0x138] sm:$0xf]
                %192 = vst [vmem:[%s178 + $0x18] sm:$0xf] %v191
                %v193 = vld [vmem:[%s177 + $0x16c] sm:$0xf]
                %194 = vst [vmem:[%s178 + $0x1c] sm:$0xf] %v193
                %v195 = vld [vmem:[%s177 + $0x1a0] sm:$0xf]
                %196 = vst [vmem:[%s178 + $0x20] sm:$0xf] %v195
                %v197 = vld [vmem:[%s177 + $0x1d4] sm:$0xf]
                %198 = vst [vmem:[%s178 + $0x24] sm:$0xf] %v197
                %v199 = vld [vmem:[%s177 + $0x208] sm:$0xf]
                %200 = vst [vmem:[%s178 + $0x28] sm:$0xf] %v199
                %v201 = vld [vmem:[%s177 + $0x23c] sm:$0xf]
                %202 = vst [vmem:[%s178 + $0x2c] sm:$0xf] %v201
                %v203 = vld [vmem:[%s177 + $0x270] sm:$0xf]
                %204 = vst [vmem:[%s178 + $0x30] sm:$0xf] %v203
                %v205 = vld [vmem:[%s177 + $0x2a4] sm:$0xf]
                %206 = vst [vmem:[%s178 + $0x34] sm:$0xf] %v205
                %v207 = vld [vmem:[%s177 + $0x2d8] sm:$0xf]
                %208 = vst [vmem:[%s178 + $0x38] sm:$0xf] %v207
                %v209 = vld [vmem:[%s177 + $0x30c] sm:$0xf]
                %210 = vst [vmem:[%s178 + $0x3c] sm:$0xf] %v209
              $region41: #{forward.21} parent=35 // loop_footer
                %s176 = sadd.s32 1, %s172
              $region42: #{forward.21} parent=35 // loop_footer_branch
                %171 = sbr.rel target = $region38
              $region43: #{forward.21} parent=35 // loop_exit
                _
            $region36: #{forward.21} parent=27 // pred_fallthru
              _
          $region28: #{forward.21} parent=23 // pred_fallthru
            _
          %262 = vnop
        $region24: #{forward.21} parent=19 // pred_fallthru
          _
        // Predicated region
        $region62: #{forward.21} parent=19 // pred_check
          %p263 = pneg %p93
        $region63: #{forward.21} parent=19 // pred_check_branch
          %265 = sbr.rel (%p263) target = $region65
        $region64: #{forward.21} parent=19 // pred_region
          %p266 = scmp.lt.s32.totalorder %s17, 12
          %s267 = scalar_select %p266, %s17, 12
          %s268 = scalar_lea.vmem %s2, %s267
        $region65: #{forward.21} parent=19 // pred_fallthru
          _
      $region20: #{forward.21} parent=5 // pred_fallthru
        _
      %p269 = scmp.le.s32.totalorder 1, %s9
      %p270 = scmp.lt.s32.totalorder %s9, 14
      %p271 = pnand %p269, %p270
      %p272 = pneg %p271
      // Predicated region
      $region66: #{forward.21} parent=5 // pred_check
        _
      $region67: #{forward.21} parent=5 // pred_check_branch
        %274 = sbr.rel (%p271) target = $region69
      $region68: #{forward.21} parent=5 // pred_region
        %s275 = ssub.s32 %s9, 1
        %s276 = sand.u32 %s60, 1
        %s277 = sand.u32 %s60, 1
        %s278 = smul.addr %s277, 64
        %s279 = scalar_lea.vmem [#allocation2], %s278
        // Predicated region
        $region70: #{forward.21} parent=68 // pred_check
          %p280 = pneg %p73
        $region71: #{forward.21} parent=68 // pred_check_branch
          %282 = sbr.rel (%p280) target = $region73
        $region72: #{forward.21} parent=68 // pred_region
          _
        $region73: #{forward.21} parent=68 // pred_fallthru
          _
        %s283 = smul.u32 4, %s18
        %p284 = scmp.lt.s32.totalorder %s283, 3
        %s285 = scalar_select %p284, %s283, 3
        %s286 = smul.addr %s285, 4
        %s287 = scalar_lea.vmem %s0, %s286
        %p288 = pneg %p47
        %p289 = pneg %p44
        %s290 = sand.u32 %s60, 1
        %s291 = sand.u32 %s60, 1
        %s292 = smul.addr %s291, 64
        %s293 = scalar_lea.vmem [#allocation2], %s292
        %p294 = pneg %p73
        %p295 = pneg %p70
        %p296 = scmp.lt.s32.totalorder %s19, 12
        %s297 = scalar_select %p296, %s19, 12
        %s298 = scalar_lea.vmem %s2, %s297
        %p299 = pneg %p99
        %p300 = pneg %p96
        %p301 = pneg %p127
        %p302 = pneg %p124
        %s303 = sand.u32 %s114, 1
        %s304 = sand.u32 %s114, 1
        %s305 = smul.addr %s304, 32
        %s306 = scalar_lea.vmem [#allocation3], %s305
        %s307 = smul.u32 4, %s18
        %p308 = scmp.lt.s32.totalorder %s307, 3
        %s309 = scalar_select %p308, %s307, 3
        %s310 = smul.addr %s309, 4
        %s311 = scalar_lea.vmem %s0, %s310
        %s312 = smul.u32 4, %s18
        %p313 = scmp.lt.s32.totalorder %s19, 12
        %s314 = scalar_select %p313, %s19, 12
        %s315 = scalar_lea.vmem %s2, %s314
        %s316 = smul.u32 4, %s18
        %v318 = vld [vmem:[%s311] sm:$0xf]
        %v319 = vld [vmem:[%s311 + $0x4] sm:$0xf]
        %v320 = vld [vmem:[%s311 + $0x8] sm:$0xf]
        %v321 = vld [vmem:[%s311 + $0xc] sm:$0xf]
        %v322 = vld [vmem:[%s279] sm:$0xf]
        %v323 = vld [vmem:[%s279 + $0x4] sm:$0xf]
        %v324 = vld [vmem:[%s279 + $0x8] sm:$0xf]
        %v325 = vld [vmem:[%s279 + $0xc] sm:$0xf]
        %v326 = vld [vmem:[%s279 + $0x10] sm:$0xf]
        %v327 = vld [vmem:[%s279 + $0x14] sm:$0xf]
        %v328 = vld [vmem:[%s279 + $0x18] sm:$0xf]
        %v329 = vld [vmem:[%s279 + $0x1c] sm:$0xf]
        %v330 = vld [vmem:[%s279 + $0x20] sm:$0xf]
        %v331 = vld [vmem:[%s279 + $0x24] sm:$0xf]
        %v332 = vld [vmem:[%s279 + $0x28] sm:$0xf]
        %v333 = vld [vmem:[%s279 + $0x2c] sm:$0xf]
        %v334 = vld [vmem:[%s279 + $0x30] sm:$0xf]
        %v335 = vld [vmem:[%s279 + $0x34] sm:$0xf]
        %v336 = vld [vmem:[%s279 + $0x38] sm:$0xf]
        %v337 = vld [vmem:[%s279 + $0x3c] sm:$0xf]
        %v338 = vld [vmem:[%s315] sm:$0x1]
        %v340 = vlaneseq
        %v341 = vshrl.u32 %v340, 7
        %v342 = vsub.s32 0, %v341
        %v343 = vrot.slane %v338, %v342
        %v349 = vunpack.c.l.b16 %v318
        %v350 = vunpack.c.l.b16 %v319
        %v351 = vunpack.c.l.b16 %v320
        %v352 = vunpack.c.l.b16 %v321
        %v353 = vpack.c.b16 %v350, %v349
        %v354 = vpack.c.b16 %v352, %v351
        %v373 = vunpack.c.l.b16 %v322
        %v374 = vunpack.c.l.b16 %v323
        %v375 = vunpack.c.l.b16 %v324
        %v376 = vunpack.c.l.b16 %v325
        %v377 = vunpack.c.l.b16 %v326
        %v378 = vunpack.c.l.b16 %v327
        %v379 = vunpack.c.l.b16 %v328
        %v380 = vunpack.c.l.b16 %v329
        %v381 = vunpack.c.l.b16 %v330
        %v382 = vunpack.c.l.b16 %v331
        %v383 = vunpack.c.l.b16 %v332
        %v384 = vunpack.c.l.b16 %v333
        %v385 = vunpack.c.l.b16 %v334
        %v386 = vunpack.c.l.b16 %v335
        %v387 = vunpack.c.l.b16 %v336
        %v388 = vunpack.c.l.b16 %v337
        %v389 = vpack.c.b16 %v374, %v373
        %v390 = vpack.c.b16 %v376, %v375
        %v391 = vpack.c.b16 %v378, %v377
        %v392 = vpack.c.b16 %v380, %v379
        %v393 = vpack.c.b16 %v382, %v381
        %v394 = vpack.c.b16 %v384, %v383
        %v395 = vpack.c.b16 %v386, %v385
        %v396 = vpack.c.b16 %v388, %v387
        %405 = vmatprep.subr.bf16.mxu0 0
        %406 = vmatpush1.bf16.msra.mxu0 %v389
        %407 = vmatprep.subr.bf16.mxu0 0
        %408 = vmatpush1.bf16.msra.mxu0 %v390
        %409 = vmatprep.subr.bf16.mxu0 0
        %410 = vmatpush1.bf16.msra.mxu0 %v391
        %411 = vmatprep.subr.bf16.mxu0 0
        %412 = vmatpush1.bf16.msra.mxu0 %v392
        %413 = vmatprep.subr.bf16.mxu0 0
        %414 = vmatpush1.bf16.msra.mxu0 %v393
        %415 = vmatprep.subr.bf16.mxu0 0
        %416 = vmatpush1.bf16.msra.mxu0 %v394
        %417 = vmatprep.subr.bf16.mxu0 0
        %418 = vmatpush1.bf16.msra.mxu0 %v395
        %419 = vmatprep.subr.bf16.mxu0 0
        %420 = vmatpush1.bf16.msra.mxu0 %v396
        %421 = vmatprep.subr.bf16.mxu0 0
        %422 = vmatpush1.bf16.msra.mxu0 0
        %423 = vmatprep.subr.bf16.mxu0 0
        %424 = vmatpush1.bf16.msra.mxu0 0
        %425 = vmatprep.subr.bf16.mxu0 0
        %426 = vmatpush1.bf16.msra.mxu0 0
        %427 = vmatprep.subr.bf16.mxu0 0
        %428 = vmatpush1.bf16.msra.mxu0 0
        %429 = vmatprep.subr.bf16.mxu0 0
        %430 = vmatpush1.bf16.msra.mxu0 0
        %431 = vmatprep.subr.bf16.mxu0 0
        %432 = vmatpush1.bf16.msra.mxu0 0
        %433 = vmatprep.subr.bf16.mxu0 0
        %434 = vmatpush1.bf16.msra.mxu0 0
        %435 = vmatprep.subr.bf16.mxu0 0
        %436 = vmatpush1.bf16.msra.mxu0 0
        %437 = vmatprep.mubr.bf16.mxu0 0
        %438 = vmatmul.mubr.bf16.gmra.mrb[0].mxu0 %v353
        %v439 = vpop.f32.mrb[0].mxu0
        %v440 = vadd.f32 %v343, %v439
        %v441 = vpop.f32.mrb[0].mxu0
        %v442 = vpop.f32.mrb[0].mxu0
        %v443 = vadd.f32 %v343, %v442
        %v444 = vpop.f32.mrb[0].mxu0
        %445 = vmatprep.mubr.bf16.mxu0 0
        %446 = vmatmul.mubr.bf16.gmra.mrb[0].mxu0 %v354
        %v447 = vpop.f32.mrb[0].mxu0
        %v448 = vadd.f32 %v343, %v447
        %v449 = vpop.f32.mrb[0].mxu0
        %v450 = vpop.f32.mrb[0].mxu0
        %v451 = vadd.f32 %v343, %v450
        %v452 = vpop.f32.mrb[0].mxu0
        %453 = vdwg.mxu0
        %454 = vst [vmem:[%s306] sm:$0xff] %v440
        %455 = vst [vmem:[%s306 + $0x8] sm:$0xff] %v443
        %456 = vst [vmem:[%s306 + $0x10] sm:$0xff] %v448
        %457 = vst [vmem:[%s306 + $0x18] sm:$0xff] %v451
        %s458 = sand.u32 %s114, 1
        %s459 = sand.u32 %s114, 1
        %s460 = smul.addr %s459, 32
        %s461 = scalar_lea.vmem [#allocation3], %s460
        // Predicated region
        $region74: #{forward.21} parent=68 // pred_check
          %p462 = pneg %p124
        $region75: #{forward.21} parent=68 // pred_check_branch
          %464 = sbr.rel (%p462) target = $region77
        $region76: #{forward.21} parent=68 // pred_region
          %s465 = smul.u32 4, %s18
          %s466 = smul.addr %s465, 13
          %s467 = sadd.s32 %s19, %s466
          %s468 = smul.addr %s467, 8
          %s469 = scalar_lea.vmem %s3, %s468
          // Predicated region
          $region78: #{forward.21} parent=76 // pred_check
            _
          $region79: #{forward.21} parent=76 // pred_check_branch
            %471 = sbr.rel (0) target = $region81
          $region80: #{forward.21} parent=76 // pred_region
            // Predicated region
            $region82: #{forward.21} parent=80 // pred_check
              _
            $region83: #{forward.21} parent=80 // pred_check_branch
              %473 = sbr.rel (0) target = $region85
            $region84: #{forward.21} parent=80 // pred_region
              // Predicated region
              $region97: #{forward.21} parent=84 // pred_check
                _
              $region98: #{forward.21} parent=84 // pred_check_branch
                %494 = sbr.rel (0) target = $region100
              $region99: #{forward.21} parent=84 // pred_region
                loop: start=0, step=1, limit=1
                $region101: #{forward.21} parent=99 // loop_pre_header
                  _
                $region102: #{forward.21} parent=99 // loop_header
                  %s496 = sphi 0, %s500
                  %p497 = scmp.ge.s32.totalorder %s496, 1
                  %s501 = sphi %s461, %s461
                  %s502 = sphi %s469, %s469
                $region103: #{forward.21} parent=99 // loop_header_branch
                  %499 = sbr.rel (%p497) target = $region107
                $region104: #{forward.21} parent=99 // loop_body
                  %v503 = vld [vmem:[%s501] sm:$0xff]
                  %504 = vst [vmem:[%s502] sm:$0xff] %v503
                  %v505 = vld [vmem:[%s501 + $0x8] sm:$0xff]
                  %506 = vst [vmem:[%s502 + $0x68] sm:$0xff] %v505
                  %v507 = vld [vmem:[%s501 + $0x10] sm:$0xff]
                  %508 = vst [vmem:[%s502 + $0xd0] sm:$0xff] %v507
                  %v509 = vld [vmem:[%s501 + $0x18] sm:$0xff]
                  %510 = vst [vmem:[%s502 + $0x138] sm:$0xff] %v509
                $region105: #{forward.21} parent=99 // loop_footer
                  %s500 = sadd.s32 1, %s496
                $region106: #{forward.21} parent=99 // loop_footer_branch
                  %495 = sbr.rel target = $region102
                $region107: #{forward.21} parent=99 // loop_exit
                  _
              $region100: #{forward.21} parent=84 // pred_fallthru
                _
              // Predicated region
              $region108: #{forward.21} parent=84 // pred_check
                _
              $region109: #{forward.21} parent=84 // pred_check_branch
                %512 = sbr.rel target = $region111
              $region110: #{forward.21} parent=84 // pred_region
                _
              $region111: #{forward.21} parent=84 // pred_fallthru
                _
            $region85: #{forward.21} parent=80 // pred_fallthru
              _
            // Predicated region
            $region86: #{forward.21} parent=80 // pred_check
              _
            $region87: #{forward.21} parent=80 // pred_check_branch
              %475 = sbr.rel target = $region89
            $region88: #{forward.21} parent=80 // pred_region
              loop: start=0, step=1, limit=1
              $region90: #{forward.21} parent=88 // loop_pre_header
                _
              $region91: #{forward.21} parent=88 // loop_header
                %s478 = sphi 0, %s482
                %p479 = scmp.ge.s32.totalorder %s478, 1
                %s483 = sphi %s461, %s461
                %s484 = sphi %s469, %s469
              $region92: #{forward.21} parent=88 // loop_header_branch
                %481 = sbr.rel (%p479) target = $region96
              $region93: #{forward.21} parent=88 // loop_body
                %v485 = vld [vmem:[%s483] sm:$0xff]
                %486 = vst [vmem:[%s484] sm:$0xff] %v485
                %v487 = vld [vmem:[%s483 + $0x8] sm:$0xff]
                %488 = vst [vmem:[%s484 + $0x68] sm:$0xff] %v487
                %v489 = vld [vmem:[%s483 + $0x10] sm:$0xff]
                %490 = vst [vmem:[%s484 + $0xd0] sm:$0xff] %v489
                %v491 = vld [vmem:[%s483 + $0x18] sm:$0xff]
                %492 = vst [vmem:[%s484 + $0x138] sm:$0xff] %v491
              $region94: #{forward.21} parent=88 // loop_footer
                %s482 = sadd.s32 1, %s478
              $region95: #{forward.21} parent=88 // loop_footer_branch
                %477 = sbr.rel target = $region91
              $region96: #{forward.21} parent=88 // loop_exit
                _
            $region89: #{forward.21} parent=80 // pred_fallthru
              _
          $region81: #{forward.21} parent=76 // pred_fallthru
            _
          %513 = vnop
        $region77: #{forward.21} parent=68 // pred_fallthru
          _
      $region69: #{forward.21} parent=5 // pred_fallthru
        _
      %p514 = scmp.le.s32.totalorder 2, %s9
      // Predicated region
      $region112: #{forward.21} parent=5 // pred_check
        %p515 = pneg %p514
      $region113: #{forward.21} parent=5 // pred_check_branch
        %517 = sbr.rel (%p515) target = $region115
      $region114: #{forward.21} parent=5 // pred_region
        %s518 = ssub.s32 %s9, 2
        // Predicated region
        $region116: #{forward.21} parent=114 // pred_check
          %p519 = pneg %p130
        $region117: #{forward.21} parent=114 // pred_check_branch
          %521 = sbr.rel (%p519) target = $region119
        $region118: #{forward.21} parent=114 // pred_region
          %s522 = sand.u32 %s115, 1
          %s523 = sand.u32 %s115, 1
          %s524 = smul.addr %s523, 32
          %s525 = scalar_lea.vmem [#allocation3], %s524
        $region119: #{forward.21} parent=114 // pred_fallthru
          _
      $region115: #{forward.21} parent=5 // pred_fallthru
        _
    $region6: #{forward.21} parent=1 // loop_footer
      %s13 = sadd.s32 1, %s9
    $region7: #{forward.21} parent=1 // loop_footer_branch
      %8 = sbr.rel target = $region3
    $region8: #{forward.21} parent=1 // loop_exit
      _

// kernel: forward.22
$region0: #{forward.22}
  #allocation0 [shape = 'u32[]', space=smem, size = 0x4, offset = 0x4, fixed_abs, tag = 'smem constant byte address 0x4 - core index']
  #allocation1 [shape = 'u32[144,128]{1,0:T(1,128)}', space=vmem, size = 0x12000, scoped, tag = 'internal scratch']
  %s0 = inlined_call_operand.vmem [shape: bf16[248,64], index: 0, kind: input, shape index: {}]
  %s1 = inlined_call_operand.vmem [shape: bf16[64,512], index: 1, kind: input, shape index: {}]
  %s2 = inlined_call_operand.vmem [shape: f32[1,512], index: 2, kind: input, shape index: {}]
  %s3 = inlined_call_operand.vmem [shape: f32[248,512], index: 3, kind: output, shape index: {}]
  %s4 = sld [smem:[#allocation0]]
  $region102: #{forward.22} parent=0
    _
  %s6 = ssub.s32 1, %s4
  %s7 = scalar_select 0, %s6, %s4
  $region1: #{forward.22} parent=0
    #allocation2 [shape = 'u8[65536]{0}', space=vmem, size = 0x10000, scoped, tag = 'input window, operand 1']
    #allocation3 [shape = 'u8[507904]{0}', space=vmem, size = 0x7c000, scoped, tag = 'output window, operand 0']
    loop: start=0, step=1, limit=4
    $region2: #{forward.22} parent=1 // loop_pre_header
      _
    $region3: #{forward.22} parent=1 // loop_header
      %s9 = sphi 0, %s13
      %p10 = scmp.ge.s32.totalorder %s9, 4
      %s16 = sphi 0, %s28
      %s17 = sphi 0, %s24
      %s18 = sphi 0, %s16
      %s19 = sphi 0, %s17
      %s20 = sphi 0, %s18
      %s21 = sphi 0, %s19
      %s31 = sphi 0, %s33
      %s34 = sphi 0, %s31
      %s35 = sphi 0, %s34
      %s51 = sphi 0, %s35
      %s57 = sphi 0, %s59
      %s60 = sphi 0, %s57
      %s61 = sphi 0, %s60
      %s77 = sphi 0, %s61
      %s83 = sphi 0, %s85
      %s86 = sphi 0, %s83
      %s87 = sphi 0, %s86
      %s103 = sphi 0, %s87
      %s111 = sphi 0, %s113
      %s114 = sphi 0, %s111
      %s115 = sphi 0, %s114
      %s131 = sphi 0, %s115
    $region4: #{forward.22} parent=1 // loop_header_branch
      %12 = sbr.rel (%p10) target = $region8
    $region5: #{forward.22} parent=1 // loop_body
      %s14 = ssub.s32 %s9, 1
      %s15 = ssub.s32 %s9, 2
      %s22 = sadd.s32 1, %s17
      %p23 = scmp.ge.s32.totalorder %s22, 2
      %s24 = scalar_select %p23, 0, %s22
      %s25 = sadd.s32 1, %s16
      %s26 = scalar_select %p23, %s25, %s16
      %p27 = scmp.ge.s32.totalorder %s26, 1
      %s28 = scalar_select %p27, 0, %s26
      %s29 = ssub.s32 %s16, %s28
      %p30 = scmp.eq.s32.totalorder %s29, 0
      %s32 = sadd.s32 %s31, 1
      %s33 = scalar_select %p30, %s31, %s32
      %p36 = pneg %p30
      %p37 = scmp.eq.s32.totalorder %s9, 1
      %p38 = por %p36, %p37
      %p39 = scmp.ne.s32.totalorder %s31, %s34
      %p40 = scmp.eq.s32.totalorder %s9, 0
      %p41 = por %p39, %p40
      %p42 = scmp.ne.s32.totalorder %s31, %s34
      %p43 = scmp.eq.s32.totalorder %s14, 1
      %p44 = por %p42, %p43
      %p45 = scmp.ne.s32.totalorder %s34, %s35
      %p46 = scmp.eq.s32.totalorder %s14, 0
      %p47 = por %p45, %p46
      %p48 = scmp.ne.s32.totalorder %s34, %s35
      %p49 = scmp.eq.s32.totalorder %s15, 1
      %p50 = por %p48, %p49
      %p52 = scmp.ne.s32.totalorder %s35, %s51
      %p53 = scmp.eq.s32.totalorder %s15, 0
      %p54 = por %p52, %p53
      %s55 = ssub.s32 %s17, %s24
      %p56 = scmp.eq.s32.totalorder %s55, 0
      %s58 = sadd.s32 %s57, 1
      %s59 = scalar_select %p56, %s57, %s58
      %p62 = pneg %p56
      %p63 = scmp.eq.s32.totalorder %s9, 1
      %p64 = por %p62, %p63
      %p65 = scmp.ne.s32.totalorder %s57, %s60
      %p66 = scmp.eq.s32.totalorder %s9, 0
      %p67 = por %p65, %p66
      %p68 = scmp.ne.s32.totalorder %s57, %s60
      %p69 = scmp.eq.s32.totalorder %s14, 1
      %p70 = por %p68, %p69
      %p71 = scmp.ne.s32.totalorder %s60, %s61
      %p72 = scmp.eq.s32.totalorder %s14, 0
      %p73 = por %p71, %p72
      %p74 = scmp.ne.s32.totalorder %s60, %s61
      %p75 = scmp.eq.s32.totalorder %s15, 1
      %p76 = por %p74, %p75
      %p78 = scmp.ne.s32.totalorder %s61, %s77
      %p79 = scmp.eq.s32.totalorder %s15, 0
      %p80 = por %p78, %p79
      %s81 = ssub.s32 %s17, %s24
      %p82 = scmp.eq.s32.totalorder %s81, 0
      %s84 = sadd.s32 %s83, 1
      %s85 = scalar_select %p82, %s83, %s84
      %p88 = pneg %p82
      %p89 = scmp.eq.s32.totalorder %s9, 1
      %p90 = por %p88, %p89
      %p91 = scmp.ne.s32.totalorder %s83, %s86
      %p92 = scmp.eq.s32.totalorder %s9, 0
      %p93 = por %p91, %p92
      %p94 = scmp.ne.s32.totalorder %s83, %s86
      %p95 = scmp.eq.s32.totalorder %s14, 1
      %p96 = por %p94, %p95
      %p97 = scmp.ne.s32.totalorder %s86, %s87
      %p98 = scmp.eq.s32.totalorder %s14, 0
      %p99 = por %p97, %p98
      %p100 = scmp.ne.s32.totalorder %s86, %s87
      %p101 = scmp.eq.s32.totalorder %s15, 1
      %p102 = por %p100, %p101
      %p104 = scmp.ne.s32.totalorder %s87, %s103
      %p105 = scmp.eq.s32.totalorder %s15, 0
      %p106 = por %p104, %p105
      %s107 = ssub.s32 %s16, %s28
      %s108 = ssub.s32 %s17, %s24
      %s109 = sor.u32 %s107, %s108
      %p110 = scmp.eq.s32.totalorder %s109, 0
      %s112 = sadd.s32 %s111, 1
      %s113 = scalar_select %p110, %s111, %s112
      %p116 = pneg %p110
      %p117 = scmp.eq.s32.totalorder %s9, 1
      %p118 = por %p116, %p117
      %p119 = scmp.ne.s32.totalorder %s111, %s114
      %p120 = scmp.eq.s32.totalorder %s9, 0
      %p121 = por %p119, %p120
      %p122 = scmp.ne.s32.totalorder %s111, %s114
      %p123 = scmp.eq.s32.totalorder %s14, 1
      %p124 = por %p122, %p123
      %p125 = scmp.ne.s32.totalorder %s114, %s115
      %p126 = scmp.eq.s32.totalorder %s14, 0
      %p127 = por %p125, %p126
      %p128 = scmp.ne.s32.totalorder %s114, %s115
      %p129 = scmp.eq.s32.totalorder %s15, 1
      %p130 = por %p128, %p129
      %p132 = scmp.ne.s32.totalorder %s115, %s131
      %p133 = scmp.eq.s32.totalorder %s15, 0
      %p134 = por %p132, %p133
      %p135 = scmp.le.s32.totalorder 1, %s9
      %p136 = scmp.lt.s32.totalorder %s9, 3
      %p137 = pnand %p135, %p136
      %p138 = pneg %p137
      // Predicated region
      $region9: #{forward.22} parent=5 // pred_check
        _
      $region10: #{forward.22} parent=5 // pred_check_branch
        %140 = sbr.rel (%p137) target = $region12
      $region11: #{forward.22} parent=5 // pred_region
        %s141 = ssub.s32 %s9, 1
        // Predicated region
        $region13: #{forward.22} parent=11 // pred_check
          %p142 = pneg %p47
        $region14: #{forward.22} parent=11 // pred_check_branch
          %144 = sbr.rel (%p142) target = $region16
        $region15: #{forward.22} parent=11 // pred_region
          %s145 = smul.u32 31, %s18
          %p146 = scmp.lt.s32.totalorder %s145, 30
          %s147 = scalar_select %p146, %s145, 30
          %s148 = smul.addr %s147, 4
          %s149 = scalar_lea.vmem %s0, %s148
          %s150 = smul.u32 31, %s18
        $region16: #{forward.22} parent=11 // pred_fallthru
          _
      $region12: #{forward.22} parent=5 // pred_fallthru
        _
      %p151 = scmp.lt.s32.totalorder %s9, 2
      // Predicated region
      $region17: #{forward.22} parent=5 // pred_check
        %p152 = pneg %p151
      $region18: #{forward.22} parent=5 // pred_check_branch
        %154 = sbr.rel (%p152) target = $region20
      $region19: #{forward.22} parent=5 // pred_region
        // Predicated region
        $region21: #{forward.22} parent=19 // pred_check
          %p155 = pneg %p67
        $region22: #{forward.22} parent=19 // pred_check_branch
          %157 = sbr.rel (%p155) target = $region24
        $region23: #{forward.22} parent=19 // pred_region
          %s158 = sand.u32 %s57, 1
          %s159 = sand.u32 %s57, 1
          %s160 = smul.addr %s159, 64
          %s161 = scalar_lea.vmem [#allocation2], %s160
          %s162 = smul.u32 2, %s17
          %s163 = smul.addr %s162, 4
          %s164 = scalar_lea.vmem %s1, %s163
          // Predicated region
          $region25: #{forward.22} parent=23 // pred_check
            _
          $region26: #{forward.22} parent=23 // pred_check_branch
            %166 = sbr.rel (0) target = $region28
          $region27: #{forward.22} parent=23 // pred_region
            // Predicated region
            $region29: #{forward.22} parent=27 // pred_check
              _
            $region30: #{forward.22} parent=27 // pred_check_branch
              %168 = sbr.rel (0) target = $region32
            $region31: #{forward.22} parent=27 // pred_region
              // Predicated region
              $region44: #{forward.22} parent=31 // pred_check
                _
              $region45: #{forward.22} parent=31 // pred_check_branch
                %197 = sbr.rel (0) target = $region47
              $region46: #{forward.22} parent=31 // pred_region
                loop: start=0, step=1, limit=1
                $region48: #{forward.22} parent=46 // loop_pre_header
                  _
                $region49: #{forward.22} parent=46 // loop_header
                  %s199 = sphi 0, %s203
                  %p200 = scmp.ge.s32.totalorder %s199, 1
                  %s204 = sphi %s164, %s164
                  %s205 = sphi %s161, %s161
                $region50: #{forward.22} parent=46 // loop_header_branch
                  %202 = sbr.rel (%p200) target = $region54
                $region51: #{forward.22} parent=46 // loop_body
                  %v206 = vld [vmem:[%s204] sm:$0xff]
                  %207 = vst [vmem:[%s205] sm:$0xff] %v206
                  %v208 = vld [vmem:[%s204 + $0x10] sm:$0xff]
                  %209 = vst [vmem:[%s205 + $0x8] sm:$0xff] %v208
                  %v210 = vld [vmem:[%s204 + $0x20] sm:$0xff]
                  %211 = vst [vmem:[%s205 + $0x10] sm:$0xff] %v210
                  %v212 = vld [vmem:[%s204 + $0x30] sm:$0xff]
                  %213 = vst [vmem:[%s205 + $0x18] sm:$0xff] %v212
                  %v214 = vld [vmem:[%s204 + $0x40] sm:$0xff]
                  %215 = vst [vmem:[%s205 + $0x20] sm:$0xff] %v214
                  %v216 = vld [vmem:[%s204 + $0x50] sm:$0xff]
                  %217 = vst [vmem:[%s205 + $0x28] sm:$0xff] %v216
                  %v218 = vld [vmem:[%s204 + $0x60] sm:$0xff]
                  %219 = vst [vmem:[%s205 + $0x30] sm:$0xff] %v218
                  %v220 = vld [vmem:[%s204 + $0x70] sm:$0xff]
                  %221 = vst [vmem:[%s205 + $0x38] sm:$0xff] %v220
                $region52: #{forward.22} parent=46 // loop_footer
                  %s203 = sadd.s32 1, %s199
                $region53: #{forward.22} parent=46 // loop_footer_branch
                  %198 = sbr.rel target = $region49
                $region54: #{forward.22} parent=46 // loop_exit
                  _
              $region47: #{forward.22} parent=31 // pred_fallthru
                _
              // Predicated region
              $region55: #{forward.22} parent=31 // pred_check
                _
              $region56: #{forward.22} parent=31 // pred_check_branch
                %223 = sbr.rel target = $region58
              $region57: #{forward.22} parent=31 // pred_region
                _
              $region58: #{forward.22} parent=31 // pred_fallthru
                _
            $region32: #{forward.22} parent=27 // pred_fallthru
              _
            // Predicated region
            $region33: #{forward.22} parent=27 // pred_check
              _
            $region34: #{forward.22} parent=27 // pred_check_branch
              %170 = sbr.rel target = $region36
            $region35: #{forward.22} parent=27 // pred_region
              loop: start=0, step=1, limit=1
              $region37: #{forward.22} parent=35 // loop_pre_header
                _
              $region38: #{forward.22} parent=35 // loop_header
                %s173 = sphi 0, %s177
                %p174 = scmp.ge.s32.totalorder %s173, 1
                %s178 = sphi %s164, %s164
                %s179 = sphi %s161, %s161
              $region39: #{forward.22} parent=35 // loop_header_branch
                %176 = sbr.rel (%p174) target = $region43
              $region40: #{forward.22} parent=35 // loop_body
                %v180 = vld [vmem:[%s178] sm:$0xff]
                %181 = vst [vmem:[%s179] sm:$0xff] %v180
                %v182 = vld [vmem:[%s178 + $0x10] sm:$0xff]
                %183 = vst [vmem:[%s179 + $0x8] sm:$0xff] %v182
                %v184 = vld [vmem:[%s178 + $0x20] sm:$0xff]
                %185 = vst [vmem:[%s179 + $0x10] sm:$0xff] %v184
                %v186 = vld [vmem:[%s178 + $0x30] sm:$0xff]
                %187 = vst [vmem:[%s179 + $0x18] sm:$0xff] %v186
                %v188 = vld [vmem:[%s178 + $0x40] sm:$0xff]
                %189 = vst [vmem:[%s179 + $0x20] sm:$0xff] %v188
                %v190 = vld [vmem:[%s178 + $0x50] sm:$0xff]
                %191 = vst [vmem:[%s179 + $0x28] sm:$0xff] %v190
                %v192 = vld [vmem:[%s178 + $0x60] sm:$0xff]
                %193 = vst [vmem:[%s179 + $0x30] sm:$0xff] %v192
                %v194 = vld [vmem:[%s178 + $0x70] sm:$0xff]
                %195 = vst [vmem:[%s179 + $0x38] sm:$0xff] %v194
              $region41: #{forward.22} parent=35 // loop_footer
                %s177 = sadd.s32 1, %s173
              $region42: #{forward.22} parent=35 // loop_footer_branch
                %172 = sbr.rel target = $region38
              $region43: #{forward.22} parent=35 // loop_exit
                _
            $region36: #{forward.22} parent=27 // pred_fallthru
              _
          $region28: #{forward.22} parent=23 // pred_fallthru
            _
          %224 = vnop
        $region24: #{forward.22} parent=19 // pred_fallthru
          _
        // Predicated region
        $region59: #{forward.22} parent=19 // pred_check
          %p225 = pneg %p93
        $region60: #{forward.22} parent=19 // pred_check_branch
          %227 = sbr.rel (%p225) target = $region62
        $region61: #{forward.22} parent=19 // pred_region
          %s228 = smul.u32 2, %s17
          %p229 = scmp.lt.s32.totalorder %s228, 3
          %s230 = scalar_select %p229, %s228, 3
          %s231 = scalar_lea.vmem %s2, %s230
          %s232 = smul.u32 2, %s17
        $region62: #{forward.22} parent=19 // pred_fallthru
          _
      $region20: #{forward.22} parent=5 // pred_fallthru
        _
      %p233 = scmp.le.s32.totalorder 1, %s9
      %p234 = scmp.lt.s32.totalorder %s9, 3
      %p235 = pnand %p233, %p234
      %p236 = pneg %p235
      // Predicated region
      $region63: #{forward.22} parent=5 // pred_check
        _
      $region64: #{forward.22} parent=5 // pred_check_branch
        %238 = sbr.rel (%p235) target = $region66
      $region65: #{forward.22} parent=5 // pred_region
        %s239 = ssub.s32 %s9, 1
        %s240 = sand.u32 %s60, 1
        %s241 = sand.u32 %s60, 1
        %s242 = smul.addr %s241, 64
        %s243 = scalar_lea.vmem [#allocation2], %s242
        // Predicated region
        $region67: #{forward.22} parent=65 // pred_check
          %p244 = pneg %p73
        $region68: #{forward.22} parent=65 // pred_check_branch
          %246 = sbr.rel (%p244) target = $region70
        $region69: #{forward.22} parent=65 // pred_region
          _
        $region70: #{forward.22} parent=65 // pred_fallthru
          _
        %s247 = smul.u32 31, %s18
        %p248 = scmp.lt.s32.totalorder %s247, 30
        %s249 = scalar_select %p248, %s247, 30
        %s250 = smul.addr %s249, 4
        %s251 = scalar_lea.vmem %s0, %s250
        %p252 = pneg %p47
        %p253 = pneg %p44
        %s254 = sand.u32 %s60, 1
        %s255 = sand.u32 %s60, 1
        %s256 = smul.addr %s255, 64
        %s257 = scalar_lea.vmem [#allocation2], %s256
        %p258 = pneg %p73
        %p259 = pneg %p70
        %s260 = smul.u32 2, %s19
        %p261 = scmp.lt.s32.totalorder %s260, 3
        %s262 = scalar_select %p261, %s260, 3
        %s263 = scalar_lea.vmem %s2, %s262
        %p264 = pneg %p99
        %p265 = pneg %p96
        %p266 = pneg %p127
        %p267 = pneg %p124
        %s268 = sand.u32 %s114, 1
        %s269 = sand.u32 %s114, 1
        %s270 = smul.addr %s269, 496
        %s271 = scalar_lea.vmem [#allocation3], %s270
        %s272 = smul.u32 31, %s18
        %p273 = scmp.lt.s32.totalorder %s272, 30
        %s274 = scalar_select %p273, %s272, 30
        %s275 = smul.addr %s274, 4
        %s276 = scalar_lea.vmem %s0, %s275
        %s277 = smul.u32 31, %s18
        %s278 = smul.u32 2, %s19
        %s279 = smul.u32 2, %s19
        %p280 = scmp.lt.s32.totalorder %s279, 3
        %s281 = scalar_select %p280, %s279, 3
        %s282 = scalar_lea.vmem %s2, %s281
        %s283 = smul.u32 2, %s19
        %s284 = smul.u32 31, %s18
        %s285 = smul.u32 2, %s19
        %v287 = vld [vmem:[%s276] sm:$0xf]
        %v288 = vld [vmem:[%s276 + $0x4] sm:$0xf]
        %v289 = vld [vmem:[%s276 + $0x8] sm:$0xf]
        %v290 = vld [vmem:[%s276 + $0xc] sm:$0xf]
        %v291 = vld [vmem:[%s276 + $0x10] sm:$0xf]
        %v292 = vld [vmem:[%s276 + $0x14] sm:$0xf]
        %v293 = vld [vmem:[%s276 + $0x18] sm:$0xf]
        %v294 = vld [vmem:[%s276 + $0x1c] sm:$0xf]
        %v295 = vld [vmem:[%s276 + $0x20] sm:$0xf]
        %v296 = vld [vmem:[%s276 + $0x24] sm:$0xf]
        %v297 = vld [vmem:[%s276 + $0x28] sm:$0xf]
        %v298 = vld [vmem:[%s276 + $0x2c] sm:$0xf]
        %v299 = vld [vmem:[%s276 + $0x30] sm:$0xf]
        %v300 = vld [vmem:[%s276 + $0x34] sm:$0xf]
        %v301 = vld [vmem:[%s276 + $0x38] sm:$0xf]
        %v302 = vld [vmem:[%s276 + $0x3c] sm:$0xf]
        %v303 = vld [vmem:[%s276 + $0x40] sm:$0xf]
        %v304 = vld [vmem:[%s276 + $0x44] sm:$0xf]
        %v305 = vld [vmem:[%s276 + $0x48] sm:$0xf]
        %v306 = vld [vmem:[%s276 + $0x4c] sm:$0xf]
        %v307 = vld [vmem:[%s276 + $0x50] sm:$0xf]
        %v308 = vld [vmem:[%s276 + $0x54] sm:$0xf]
        %v309 = vld [vmem:[%s276 + $0x58] sm:$0xf]
        %v310 = vld [vmem:[%s276 + $0x5c] sm:$0xf]
        %v311 = vld [vmem:[%s276 + $0x60] sm:$0xf]
        %v312 = vld [vmem:[%s276 + $0x64] sm:$0xf]
        %v313 = vld [vmem:[%s276 + $0x68] sm:$0xf]
        %v314 = vld [vmem:[%s276 + $0x6c] sm:$0xf]
        %v315 = vld [vmem:[%s276 + $0x70] sm:$0xf]
        %v316 = vld [vmem:[%s276 + $0x74] sm:$0xf]
        %v317 = vld [vmem:[%s276 + $0x78] sm:$0xf]
        %v318 = vld [vmem:[%s243] sm:$0xff]
        %v319 = vld [vmem:[%s243 + $0x8] sm:$0xff]
        %v320 = vld [vmem:[%s243 + $0x10] sm:$0xff]
        %v321 = vld [vmem:[%s243 + $0x18] sm:$0xff]
        %v322 = vld [vmem:[%s243 + $0x20] sm:$0xff]
        %v323 = vld [vmem:[%s243 + $0x28] sm:$0xff]
        %v324 = vld [vmem:[%s243 + $0x30] sm:$0xff]
        %v325 = vld [vmem:[%s243 + $0x38] sm:$0xff]
        %v326 = vld [vmem:[%s282] sm:$0x3]
        %v328 = vlaneseq
        %v329 = vshrl.u32 %v328, 7
        %v330 = vsub.s32 0, %v329
        %v331 = vrot.slane %v326, %v330
        %v332 = vlaneseq
        %v333 = vshrl.u32 %v332, 7
        %v334 = vsub.s32 1, %v333
        %v335 = vrot.slane %v326, %v334
        %v369 = vunpack.c.l.b16 %v287
        %v370 = vunpack.c.l.b16 %v288
        %v371 = vunpack.c.l.b16 %v289
        %v372 = vunpack.c.l.b16 %v290
        %v373 = vunpack.c.l.b16 %v291
        %v374 = vunpack.c.l.b16 %v292
        %v375 = vunpack.c.l.b16 %v293
        %v376 = vunpack.c.l.b16 %v294
        %v377 = vunpack.c.l.b16 %v295
        %v378 = vunpack.c.l.b16 %v296
        %v379 = vunpack.c.l.b16 %v297
        %v380 = vunpack.c.l.b16 %v298
        %v381 = vunpack.c.l.b16 %v299
        %v382 = vunpack.c.l.b16 %v300
        %v383 = vunpack.c.l.b16 %v301
        %v384 = vunpack.c.l.b16 %v302
        %v385 = vunpack.c.l.b16 %v303
        %v386 = vunpack.c.l.b16 %v304
        %v387 = vunpack.c.l.b16 %v305
        %v388 = vunpack.c.l.b16 %v306
        %v389 = vunpack.c.l.b16 %v307
        %v390 = vunpack.c.l.b16 %v308
        %v391 = vunpack.c.l.b16 %v309
        %v392 = vunpack.c.l.b16 %v310
        %v393 = vunpack.c.l.b16 %v311
        %v394 = vunpack.c.l.b16 %v312
        %v395 = vunpack.c.l.b16 %v313
        %v396 = vunpack.c.l.b16 %v314
        %v397 = vunpack.c.l.b16 %v315
        %v398 = vunpack.c.l.b16 %v316
        %v399 = vunpack.c.l.b16 %v317
        %v400 = vpack.c.b16 %v370, %v369
        %v401 = vpack.c.b16 %v372, %v371
        %v402 = vpack.c.b16 %v374, %v373
        %v403 = vpack.c.b16 %v376, %v375
        %v404 = vpack.c.b16 %v378, %v377
        %v405 = vpack.c.b16 %v380, %v379
        %v406 = vpack.c.b16 %v382, %v381
        %v407 = vpack.c.b16 %v384, %v383
        %v408 = vpack.c.b16 %v386, %v385
        %v409 = vpack.c.b16 %v388, %v387
        %v410 = vpack.c.b16 %v390, %v389
        %v411 = vpack.c.b16 %v392, %v391
        %v412 = vpack.c.b16 %v394, %v393
        %v413 = vpack.c.b16 %v396, %v395
        %v414 = vpack.c.b16 %v398, %v397
        %v415 = vpack.c.b16 %v399, %v399
        %v424 = vunpack.c.l.b16 %v318
        %v425 = vunpack.c.h.b16 %v318
        %v426 = vunpack.c.l.b16 %v319
        %v427 = vunpack.c.h.b16 %v319
        %v428 = vunpack.c.l.b16 %v320
        %v429 = vunpack.c.h.b16 %v320
        %v430 = vunpack.c.l.b16 %v321
        %v431 = vunpack.c.h.b16 %v321
        %v432 = vunpack.c.l.b16 %v322
        %v433 = vunpack.c.h.b16 %v322
        %v434 = vunpack.c.l.b16 %v323
        %v435 = vunpack.c.h.b16 %v323
        %v436 = vunpack.c.l.b16 %v324
        %v437 = vunpack.c.h.b16 %v324
        %v438 = vunpack.c.l.b16 %v325
        %v439 = vunpack.c.h.b16 %v325
        %v440 = vpack.c.b16 %v426, %v424
        %v441 = vpack.c.b16 %v427, %v425
        %v442 = vpack.c.b16 %v430, %v428
        %v443 = vpack.c.b16 %v431, %v429
        %v444 = vpack.c.b16 %v434, %v432
        %v445 = vpack.c.b16 %v435, %v433
        %v446 = vpack.c.b16 %v438, %v436
        %v447 = vpack.c.b16 %v439, %v437
        %vm456 = vcmask 523264
        %v458 = vsel %vm456, %v400, 0
        %v461 = vsel %vm456, %v401, 0
        %v464 = vsel %vm456, %v402, 0
        %v467 = vsel %vm456, %v403, 0
        %v470 = vsel %vm456, %v404, 0
        %v473 = vsel %vm456, %v405, 0
        %v476 = vsel %vm456, %v406, 0
        %v479 = vsel %vm456, %v407, 0
        %v482 = vsel %vm456, %v408, 0
        %v485 = vsel %vm456, %v409, 0
        %v488 = vsel %vm456, %v410, 0
        %v491 = vsel %vm456, %v411, 0
        %v494 = vsel %vm456, %v412, 0
        %v497 = vsel %vm456, %v413, 0
        %v500 = vsel %vm456, %v414, 0
        %v503 = vsel %vm456, %v415, 0
        %505 = vmatprep.subr.bf16.mxu0 %v441
        %506 = vmatpush1.bf16.msra.mxu0 %v440
        %507 = vmatprep.subr.bf16.mxu0 %v443
        %508 = vmatpush1.bf16.msra.mxu0 %v442
        %509 = vmatprep.subr.bf16.mxu0 %v445
        %510 = vmatpush1.bf16.msra.mxu0 %v444
        %511 = vmatprep.subr.bf16.mxu0 %v447
        %512 = vmatpush1.bf16.msra.mxu0 %v446
        %513 = vmatprep.subr.bf16.mxu0 0
        %514 = vmatpush1.bf16.msra.mxu0 0
        %515 = vmatprep.subr.bf16.mxu0 0
        %516 = vmatpush1.bf16.msra.mxu0 0
        %517 = vmatprep.subr.bf16.mxu0 0
        %518 = vmatpush1.bf16.msra.mxu0 0
        %519 = vmatprep.subr.bf16.mxu0 0
        %520 = vmatpush1.bf16.msra.mxu0 0
        %521 = vmatprep.subr.bf16.mxu0 0
        %522 = vmatpush1.bf16.msra.mxu0 0
        %523 = vmatprep.subr.bf16.mxu0 0
        %524 = vmatpush1.bf16.msra.mxu0 0
        %525 = vmatprep.subr.bf16.mxu0 0
        %526 = vmatpush1.bf16.msra.mxu0 0
        %527 = vmatprep.subr.bf16.mxu0 0
        %528 = vmatpush1.bf16.msra.mxu0 0
        %529 = vmatprep.subr.bf16.mxu0 0
        %530 = vmatpush1.bf16.msra.mxu0 0
        %531 = vmatprep.subr.bf16.mxu0 0
        %532 = vmatpush1.bf16.msra.mxu0 0
        %533 = vmatprep.subr.bf16.mxu0 0
        %534 = vmatpush1.bf16.msra.mxu0 0
        %535 = vmatprep.subr.bf16.mxu0 0
        %536 = vmatpush1.bf16.msra.mxu0 0
        %537 = vmatprep.mubr.bf16.mxu0 0
        %538 = vmatmul.mubr.bf16.gmra.mrb[0].mxu0 %v458
        %v539 = vpop.f32.mrb[0].mxu0
        %v540 = vadd.f32 %v331, %v539
        %v541 = vpop.f32.mrb[0].mxu0
        %v542 = vadd.f32 %v335, %v541
        %v543 = vpop.f32.mrb[0].mxu0
        %v544 = vadd.f32 %v331, %v543
        %v545 = vpop.f32.mrb[0].mxu0
        %v546 = vadd.f32 %v335, %v545
        %547 = vmatprep.mubr.bf16.mxu0 0
        %548 = vmatmul.mubr.bf16.gmra.mrb[0].mxu0 %v461
        %v549 = vpop.f32.mrb[0].mxu0
        %v550 = vadd.f32 %v331, %v549
        %v551 = vpop.f32.mrb[0].mxu0
        %v552 = vadd.f32 %v335, %v551
        %v553 = vpop.f32.mrb[0].mxu0
        %v554 = vadd.f32 %v331, %v553
        %v555 = vpop.f32.mrb[0].mxu0
        %v556 = vadd.f32 %v335, %v555
        %557 = vmatprep.mubr.bf16.mxu0 0
        %558 = vmatmul.mubr.bf16.gmra.mrb[0].mxu0 %v464
        %v559 = vpop.f32.mrb[0].mxu0
        %v560 = vadd.f32 %v331, %v559
        %v561 = vpop.f32.mrb[0].mxu0
        %v562 = vadd.f32 %v335, %v561
        %v563 = vpop.f32.mrb[0].mxu0
        %v564 = vadd.f32 %v331, %v563
        %v565 = vpop.f32.mrb[0].mxu0
        %v566 = vadd.f32 %v335, %v565
        %567 = vmatprep.mubr.bf16.mxu0 0
        %568 = vmatmul.mubr.bf16.gmra.mrb[0].mxu0 %v467
        %v569 = vpop.f32.mrb[0].mxu0
        %v570 = vadd.f32 %v331, %v569
        %v571 = vpop.f32.mrb[0].mxu0
        %v572 = vadd.f32 %v335, %v571
        %v573 = vpop.f32.mrb[0].mxu0
        %v574 = vadd.f32 %v331, %v573
        %v575 = vpop.f32.mrb[0].mxu0
        %v576 = vadd.f32 %v335, %v575
        %577 = vmatprep.mubr.bf16.mxu0 0
        %578 = vmatmul.mubr.bf16.gmra.mrb[0].mxu0 %v470
        %v579 = vpop.f32.mrb[0].mxu0
        %v580 = vadd.f32 %v331, %v579
        %v581 = vpop.f32.mrb[0].mxu0
        %v582 = vadd.f32 %v335, %v581
        %v583 = vpop.f32.mrb[0].mxu0
        %v584 = vadd.f32 %v331, %v583
        %v585 = vpop.f32.mrb[0].mxu0
        %v586 = vadd.f32 %v335, %v585
        %587 = vmatprep.mubr.bf16.mxu0 0
        %588 = vmatmul.mubr.bf16.gmra.mrb[0].mxu0 %v473
        %v589 = vpop.f32.mrb[0].mxu0
        %v590 = vadd.f32 %v331, %v589
        %v591 = vpop.f32.mrb[0].mxu0
        %v592 = vadd.f32 %v335, %v591
        %v593 = vpop.f32.mrb[0].mxu0
        %v594 = vadd.f32 %v331, %v593
        %v595 = vpop.f32.mrb[0].mxu0
        %v596 = vadd.f32 %v335, %v595
        %597 = vmatprep.mubr.bf16.mxu0 0
        %598 = vmatmul.mubr.bf16.gmra.mrb[0].mxu0 %v476
        %v599 = vpop.f32.mrb[0].mxu0
        %v600 = vadd.f32 %v331, %v599
        %v601 = vpop.f32.mrb[0].mxu0
        %v602 = vadd.f32 %v335, %v601
        %v603 = vpop.f32.mrb[0].mxu0
        %v604 = vadd.f32 %v331, %v603
        %v605 = vpop.f32.mrb[0].mxu0
        %v606 = vadd.f32 %v335, %v605
        %607 = vmatprep.mubr.bf16.mxu0 0
        %608 = vmatmul.mubr.bf16.gmra.mrb[0].mxu0 %v479
        %v609 = vpop.f32.mrb[0].mxu0
        %v610 = vadd.f32 %v331, %v609
        %v611 = vpop.f32.mrb[0].mxu0
        %v612 = vadd.f32 %v335, %v611
        %v613 = vpop.f32.mrb[0].mxu0
        %v614 = vadd.f32 %v331, %v613
        %v615 = vpop.f32.mrb[0].mxu0
        %v616 = vadd.f32 %v335, %v615
        %617 = vmatprep.mubr.bf16.mxu0 0
        %618 = vmatmul.mubr.bf16.gmra.mrb[0].mxu0 %v482
        %v619 = vpop.f32.mrb[0].mxu0
        %v620 = vadd.f32 %v331, %v619
        %v621 = vpop.f32.mrb[0].mxu0
        %v622 = vadd.f32 %v335, %v621
        %v623 = vpop.f32.mrb[0].mxu0
        %v624 = vadd.f32 %v331, %v623
        %v625 = vpop.f32.mrb[0].mxu0
        %v626 = vadd.f32 %v335, %v625
        %627 = vmatprep.mubr.bf16.mxu0 0
        %628 = vmatmul.mubr.bf16.gmra.mrb[0].mxu0 %v485
        %v629 = vpop.f32.mrb[0].mxu0
        %v630 = vadd.f32 %v331, %v629
        %v631 = vpop.f32.mrb[0].mxu0
        %v632 = vadd.f32 %v335, %v631
        %v633 = vpop.f32.mrb[0].mxu0
        %v634 = vadd.f32 %v331, %v633
        %v635 = vpop.f32.mrb[0].mxu0
        %v636 = vadd.f32 %v335, %v635
        %637 = vmatprep.mubr.bf16.mxu0 0
        %638 = vmatmul.mubr.bf16.gmra.mrb[0].mxu0 %v488
        %v639 = vpop.f32.mrb[0].mxu0
        %v640 = vadd.f32 %v331, %v639
        %v641 = vpop.f32.mrb[0].mxu0
        %v642 = vadd.f32 %v335, %v641
        %v643 = vpop.f32.mrb[0].mxu0
        %v644 = vadd.f32 %v331, %v643
        %v645 = vpop.f32.mrb[0].mxu0
        %v646 = vadd.f32 %v335, %v645
        %647 = vmatprep.mubr.bf16.mxu0 0
        %648 = vmatmul.mubr.bf16.gmra.mrb[0].mxu0 %v491
        %v649 = vpop.f32.mrb[0].mxu0
        %v650 = vadd.f32 %v331, %v649
        %v651 = vpop.f32.mrb[0].mxu0
        %v652 = vadd.f32 %v335, %v651
        %v653 = vpop.f32.mrb[0].mxu0
        %v654 = vadd.f32 %v331, %v653
        %v655 = vpop.f32.mrb[0].mxu0
        %v656 = vadd.f32 %v335, %v655
        %657 = vmatprep.mubr.bf16.mxu0 0
        %658 = vmatmul.mubr.bf16.gmra.mrb[0].mxu0 %v494
        %v659 = vpop.f32.mrb[0].mxu0
        %v660 = vadd.f32 %v331, %v659
        %v661 = vpop.f32.mrb[0].mxu0
        %v662 = vadd.f32 %v335, %v661
        %v663 = vpop.f32.mrb[0].mxu0
        %v664 = vadd.f32 %v331, %v663
        %v665 = vpop.f32.mrb[0].mxu0
        %v666 = vadd.f32 %v335, %v665
        %667 = vmatprep.mubr.bf16.mxu0 0
        %668 = vmatmul.mubr.bf16.gmra.mrb[0].mxu0 %v497
        %v669 = vpop.f32.mrb[0].mxu0
        %v670 = vadd.f32 %v331, %v669
        %v671 = vpop.f32.mrb[0].mxu0
        %v672 = vadd.f32 %v335, %v671
        %v673 = vpop.f32.mrb[0].mxu0
        %v674 = vadd.f32 %v331, %v673
        %v675 = vpop.f32.mrb[0].mxu0
        %v676 = vadd.f32 %v335, %v675
        %677 = vmatprep.mubr.bf16.mxu0 0
        %678 = vmatmul.mubr.bf16.gmra.mrb[0].mxu0 %v500
        %v679 = vpop.f32.mrb[0].mxu0
        %v680 = vadd.f32 %v331, %v679
        %v681 = vpop.f32.mrb[0].mxu0
        %v682 = vadd.f32 %v335, %v681
        %v683 = vpop.f32.mrb[0].mxu0
        %v684 = vadd.f32 %v331, %v683
        %v685 = vpop.f32.mrb[0].mxu0
        %v686 = vadd.f32 %v335, %v685
        %687 = vmatprep.mubr.bf16.mxu0 0
        %688 = vmatmul.mubr.bf16.gmra.mrb[0].mxu0 %v503
        %v689 = vpop.f32.mrb[0].mxu0
        %v690 = vadd.f32 %v331, %v689
        %v691 = vpop.f32.mrb[0].mxu0
        %v692 = vadd.f32 %v335, %v691
        %v693 = vpop.f32.mrb[0].mxu0
        %v694 = vpop.f32.mrb[0].mxu0
        %695 = vdwg.mxu0
        %696 = vst [vmem:[%s271] sm:$0xff] %v540
        %697 = vst [vmem:[%s271 + $0x8] sm:$0xff] %v542
        %698 = vst [vmem:[%s271 + $0x10] sm:$0xff] %v544
        %699 = vst [vmem:[%s271 + $0x18] sm:$0xff] %v546
        %700 = vst [vmem:[%s271 + $0x20] sm:$0xff] %v550
        %701 = vst [vmem:[%s271 + $0x28] sm:$0xff] %v552
        %702 = vst [vmem:[%s271 + $0x30] sm:$0xff] %v554
        %703 = vst [vmem:[%s271 + $0x38] sm:$0xff] %v556
        %704 = vst [vmem:[%s271 + $0x40] sm:$0xff] %v560
        %705 = vst [vmem:[%s271 + $0x48] sm:$0xff] %v562
        %706 = vst [vmem:[%s271 + $0x50] sm:$0xff] %v564
        %707 = vst [vmem:[%s271 + $0x58] sm:$0xff] %v566
        %708 = vst [vmem:[%s271 + $0x60] sm:$0xff] %v570
        %709 = vst [vmem:[%s271 + $0x68] sm:$0xff] %v572
        %710 = vst [vmem:[%s271 + $0x70] sm:$0xff] %v574
        %711 = vst [vmem:[%s271 + $0x78] sm:$0xff] %v576
        %712 = vst [vmem:[%s271 + $0x80] sm:$0xff] %v580
        %713 = vst [vmem:[%s271 + $0x88] sm:$0xff] %v582
        %714 = vst [vmem:[%s271 + $0x90] sm:$0xff] %v584
        %715 = vst [vmem:[%s271 + $0x98] sm:$0xff] %v586
        %716 = vst [vmem:[%s271 + $0xa0] sm:$0xff] %v590
        %717 = vst [vmem:[%s271 + $0xa8] sm:$0xff] %v592
        %718 = vst [vmem:[%s271 + $0xb0] sm:$0xff] %v594
        %719 = vst [vmem:[%s271 + $0xb8] sm:$0xff] %v596
        %720 = vst [vmem:[%s271 + $0xc0] sm:$0xff] %v600
        %721 = vst [vmem:[%s271 + $0xc8] sm:$0xff] %v602
        %722 = vst [vmem:[%s271 + $0xd0] sm:$0xff] %v604
        %723 = vst [vmem:[%s271 + $0xd8] sm:$0xff] %v606
        %724 = vst [vmem:[%s271 + $0xe0] sm:$0xff] %v610
        %725 = vst [vmem:[%s271 + $0xe8] sm:$0xff] %v612
        %726 = vst [vmem:[%s271 + $0xf0] sm:$0xff] %v614
        %727 = vst [vmem:[%s271 + $0xf8] sm:$0xff] %v616
        %728 = vst [vmem:[%s271 + $0x100] sm:$0xff] %v620
        %729 = vst [vmem:[%s271 + $0x108] sm:$0xff] %v622
        %730 = vst [vmem:[%s271 + $0x110] sm:$0xff] %v624
        %731 = vst [vmem:[%s271 + $0x118] sm:$0xff] %v626
        %732 = vst [vmem:[%s271 + $0x120] sm:$0xff] %v630
        %733 = vst [vmem:[%s271 + $0x128] sm:$0xff] %v632
        %734 = vst [vmem:[%s271 + $0x130] sm:$0xff] %v634
        %735 = vst [vmem:[%s271 + $0x138] sm:$0xff] %v636
        %736 = vst [vmem:[%s271 + $0x140] sm:$0xff] %v640
        %737 = vst [vmem:[%s271 + $0x148] sm:$0xff] %v642
        %738 = vst [vmem:[%s271 + $0x150] sm:$0xff] %v644
        %739 = vst [vmem:[%s271 + $0x158] sm:$0xff] %v646
        %740 = vst [vmem:[%s271 + $0x160] sm:$0xff] %v650
        %741 = vst [vmem:[%s271 + $0x168] sm:$0xff] %v652
        %742 = vst [vmem:[%s271 + $0x170] sm:$0xff] %v654
        %743 = vst [vmem:[%s271 + $0x178] sm:$0xff] %v656
        %744 = vst [vmem:[%s271 + $0x180] sm:$0xff] %v660
        %745 = vst [vmem:[%s271 + $0x188] sm:$0xff] %v662
        %746 = vst [vmem:[%s271 + $0x190] sm:$0xff] %v664
        %747 = vst [vmem:[%s271 + $0x198] sm:$0xff] %v666
        %748 = vst [vmem:[%s271 + $0x1a0] sm:$0xff] %v670
        %749 = vst [vmem:[%s271 + $0x1a8] sm:$0xff] %v672
        %750 = vst [vmem:[%s271 + $0x1b0] sm:$0xff] %v674
        %751 = vst [vmem:[%s271 + $0x1b8] sm:$0xff] %v676
        %752 = vst [vmem:[%s271 + $0x1c0] sm:$0xff] %v680
        %753 = vst [vmem:[%s271 + $0x1c8] sm:$0xff] %v682
        %754 = vst [vmem:[%s271 + $0x1d0] sm:$0xff] %v684
        %755 = vst [vmem:[%s271 + $0x1d8] sm:$0xff] %v686
        %756 = vst [vmem:[%s271 + $0x1e0] sm:$0xff] %v690
        %757 = vst [vmem:[%s271 + $0x1e8] sm:$0xff] %v692
        %s758 = sand.u32 %s114, 1
        %s759 = sand.u32 %s114, 1
        %s760 = smul.addr %s759, 496
        %s761 = scalar_lea.vmem [#allocation3], %s760
        // Predicated region
        $region71: #{forward.22} parent=65 // pred_check
          %p762 = pneg %p124
        $region72: #{forward.22} parent=65 // pred_check_branch
          %764 = sbr.rel (%p762) target = $region74
        $region73: #{forward.22} parent=65 // pred_region
          %s765 = smul.u32 31, %s18
          %s766 = smul.u32 2, %s19
          %s767 = smul.addr %s765, 4
          %s768 = sadd.s32 %s766, %s767
          %s769 = smul.addr %s768, 8
          %s770 = scalar_lea.vmem %s3, %s769
          // Predicated region
          $region75: #{forward.22} parent=73 // pred_check
            _
          $region76: #{forward.22} parent=73 // pred_check_branch
            %772 = sbr.rel (0) target = $region78
          $region77: #{forward.22} parent=73 // pred_region
            // Predicated region
            $region79: #{forward.22} parent=77 // pred_check
              _
            $region80: #{forward.22} parent=77 // pred_check_branch
              %774 = sbr.rel (0) target = $region82
            $region81: #{forward.22} parent=77 // pred_region
              loop: start=0, step=1, limit=1
              $region83: #{forward.22} parent=81 // loop_pre_header
                _
              $region84: #{forward.22} parent=81 // loop_header
                %s776 = sphi 0, %s780
                %p777 = scmp.ge.s32.totalorder %s776, 1
                %s781 = sphi %s761, %s761
                %s782 = sphi %s770, %s770
              $region85: #{forward.22} parent=81 // loop_header_branch
                %779 = sbr.rel (%p777) target = $region89
              $region86: #{forward.22} parent=81 // loop_body
                %v783 = vld [vmem:[%s781] sm:$0xff]
                %784 = vst [vmem:[%s782] sm:$0xff] %v783
                %v785 = vld [vmem:[%s781 + $0x8] sm:$0xff]
                %786 = vst [vmem:[%s782 + $0x8] sm:$0xff] %v785
                %v787 = vld [vmem:[%s781 + $0x10] sm:$0xff]
                %788 = vst [vmem:[%s782 + $0x20] sm:$0xff] %v787
                %v789 = vld [vmem:[%s781 + $0x18] sm:$0xff]
                %790 = vst [vmem:[%s782 + $0x28] sm:$0xff] %v789
                %v791 = vld [vmem:[%s781 + $0x20] sm:$0xff]
                %792 = vst [vmem:[%s782 + $0x40] sm:$0xff] %v791
                %v793 = vld [vmem:[%s781 + $0x28] sm:$0xff]
                %794 = vst [vmem:[%s782 + $0x48] sm:$0xff] %v793
                %v795 = vld [vmem:[%s781 + $0x30] sm:$0xff]
                %796 = vst [vmem:[%s782 + $0x60] sm:$0xff] %v795
                %v797 = vld [vmem:[%s781 + $0x38] sm:$0xff]
                %798 = vst [vmem:[%s782 + $0x68] sm:$0xff] %v797
                %v799 = vld [vmem:[%s781 + $0x40] sm:$0xff]
                %800 = vst [vmem:[%s782 + $0x80] sm:$0xff] %v799
                %v801 = vld [vmem:[%s781 + $0x48] sm:$0xff]
                %802 = vst [vmem:[%s782 + $0x88] sm:$0xff] %v801
                %v803 = vld [vmem:[%s781 + $0x50] sm:$0xff]
                %804 = vst [vmem:[%s782 + $0xa0] sm:$0xff] %v803
                %v805 = vld [vmem:[%s781 + $0x58] sm:$0xff]
                %806 = vst [vmem:[%s782 + $0xa8] sm:$0xff] %v805
                %v807 = vld [vmem:[%s781 + $0x60] sm:$0xff]
                %808 = vst [vmem:[%s782 + $0xc0] sm:$0xff] %v807
                %v809 = vld [vmem:[%s781 + $0x68] sm:$0xff]
                %810 = vst [vmem:[%s782 + $0xc8] sm:$0xff] %v809
                %v811 = vld [vmem:[%s781 + $0x70] sm:$0xff]
                %812 = vst [vmem:[%s782 + $0xe0] sm:$0xff] %v811
                %v813 = vld [vmem:[%s781 + $0x78] sm:$0xff]
                %814 = vst [vmem:[%s782 + $0xe8] sm:$0xff] %v813
                %v815 = vld [vmem:[%s781 + $0x80] sm:$0xff]
                %816 = vst [vmem:[%s782 + $0x100] sm:$0xff] %v815
                %v817 = vld [vmem:[%s781 + $0x88] sm:$0xff]
                %818 = vst [vmem:[%s782 + $0x108] sm:$0xff] %v817
                %v819 = vld [vmem:[%s781 + $0x90] sm:$0xff]
                %820 = vst [vmem:[%s782 + $0x120] sm:$0xff] %v819
                %v821 = vld [vmem:[%s781 + $0x98] sm:$0xff]
                %822 = vst [vmem:[%s782 + $0x128] sm:$0xff] %v821
                %v823 = vld [vmem:[%s781 + $0xa0] sm:$0xff]
                %824 = vst [vmem:[%s782 + $0x140] sm:$0xff] %v823
                %v825 = vld [vmem:[%s781 + $0xa8] sm:$0xff]
                %826 = vst [vmem:[%s782 + $0x148] sm:$0xff] %v825
                %v827 = vld [vmem:[%s781 + $0xb0] sm:$0xff]
                %828 = vst [vmem:[%s782 + $0x160] sm:$0xff] %v827
                %v829 = vld [vmem:[%s781 + $0xb8] sm:$0xff]
                %830 = vst [vmem:[%s782 + $0x168] sm:$0xff] %v829
                %v831 = vld [vmem:[%s781 + $0xc0] sm:$0xff]
                %832 = vst [vmem:[%s782 + $0x180] sm:$0xff] %v831
                %v833 = vld [vmem:[%s781 + $0xc8] sm:$0xff]
                %834 = vst [vmem:[%s782 + $0x188] sm:$0xff] %v833
                %v835 = vld [vmem:[%s781 + $0xd0] sm:$0xff]
                %836 = vst [vmem:[%s782 + $0x1a0] sm:$0xff] %v835
                %v837 = vld [vmem:[%s781 + $0xd8] sm:$0xff]
                %838 = vst [vmem:[%s782 + $0x1a8] sm:$0xff] %v837
                %v839 = vld [vmem:[%s781 + $0xe0] sm:$0xff]
                %840 = vst [vmem:[%s782 + $0x1c0] sm:$0xff] %v839
                %v841 = vld [vmem:[%s781 + $0xe8] sm:$0xff]
                %842 = vst [vmem:[%s782 + $0x1c8] sm:$0xff] %v841
                %v843 = vld [vmem:[%s781 + $0xf0] sm:$0xff]
                %844 = vst [vmem:[%s782 + $0x1e0] sm:$0xff] %v843
                %v845 = vld [vmem:[%s781 + $0xf8] sm:$0xff]
                %846 = vst [vmem:[%s782 + $0x1e8] sm:$0xff] %v845
                %v847 = vld [vmem:[%s781 + $0x100] sm:$0xff]
                %848 = vst [vmem:[%s782 + $0x200] sm:$0xff] %v847
                %v849 = vld [vmem:[%s781 + $0x108] sm:$0xff]
                %850 = vst [vmem:[%s782 + $0x208] sm:$0xff] %v849
                %v851 = vld [vmem:[%s781 + $0x110] sm:$0xff]
                %852 = vst [vmem:[%s782 + $0x220] sm:$0xff] %v851
                %v853 = vld [vmem:[%s781 + $0x118] sm:$0xff]
                %854 = vst [vmem:[%s782 + $0x228] sm:$0xff] %v853
                %v855 = vld [vmem:[%s781 + $0x120] sm:$0xff]
                %856 = vst [vmem:[%s782 + $0x240] sm:$0xff] %v855
                %v857 = vld [vmem:[%s781 + $0x128] sm:$0xff]
                %858 = vst [vmem:[%s782 + $0x248] sm:$0xff] %v857
                %v859 = vld [vmem:[%s781 + $0x130] sm:$0xff]
                %860 = vst [vmem:[%s782 + $0x260] sm:$0xff] %v859
                %v861 = vld [vmem:[%s781 + $0x138] sm:$0xff]
                %862 = vst [vmem:[%s782 + $0x268] sm:$0xff] %v861
                %v863 = vld [vmem:[%s781 + $0x140] sm:$0xff]
                %864 = vst [vmem:[%s782 + $0x280] sm:$0xff] %v863
                %v865 = vld [vmem:[%s781 + $0x148] sm:$0xff]
                %866 = vst [vmem:[%s782 + $0x288] sm:$0xff] %v865
                %v867 = vld [vmem:[%s781 + $0x150] sm:$0xff]
                %868 = vst [vmem:[%s782 + $0x2a0] sm:$0xff] %v867
                %v869 = vld [vmem:[%s781 + $0x158] sm:$0xff]
                %870 = vst [vmem:[%s782 + $0x2a8] sm:$0xff] %v869
                %v871 = vld [vmem:[%s781 + $0x160] sm:$0xff]
                %872 = vst [vmem:[%s782 + $0x2c0] sm:$0xff] %v871
                %v873 = vld [vmem:[%s781 + $0x168] sm:$0xff]
                %874 = vst [vmem:[%s782 + $0x2c8] sm:$0xff] %v873
                %v875 = vld [vmem:[%s781 + $0x170] sm:$0xff]
                %876 = vst [vmem:[%s782 + $0x2e0] sm:$0xff] %v875
                %v877 = vld [vmem:[%s781 + $0x178] sm:$0xff]
                %878 = vst [vmem:[%s782 + $0x2e8] sm:$0xff] %v877
                %v879 = vld [vmem:[%s781 + $0x180] sm:$0xff]
                %880 = vst [vmem:[%s782 + $0x300] sm:$0xff] %v879
                %v881 = vld [vmem:[%s781 + $0x188] sm:$0xff]
                %882 = vst [vmem:[%s782 + $0x308] sm:$0xff] %v881
                %v883 = vld [vmem:[%s781 + $0x190] sm:$0xff]
                %884 = vst [vmem:[%s782 + $0x320] sm:$0xff] %v883
                %v885 = vld [vmem:[%s781 + $0x198] sm:$0xff]
                %886 = vst [vmem:[%s782 + $0x328] sm:$0xff] %v885
                %v887 = vld [vmem:[%s781 + $0x1a0] sm:$0xff]
                %888 = vst [vmem:[%s782 + $0x340] sm:$0xff] %v887
                %v889 = vld [vmem:[%s781 + $0x1a8] sm:$0xff]
                %890 = vst [vmem:[%s782 + $0x348] sm:$0xff] %v889
                %v891 = vld [vmem:[%s781 + $0x1b0] sm:$0xff]
                %892 = vst [vmem:[%s782 + $0x360] sm:$0xff] %v891
                %v893 = vld [vmem:[%s781 + $0x1b8] sm:$0xff]
                %894 = vst [vmem:[%s782 + $0x368] sm:$0xff] %v893
                %v895 = vld [vmem:[%s781 + $0x1c0] sm:$0xff]
                %896 = vst [vmem:[%s782 + $0x380] sm:$0xff] %v895
                %v897 = vld [vmem:[%s781 + $0x1c8] sm:$0xff]
                %898 = vst [vmem:[%s782 + $0x388] sm:$0xff] %v897
                %v899 = vld [vmem:[%s781 + $0x1d0] sm:$0xff]
                %900 = vst [vmem:[%s782 + $0x3a0] sm:$0xff] %v899
                %v901 = vld [vmem:[%s781 + $0x1d8] sm:$0xff]
                %902 = vst [vmem:[%s782 + $0x3a8] sm:$0xff] %v901
                %v903 = vld [vmem:[%s781 + $0x1e0] sm:$0xff]
                %904 = vst [vmem:[%s782 + $0x3c0] sm:$0xff] %v903
                %v905 = vld [vmem:[%s781 + $0x1e8] sm:$0xff]
                %906 = vst [vmem:[%s782 + $0x3c8] sm:$0xff] %v905
              $region87: #{forward.22} parent=81 // loop_footer
                %s780 = sadd.s32 1, %s776
              $region88: #{forward.22} parent=81 // loop_footer_branch
                %775 = sbr.rel target = $region84
              $region89: #{forward.22} parent=81 // loop_exit
                _
            $region82: #{forward.22} parent=77 // pred_fallthru
              _
            // Predicated region
            $region90: #{forward.22} parent=77 // pred_check
              _
            $region91: #{forward.22} parent=77 // pred_check_branch
              %908 = sbr.rel target = $region93
            $region92: #{forward.22} parent=77 // pred_region
              _
            $region93: #{forward.22} parent=77 // pred_fallthru
              _
          $region78: #{forward.22} parent=73 // pred_fallthru
            _
          %909 = vnop
        $region74: #{forward.22} parent=65 // pred_fallthru
          _
      $region66: #{forward.22} parent=5 // pred_fallthru
        _
      %p910 = scmp.le.s32.totalorder 2, %s9
      // Predicated region
      $region94: #{forward.22} parent=5 // pred_check
        %p911 = pneg %p910
      $region95: #{forward.22} parent=5 // pred_check_branch
        %913 = sbr.rel (%p911) target = $region97
      $region96: #{forward.22} parent=5 // pred_region
        %s914 = ssub.s32 %s9, 2
        // Predicated region
        $region98: #{forward.22} parent=96 // pred_check
          %p915 = pneg %p130
        $region99: #{forward.22} parent=96 // pred_check_branch
          %917 = sbr.rel (%p915) target = $region101
        $region100: #{forward.22} parent=96 // pred_region
          %s918 = sand.u32 %s115, 1
          %s919 = sand.u32 %s115, 1
          %s920 = smul.addr %s919, 496
          %s921 = scalar_lea.vmem [#allocation3], %s920
        $region101: #{forward.22} parent=96 // pred_fallthru
          _
      $region97: #{forward.22} parent=5 // pred_fallthru
        _
    $region6: #{forward.22} parent=1 // loop_footer
      %s13 = sadd.s32 1, %s9
    $region7: #{forward.22} parent=1 // loop_footer_branch
      %8 = sbr.rel target = $region3
    $region8: #{forward.22} parent=1 // loop_exit
      _

// kernel: forward.23
$region0: #{forward.23}
  #allocation0 [shape = 'u32[]', space=smem, size = 0x4, offset = 0x4, fixed_abs, tag = 'smem constant byte address 0x4 - core index']
  #allocation1 [shape = 'u32[144,128]{1,0:T(1,128)}', space=vmem, size = 0x12000, scoped, tag = 'internal scratch']
  %s0 = inlined_call_operand.vmem [shape: bf16[1152,32], index: 0, kind: input, shape index: {}]
  %s1 = inlined_call_operand.vmem [shape: bf16[32,128], index: 1, kind: input, shape index: {}]
  %s2 = inlined_call_operand.vmem [shape: f32[1,128], index: 2, kind: input, shape index: {}]
  %s3 = inlined_call_operand.vmem [shape: f32[1152,128], index: 3, kind: output, shape index: {}]
  %s4 = sld [smem:[#allocation0]]
  $region45: #{forward.23} parent=0
    _
  %s6 = ssub.s32 1, %s4
  %s7 = scalar_select 0, %s6, %s4
  loop: start=0, step=1, limit=4
  $region2: #{forward.23} parent=0 // loop_pre_header
    _
  $region3: #{forward.23} parent=0 // loop_header
    %s9 = sphi 0, %s13
    %p10 = scmp.ge.s32.totalorder %s9, 4
    %s16 = sphi 0, %s28
    %s17 = sphi 0, %s24
    %s18 = sphi 0, %s16
    %s19 = sphi 0, %s17
    %s20 = sphi 0, %s18
    %s21 = sphi 0, %s19
    %s31 = sphi 0, %s33
    %s34 = sphi 0, %s31
    %s35 = sphi 0, %s34
    %s51 = sphi 0, %s35
    %s57 = sphi 0, %s59
    %s60 = sphi 0, %s57
    %s61 = sphi 0, %s60
    %s77 = sphi 0, %s61
    %s83 = sphi 0, %s85
    %s86 = sphi 0, %s83
    %s87 = sphi 0, %s86
    %s103 = sphi 0, %s87
    %s111 = sphi 0, %s113
    %s114 = sphi 0, %s111
    %s115 = sphi 0, %s114
    %s131 = sphi 0, %s115
  $region4: #{forward.23} parent=0 // loop_header_branch
    %12 = sbr.rel (%p10) target = $region8
  $region5: #{forward.23} parent=0 // loop_body
    %s14 = ssub.s32 %s9, 1
    %s15 = ssub.s32 %s9, 2
    %s22 = sadd.s32 1, %s17
    %p23 = scmp.ge.s32.totalorder %s22, 1
    %s24 = scalar_select %p23, 0, %s22
    %s25 = sadd.s32 1, %s16
    %s26 = scalar_select %p23, %s25, %s16
    %p27 = scmp.ge.s32.totalorder %s26, 2
    %s28 = scalar_select %p27, 0, %s26
    %s29 = ssub.s32 %s16, %s28
    %p30 = scmp.eq.s32.totalorder %s29, 0
    %s32 = sadd.s32 %s31, 1
    %s33 = scalar_select %p30, %s31, %s32
    %p36 = pneg %p30
    %p37 = scmp.eq.s32.totalorder %s9, 1
    %p38 = por %p36, %p37
    %p39 = scmp.ne.s32.totalorder %s31, %s34
    %p40 = scmp.eq.s32.totalorder %s9, 0
    %p41 = por %p39, %p40
    %p42 = scmp.ne.s32.totalorder %s31, %s34
    %p43 = scmp.eq.s32.totalorder %s14, 1
    %p44 = por %p42, %p43
    %p45 = scmp.ne.s32.totalorder %s34, %s35
    %p46 = scmp.eq.s32.totalorder %s14, 0
    %p47 = por %p45, %p46
    %p48 = scmp.ne.s32.totalorder %s34, %s35
    %p49 = scmp.eq.s32.totalorder %s15, 1
    %p50 = por %p48, %p49
    %p52 = scmp.ne.s32.totalorder %s35, %s51
    %p53 = scmp.eq.s32.totalorder %s15, 0
    %p54 = por %p52, %p53
    %s55 = ssub.s32 %s17, %s24
    %p56 = scmp.eq.s32.totalorder %s55, 0
    %s58 = sadd.s32 %s57, 1
    %s59 = scalar_select %p56, %s57, %s58
    %p62 = pneg %p56
    %p63 = scmp.eq.s32.totalorder %s9, 1
    %p64 = por %p62, %p63
    %p65 = scmp.ne.s32.totalorder %s57, %s60
    %p66 = scmp.eq.s32.totalorder %s9, 0
    %p67 = por %p65, %p66
    %p68 = scmp.ne.s32.totalorder %s57, %s60
    %p69 = scmp.eq.s32.totalorder %s14, 1
    %p70 = por %p68, %p69
    %p71 = scmp.ne.s32.totalorder %s60, %s61
    %p72 = scmp.eq.s32.totalorder %s14, 0
    %p73 = por %p71, %p72
    %p74 = scmp.ne.s32.totalorder %s60, %s61
    %p75 = scmp.eq.s32.totalorder %s15, 1
    %p76 = por %p74, %p75
    %p78 = scmp.ne.s32.totalorder %s61, %s77
    %p79 = scmp.eq.s32.totalorder %s15, 0
    %p80 = por %p78, %p79
    %s81 = ssub.s32 %s17, %s24
    %p82 = scmp.eq.s32.totalorder %s81, 0
    %s84 = sadd.s32 %s83, 1
    %s85 = scalar_select %p82, %s83, %s84
    %p88 = pneg %p82
    %p89 = scmp.eq.s32.totalorder %s9, 1
    %p90 = por %p88, %p89
    %p91 = scmp.ne.s32.totalorder %s83, %s86
    %p92 = scmp.eq.s32.totalorder %s9, 0
    %p93 = por %p91, %p92
    %p94 = scmp.ne.s32.totalorder %s83, %s86
    %p95 = scmp.eq.s32.totalorder %s14, 1
    %p96 = por %p94, %p95
    %p97 = scmp.ne.s32.totalorder %s86, %s87
    %p98 = scmp.eq.s32.totalorder %s14, 0
    %p99 = por %p97, %p98
    %p100 = scmp.ne.s32.totalorder %s86, %s87
    %p101 = scmp.eq.s32.totalorder %s15, 1
    %p102 = por %p100, %p101
    %p104 = scmp.ne.s32.totalorder %s87, %s103
    %p105 = scmp.eq.s32.totalorder %s15, 0
    %p106 = por %p104, %p105
    %s107 = ssub.s32 %s16, %s28
    %s108 = ssub.s32 %s17, %s24
    %s109 = sor.u32 %s107, %s108
    %p110 = scmp.eq.s32.totalorder %s109, 0
    %s112 = sadd.s32 %s111, 1
    %s113 = scalar_select %p110, %s111, %s112
    %p116 = pneg %p110
    %p117 = scmp.eq.s32.totalorder %s9, 1
    %p118 = por %p116, %p117
    %p119 = scmp.ne.s32.totalorder %s111, %s114
    %p120 = scmp.eq.s32.totalorder %s9, 0
    %p121 = por %p119, %p120
    %p122 = scmp.ne.s32.totalorder %s111, %s114
    %p123 = scmp.eq.s32.totalorder %s14, 1
    %p124 = por %p122, %p123
    %p125 = scmp.ne.s32.totalorder %s114, %s115
    %p126 = scmp.eq.s32.totalorder %s14, 0
    %p127 = por %p125, %p126
    %p128 = scmp.ne.s32.totalorder %s114, %s115
    %p129 = scmp.eq.s32.totalorder %s15, 1
    %p130 = por %p128, %p129
    %p132 = scmp.ne.s32.totalorder %s115, %s131
    %p133 = scmp.eq.s32.totalorder %s15, 0
    %p134 = por %p132, %p133
    %p135 = scmp.le.s32.totalorder 1, %s9
    %p136 = scmp.lt.s32.totalorder %s9, 3
    %p137 = pnand %p135, %p136
    %p138 = pneg %p137
    // Predicated region
    $region9: #{forward.23} parent=5 // pred_check
      _
    $region10: #{forward.23} parent=5 // pred_check_branch
      %140 = sbr.rel (%p137) target = $region12
    $region11: #{forward.23} parent=5 // pred_region
      %s141 = ssub.s32 %s9, 1
      // Predicated region
      $region13: #{forward.23} parent=11 // pred_check
        %p142 = pneg %p73
      $region14: #{forward.23} parent=11 // pred_check_branch
        %144 = sbr.rel (%p142) target = $region16
      $region15: #{forward.23} parent=11 // pred_region
        %p145 = scmp.lt.s32.totalorder %s19, 0
        %s146 = scalar_select %p145, %s19, 0
        %s147 = smul.addr %s146, 4
        %s148 = scalar_lea.vmem %s1, %s147
      $region16: #{forward.23} parent=11 // pred_fallthru
        _
      // Predicated region
      $region17: #{forward.23} parent=11 // pred_check
        %p149 = pneg %p99
      $region18: #{forward.23} parent=11 // pred_check_branch
        %151 = sbr.rel (%p149) target = $region20
      $region19: #{forward.23} parent=11 // pred_region
        %p152 = scmp.lt.s32.totalorder %s19, 0
        %s153 = scalar_select %p152, %s19, 0
        %s154 = scalar_lea.vmem %s2, %s153
      $region20: #{forward.23} parent=11 // pred_fallthru
        _
    $region12: #{forward.23} parent=5 // pred_fallthru
      _
    %p155 = scmp.lt.s32.totalorder %s9, 2
    // Predicated region
    $region21: #{forward.23} parent=5 // pred_check
      %p156 = pneg %p155
    $region22: #{forward.23} parent=5 // pred_check_branch
      %158 = sbr.rel (%p156) target = $region24
    $region23: #{forward.23} parent=5 // pred_region
      // Predicated region
      $region25: #{forward.23} parent=23 // pred_check
        %p159 = pneg %p41
      $region26: #{forward.23} parent=23 // pred_check_branch
        %161 = sbr.rel (%p159) target = $region28
      $region27: #{forward.23} parent=23 // pred_region
        %s162 = smul.u32 72, %s16
        %p163 = scmp.lt.s32.totalorder %s162, 143
        %s164 = scalar_select %p163, %s162, 143
        %s165 = smul.addr %s164, 4
        %s166 = scalar_lea.vmem %s0, %s165
        %s167 = smul.u32 72, %s16
      $region28: #{forward.23} parent=23 // pred_fallthru
        _
    $region24: #{forward.23} parent=5 // pred_fallthru
      _
    %p168 = scmp.le.s32.totalorder 1, %s9
    %p169 = scmp.lt.s32.totalorder %s9, 3
    %p170 = pnand %p168, %p169
    %p171 = pneg %p170
    // Predicated region
    $region29: #{forward.23} parent=5 // pred_check
      _
    $region30: #{forward.23} parent=5 // pred_check_branch
      %173 = sbr.rel (%p170) target = $region32
    $region31: #{forward.23} parent=5 // pred_region
      %s174 = ssub.s32 %s9, 1
      %s175 = smul.u32 72, %s18
      %p176 = scmp.lt.s32.totalorder %s175, 143
      %s177 = scalar_select %p176, %s175, 143
      %s178 = smul.addr %s177, 4
      %s179 = scalar_lea.vmem %s0, %s178
      %p180 = pneg %p47
      %p181 = pneg %p44
      %p182 = scmp.lt.s32.totalorder %s19, 0
      %s183 = scalar_select %p182, %s19, 0
      %s184 = smul.addr %s183, 4
      %s185 = scalar_lea.vmem %s1, %s184
      %p186 = pneg %p73
      %p187 = pneg %p70
      %p188 = scmp.lt.s32.totalorder %s19, 0
      %s189 = scalar_select %p188, %s19, 0
      %s190 = scalar_lea.vmem %s2, %s189
      %p191 = pneg %p99
      %p192 = pneg %p96
      %p193 = pneg %p127
      %p194 = pneg %p124
      %s195 = smul.u32 72, %s18
      %p196 = scmp.lt.s32.totalorder %s195, 143
      %s197 = scalar_select %p196, %s195, 143
      %p198 = scmp.lt.s32.totalorder %s19, 0
      %s199 = scalar_select %p198, %s19, 0
      %s200 = sadd.s32 %s199, %s197
      %s201 = smul.addr %s200, 8
      %s202 = scalar_lea.vmem %s3, %s201
      %s203 = smul.u32 72, %s18
      %p204 = scmp.lt.s32.totalorder %s203, 143
      %s205 = scalar_select %p204, %s203, 143
      %s206 = smul.addr %s205, 4
      %s207 = scalar_lea.vmem %s0, %s206
      %s208 = smul.u32 72, %s18
      %p209 = scmp.lt.s32.totalorder %s19, 0
      %s210 = scalar_select %p209, %s19, 0
      %s211 = smul.addr %s210, 4
      %s212 = scalar_lea.vmem %s1, %s211
      %p213 = scmp.lt.s32.totalorder %s19, 0
      %s214 = scalar_select %p213, %s19, 0
      %s215 = scalar_lea.vmem %s2, %s214
      %s216 = smul.u32 72, %s18
      %p217 = scmp.lt.s32.totalorder %s216, 143
      %s218 = scalar_select %p217, %s216, 143
      %p219 = scmp.lt.s32.totalorder %s19, 0
      %s220 = scalar_select %p219, %s19, 0
      %s221 = sadd.s32 %s220, %s218
      %s222 = smul.addr %s221, 8
      %s223 = scalar_lea.vmem %s3, %s222
      %s224 = smul.u32 72, %s18
      %v226 = vld [vmem:[%s207] sm:$0xf]
      %v227 = vld [vmem:[%s207 + $0x4] sm:$0xf]
      %v228 = vld [vmem:[%s207 + $0x8] sm:$0xf]
      %v229 = vld [vmem:[%s207 + $0xc] sm:$0xf]
      %v230 = vld [vmem:[%s207 + $0x10] sm:$0xf]
      %v231 = vld [vmem:[%s207 + $0x14] sm:$0xf]
      %v232 = vld [vmem:[%s207 + $0x18] sm:$0xf]
      %v233 = vld [vmem:[%s207 + $0x1c] sm:$0xf]
      %v234 = vld [vmem:[%s207 + $0x20] sm:$0xf]
      %v235 = vld [vmem:[%s207 + $0x24] sm:$0xf]
      %v236 = vld [vmem:[%s207 + $0x28] sm:$0xf]
      %v237 = vld [vmem:[%s207 + $0x2c] sm:$0xf]
      %v238 = vld [vmem:[%s207 + $0x30] sm:$0xf]
      %v239 = vld [vmem:[%s207 + $0x34] sm:$0xf]
      %v240 = vld [vmem:[%s207 + $0x38] sm:$0xf]
      %v241 = vld [vmem:[%s207 + $0x3c] sm:$0xf]
      %v242 = vld [vmem:[%s207 + $0x40] sm:$0xf]
      %v243 = vld [vmem:[%s207 + $0x44] sm:$0xf]
      %v244 = vld [vmem:[%s207 + $0x48] sm:$0xf]
      %v245 = vld [vmem:[%s207 + $0x4c] sm:$0xf]
      %v246 = vld [vmem:[%s207 + $0x50] sm:$0xf]
      %v247 = vld [vmem:[%s207 + $0x54] sm:$0xf]
      %v248 = vld [vmem:[%s207 + $0x58] sm:$0xf]
      %v249 = vld [vmem:[%s207 + $0x5c] sm:$0xf]
      %v250 = vld [vmem:[%s207 + $0x60] sm:$0xf]
      %v251 = vld [vmem:[%s207 + $0x64] sm:$0xf]
      %v252 = vld [vmem:[%s207 + $0x68] sm:$0xf]
      %v253 = vld [vmem:[%s207 + $0x6c] sm:$0xf]
      %v254 = vld [vmem:[%s207 + $0x70] sm:$0xf]
      %v255 = vld [vmem:[%s207 + $0x74] sm:$0xf]
      %v256 = vld [vmem:[%s207 + $0x78] sm:$0xf]
      %v257 = vld [vmem:[%s207 + $0x7c] sm:$0xf]
      %v258 = vld [vmem:[%s207 + $0x80] sm:$0xf]
      %v259 = vld [vmem:[%s207 + $0x84] sm:$0xf]
      %v260 = vld [vmem:[%s207 + $0x88] sm:$0xf]
      %v261 = vld [vmem:[%s207 + $0x8c] sm:$0xf]
      %v262 = vld [vmem:[%s207 + $0x90] sm:$0xf]
      %v263 = vld [vmem:[%s207 + $0x94] sm:$0xf]
      %v264 = vld [vmem:[%s207 + $0x98] sm:$0xf]
      %v265 = vld [vmem:[%s207 + $0x9c] sm:$0xf]
      %v266 = vld [vmem:[%s207 + $0xa0] sm:$0xf]
      %v267 = vld [vmem:[%s207 + $0xa4] sm:$0xf]
      %v268 = vld [vmem:[%s207 + $0xa8] sm:$0xf]
      %v269 = vld [vmem:[%s207 + $0xac] sm:$0xf]
      %v270 = vld [vmem:[%s207 + $0xb0] sm:$0xf]
      %v271 = vld [vmem:[%s207 + $0xb4] sm:$0xf]
      %v272 = vld [vmem:[%s207 + $0xb8] sm:$0xf]
      %v273 = vld [vmem:[%s207 + $0xbc] sm:$0xf]
      %v274 = vld [vmem:[%s207 + $0xc0] sm:$0xf]
      %v275 = vld [vmem:[%s207 + $0xc4] sm:$0xf]
      %v276 = vld [vmem:[%s207 + $0xc8] sm:$0xf]
      %v277 = vld [vmem:[%s207 + $0xcc] sm:$0xf]
      %v278 = vld [vmem:[%s207 + $0xd0] sm:$0xf]
      %v279 = vld [vmem:[%s207 + $0xd4] sm:$0xf]
      %v280 = vld [vmem:[%s207 + $0xd8] sm:$0xf]
      %v281 = vld [vmem:[%s207 + $0xdc] sm:$0xf]
      %v282 = vld [vmem:[%s207 + $0xe0] sm:$0xf]
      %v283 = vld [vmem:[%s207 + $0xe4] sm:$0xf]
      %v284 = vld [vmem:[%s207 + $0xe8] sm:$0xf]
      %v285 = vld [vmem:[%s207 + $0xec] sm:$0xf]
      %v286 = vld [vmem:[%s207 + $0xf0] sm:$0xf]
      %v287 = vld [vmem:[%s207 + $0xf4] sm:$0xf]
      %v288 = vld [vmem:[%s207 + $0xf8] sm:$0xf]
      %v289 = vld [vmem:[%s207 + $0xfc] sm:$0xf]
      %v290 = vld [vmem:[%s207 + $0x100] sm:$0xf]
      %v291 = vld [vmem:[%s207 + $0x104] sm:$0xf]
      %v292 = vld [vmem:[%s207 + $0x108] sm:$0xf]
      %v293 = vld [vmem:[%s207 + $0x10c] sm:$0xf]
      %v294 = vld [vmem:[%s207 + $0x110] sm:$0xf]
      %v295 = vld [vmem:[%s207 + $0x114] sm:$0xf]
      %v296 = vld [vmem:[%s207 + $0x118] sm:$0xf]
      %v297 = vld [vmem:[%s207 + $0x11c] sm:$0xf]
      %v298 = vld [vmem:[%s212] sm:$0xf]
      %v299 = vld [vmem:[%s212 + $0x4] sm:$0xf]
      %v300 = vld [vmem:[%s212 + $0x8] sm:$0xf]
      %v301 = vld [vmem:[%s212 + $0xc] sm:$0xf]
      %v302 = vld [vmem:[%s215] sm:$0x1]
      %v304 = vlaneseq
      %v305 = vshrl.u32 %v304, 7
      %v306 = vsub.s32 0, %v305
      %v307 = vrot.slane %v302, %v306
      %v381 = vunpack.c.l.b16 %v226
      %v382 = vunpack.c.l.b16 %v227
      %v383 = vunpack.c.l.b16 %v228
      %v384 = vunpack.c.l.b16 %v229
      %v385 = vunpack.c.l.b16 %v230
      %v386 = vunpack.c.l.b16 %v231
      %v387 = vunpack.c.l.b16 %v232
      %v388 = vunpack.c.l.b16 %v233
      %v389 = vunpack.c.l.b16 %v234
      %v390 = vunpack.c.l.b16 %v235
      %v391 = vunpack.c.l.b16 %v236
      %v392 = vunpack.c.l.b16 %v237
      %v393 = vunpack.c.l.b16 %v238
      %v394 = vunpack.c.l.b16 %v239
      %v395 = vunpack.c.l.b16 %v240
      %v396 = vunpack.c.l.b16 %v241
      %v397 = vunpack.c.l.b16 %v242
      %v398 = vunpack.c.l.b16 %v243
      %v399 = vunpack.c.l.b16 %v244
      %v400 = vunpack.c.l.b16 %v245
      %v401 = vunpack.c.l.b16 %v246
      %v402 = vunpack.c.l.b16 %v247
      %v403 = vunpack.c.l.b16 %v248
      %v404 = vunpack.c.l.b16 %v249
      %v405 = vunpack.c.l.b16 %v250
      %v406 = vunpack.c.l.b16 %v251
      %v407 = vunpack.c.l.b16 %v252
      %v408 = vunpack.c.l.b16 %v253
      %v409 = vunpack.c.l.b16 %v254
      %v410 = vunpack.c.l.b16 %v255
      %v411 = vunpack.c.l.b16 %v256
      %v412 = vunpack.c.l.b16 %v257
      %v413 = vunpack.c.l.b16 %v258
      %v414 = vunpack.c.l.b16 %v259
      %v415 = vunpack.c.l.b16 %v260
      %v416 = vunpack.c.l.b16 %v261
      %v417 = vunpack.c.l.b16 %v262
      %v418 = vunpack.c.l.b16 %v263
      %v419 = vunpack.c.l.b16 %v264
      %v420 = vunpack.c.l.b16 %v265
      %v421 = vunpack.c.l.b16 %v266
      %v422 = vunpack.c.l.b16 %v267
      %v423 = vunpack.c.l.b16 %v268
      %v424 = vunpack.c.l.b16 %v269
      %v425 = vunpack.c.l.b16 %v270
      %v426 = vunpack.c.l.b16 %v271
      %v427 = vunpack.c.l.b16 %v272
      %v428 = vunpack.c.l.b16 %v273
      %v429 = vunpack.c.l.b16 %v274
      %v430 = vunpack.c.l.b16 %v275
      %v431 = vunpack.c.l.b16 %v276
      %v432 = vunpack.c.l.b16 %v277
      %v433 = vunpack.c.l.b16 %v278
      %v434 = vunpack.c.l.b16 %v279
      %v435 = vunpack.c.l.b16 %v280
      %v436 = vunpack.c.l.b16 %v281
      %v437 = vunpack.c.l.b16 %v282
      %v438 = vunpack.c.l.b16 %v283
      %v439 = vunpack.c.l.b16 %v284
      %v440 = vunpack.c.l.b16 %v285
      %v441 = vunpack.c.l.b16 %v286
      %v442 = vunpack.c.l.b16 %v287
      %v443 = vunpack.c.l.b16 %v288
      %v444 = vunpack.c.l.b16 %v289
      %v445 = vunpack.c.l.b16 %v290
      %v446 = vunpack.c.l.b16 %v291
      %v447 = vunpack.c.l.b16 %v292
      %v448 = vunpack.c.l.b16 %v293
      %v449 = vunpack.c.l.b16 %v294
      %v450 = vunpack.c.l.b16 %v295
      %v451 = vunpack.c.l.b16 %v296
      %v452 = vunpack.c.l.b16 %v297
      %v453 = vpack.c.b16 %v382, %v381
      %v454 = vpack.c.b16 %v384, %v383
      %v455 = vpack.c.b16 %v386, %v385
      %v456 = vpack.c.b16 %v388, %v387
      %v457 = vpack.c.b16 %v390, %v389
      %v458 = vpack.c.b16 %v392, %v391
      %v459 = vpack.c.b16 %v394, %v393
      %v460 = vpack.c.b16 %v396, %v395
      %v461 = vpack.c.b16 %v398, %v397
      %v462 = vpack.c.b16 %v400, %v399
      %v463 = vpack.c.b16 %v402, %v401
      %v464 = vpack.c.b16 %v404, %v403
      %v465 = vpack.c.b16 %v406, %v405
      %v466 = vpack.c.b16 %v408, %v407
      %v467 = vpack.c.b16 %v410, %v409
      %v468 = vpack.c.b16 %v412, %v411
      %v469 = vpack.c.b16 %v414, %v413
      %v470 = vpack.c.b16 %v416, %v415
      %v471 = vpack.c.b16 %v418, %v417
      %v472 = vpack.c.b16 %v420, %v419
      %v473 = vpack.c.b16 %v422, %v421
      %v474 = vpack.c.b16 %v424, %v423
      %v475 = vpack.c.b16 %v426, %v425
      %v476 = vpack.c.b16 %v428, %v427
      %v477 = vpack.c.b16 %v430, %v429
      %v478 = vpack.c.b16 %v432, %v431
      %v479 = vpack.c.b16 %v434, %v433
      %v480 = vpack.c.b16 %v436, %v435
      %v481 = vpack.c.b16 %v438, %v437
      %v482 = vpack.c.b16 %v440, %v439
      %v483 = vpack.c.b16 %v442, %v441
      %v484 = vpack.c.b16 %v444, %v443
      %v485 = vpack.c.b16 %v446, %v445
      %v486 = vpack.c.b16 %v448, %v447
      %v487 = vpack.c.b16 %v450, %v449
      %v488 = vpack.c.b16 %v452, %v451
      %v493 = vunpack.c.l.b16 %v298
      %v494 = vunpack.c.l.b16 %v299
      %v495 = vunpack.c.l.b16 %v300
      %v496 = vunpack.c.l.b16 %v301
      %v497 = vpack.c.b16 %v494, %v493
      %v498 = vpack.c.b16 %v496, %v495
      %vm501 = vcmask 261120
      %v503 = vsel %vm501, %v453, 0
      %v506 = vsel %vm501, %v454, 0
      %v509 = vsel %vm501, %v455, 0
      %v512 = vsel %vm501, %v456, 0
      %v515 = vsel %vm501, %v457, 0
      %v518 = vsel %vm501, %v458, 0
      %v521 = vsel %vm501, %v459, 0
      %v524 = vsel %vm501, %v460, 0
      %v527 = vsel %vm501, %v461, 0
      %v530 = vsel %vm501, %v462, 0
      %v533 = vsel %vm501, %v463, 0
      %v536 = vsel %vm501, %v464, 0
      %v539 = vsel %vm501, %v465, 0
      %v542 = vsel %vm501, %v466, 0
      %v545 = vsel %vm501, %v467, 0
      %v548 = vsel %vm501, %v468, 0
      %v551 = vsel %vm501, %v469, 0
      %v554 = vsel %vm501, %v470, 0
      %v557 = vsel %vm501, %v471, 0
      %v560 = vsel %vm501, %v472, 0
      %v563 = vsel %vm501, %v473, 0
      %v566 = vsel %vm501, %v474, 0
      %v569 = vsel %vm501, %v475, 0
      %v572 = vsel %vm501, %v476, 0
      %v575 = vsel %vm501, %v477, 0
      %v578 = vsel %vm501, %v478, 0
      %v581 = vsel %vm501, %v479, 0
      %v584 = vsel %vm501, %v480, 0
      %v587 = vsel %vm501, %v481, 0
      %v590 = vsel %vm501, %v482, 0
      %v593 = vsel %vm501, %v483, 0
      %v596 = vsel %vm501, %v484, 0
      %v599 = vsel %vm501, %v485, 0
      %v602 = vsel %vm501, %v486, 0
      %v605 = vsel %vm501, %v487, 0
      %v608 = vsel %vm501, %v488, 0
      %610 = vmatprep.subr.bf16.mxu0 0
      %611 = vmatpush1.bf16.msra.mxu0 %v497
      %612 = vmatprep.subr.bf16.mxu0 0
      %613 = vmatpush1.bf16.msra.mxu0 %v498
      %614 = vmatprep.subr.bf16.mxu0 0
      %615 = vmatpush1.bf16.msra.mxu0 0
      %616 = vmatprep.subr.bf16.mxu0 0
      %617 = vmatpush1.bf16.msra.mxu0 0
      %618 = vmatprep.subr.bf16.mxu0 0
      %619 = vmatpush1.bf16.msra.mxu0 0
      %620 = vmatprep.subr.bf16.mxu0 0
      %621 = vmatpush1.bf16.msra.mxu0 0
      %622 = vmatprep.subr.bf16.mxu0 0
      %623 = vmatpush1.bf16.msra.mxu0 0
      %624 = vmatprep.subr.bf16.mxu0 0
      %625 = vmatpush1.bf16.msra.mxu0 0
      %626 = vmatprep.subr.bf16.mxu0 0
      %627 = vmatpush1.bf16.msra.mxu0 0
      %628 = vmatprep.subr.bf16.mxu0 0
      %629 = vmatpush1.bf16.msra.mxu0 0
      %630 = vmatprep.subr.bf16.mxu0 0
      %631 = vmatpush1.bf16.msra.mxu0 0
      %632 = vmatprep.subr.bf16.mxu0 0
      %633 = vmatpush1.bf16.msra.mxu0 0
      %634 = vmatprep.subr.bf16.mxu0 0
      %635 = vmatpush1.bf16.msra.mxu0 0
      %636 = vmatprep.subr.bf16.mxu0 0
      %637 = vmatpush1.bf16.msra.mxu0 0
      %638 = vmatprep.subr.bf16.mxu0 0
      %639 = vmatpush1.bf16.msra.mxu0 0
      %640 = vmatprep.subr.bf16.mxu0 0
      %641 = vmatpush1.bf16.msra.mxu0 0
      %642 = vmatprep.mubr.bf16.mxu0 0
      %643 = vmatmul.mubr.bf16.gmra.mrb[0].mxu0 %v503
      %v644 = vpop.f32.mrb[0].mxu0
      %v645 = vadd.f32 %v307, %v644
      %v646 = vpop.f32.mrb[0].mxu0
      %v647 = vpop.f32.mrb[0].mxu0
      %v648 = vadd.f32 %v307, %v647
      %v649 = vpop.f32.mrb[0].mxu0
      %650 = vmatprep.mubr.bf16.mxu0 0
      %651 = vmatmul.mubr.bf16.gmra.mrb[0].mxu0 %v506
      %v652 = vpop.f32.mrb[0].mxu0
      %v653 = vadd.f32 %v307, %v652
      %v654 = vpop.f32.mrb[0].mxu0
      %v655 = vpop.f32.mrb[0].mxu0
      %v656 = vadd.f32 %v307, %v655
      %v657 = vpop.f32.mrb[0].mxu0
      %658 = vmatprep.mubr.bf16.mxu0 0
      %659 = vmatmul.mubr.bf16.gmra.mrb[0].mxu0 %v509
      %v660 = vpop.f32.mrb[0].mxu0
      %v661 = vadd.f32 %v307, %v660
      %v662 = vpop.f32.mrb[0].mxu0
      %v663 = vpop.f32.mrb[0].mxu0
      %v664 = vadd.f32 %v307, %v663
      %v665 = vpop.f32.mrb[0].mxu0
      %666 = vmatprep.mubr.bf16.mxu0 0
      %667 = vmatmul.mubr.bf16.gmra.mrb[0].mxu0 %v512
      %v668 = vpop.f32.mrb[0].mxu0
      %v669 = vadd.f32 %v307, %v668
      %v670 = vpop.f32.mrb[0].mxu0
      %v671 = vpop.f32.mrb[0].mxu0
      %v672 = vadd.f32 %v307, %v671
      %v673 = vpop.f32.mrb[0].mxu0
      %674 = vmatprep.mubr.bf16.mxu0 0
      %675 = vmatmul.mubr.bf16.gmra.mrb[0].mxu0 %v515
      %v676 = vpop.f32.mrb[0].mxu0
      %v677 = vadd.f32 %v307, %v676
      %v678 = vpop.f32.mrb[0].mxu0
      %v679 = vpop.f32.mrb[0].mxu0
      %v680 = vadd.f32 %v307, %v679
      %v681 = vpop.f32.mrb[0].mxu0
      %682 = vmatprep.mubr.bf16.mxu0 0
      %683 = vmatmul.mubr.bf16.gmra.mrb[0].mxu0 %v518
      %v684 = vpop.f32.mrb[0].mxu0
      %v685 = vadd.f32 %v307, %v684
      %v686 = vpop.f32.mrb[0].mxu0
      %v687 = vpop.f32.mrb[0].mxu0
      %v688 = vadd.f32 %v307, %v687
      %v689 = vpop.f32.mrb[0].mxu0
      %690 = vmatprep.mubr.bf16.mxu0 0
      %691 = vmatmul.mubr.bf16.gmra.mrb[0].mxu0 %v521
      %v692 = vpop.f32.mrb[0].mxu0
      %v693 = vadd.f32 %v307, %v692
      %v694 = vpop.f32.mrb[0].mxu0
      %v695 = vpop.f32.mrb[0].mxu0
      %v696 = vadd.f32 %v307, %v695
      %v697 = vpop.f32.mrb[0].mxu0
      %698 = vmatprep.mubr.bf16.mxu0 0
      %699 = vmatmul.mubr.bf16.gmra.mrb[0].mxu0 %v524
      %v700 = vpop.f32.mrb[0].mxu0
      %v701 = vadd.f32 %v307, %v700
      %v702 = vpop.f32.mrb[0].mxu0
      %v703 = vpop.f32.mrb[0].mxu0
      %v704 = vadd.f32 %v307, %v703
      %v705 = vpop.f32.mrb[0].mxu0
      %706 = vmatprep.mubr.bf16.mxu0 0
      %707 = vmatmul.mubr.bf16.gmra.mrb[0].mxu0 %v527
      %v708 = vpop.f32.mrb[0].mxu0
      %v709 = vadd.f32 %v307, %v708
      %v710 = vpop.f32.mrb[0].mxu0
      %v711 = vpop.f32.mrb[0].mxu0
      %v712 = vadd.f32 %v307, %v711
      %v713 = vpop.f32.mrb[0].mxu0
      %714 = vmatprep.mubr.bf16.mxu0 0
      %715 = vmatmul.mubr.bf16.gmra.mrb[0].mxu0 %v530
      %v716 = vpop.f32.mrb[0].mxu0
      %v717 = vadd.f32 %v307, %v716
      %v718 = vpop.f32.mrb[0].mxu0
      %v719 = vpop.f32.mrb[0].mxu0
      %v720 = vadd.f32 %v307, %v719
      %v721 = vpop.f32.mrb[0].mxu0
      %722 = vmatprep.mubr.bf16.mxu0 0
      %723 = vmatmul.mubr.bf16.gmra.mrb[0].mxu0 %v533
      %v724 = vpop.f32.mrb[0].mxu0
      %v725 = vadd.f32 %v307, %v724
      %v726 = vpop.f32.mrb[0].mxu0
      %v727 = vpop.f32.mrb[0].mxu0
      %v728 = vadd.f32 %v307, %v727
      %v729 = vpop.f32.mrb[0].mxu0
      %730 = vmatprep.mubr.bf16.mxu0 0
      %731 = vmatmul.mubr.bf16.gmra.mrb[0].mxu0 %v536
      %v732 = vpop.f32.mrb[0].mxu0
      %v733 = vadd.f32 %v307, %v732
      %v734 = vpop.f32.mrb[0].mxu0
      %v735 = vpop.f32.mrb[0].mxu0
      %v736 = vadd.f32 %v307, %v735
      %v737 = vpop.f32.mrb[0].mxu0
      %738 = vmatprep.mubr.bf16.mxu0 0
      %739 = vmatmul.mubr.bf16.gmra.mrb[0].mxu0 %v539
      %v740 = vpop.f32.mrb[0].mxu0
      %v741 = vadd.f32 %v307, %v740
      %v742 = vpop.f32.mrb[0].mxu0
      %v743 = vpop.f32.mrb[0].mxu0
      %v744 = vadd.f32 %v307, %v743
      %v745 = vpop.f32.mrb[0].mxu0
      %746 = vmatprep.mubr.bf16.mxu0 0
      %747 = vmatmul.mubr.bf16.gmra.mrb[0].mxu0 %v542
      %v748 = vpop.f32.mrb[0].mxu0
      %v749 = vadd.f32 %v307, %v748
      %v750 = vpop.f32.mrb[0].mxu0
      %v751 = vpop.f32.mrb[0].mxu0
      %v752 = vadd.f32 %v307, %v751
      %v753 = vpop.f32.mrb[0].mxu0
      %754 = vmatprep.mubr.bf16.mxu0 0
      %755 = vmatmul.mubr.bf16.gmra.mrb[0].mxu0 %v545
      %v756 = vpop.f32.mrb[0].mxu0
      %v757 = vadd.f32 %v307, %v756
      %v758 = vpop.f32.mrb[0].mxu0
      %v759 = vpop.f32.mrb[0].mxu0
      %v760 = vadd.f32 %v307, %v759
      %v761 = vpop.f32.mrb[0].mxu0
      %762 = vmatprep.mubr.bf16.mxu0 0
      %763 = vmatmul.mubr.bf16.gmra.mrb[0].mxu0 %v548
      %v764 = vpop.f32.mrb[0].mxu0
      %v765 = vadd.f32 %v307, %v764
      %v766 = vpop.f32.mrb[0].mxu0
      %v767 = vpop.f32.mrb[0].mxu0
      %v768 = vadd.f32 %v307, %v767
      %v769 = vpop.f32.mrb[0].mxu0
      %770 = vmatprep.mubr.bf16.mxu0 0
      %771 = vmatmul.mubr.bf16.gmra.mrb[0].mxu0 %v551
      %v772 = vpop.f32.mrb[0].mxu0
      %v773 = vadd.f32 %v307, %v772
      %v774 = vpop.f32.mrb[0].mxu0
      %v775 = vpop.f32.mrb[0].mxu0
      %v776 = vadd.f32 %v307, %v775
      %v777 = vpop.f32.mrb[0].mxu0
      %778 = vmatprep.mubr.bf16.mxu0 0
      %779 = vmatmul.mubr.bf16.gmra.mrb[0].mxu0 %v554
      %v780 = vpop.f32.mrb[0].mxu0
      %v781 = vadd.f32 %v307, %v780
      %v782 = vpop.f32.mrb[0].mxu0
      %v783 = vpop.f32.mrb[0].mxu0
      %v784 = vadd.f32 %v307, %v783
      %v785 = vpop.f32.mrb[0].mxu0
      %786 = vmatprep.mubr.bf16.mxu0 0
      %787 = vmatmul.mubr.bf16.gmra.mrb[0].mxu0 %v557
      %v788 = vpop.f32.mrb[0].mxu0
      %v789 = vadd.f32 %v307, %v788
      %v790 = vpop.f32.mrb[0].mxu0
      %v791 = vpop.f32.mrb[0].mxu0
      %v792 = vadd.f32 %v307, %v791
      %v793 = vpop.f32.mrb[0].mxu0
      %794 = vmatprep.mubr.bf16.mxu0 0
      %795 = vmatmul.mubr.bf16.gmra.mrb[0].mxu0 %v560
      %v796 = vpop.f32.mrb[0].mxu0
      %v797 = vadd.f32 %v307, %v796
      %v798 = vpop.f32.mrb[0].mxu0
      %v799 = vpop.f32.mrb[0].mxu0
      %v800 = vadd.f32 %v307, %v799
      %v801 = vpop.f32.mrb[0].mxu0
      %802 = vmatprep.mubr.bf16.mxu0 0
      %803 = vmatmul.mubr.bf16.gmra.mrb[0].mxu0 %v563
      %v804 = vpop.f32.mrb[0].mxu0
      %v805 = vadd.f32 %v307, %v804
      %v806 = vpop.f32.mrb[0].mxu0
      %v807 = vpop.f32.mrb[0].mxu0
      %v808 = vadd.f32 %v307, %v807
      %v809 = vpop.f32.mrb[0].mxu0
      %810 = vmatprep.mubr.bf16.mxu0 0
      %811 = vmatmul.mubr.bf16.gmra.mrb[0].mxu0 %v566
      %v812 = vpop.f32.mrb[0].mxu0
      %v813 = vadd.f32 %v307, %v812
      %v814 = vpop.f32.mrb[0].mxu0
      %v815 = vpop.f32.mrb[0].mxu0
      %v816 = vadd.f32 %v307, %v815
      %v817 = vpop.f32.mrb[0].mxu0
      %818 = vmatprep.mubr.bf16.mxu0 0
      %819 = vmatmul.mubr.bf16.gmra.mrb[0].mxu0 %v569
      %v820 = vpop.f32.mrb[0].mxu0
      %v821 = vadd.f32 %v307, %v820
      %v822 = vpop.f32.mrb[0].mxu0
      %v823 = vpop.f32.mrb[0].mxu0
      %v824 = vadd.f32 %v307, %v823
      %v825 = vpop.f32.mrb[0].mxu0
      %826 = vmatprep.mubr.bf16.mxu0 0
      %827 = vmatmul.mubr.bf16.gmra.mrb[0].mxu0 %v572
      %v828 = vpop.f32.mrb[0].mxu0
      %v829 = vadd.f32 %v307, %v828
      %v830 = vpop.f32.mrb[0].mxu0
      %v831 = vpop.f32.mrb[0].mxu0
      %v832 = vadd.f32 %v307, %v831
      %v833 = vpop.f32.mrb[0].mxu0
      %834 = vmatprep.mubr.bf16.mxu0 0
      %835 = vmatmul.mubr.bf16.gmra.mrb[0].mxu0 %v575
      %v836 = vpop.f32.mrb[0].mxu0
      %v837 = vadd.f32 %v307, %v836
      %v838 = vpop.f32.mrb[0].mxu0
      %v839 = vpop.f32.mrb[0].mxu0
      %v840 = vadd.f32 %v307, %v839
      %v841 = vpop.f32.mrb[0].mxu0
      %842 = vmatprep.mubr.bf16.mxu0 0
      %843 = vmatmul.mubr.bf16.gmra.mrb[0].mxu0 %v578
      %v844 = vpop.f32.mrb[0].mxu0
      %v845 = vadd.f32 %v307, %v844
      %v846 = vpop.f32.mrb[0].mxu0
      %v847 = vpop.f32.mrb[0].mxu0
      %v848 = vadd.f32 %v307, %v847
      %v849 = vpop.f32.mrb[0].mxu0
      %850 = vmatprep.mubr.bf16.mxu0 0
      %851 = vmatmul.mubr.bf16.gmra.mrb[0].mxu0 %v581
      %v852 = vpop.f32.mrb[0].mxu0
      %v853 = vadd.f32 %v307, %v852
      %v854 = vpop.f32.mrb[0].mxu0
      %v855 = vpop.f32.mrb[0].mxu0
      %v856 = vadd.f32 %v307, %v855
      %v857 = vpop.f32.mrb[0].mxu0
      %858 = vmatprep.mubr.bf16.mxu0 0
      %859 = vmatmul.mubr.bf16.gmra.mrb[0].mxu0 %v584
      %v860 = vpop.f32.mrb[0].mxu0
      %v861 = vadd.f32 %v307, %v860
      %v862 = vpop.f32.mrb[0].mxu0
      %v863 = vpop.f32.mrb[0].mxu0
      %v864 = vadd.f32 %v307, %v863
      %v865 = vpop.f32.mrb[0].mxu0
      %866 = vmatprep.mubr.bf16.mxu0 0
      %867 = vmatmul.mubr.bf16.gmra.mrb[0].mxu0 %v587
      %v868 = vpop.f32.mrb[0].mxu0
      %v869 = vadd.f32 %v307, %v868
      %v870 = vpop.f32.mrb[0].mxu0
      %v871 = vpop.f32.mrb[0].mxu0
      %v872 = vadd.f32 %v307, %v871
      %v873 = vpop.f32.mrb[0].mxu0
      %874 = vmatprep.mubr.bf16.mxu0 0
      %875 = vmatmul.mubr.bf16.gmra.mrb[0].mxu0 %v590
      %v876 = vpop.f32.mrb[0].mxu0
      %v877 = vadd.f32 %v307, %v876
      %v878 = vpop.f32.mrb[0].mxu0
      %v879 = vpop.f32.mrb[0].mxu0
      %v880 = vadd.f32 %v307, %v879
      %v881 = vpop.f32.mrb[0].mxu0
      %882 = vmatprep.mubr.bf16.mxu0 0
      %883 = vmatmul.mubr.bf16.gmra.mrb[0].mxu0 %v593
      %v884 = vpop.f32.mrb[0].mxu0
      %v885 = vadd.f32 %v307, %v884
      %v886 = vpop.f32.mrb[0].mxu0
      %v887 = vpop.f32.mrb[0].mxu0
      %v888 = vadd.f32 %v307, %v887
      %v889 = vpop.f32.mrb[0].mxu0
      %890 = vmatprep.mubr.bf16.mxu0 0
      %891 = vmatmul.mubr.bf16.gmra.mrb[0].mxu0 %v596
      %v892 = vpop.f32.mrb[0].mxu0
      %v893 = vadd.f32 %v307, %v892
      %v894 = vpop.f32.mrb[0].mxu0
      %v895 = vpop.f32.mrb[0].mxu0
      %v896 = vadd.f32 %v307, %v895
      %v897 = vpop.f32.mrb[0].mxu0
      %898 = vmatprep.mubr.bf16.mxu0 0
      %899 = vmatmul.mubr.bf16.gmra.mrb[0].mxu0 %v599
      %v900 = vpop.f32.mrb[0].mxu0
      %v901 = vadd.f32 %v307, %v900
      %v902 = vpop.f32.mrb[0].mxu0
      %v903 = vpop.f32.mrb[0].mxu0
      %v904 = vadd.f32 %v307, %v903
      %v905 = vpop.f32.mrb[0].mxu0
      %906 = vmatprep.mubr.bf16.mxu0 0
      %907 = vmatmul.mubr.bf16.gmra.mrb[0].mxu0 %v602
      %v908 = vpop.f32.mrb[0].mxu0
      %v909 = vadd.f32 %v307, %v908
      %v910 = vpop.f32.mrb[0].mxu0
      %v911 = vpop.f32.mrb[0].mxu0
      %v912 = vadd.f32 %v307, %v911
      %v913 = vpop.f32.mrb[0].mxu0
      %914 = vmatprep.mubr.bf16.mxu0 0
      %915 = vmatmul.mubr.bf16.gmra.mrb[0].mxu0 %v605
      %v916 = vpop.f32.mrb[0].mxu0
      %v917 = vadd.f32 %v307, %v916
      %v918 = vpop.f32.mrb[0].mxu0
      %v919 = vpop.f32.mrb[0].mxu0
      %v920 = vadd.f32 %v307, %v919
      %v921 = vpop.f32.mrb[0].mxu0
      %922 = vmatprep.mubr.bf16.mxu0 0
      %923 = vmatmul.mubr.bf16.gmra.mrb[0].mxu0 %v608
      %v924 = vpop.f32.mrb[0].mxu0
      %v925 = vadd.f32 %v307, %v924
      %v926 = vpop.f32.mrb[0].mxu0
      %v927 = vpop.f32.mrb[0].mxu0
      %v928 = vadd.f32 %v307, %v927
      %v929 = vpop.f32.mrb[0].mxu0
      %930 = vdwg.mxu0
      %931 = vst [vmem:[%s223] sm:$0xff] %v645
      %932 = vst [vmem:[%s223 + $0x8] sm:$0xff] %v648
      %933 = vst [vmem:[%s223 + $0x10] sm:$0xff] %v653
      %934 = vst [vmem:[%s223 + $0x18] sm:$0xff] %v656
      %935 = vst [vmem:[%s223 + $0x20] sm:$0xff] %v661
      %936 = vst [vmem:[%s223 + $0x28] sm:$0xff] %v664
      %937 = vst [vmem:[%s223 + $0x30] sm:$0xff] %v669
      %938 = vst [vmem:[%s223 + $0x38] sm:$0xff] %v672
      %939 = vst [vmem:[%s223 + $0x40] sm:$0xff] %v677
      %940 = vst [vmem:[%s223 + $0x48] sm:$0xff] %v680
      %941 = vst [vmem:[%s223 + $0x50] sm:$0xff] %v685
      %942 = vst [vmem:[%s223 + $0x58] sm:$0xff] %v688
      %943 = vst [vmem:[%s223 + $0x60] sm:$0xff] %v693
      %944 = vst [vmem:[%s223 + $0x68] sm:$0xff] %v696
      %945 = vst [vmem:[%s223 + $0x70] sm:$0xff] %v701
      %946 = vst [vmem:[%s223 + $0x78] sm:$0xff] %v704
      %947 = vst [vmem:[%s223 + $0x80] sm:$0xff] %v709
      %948 = vst [vmem:[%s223 + $0x88] sm:$0xff] %v712
      %949 = vst [vmem:[%s223 + $0x90] sm:$0xff] %v717
      %950 = vst [vmem:[%s223 + $0x98] sm:$0xff] %v720
      %951 = vst [vmem:[%s223 + $0xa0] sm:$0xff] %v725
      %952 = vst [vmem:[%s223 + $0xa8] sm:$0xff] %v728
      %953 = vst [vmem:[%s223 + $0xb0] sm:$0xff] %v733
      %954 = vst [vmem:[%s223 + $0xb8] sm:$0xff] %v736
      %955 = vst [vmem:[%s223 + $0xc0] sm:$0xff] %v741
      %956 = vst [vmem:[%s223 + $0xc8] sm:$0xff] %v744
      %957 = vst [vmem:[%s223 + $0xd0] sm:$0xff] %v749
      %958 = vst [vmem:[%s223 + $0xd8] sm:$0xff] %v752
      %959 = vst [vmem:[%s223 + $0xe0] sm:$0xff] %v757
      %960 = vst [vmem:[%s223 + $0xe8] sm:$0xff] %v760
      %961 = vst [vmem:[%s223 + $0xf0] sm:$0xff] %v765
      %962 = vst [vmem:[%s223 + $0xf8] sm:$0xff] %v768
      %963 = vst [vmem:[%s223 + $0x100] sm:$0xff] %v773
      %964 = vst [vmem:[%s223 + $0x108] sm:$0xff] %v776
      %965 = vst [vmem:[%s223 + $0x110] sm:$0xff] %v781
      %966 = vst [vmem:[%s223 + $0x118] sm:$0xff] %v784
      %967 = vst [vmem:[%s223 + $0x120] sm:$0xff] %v789
      %968 = vst [vmem:[%s223 + $0x128] sm:$0xff] %v792
      %969 = vst [vmem:[%s223 + $0x130] sm:$0xff] %v797
      %970 = vst [vmem:[%s223 + $0x138] sm:$0xff] %v800
      %971 = vst [vmem:[%s223 + $0x140] sm:$0xff] %v805
      %972 = vst [vmem:[%s223 + $0x148] sm:$0xff] %v808
      %973 = vst [vmem:[%s223 + $0x150] sm:$0xff] %v813
      %974 = vst [vmem:[%s223 + $0x158] sm:$0xff] %v816
      %975 = vst [vmem:[%s223 + $0x160] sm:$0xff] %v821
      %976 = vst [vmem:[%s223 + $0x168] sm:$0xff] %v824
      %977 = vst [vmem:[%s223 + $0x170] sm:$0xff] %v829
      %978 = vst [vmem:[%s223 + $0x178] sm:$0xff] %v832
      %979 = vst [vmem:[%s223 + $0x180] sm:$0xff] %v837
      %980 = vst [vmem:[%s223 + $0x188] sm:$0xff] %v840
      %981 = vst [vmem:[%s223 + $0x190] sm:$0xff] %v845
      %982 = vst [vmem:[%s223 + $0x198] sm:$0xff] %v848
      %983 = vst [vmem:[%s223 + $0x1a0] sm:$0xff] %v853
      %984 = vst [vmem:[%s223 + $0x1a8] sm:$0xff] %v856
      %985 = vst [vmem:[%s223 + $0x1b0] sm:$0xff] %v861
      %986 = vst [vmem:[%s223 + $0x1b8] sm:$0xff] %v864
      %987 = vst [vmem:[%s223 + $0x1c0] sm:$0xff] %v869
      %988 = vst [vmem:[%s223 + $0x1c8] sm:$0xff] %v872
      %989 = vst [vmem:[%s223 + $0x1d0] sm:$0xff] %v877
      %990 = vst [vmem:[%s223 + $0x1d8] sm:$0xff] %v880
      %991 = vst [vmem:[%s223 + $0x1e0] sm:$0xff] %v885
      %992 = vst [vmem:[%s223 + $0x1e8] sm:$0xff] %v888
      %993 = vst [vmem:[%s223 + $0x1f0] sm:$0xff] %v893
      %994 = vst [vmem:[%s223 + $0x1f8] sm:$0xff] %v896
      %995 = vst [vmem:[%s223 + $0x200] sm:$0xff] %v901
      %996 = vst [vmem:[%s223 + $0x208] sm:$0xff] %v904
      %997 = vst [vmem:[%s223 + $0x210] sm:$0xff] %v909
      %998 = vst [vmem:[%s223 + $0x218] sm:$0xff] %v912
      %999 = vst [vmem:[%s223 + $0x220] sm:$0xff] %v917
      %1000 = vst [vmem:[%s223 + $0x228] sm:$0xff] %v920
      %1001 = vst [vmem:[%s223 + $0x230] sm:$0xff] %v925
      %1002 = vst [vmem:[%s223 + $0x238] sm:$0xff] %v928
      %s1003 = smul.u32 72, %s18
      %p1004 = scmp.lt.s32.totalorder %s1003, 143
      %s1005 = scalar_select %p1004, %s1003, 143
      %p1006 = scmp.lt.s32.totalorder %s19, 0
      %s1007 = scalar_select %p1006, %s19, 0
      %s1008 = sadd.s32 %s1007, %s1005
      %s1009 = smul.addr %s1008, 8
      %s1010 = scalar_lea.vmem %s3, %s1009
      // Predicated region
      $region33: #{forward.23} parent=31 // pred_check
        %p1011 = pneg %p124
      $region34: #{forward.23} parent=31 // pred_check_branch
        %1013 = sbr.rel (%p1011) target = $region36
      $region35: #{forward.23} parent=31 // pred_region
        %s1014 = smul.u32 72, %s18
      $region36: #{forward.23} parent=31 // pred_fallthru
        _
    $region32: #{forward.23} parent=5 // pred_fallthru
      _
    %p1015 = scmp.le.s32.totalorder 2, %s9
    // Predicated region
    $region37: #{forward.23} parent=5 // pred_check
      %p1016 = pneg %p1015
    $region38: #{forward.23} parent=5 // pred_check_branch
      %1018 = sbr.rel (%p1016) target = $region40
    $region39: #{forward.23} parent=5 // pred_region
      %s1019 = ssub.s32 %s9, 2
      // Predicated region
      $region41: #{forward.23} parent=39 // pred_check
        %p1020 = pneg %p130
      $region42: #{forward.23} parent=39 // pred_check_branch
        %1022 = sbr.rel (%p1020) target = $region44
      $region43: #{forward.23} parent=39 // pred_region
        %s1023 = smul.u32 72, %s20
        %p1024 = scmp.lt.s32.totalorder %s1023, 143
        %s1025 = scalar_select %p1024, %s1023, 143
        %p1026 = scmp.lt.s32.totalorder %s21, 0
        %s1027 = scalar_select %p1026, %s21, 0
        %s1028 = sadd.s32 %s1027, %s1025
        %s1029 = smul.addr %s1028, 8
        %s1030 = scalar_lea.vmem %s3, %s1029
      $region44: #{forward.23} parent=39 // pred_fallthru
        _
    $region40: #{forward.23} parent=5 // pred_fallthru
      _
  $region6: #{forward.23} parent=0 // loop_footer
    %s13 = sadd.s32 1, %s9
  $region7: #{forward.23} parent=0 // loop_footer_branch
    %8 = sbr.rel target = $region3
  $region8: #{forward.23} parent=0 // loop_exit
    _

</llo_original>
